<compile_context>
chip_gen: v6e
topology: v6e:2x2x1
jax: 0.10.0
libtpu: 0.0.40
codegen_flags: <defaults>
</compile_context>

<pallas_src>
import math
from functools import partial

import jax
import jax.numpy as jnp
from jax import lax
from jax.experimental import pallas as pl
from jax.experimental.pallas import tpu as pltpu

LN_EPS = 1e-5                      # torch.nn.LayerNorm default
MATMUL_DTYPE = jnp.bfloat16        # MXU input / block-weight storage dtype
                                   # (f32 accumulation everywhere).  Set to
                                   # jnp.float32 for bit-level parity checks.
MASK_NEG = -1e30                   # additive mask for padded key positions


# ----------------------------- in-kernel helpers -----------------------------

def _linear(x, w, b=None):
    # x: (M, K), w: (K, O) (already bf16 for the packed block weights), b: (1, O)
    y = jnp.dot(x.astype(MATMUL_DTYPE), w.astype(MATMUL_DTYPE),
                preferred_element_type=jnp.float32)
    return y if b is None else y + b


def _layernorm(x, w, b):
    # f32 statistics (v5e has no bf16 VALU/EUP)
    mu = jnp.mean(x, axis=-1, keepdims=True)
    xc = x - mu
    var = jnp.mean(xc * xc, axis=-1, keepdims=True)
    return xc * lax.rsqrt(var + LN_EPS) * w + b


def _gelu(x):
    # exact GELU (nn.GELU default, approximate='none')
    return 0.5 * x * (1.0 + lax.erf(x * (1.0 / math.sqrt(2.0))))


def _softmax(x):
    m = jnp.max(x, axis=-1, keepdims=True)
    e = jnp.exp(x - m)
    # EUP reciprocal frees VALU cycles in the softmax epilogue
    return e * pl.reciprocal(jnp.sum(e, axis=-1, keepdims=True), approx=True)


def _split_heads(x, bt, n_pad, h, d):
    # (bt*n_pad, h*d) -> (bt*h, n_pad, d): head-major leading batch for the MXU einsum
    return x.reshape(bt, n_pad, h, d).transpose(0, 2, 1, 3).reshape(bt * h, n_pad, d)


def _merge_heads(x, bt, n_pad, h, d):
    # (bt*h, n_pad, d) -> (bt*n_pad, h*d): C = h*d back on the lane axis
    return x.reshape(bt, h, n_pad, d).transpose(0, 2, 1, 3).reshape(bt * n_pad, h * d)


# --------------------------------- kernel ------------------------------------

def vit_kernel(num_heads, n_valid,
               patches_ref, patch_w_ref, embed_add_ref,
               wa_ref, wb_ref, vec_ref,
               norm_w_ref, norm_b_ref, head_w_ref, head_b_ref,
               o_ref, acc_ref):
    layer = pl.program_id(1)
    bt, n_pad, k_dim = patches_ref.shape
    e = patch_w_ref.shape[1]
    m = bt * n_pad
    d = e // num_heads
    scale = d ** -0.5

    # ---- layer 0: patch-embed + CLS + pos_embed into the residual scratch ----
    # (padded patch rows are zero; embed_add holds cls+pos0 / pos+bias / zeros)
    @pl.when(layer == 0)
    def _():
        pm = patches_ref[...].reshape(m, k_dim)
        emb = _linear(pm, patch_w_ref[...])                               # (m, e)
        acc_ref[...] = emb.reshape(bt, n_pad, e) + embed_add_ref[...][None, :, :]

    # ---- per-layer weights, sliced out of the packed slabs ----
    wa = wa_ref[0]                        # (e, 4e+hidden) bf16: [qkv | proj | fc1]
    wb = wb_ref[0]                        # (hidden, e)    bf16: fc2
    vec = vec_ref[0]                      # (8, vmax)      f32 : biases / LN params
    hidden = wa.shape[1] - 4 * e
    qkv_w = wa[:, 0:3 * e]
    proj_w = wa[:, 3 * e:4 * e]
    fc1_w = wa[:, 4 * e:]
    ln1_w, ln1_b = vec[0:1, :e], vec[1:2, :e]
    qkv_b = vec[2:3, :3 * e]
    proj_b = vec[3:4, :e]
    ln2_w, ln2_b = vec[4:5, :e], vec[5:6, :e]
    fc1_b = vec[6:7, :hidden]
    fc2_b = vec[7:8, :e]

    x = acc_ref[...].reshape(m, e)        # residual stream, f32, (Bt*n_pad, C)

    # ------------------ attention branch ------------------
    x1 = _layernorm(x, ln1_w, ln1_b)
    qkv = _linear(x1, qkv_w, qkv_b)                                       # (m, 3e)
    q = _split_heads(qkv[:, 0:e], bt, n_pad, num_heads, d)
    k = _split_heads(qkv[:, e:2 * e], bt, n_pad, num_heads, d)
    v = _split_heads(qkv[:, 2 * e:3 * e], bt, n_pad, num_heads, d)

    s = jnp.einsum('gnd,gmd->gnm',
                   q.astype(MATMUL_DTYPE), k.astype(MATMUL_DTYPE),
                   preferred_element_type=jnp.float32) * scale            # (G, Np, Np)
    key_pos = lax.broadcasted_iota(jnp.int32, (1, 1, n_pad), 2)
    s = jnp.where(key_pos < n_valid, s, MASK_NEG)                         # mask pad keys
    p = _softmax(s)                                                       # f32
    ao = jnp.einsum('gnm,gmd->gnd',
                    p.astype(MATMUL_DTYPE), v.astype(MATMUL_DTYPE),
                    preferred_element_type=jnp.float32)                   # (G, Np, d)
    attn_out = _merge_heads(ao, bt, n_pad, num_heads, d)                  # (m, e)
    x = x + _linear(attn_out, proj_w, proj_b)

    # --------------------- MLP branch ----------------------
    x2 = _layernorm(x, ln2_w, ln2_b)
    hmid = _gelu(_linear(x2, fc1_w, fc1_b))
    x = x + _linear(hmid, wb, fc2_b)

    acc_ref[...] = x.reshape(bt, n_pad, e)

    # ---- last layer: final LayerNorm on CLS row + classifier head ----
    @pl.when(layer == pl.num_programs(1) - 1)
    def _():
        cls = x.reshape(bt, n_pad, e)[:, 0, :]                            # (bt, e)
        hcls = _layernorm(cls, norm_w_ref[...], norm_b_ref[...])
        o_ref[...] = _linear(hcls, head_w_ref[...], head_b_ref[...])


# ------------------------------ pallas wrapper --------------------------------

def _round_up(x, mult):
    return ((x + mult - 1) // mult) * mult


def _pick_batch_tile(batch, n_pad, target_rows=256):
    # Largest divisor of `batch` with bt*n_pad <= target_rows (MXU-height fill:
    # ~256 rows on v6e/v7x; 128 already saturates v5e's 4x128^2 MXU).
    bt = 1
    for c in range(1, batch + 1):
        if batch % c == 0 and c * n_pad <= target_rows:
            bt = c
    return bt


def _vmem_limit_bytes():
    # ~3/4 of physical VMEM, capped at 100 MiB: ~96 MiB on v5e/v6e (128 MiB parts),
    # ~48 MiB on v7x (64 MiB part).  Conservative fallback if the query fails.
    try:
        cap = int(pltpu.get_tpu_info().vmem_capacity_bytes)
    except Exception:
        cap = 64 * 1024 * 1024
    return int(min((cap * 3) // 4, 100 * 1024 * 1024))


def vit_forward(x_nchw, params, *, patch_size, num_heads):
    B, c_in, h_img, w_img = x_nchw.shape
    p = patch_size
    hp, wp = h_img // p, w_img // p
    P = hp * wp
    N = P + 1                                  # tokens incl. CLS
    n_pad = _round_up(N, 16)                   # aligned for f32 and bf16 packing
    K = c_in * p * p
    E = params['patch_w'].shape[1]
    NC = params['head_w'].shape[1]
    blk = params['blocks']
    depth = blk['wa'].shape[0]
    hidden = blk['wb'].shape[1]
    vmax = blk['vec'].shape[2]

    # -------- host-side layout glue (runs once, outside the kernel) --------
    # patchify: NCHW -> (B, P, C*p*p), channel-major within each patch
    patches = x_nchw.reshape(B, c_in, hp, p, wp, p)
    patches = patches.transpose(0, 2, 4, 1, 3, 5).reshape(B, P, K).astype(jnp.float32)
    # pad to n_pad tokens: row 0 is the CLS slot, rows N.. are padding (zero input)
    patches_pad = jnp.zeros((B, n_pad, K), jnp.float32).at[:, 1:N, :].set(patches)
    # additive constant folding cls_token, pos_embed and the patch-embed bias
    pos = params['pos_embed']
    embed_add = jnp.zeros((n_pad, E), jnp.float32)
    embed_add = embed_add.at[0, :].set(params['cls_token'][0] + pos[0])
    embed_add = embed_add.at[1:N, :].set(pos[1:] + params['patch_b'])

    bt = _pick_batch_tile(B, n_pad)
    grid = (B // bt, depth)
    # TODO(synk): for v7x single-image inference (B // bt == 1) split rows/heads
    # across the two TensorCores instead; with one outer block one core idles.

    in_specs = [
        pl.BlockSpec((bt, n_pad, K), lambda b, l: (b, 0, 0)),              # patches
        pl.BlockSpec((K, E), lambda b, l: (0, 0)),                         # patch_w
        pl.BlockSpec((n_pad, E), lambda b, l: (0, 0)),                     # embed_add
        pl.BlockSpec((1, E, 4 * E + hidden), lambda b, l: (l, 0, 0)),      # wa (bf16)
        pl.BlockSpec((1, hidden, E), lambda b, l: (l, 0, 0)),              # wb (bf16)
        pl.BlockSpec((1, 8, vmax), lambda b, l: (l, 0, 0)),                # vec (f32)
        pl.BlockSpec((1, E), lambda b, l: (0, 0)),                         # norm_w
        pl.BlockSpec((1, E), lambda b, l: (0, 0)),                         # norm_b
        pl.BlockSpec((E, NC), lambda b, l: (0, 0)),                        # head_w
        pl.BlockSpec((1, NC), lambda b, l: (0, 0)),                        # head_b
    ]
    out_specs = pl.BlockSpec((bt, NC), lambda b, l: (b, 0))

    return pl.pallas_call(
        partial(vit_kernel, num_heads, N),
        out_shape=jax.ShapeDtypeStruct((B, NC), jnp.float32),
        grid=grid,
        in_specs=in_specs,
        out_specs=out_specs,
        scratch_shapes=[pltpu.VMEM((bt, n_pad, E), jnp.float32)],
        compiler_params=pltpu.CompilerParams(
            dimension_semantics=("parallel", "arbitrary"),
            vmem_limit_bytes=_vmem_limit_bytes(),
        ),
    )(patches_pad, params['patch_w'], embed_add,
      blk['wa'], blk['wb'], blk['vec'],
      params['norm_w'], params['norm_b'], params['head_w'], params['head_b'])


# ------------------------------- parameter init --------------------------------

def make_params(key, *, in_chans, patch_size, num_patches, embed_dim, depth,
                mlp_ratio, num_classes):
    E = embed_dim
    hidden = int(E * mlp_ratio)
    K = in_chans * patch_size * patch_size
    vmax = max(3 * E, hidden, E)
    keys = iter(jax.random.split(key, 8 + 12 * depth))

    def tn(shape):   # deterministic stand-in for trunc_normal_(std=0.02)
        return (0.02 * jax.random.normal(next(keys), shape)).astype(jnp.float32)

    # NOTE: the reference module zero-inits biases / ones-inits LN weights; small
    # random values are used here so the parity check exercises every parameter path.
    params = {
        'patch_w': tn((K, E)),                  # (K, O) layout -> lane-dense outputs
        'patch_b': tn((1, E)),
        'cls_token': tn((1, E)),
        'pos_embed': tn((num_patches + 1, E)),
        'norm_w': 1.0 + tn((1, E)),
        'norm_b': tn((1, E)),
        'head_w': tn((E, num_classes)),
        'head_b': tn((1, num_classes)),
    }

    wa_l, wb_l, vec_l = [], [], []
    for _ in range(depth):
        qkv_w, proj_w = tn((E, 3 * E)), tn((E, E))
        fc1_w, fc2_w = tn((E, hidden)), tn((hidden, E))
        wa_l.append(jnp.concatenate([qkv_w, proj_w, fc1_w], axis=1))
        wb_l.append(fc2_w)
        vec = jnp.zeros((8, vmax), jnp.float32)
        vec = vec.at[0, :E].set(1.0 + tn((E,)))          # ln1_w
        vec = vec.at[1, :E].set(tn((E,)))                # ln1_b
        vec = vec.at[2, :3 * E].set(tn((3 * E,)))        # qkv_b
        vec = vec.at[3, :E].set(tn((E,)))                # proj_b
        vec = vec.at[4, :E].set(1.0 + tn((E,)))          # ln2_w
        vec = vec.at[5, :E].set(tn((E,)))                # ln2_b
        vec = vec.at[6, :hidden].set(tn((hidden,)))      # fc1_b
        vec = vec.at[7, :E].set(tn((E,)))                # fc2_b
        vec_l.append(vec)

    params['blocks'] = {
        'wa': jnp.stack(wa_l).astype(MATMUL_DTYPE),      # (depth, E, 4E+hidden)
        'wb': jnp.stack(wb_l).astype(MATMUL_DTYPE),      # (depth, hidden, E)
        'vec': jnp.stack(vec_l),                         # (depth, 8, vmax) f32
    }
    return params


# --------------------------- pure-jnp f32 reference ----------------------------

def vit_reference(x_nchw, params, *, patch_size, num_heads):
    """Mirrors the PyTorch VisionTransformer.forward (eval mode) in f32."""
    B, c_in, h_img, w_img = x_nchw.shape
    p = patch_size
    hp, wp = h_img // p, w_img // p
    P = hp * wp
    E = params['patch_w'].shape[1]
    H = num_heads
    d = E // H

    patches = x_nchw.reshape(B, c_in, hp, p, wp, p)
    patches = patches.transpose(0, 2, 4, 1, 3, 5).reshape(B, P, -1).astype(jnp.float32)

    x = patches @ params['patch_w'] + params['patch_b']
    cls = jnp.broadcast_to(params['cls_token'][None], (B, 1, E))
    x = jnp.concatenate([cls, x], axis=1) + params['pos_embed'][None]
    N = x.shape[1]

    def ln(v, w, b):
        mu = v.mean(-1, keepdims=True)
        var = ((v - mu) ** 2).mean(-1, keepdims=True)
        return (v - mu) / jnp.sqrt(var + LN_EPS) * w + b

    blk = params['blocks']
    for l in range(blk['wa'].shape[0]):
        wa = blk['wa'][l].astype(jnp.float32)
        wb = blk['wb'][l].astype(jnp.float32)
        vec = blk['vec'][l]
        hidden = wa.shape[1] - 4 * E
        qkv_w, proj_w, fc1_w, fc2_w = wa[:, :3 * E], wa[:, 3 * E:4 * E], wa[:, 4 * E:], wb

        x1 = ln(x, vec[0, :E], vec[1, :E])
        qkv = (x1 @ qkv_w + vec[2, :3 * E]).reshape(B, N, 3, H, d).transpose(2, 0, 3, 1, 4)
        q, k, v = qkv[0], qkv[1], qkv[2]                         # (B, H, N, d)
        att = jax.nn.softmax((q @ jnp.swapaxes(k, -1, -2)) * (d ** -0.5), axis=-1)
        ao = (att @ v).transpose(0, 2, 1, 3).reshape(B, N, E)
        x = x + (ao @ proj_w + vec[3, :E])

        x2 = ln(x, vec[4, :E], vec[5, :E])
        hmid = x2 @ fc1_w + vec[6, :hidden]
        hmid = 0.5 * hmid * (1.0 + lax.erf(hmid / math.sqrt(2.0)))
        x = x + (hmid @ fc2_w + vec[7, :E])

    x = ln(x, params['norm_w'][0], params['norm_b'][0])
    return x[:, 0] @ params['head_w'] + params['head_b']


# ----------------------------------- main ---------------------------------------

if __name__ == "__main__":
    # small config consistent with the module's forward
    B = 2
    in_chans = 4
    img_size = 16
    patch_size = 4
    embed_dim = 32
    depth = 2
    num_heads = 4
    mlp_ratio = 4.0
    num_classes = 10
    num_patches = (img_size // patch_size) ** 2      # 16 patches -> seq 17 with CLS

    key = jax.random.PRNGKey(0)
    pkey, xkey = jax.random.split(key)

    params = make_params(pkey,
                         in_chans=in_chans, patch_size=patch_size,
                         num_patches=num_patches, embed_dim=embed_dim,
                         depth=depth, mlp_ratio=mlp_ratio,
                         num_classes=num_classes)

    x = jax.random.normal(xkey, (B, in_chans, img_size, img_size), dtype=jnp.float32)

    out = vit_forward(x, params, patch_size=patch_size, num_heads=num_heads)
    out = jax.block_until_ready(out)
    assert out.shape == (B, num_classes)
    assert bool(jnp.all(jnp.isfinite(out)))

    # parity vs. a pure-jnp f32 reference (tolerance covers bf16 MXU inputs,
    # bf16-stored block weights and the approx EUP reciprocal in softmax)
    ref = vit_reference(x, params, patch_size=patch_size, num_heads=num_heads)
    max_diff = float(jnp.max(jnp.abs(out - ref)))
    assert max_diff < 5e-2, f"parity check failed: max|diff| = {max_diff:.3e}"

    print("KERNEL_OK")
</pallas_src>

<mosaic_0001>
module attributes {stable_mosaic.version = 11 : i64} {
  func.func @vit_kernel(%arg0: i32, %arg1: i32, %arg2: memref<2x32x64xf32, #tpu.memory_space<vmem>>, %arg3: memref<64x32xf32, #tpu.memory_space<vmem>>, %arg4: memref<32x32xf32, #tpu.memory_space<vmem>>, %arg5: memref<1x32x256xbf16, #tpu.memory_space<vmem>>, %arg6: memref<1x128x32xbf16, #tpu.memory_space<vmem>>, %arg7: memref<1x8x128xf32, #tpu.memory_space<vmem>>, %arg8: memref<1x32xf32, #tpu.memory_space<vmem>>, %arg9: memref<1x32xf32, #tpu.memory_space<vmem>>, %arg10: memref<32x10xf32, #tpu.memory_space<vmem>>, %arg11: memref<1x10xf32, #tpu.memory_space<vmem>>, %arg12: memref<2x10xf32, #tpu.memory_space<vmem>>, %arg13: memref<2x32x32xf32, #tpu.memory_space<vmem>>) attributes {dimension_semantics = [#tpu.dimension_semantics<parallel>, #tpu.dimension_semantics<arbitrary>], iteration_bounds = array<i64: 1, 2>, scalar_prefetch = 0 : i64, scratch_operands = 1 : i64, tpu.core_type = #tpu.core_type<tc>, window_params = [{transform_indices = @transform_0, window_bounds = array<i64: 2, 32, 64>}, {pipeline_mode = #tpu.pipeline_mode<synchronous>, transform_indices = @transform_1, window_bounds = array<i64: 64, 32>}, {pipeline_mode = #tpu.pipeline_mode<synchronous>, transform_indices = @transform_2, window_bounds = array<i64: 32, 32>}, {transform_indices = @transform_3, window_bounds = array<i64: 1, 32, 256>}, {transform_indices = @transform_4, window_bounds = array<i64: 1, 128, 32>}, {transform_indices = @transform_5, window_bounds = array<i64: 1, 8, 128>}, {pipeline_mode = #tpu.pipeline_mode<synchronous>, transform_indices = @transform_6, window_bounds = array<i64: 1, 32>}, {pipeline_mode = #tpu.pipeline_mode<synchronous>, transform_indices = @transform_7, window_bounds = array<i64: 1, 32>}, {pipeline_mode = #tpu.pipeline_mode<synchronous>, transform_indices = @transform_8, window_bounds = array<i64: 32, 10>}, {pipeline_mode = #tpu.pipeline_mode<synchronous>, transform_indices = @transform_9, window_bounds = array<i64: 1, 10>}, {transform_indices = @transform_10, window_bounds = array<i64: 2, 10>}]} {
    %c0_i32 = arith.constant 0 : i32
    %0 = arith.cmpi eq, %arg1, %c0_i32 : i32
    %1 = arith.extui %0 : i1 to i32
    %c0_i32_0 = arith.constant 0 : i32
    %2 = arith.cmpi ne, %1, %c0_i32_0 : i32
    scf.if %2 {
      %c0_38 = arith.constant 0 : index
      %c0_39 = arith.constant 0 : index
      %c0_40 = arith.constant 0 : index
      %133 = vector.load %arg2[%c0_38, %c0_39, %c0_40] : memref<2x32x64xf32, #tpu.memory_space<vmem>>, vector<2x32x64xf32>
      %134 = vector.shape_cast %133 : vector<2x32x64xf32> to vector<64x64xf32>
      %c0_41 = arith.constant 0 : index
      %c0_42 = arith.constant 0 : index
      %135 = vector.load %arg3[%c0_41, %c0_42] : memref<64x32xf32, #tpu.memory_space<vmem>>, vector<64x32xf32>
      %136 = arith.truncf %134 : vector<64x64xf32> to vector<64x64xbf16>
      %137 = arith.truncf %135 : vector<64x32xf32> to vector<64x32xbf16>
      %cst_43 = arith.constant dense<0.000000e+00> : vector<64x32xf32>
      %138 = tpu.matmul %136, %137, %cst_43 {dimension_numbers = #tpu.dot_dimension_numbers<[1], [0], [0], [1], [0, 0, 1, 1], [], []>} : vector<64x64xbf16>, vector<64x32xbf16>, vector<64x32xf32> -> vector<64x32xf32>
      %139 = vector.shape_cast %138 : vector<64x32xf32> to vector<2x32x32xf32>
      %c0_44 = arith.constant 0 : index
      %c0_45 = arith.constant 0 : index
      %140 = vector.load %arg4[%c0_44, %c0_45] : memref<32x32xf32, #tpu.memory_space<vmem>>, vector<32x32xf32>
      %141 = vector.shape_cast %140 : vector<32x32xf32> to vector<1x32x32xf32>
      %142 = vector.broadcast %141 : vector<1x32x32xf32> to vector<2x32x32xf32>
      %143 = arith.addf %139, %142 : vector<2x32x32xf32>
      %c0_46 = arith.constant 0 : index
      %c0_47 = arith.constant 0 : index
      %c0_48 = arith.constant 0 : index
      %144 = vector.load %arg13[%c0_46, %c0_47, %c0_48] : memref<2x32x32xf32, #tpu.memory_space<vmem>>, vector<2x32x32xf32>
      tpu.vector_store %arg13[%c0_46, %c0_47, %c0_48], %143 {strides = array<i32>} : memref<2x32x32xf32, #tpu.memory_space<vmem>>, vector<2x32x32xf32>,
    } else {
    }
    %c0 = arith.constant 0 : index
    %c0_1 = arith.constant 0 : index
    %c0_2 = arith.constant 0 : index
    %3 = vector.load %arg5[%c0, %c0_1, %c0_2] : memref<1x32x256xbf16, #tpu.memory_space<vmem>>, vector<1x32x256xbf16>
    %4 = vector.shape_cast %3 : vector<1x32x256xbf16> to vector<32x256xbf16>
    %c0_3 = arith.constant 0 : index
    %c0_4 = arith.constant 0 : index
    %c0_5 = arith.constant 0 : index
    %5 = vector.load %arg6[%c0_3, %c0_4, %c0_5] : memref<1x128x32xbf16, #tpu.memory_space<vmem>>, vector<1x128x32xbf16>
    %6 = vector.shape_cast %5 : vector<1x128x32xbf16> to vector<128x32xbf16>
    %c0_6 = arith.constant 0 : index
    %c0_7 = arith.constant 0 : index
    %c0_8 = arith.constant 0 : index
    %7 = vector.load %arg7[%c0_6, %c0_7, %c0_8] : memref<1x8x128xf32, #tpu.memory_space<vmem>>, vector<1x8x128xf32>
    %8 = vector.shape_cast %7 : vector<1x8x128xf32> to vector<8x128xf32>
    %9 = vector.extract_strided_slice %4 {offsets = [0, 0], sizes = [32, 96], strides = [1, 1]} : vector<32x256xbf16> to vector<32x96xbf16>
    %10 = vector.extract_strided_slice %4 {offsets = [0, 96], sizes = [32, 32], strides = [1, 1]} : vector<32x256xbf16> to vector<32x32xbf16>
    %11 = vector.extract_strided_slice %4 {offsets = [0, 128], sizes = [32, 128], strides = [1, 1]} : vector<32x256xbf16> to vector<32x128xbf16>
    %12 = vector.extract_strided_slice %8 {offsets = [0, 0], sizes = [1, 32], strides = [1, 1]} : vector<8x128xf32> to vector<1x32xf32>
    %13 = vector.extract_strided_slice %8 {offsets = [1, 0], sizes = [1, 32], strides = [1, 1]} : vector<8x128xf32> to vector<1x32xf32>
    %14 = vector.extract_strided_slice %8 {offsets = [2, 0], sizes = [1, 96], strides = [1, 1]} : vector<8x128xf32> to vector<1x96xf32>
    %15 = vector.extract_strided_slice %8 {offsets = [3, 0], sizes = [1, 32], strides = [1, 1]} : vector<8x128xf32> to vector<1x32xf32>
    %16 = vector.extract_strided_slice %8 {offsets = [4, 0], sizes = [1, 32], strides = [1, 1]} : vector<8x128xf32> to vector<1x32xf32>
    %17 = vector.extract_strided_slice %8 {offsets = [5, 0], sizes = [1, 32], strides = [1, 1]} : vector<8x128xf32> to vector<1x32xf32>
    %18 = vector.extract_strided_slice %8 {offsets = [6, 0], sizes = [1, 128], strides = [1, 1]} : vector<8x128xf32> to vector<1x128xf32>
    %19 = vector.extract_strided_slice %8 {offsets = [7, 0], sizes = [1, 32], strides = [1, 1]} : vector<8x128xf32> to vector<1x32xf32>
    %c0_9 = arith.constant 0 : index
    %c0_10 = arith.constant 0 : index
    %c0_11 = arith.constant 0 : index
    %20 = vector.load %arg13[%c0_9, %c0_10, %c0_11] : memref<2x32x32xf32, #tpu.memory_space<vmem>>, vector<2x32x32xf32>
    %21 = vector.shape_cast %20 : vector<2x32x32xf32> to vector<64x32xf32>
    %cst = arith.constant dense<0.000000e+00> : vector<64xf32>
    %22 = vector.multi_reduction <add>, %21, %cst [1] : vector<64x32xf32> to vector<64xf32>
    %23 = vector.shape_cast %22 : vector<64xf32> to vector<64x1xf32>
    %cst_12 = arith.constant 3.200000e+01 : f32
    %24 = vector.broadcast %cst_12 : f32 to vector<64x1xf32>
    %25 = arith.divf %23, %24 : vector<64x1xf32>
    %26 = vector.broadcast %25 : vector<64x1xf32> to vector<64x32xf32>
    %27 = arith.subf %21, %26 : vector<64x32xf32>
    %28 = arith.mulf %27, %27 : vector<64x32xf32>
    %cst_13 = arith.constant dense<0.000000e+00> : vector<64xf32>
    %29 = vector.multi_reduction <add>, %28, %cst_13 [1] : vector<64x32xf32> to vector<64xf32>
    %30 = vector.shape_cast %29 : vector<64xf32> to vector<64x1xf32>
    %cst_14 = arith.constant 3.200000e+01 : f32
    %31 = vector.broadcast %cst_14 : f32 to vector<64x1xf32>
    %32 = arith.divf %30, %31 : vector<64x1xf32>
    %cst_15 = arith.constant 9.99999974E-6 : f32
    %33 = vector.broadcast %cst_15 : f32 to vector<64x1xf32>
    %34 = arith.addf %32, %33 : vector<64x1xf32>
    %35 = math.rsqrt %34 : vector<64x1xf32>
    %36 = vector.broadcast %35 : vector<64x1xf32> to vector<64x32xf32>
    %37 = arith.mulf %27, %36 : vector<64x32xf32>
    %38 = vector.broadcast %12 : vector<1x32xf32> to vector<64x32xf32>
    %39 = arith.mulf %37, %38 : vector<64x32xf32>
    %40 = vector.broadcast %13 : vector<1x32xf32> to vector<64x32xf32>
    %41 = arith.addf %39, %40 : vector<64x32xf32>
    %42 = arith.truncf %41 : vector<64x32xf32> to vector<64x32xbf16>
    %cst_16 = arith.constant dense<0.000000e+00> : vector<64x96xf32>
    %43 = tpu.matmul %42, %9, %cst_16 {dimension_numbers = #tpu.dot_dimension_numbers<[1], [0], [0], [1], [0, 0, 1, 1], [], []>} : vector<64x32xbf16>, vector<32x96xbf16>, vector<64x96xf32> -> vector<64x96xf32>
    %44 = vector.broadcast %14 : vector<1x96xf32> to vector<64x96xf32>
    %45 = arith.addf %43, %44 : vector<64x96xf32>
    %46 = vector.extract_strided_slice %45 {offsets = [0, 0], sizes = [64, 32], strides = [1, 1]} : vector<64x96xf32> to vector<64x32xf32>
    %47 = vector.shape_cast %46 : vector<64x32xf32> to vector<2x32x4x8xf32>
    %48 = tpu.transpose %47, [0, 2, 1, 3] : vector<2x32x4x8xf32> -> vector<2x4x32x8xf32>
    %49 = vector.shape_cast %48 : vector<2x4x32x8xf32> to vector<8x32x8xf32>
    %50 = vector.extract_strided_slice %45 {offsets = [0, 32], sizes = [64, 32], strides = [1, 1]} : vector<64x96xf32> to vector<64x32xf32>
    %51 = vector.shape_cast %50 : vector<64x32xf32> to vector<2x32x4x8xf32>
    %52 = tpu.transpose %51, [0, 2, 1, 3] : vector<2x32x4x8xf32> -> vector<2x4x32x8xf32>
    %53 = vector.shape_cast %52 : vector<2x4x32x8xf32> to vector<8x32x8xf32>
    %54 = vector.extract_strided_slice %45 {offsets = [0, 64], sizes = [64, 32], strides = [1, 1]} : vector<64x96xf32> to vector<64x32xf32>
    %55 = vector.shape_cast %54 : vector<64x32xf32> to vector<2x32x4x8xf32>
    %56 = tpu.transpose %55, [0, 2, 1, 3] : vector<2x32x4x8xf32> -> vector<2x4x32x8xf32>
    %57 = vector.shape_cast %56 : vector<2x4x32x8xf32> to vector<8x32x8xf32>
    %58 = arith.truncf %49 : vector<8x32x8xf32> to vector<8x32x8xbf16>
    %59 = arith.truncf %53 : vector<8x32x8xf32> to vector<8x32x8xbf16>
    "tpu.trace_start"() <{level = 10 : i32, message = "gnd,gmd->gnm"}> : () -> ()
    %cst_17 = arith.constant dense<0.000000e+00> : vector<8x32x32xf32>
    %60 = tpu.matmul %58, %59, %cst_17 {dimension_numbers = #tpu.dot_dimension_numbers<[2], [2], [1], [1], [0, 0, 0, 1, 1, 1], [0], [0]>} : vector<8x32x8xbf16>, vector<8x32x8xbf16>, vector<8x32x32xf32> -> vector<8x32x32xf32>
    "tpu.trace_stop"() : () -> ()
    %cst_18 = arith.constant 0.353553385 : f32
    %61 = vector.broadcast %cst_18 : f32 to vector<8x32x32xf32>
    %62 = arith.mulf %60, %61 : vector<8x32x32xf32>
    %63 = tpu.iota {dimensions = array<i32: 2>} : vector<1x1x32xi32>
    %c17_i32 = arith.constant 17 : i32
    %64 = vector.broadcast %c17_i32 : i32 to vector<1x1x32xi32>
    %65 = arith.cmpi slt, %63, %64 : vector<1x1x32xi32>
    %cst_19 = arith.constant -1.000000e+30 : f32
    %66 = vector.shape_cast %65 : vector<1x1x32xi1> to vector<1x1x32xi1>
    %67 = vector.broadcast %66 : vector<1x1x32xi1> to vector<8x32x32xi1>
    %68 = vector.broadcast %cst_19 : f32 to vector<8x32x32xf32>
    %69 = arith.select %67, %62, %68 : vector<8x32x32xi1>, vector<8x32x32xf32>
    %cst_20 = arith.constant dense<0xFF800000> : vector<8x32xf32>
    %70 = vector.multi_reduction <maximumf>, %69, %cst_20 [2] : vector<8x32x32xf32> to vector<8x32xf32>
    %71 = vector.shape_cast %70 : vector<8x32xf32> to vector<8x32x1xf32>
    %72 = vector.broadcast %71 : vector<8x32x1xf32> to vector<8x32x32xf32>
    %73 = arith.subf %69, %72 : vector<8x32x32xf32>
    %74 = math.exp %73 : vector<8x32x32xf32>
    %cst_21 = arith.constant dense<0.000000e+00> : vector<8x32xf32>
    %75 = vector.multi_reduction <add>, %74, %cst_21 [2] : vector<8x32x32xf32> to vector<8x32xf32>
    %76 = vector.shape_cast %75 : vector<8x32xf32> to vector<8x32x1xf32>
    %77 = tpu.reciprocal %76 {approx = true} : vector<8x32x1xf32> -> vector<8x32x1xf32>
    %78 = vector.broadcast %77 : vector<8x32x1xf32> to vector<8x32x32xf32>
    %79 = arith.mulf %74, %78 : vector<8x32x32xf32>
    %80 = arith.truncf %79 : vector<8x32x32xf32> to vector<8x32x32xbf16>
    %81 = arith.truncf %57 : vector<8x32x8xf32> to vector<8x32x8xbf16>
    "tpu.trace_start"() <{level = 10 : i32, message = "gnm,gmd->gnd"}> : () -> ()
    %cst_22 = arith.constant dense<0.000000e+00> : vector<8x32x8xf32>
    %82 = tpu.matmul %80, %81, %cst_22 {dimension_numbers = #tpu.dot_dimension_numbers<[2], [1], [1], [2], [0, 0, 0, 1, 1, 2], [0], [0]>} : vector<8x32x32xbf16>, vector<8x32x8xbf16>, vector<8x32x8xf32> -> vector<8x32x8xf32>
    "tpu.trace_stop"() : () -> ()
    %83 = vector.shape_cast %82 : vector<8x32x8xf32> to vector<2x4x32x8xf32>
    %84 = tpu.transpose %83, [0, 2, 1, 3] : vector<2x4x32x8xf32> -> vector<2x32x4x8xf32>
    %85 = vector.shape_cast %84 : vector<2x32x4x8xf32> to vector<64x32xf32>
    %86 = arith.truncf %85 : vector<64x32xf32> to vector<64x32xbf16>
    %cst_23 = arith.constant dense<0.000000e+00> : vector<64x32xf32>
    %87 = tpu.matmul %86, %10, %cst_23 {dimension_numbers = #tpu.dot_dimension_numbers<[1], [0], [0], [1], [0, 0, 1, 1], [], []>} : vector<64x32xbf16>, vector<32x32xbf16>, vector<64x32xf32> -> vector<64x32xf32>
    %88 = vector.broadcast %15 : vector<1x32xf32> to vector<64x32xf32>
    %89 = arith.addf %87, %88 : vector<64x32xf32>
    %90 = arith.addf %21, %89 : vector<64x32xf32>
    %cst_24 = arith.constant dense<0.000000e+00> : vector<64xf32>
    %91 = vector.multi_reduction <add>, %90, %cst_24 [1] : vector<64x32xf32> to vector<64xf32>
    %92 = vector.shape_cast %91 : vector<64xf32> to vector<64x1xf32>
    %cst_25 = arith.constant 3.200000e+01 : f32
    %93 = vector.broadcast %cst_25 : f32 to vector<64x1xf32>
    %94 = arith.divf %92, %93 : vector<64x1xf32>
    %95 = vector.broadcast %94 : vector<64x1xf32> to vector<64x32xf32>
    %96 = arith.subf %90, %95 : vector<64x32xf32>
    %97 = arith.mulf %96, %96 : vector<64x32xf32>
    %cst_26 = arith.constant dense<0.000000e+00> : vector<64xf32>
    %98 = vector.multi_reduction <add>, %97, %cst_26 [1] : vector<64x32xf32> to vector<64xf32>
    %99 = vector.shape_cast %98 : vector<64xf32> to vector<64x1xf32>
    %cst_27 = arith.constant 3.200000e+01 : f32
    %100 = vector.broadcast %cst_27 : f32 to vector<64x1xf32>
    %101 = arith.divf %99, %100 : vector<64x1xf32>
    %cst_28 = arith.constant 9.99999974E-6 : f32
    %102 = vector.broadcast %cst_28 : f32 to vector<64x1xf32>
    %103 = arith.addf %101, %102 : vector<64x1xf32>
    %104 = math.rsqrt %103 : vector<64x1xf32>
    %105 = vector.broadcast %104 : vector<64x1xf32> to vector<64x32xf32>
    %106 = arith.mulf %96, %105 : vector<64x32xf32>
    %107 = vector.broadcast %16 : vector<1x32xf32> to vector<64x32xf32>
    %108 = arith.mulf %106, %107 : vector<64x32xf32>
    %109 = vector.broadcast %17 : vector<1x32xf32> to vector<64x32xf32>
    %110 = arith.addf %108, %109 : vector<64x32xf32>
    %111 = arith.truncf %110 : vector<64x32xf32> to vector<64x32xbf16>
    %cst_29 = arith.constant dense<0.000000e+00> : vector<64x128xf32>
    %112 = tpu.matmul %111, %11, %cst_29 {dimension_numbers = #tpu.dot_dimension_numbers<[1], [0], [0], [1], [0, 0, 1, 1], [], []>} : vector<64x32xbf16>, vector<32x128xbf16>, vector<64x128xf32> -> vector<64x128xf32>
    %113 = vector.broadcast %18 : vector<1x128xf32> to vector<64x128xf32>
    %114 = arith.addf %112, %113 : vector<64x128xf32>
    %cst_30 = arith.constant 5.000000e-01 : f32
    %115 = vector.broadcast %cst_30 : f32 to vector<64x128xf32>
    %116 = arith.mulf %115, %114 : vector<64x128xf32>
    %cst_31 = arith.constant 0.707106769 : f32
    %117 = vector.broadcast %cst_31 : f32 to vector<64x128xf32>
    %118 = arith.mulf %114, %117 : vector<64x128xf32>
    %119 = math.erf %118 : vector<64x128xf32>
    %cst_32 = arith.constant 1.000000e+00 : f32
    %120 = vector.broadcast %cst_32 : f32 to vector<64x128xf32>
    %121 = arith.addf %120, %119 : vector<64x128xf32>
    %122 = arith.mulf %116, %121 : vector<64x128xf32>
    %123 = arith.truncf %122 : vector<64x128xf32> to vector<64x128xbf16>
    %cst_33 = arith.constant dense<0.000000e+00> : vector<64x32xf32>
    %124 = tpu.matmul %123, %6, %cst_33 {dimension_numbers = #tpu.dot_dimension_numbers<[1], [0], [0], [1], [0, 0, 1, 1], [], []>} : vector<64x128xbf16>, vector<128x32xbf16>, vector<64x32xf32> -> vector<64x32xf32>
    %125 = vector.broadcast %19 : vector<1x32xf32> to vector<64x32xf32>
    %126 = arith.addf %124, %125 : vector<64x32xf32>
    %127 = arith.addf %90, %126 : vector<64x32xf32>
    %128 = vector.shape_cast %127 : vector<64x32xf32> to vector<2x32x32xf32>
    %c0_34 = arith.constant 0 : index
    %c0_35 = arith.constant 0 : index
    %c0_36 = arith.constant 0 : index
    %129 = vector.load %arg13[%c0_34, %c0_35, %c0_36] : memref<2x32x32xf32, #tpu.memory_space<vmem>>, vector<2x32x32xf32>
    tpu.vector_store %arg13[%c0_34, %c0_35, %c0_36], %128 {strides = array<i32>} : memref<2x32x32xf32, #tpu.memory_space<vmem>>, vector<2x32x32xf32>,
    %c1_i32 = arith.constant 1 : i32
    %130 = arith.cmpi eq, %arg1, %c1_i32 : i32
    %131 = arith.extui %130 : i1 to i32
    %c0_i32_37 = arith.constant 0 : i32
    %132 = arith.cmpi ne, %131, %c0_i32_37 : i32
    scf.if %132 {
      %133 = vector.shape_cast %127 : vector<64x32xf32> to vector<2x32x32xf32>
      %134 = vector.extract_strided_slice %133 {offsets = [0, 0, 0], sizes = [2, 1, 32], strides = [1, 1, 1]} : vector<2x32x32xf32> to vector<2x1x32xf32>
      %135 = vector.shape_cast %134 : vector<2x1x32xf32> to vector<2x32xf32>
      %c0_38 = arith.constant 0 : index
      %c0_39 = arith.constant 0 : index
      %136 = vector.load %arg8[%c0_38, %c0_39] : memref<1x32xf32, #tpu.memory_space<vmem>>, vector<1x32xf32>
      %c0_40 = arith.constant 0 : index
      %c0_41 = arith.constant 0 : index
      %137 = vector.load %arg9[%c0_40, %c0_41] : memref<1x32xf32, #tpu.memory_space<vmem>>, vector<1x32xf32>
      %cst_42 = arith.constant dense<0.000000e+00> : vector<2xf32>
      %138 = vector.multi_reduction <add>, %135, %cst_42 [1] : vector<2x32xf32> to vector<2xf32>
      %139 = vector.shape_cast %138 : vector<2xf32> to vector<2x1xf32>
      %cst_43 = arith.constant 3.200000e+01 : f32
      %140 = vector.broadcast %cst_43 : f32 to vector<2x1xf32>
      %141 = arith.divf %139, %140 : vector<2x1xf32>
      %142 = vector.broadcast %141 : vector<2x1xf32> to vector<2x32xf32>
      %143 = arith.subf %135, %142 : vector<2x32xf32>
      %144 = arith.mulf %143, %143 : vector<2x32xf32>
      %cst_44 = arith.constant dense<0.000000e+00> : vector<2xf32>
      %145 = vector.multi_reduction <add>, %144, %cst_44 [1] : vector<2x32xf32> to vector<2xf32>
      %146 = vector.shape_cast %145 : vector<2xf32> to vector<2x1xf32>
      %cst_45 = arith.constant 3.200000e+01 : f32
      %147 = vector.broadcast %cst_45 : f32 to vector<2x1xf32>
      %148 = arith.divf %146, %147 : vector<2x1xf32>
      %cst_46 = arith.constant 9.99999974E-6 : f32
      %149 = vector.broadcast %cst_46 : f32 to vector<2x1xf32>
      %150 = arith.addf %148, %149 : vector<2x1xf32>
      %151 = math.rsqrt %150 : vector<2x1xf32>
      %152 = vector.broadcast %151 : vector<2x1xf32> to vector<2x32xf32>
      %153 = arith.mulf %143, %152 : vector<2x32xf32>
      %154 = vector.broadcast %136 : vector<1x32xf32> to vector<2x32xf32>
      %155 = arith.mulf %153, %154 : vector<2x32xf32>
      %156 = vector.broadcast %137 : vector<1x32xf32> to vector<2x32xf32>
      %157 = arith.addf %155, %156 : vector<2x32xf32>
      %c0_47 = arith.constant 0 : index
      %c0_48 = arith.constant 0 : index
      %158 = vector.load %arg10[%c0_47, %c0_48] : memref<32x10xf32, #tpu.memory_space<vmem>>, vector<32x10xf32>
      %c0_49 = arith.constant 0 : index
      %c0_50 = arith.constant 0 : index
      %159 = vector.load %arg11[%c0_49, %c0_50] : memref<1x10xf32, #tpu.memory_space<vmem>>, vector<1x10xf32>
      %160 = arith.truncf %157 : vector<2x32xf32> to vector<2x32xbf16>
      %161 = arith.truncf %158 : vector<32x10xf32> to vector<32x10xbf16>
      %cst_51 = arith.constant dense<0.000000e+00> : vector<2x10xf32>
      %162 = tpu.matmul %160, %161, %cst_51 {dimension_numbers = #tpu.dot_dimension_numbers<[1], [0], [0], [1], [0, 0, 1, 1], [], []>} : vector<2x32xbf16>, vector<32x10xbf16>, vector<2x10xf32> -> vector<2x10xf32>
      %163 = vector.broadcast %159 : vector<1x10xf32> to vector<2x10xf32>
      %164 = arith.addf %162, %163 : vector<2x10xf32>
      %c0_52 = arith.constant 0 : index
      %c0_53 = arith.constant 0 : index
      %165 = vector.load %arg12[%c0_52, %c0_53] : memref<2x10xf32, #tpu.memory_space<vmem>>, vector<2x10xf32>
      tpu.vector_store %arg12[%c0_52, %c0_53], %164 {strides = array<i32>} : memref<2x10xf32, #tpu.memory_space<vmem>>, vector<2x10xf32>,
    } else {
    }
    return
  }
  func.func @transform_0(%arg0: i32, %arg1: i32) -> (i32, i32, i32) {
    %c0_i32 = arith.constant 0 : i32
    %c0_i32_0 = arith.constant 0 : i32
    %c0_i32_1 = arith.constant 0 : i32
    return %arg0, %c0_i32, %c0_i32_0 : i32, i32, i32
  }
  func.func @transform_1(%arg0: i32, %arg1: i32) -> (i32, i32) {
    %c0_i32 = arith.constant 0 : i32
    %c0_i32_0 = arith.constant 0 : i32
    %c0_i32_1 = arith.constant 0 : i32
    return %c0_i32, %c0_i32_0 : i32, i32
  }
  func.func @transform_2(%arg0: i32, %arg1: i32) -> (i32, i32) {
    %c0_i32 = arith.constant 0 : i32
    %c0_i32_0 = arith.constant 0 : i32
    %c0_i32_1 = arith.constant 0 : i32
    return %c0_i32, %c0_i32_0 : i32, i32
  }
  func.func @transform_3(%arg0: i32, %arg1: i32) -> (i32, i32, i32) {
    %c0_i32 = arith.constant 0 : i32
    %c0_i32_0 = arith.constant 0 : i32
    %c0_i32_1 = arith.constant 0 : i32
    return %arg1, %c0_i32, %c0_i32_0 : i32, i32, i32
  }
  func.func @transform_4(%arg0: i32, %arg1: i32) -> (i32, i32, i32) {
    %c0_i32 = arith.constant 0 : i32
    %c0_i32_0 = arith.constant 0 : i32
    %c0_i32_1 = arith.constant 0 : i32
    return %arg1, %c0_i32, %c0_i32_0 : i32, i32, i32
  }
  func.func @transform_5(%arg0: i32, %arg1: i32) -> (i32, i32, i32) {
    %c0_i32 = arith.constant 0 : i32
    %c0_i32_0 = arith.constant 0 : i32
    %c0_i32_1 = arith.constant 0 : i32
    return %arg1, %c0_i32, %c0_i32_0 : i32, i32, i32
  }
  func.func @transform_6(%arg0: i32, %arg1: i32) -> (i32, i32) {
    %c0_i32 = arith.constant 0 : i32
    %c0_i32_0 = arith.constant 0 : i32
    %c0_i32_1 = arith.constant 0 : i32
    return %c0_i32, %c0_i32_0 : i32, i32
  }
  func.func @transform_7(%arg0: i32, %arg1: i32) -> (i32, i32) {
    %c0_i32 = arith.constant 0 : i32
    %c0_i32_0 = arith.constant 0 : i32
    %c0_i32_1 = arith.constant 0 : i32
    return %c0_i32, %c0_i32_0 : i32, i32
  }
  func.func @transform_8(%arg0: i32, %arg1: i32) -> (i32, i32) {
    %c0_i32 = arith.constant 0 : i32
    %c0_i32_0 = arith.constant 0 : i32
    %c0_i32_1 = arith.constant 0 : i32
    return %c0_i32, %c0_i32_0 : i32, i32
  }
  func.func @transform_9(%arg0: i32, %arg1: i32) -> (i32, i32) {
    %c0_i32 = arith.constant 0 : i32
    %c0_i32_0 = arith.constant 0 : i32
    %c0_i32_1 = arith.constant 0 : i32
    return %c0_i32, %c0_i32_0 : i32, i32
  }
  func.func @transform_10(%arg0: i32, %arg1: i32) -> (i32, i32) {
    %c0_i32 = arith.constant 0 : i32
    %c0_i32_0 = arith.constant 0 : i32
    return %arg0, %c0_i32 : i32, i32
  }
}

</mosaic_0001>

<llo_original>
// kernel: tpu_custom_call.1
$region0: #{tpu_custom_call.1}
  #allocation0 [shape = 'u32[]', space=smem, size = 0x4, offset = 0x4, fixed_abs, tag = 'smem constant byte address 0x4 - core index']
  #allocation1 [shape = 'u32[144,128]{1,0:T(1,128)}', space=vmem, size = 0x12000, scoped, tag = 'internal scratch']
  #allocation2 [shape = 'f32[2,32,32]{2,1,0:T(8,128)}', space=vmem, size = 0x8000, scoped, tag = 'scratch operand']
  %s0 = inlined_call_operand.vmem [shape: f32[2,32,64], index: 0, kind: input, shape index: {}]
  %s1 = inlined_call_operand.vmem [shape: f32[64,32], index: 1, kind: input, shape index: {}]
  %s2 = inlined_call_operand.vmem [shape: f32[32,32], index: 2, kind: input, shape index: {}]
  %s3 = inlined_call_operand.vmem [shape: bf16[2,32,256], index: 3, kind: input, shape index: {}]
  %s4 = inlined_call_operand.vmem [shape: bf16[2,128,32], index: 4, kind: input, shape index: {}]
  %s5 = inlined_call_operand.vmem [shape: f32[2,8,128], index: 5, kind: input, shape index: {}]
  %s6 = inlined_call_operand.vmem [shape: f32[1,32], index: 6, kind: input, shape index: {}]
  %s7 = inlined_call_operand.vmem [shape: f32[1,32], index: 7, kind: input, shape index: {}]
  %s8 = inlined_call_operand.vmem [shape: f32[32,10], index: 8, kind: input, shape index: {}]
  %s9 = inlined_call_operand.vmem [shape: f32[1,10], index: 9, kind: input, shape index: {}]
  %s10 = inlined_call_operand.hbm [shape: f32[2,10], index: 10, kind: output, shape index: {}]
  %s11 = sld [smem:[#allocation0]]
  $region81: #{tpu_custom_call.1} parent=0
    _
  %s13 = ssub.s32 1, %s11
  %s14 = scalar_select 0, %s13, %s11
  $region1: #{tpu_custom_call.1} parent=0
    #allocation3 [shape = 'u8[1024]{0}', space=vmem, size = 0x400, scoped, tag = 'output window, operand 0, single buffered']
    #allocation4 [shape = 's32[2]{0}', space=sflag, size = 0x8, scoped, tag = 'scoped memory for tpu_custom_call.1']
    %15 = vsyncpa [#allocation4], 0
    loop: start=0, step=1, limit=4
    $region2: #{tpu_custom_call.1} parent=1 // loop_pre_header
      _
    $region3: #{tpu_custom_call.1} parent=1 // loop_header
      %s17 = sphi 0, %s21
      %p18 = scmp.ge.s32.totalorder %s17, 4
      %s24 = sphi 0, %s36
      %s25 = sphi 0, %s32
      %s26 = sphi 0, %s24
      %s27 = sphi 0, %s25
      %s28 = sphi 0, %s26
      %s29 = sphi 0, %s27
      %s39 = sphi 0, %s41
      %s42 = sphi 0, %s39
      %s43 = sphi 0, %s42
      %s59 = sphi 0, %s43
      %s63 = sphi 0, %s63
      %s65 = sphi 0, %s63
      %s66 = sphi 0, %s65
      %s80 = sphi 0, %s66
      %s84 = sphi 0, %s84
      %s86 = sphi 0, %s84
      %s87 = sphi 0, %s86
      %s101 = sphi 0, %s87
      %s107 = sphi 0, %s109
      %s110 = sphi 0, %s107
      %s111 = sphi 0, %s110
      %s127 = sphi 0, %s111
      %s133 = sphi 0, %s135
      %s136 = sphi 0, %s133
      %s137 = sphi 0, %s136
      %s153 = sphi 0, %s137
      %s159 = sphi 0, %s161
      %s162 = sphi 0, %s159
      %s163 = sphi 0, %s162
      %s179 = sphi 0, %s163
      %s183 = sphi 0, %s183
      %s185 = sphi 0, %s183
      %s186 = sphi 0, %s185
      %s200 = sphi 0, %s186
      %s204 = sphi 0, %s204
      %s206 = sphi 0, %s204
      %s207 = sphi 0, %s206
      %s221 = sphi 0, %s207
      %s225 = sphi 0, %s225
      %s227 = sphi 0, %s225
      %s228 = sphi 0, %s227
      %s242 = sphi 0, %s228
      %s246 = sphi 0, %s246
      %s248 = sphi 0, %s246
      %s249 = sphi 0, %s248
      %s263 = sphi 0, %s249
      %s269 = sphi 0, %s271
      %s272 = sphi 0, %s269
      %s273 = sphi 0, %s272
      %s289 = sphi 0, %s273
    $region4: #{tpu_custom_call.1} parent=1 // loop_header_branch
      %20 = sbr.rel (%p18) target = $region8
    $region5: #{tpu_custom_call.1} parent=1 // loop_body
      %s22 = ssub.s32 %s17, 1
      %s23 = ssub.s32 %s17, 2
      %s30 = sadd.s32 1, %s25
      %p31 = scmp.ge.s32.totalorder %s30, 2
      %s32 = scalar_select %p31, 0, %s30
      %s33 = sadd.s32 1, %s24
      %s34 = scalar_select %p31, %s33, %s24
      %p35 = scmp.ge.s32.totalorder %s34, 1
      %s36 = scalar_select %p35, 0, %s34
      %s37 = ssub.s32 %s24, %s36
      %p38 = scmp.eq.s32.totalorder %s37, 0
      %s40 = sadd.s32 %s39, 1
      %s41 = scalar_select %p38, %s39, %s40
      %p44 = pneg %p38
      %p45 = scmp.eq.s32.totalorder %s17, 1
      %p46 = por %p44, %p45
      %p47 = scmp.ne.s32.totalorder %s39, %s42
      %p48 = scmp.eq.s32.totalorder %s17, 0
      %p49 = por %p47, %p48
      %p50 = scmp.ne.s32.totalorder %s39, %s42
      %p51 = scmp.eq.s32.totalorder %s22, 1
      %p52 = por %p50, %p51
      %p53 = scmp.ne.s32.totalorder %s42, %s43
      %p54 = scmp.eq.s32.totalorder %s22, 0
      %p55 = por %p53, %p54
      %p56 = scmp.ne.s32.totalorder %s42, %s43
      %p57 = scmp.eq.s32.totalorder %s23, 1
      %p58 = por %p56, %p57
      %p60 = scmp.ne.s32.totalorder %s43, %s59
      %p61 = scmp.eq.s32.totalorder %s23, 0
      %p62 = por %p60, %p61
      %s64 = sadd.s32 %s63, 1
      %p67 = scmp.eq.s32.totalorder %s17, 1
      %p68 = scmp.ne.s32.totalorder %s63, %s65
      %p69 = scmp.eq.s32.totalorder %s17, 0
      %p70 = por %p68, %p69
      %p71 = scmp.ne.s32.totalorder %s63, %s65
      %p72 = scmp.eq.s32.totalorder %s22, 1
      %p73 = por %p71, %p72
      %p74 = scmp.ne.s32.totalorder %s65, %s66
      %p75 = scmp.eq.s32.totalorder %s22, 0
      %p76 = por %p74, %p75
      %p77 = scmp.ne.s32.totalorder %s65, %s66
      %p78 = scmp.eq.s32.totalorder %s23, 1
      %p79 = por %p77, %p78
      %p81 = scmp.ne.s32.totalorder %s66, %s80
      %p82 = scmp.eq.s32.totalorder %s23, 0
      %p83 = por %p81, %p82
      %s85 = sadd.s32 %s84, 1
      %p88 = scmp.eq.s32.totalorder %s17, 1
      %p89 = scmp.ne.s32.totalorder %s84, %s86
      %p90 = scmp.eq.s32.totalorder %s17, 0
      %p91 = por %p89, %p90
      %p92 = scmp.ne.s32.totalorder %s84, %s86
      %p93 = scmp.eq.s32.totalorder %s22, 1
      %p94 = por %p92, %p93
      %p95 = scmp.ne.s32.totalorder %s86, %s87
      %p96 = scmp.eq.s32.totalorder %s22, 0
      %p97 = por %p95, %p96
      %p98 = scmp.ne.s32.totalorder %s86, %s87
      %p99 = scmp.eq.s32.totalorder %s23, 1
      %p100 = por %p98, %p99
      %p102 = scmp.ne.s32.totalorder %s87, %s101
      %p103 = scmp.eq.s32.totalorder %s23, 0
      %p104 = por %p102, %p103
      %s105 = ssub.s32 %s25, %s32
      %p106 = scmp.eq.s32.totalorder %s105, 0
      %s108 = sadd.s32 %s107, 1
      %s109 = scalar_select %p106, %s107, %s108
      %p112 = pneg %p106
      %p113 = scmp.eq.s32.totalorder %s17, 1
      %p114 = por %p112, %p113
      %p115 = scmp.ne.s32.totalorder %s107, %s110
      %p116 = scmp.eq.s32.totalorder %s17, 0
      %p117 = por %p115, %p116
      %p118 = scmp.ne.s32.totalorder %s107, %s110
      %p119 = scmp.eq.s32.totalorder %s22, 1
      %p120 = por %p118, %p119
      %p121 = scmp.ne.s32.totalorder %s110, %s111
      %p122 = scmp.eq.s32.totalorder %s22, 0
      %p123 = por %p121, %p122
      %p124 = scmp.ne.s32.totalorder %s110, %s111
      %p125 = scmp.eq.s32.totalorder %s23, 1
      %p126 = por %p124, %p125
      %p128 = scmp.ne.s32.totalorder %s111, %s127
      %p129 = scmp.eq.s32.totalorder %s23, 0
      %p130 = por %p128, %p129
      %s131 = ssub.s32 %s25, %s32
      %p132 = scmp.eq.s32.totalorder %s131, 0
      %s134 = sadd.s32 %s133, 1
      %s135 = scalar_select %p132, %s133, %s134
      %p138 = pneg %p132
      %p139 = scmp.eq.s32.totalorder %s17, 1
      %p140 = por %p138, %p139
      %p141 = scmp.ne.s32.totalorder %s133, %s136
      %p142 = scmp.eq.s32.totalorder %s17, 0
      %p143 = por %p141, %p142
      %p144 = scmp.ne.s32.totalorder %s133, %s136
      %p145 = scmp.eq.s32.totalorder %s22, 1
      %p146 = por %p144, %p145
      %p147 = scmp.ne.s32.totalorder %s136, %s137
      %p148 = scmp.eq.s32.totalorder %s22, 0
      %p149 = por %p147, %p148
      %p150 = scmp.ne.s32.totalorder %s136, %s137
      %p151 = scmp.eq.s32.totalorder %s23, 1
      %p152 = por %p150, %p151
      %p154 = scmp.ne.s32.totalorder %s137, %s153
      %p155 = scmp.eq.s32.totalorder %s23, 0
      %p156 = por %p154, %p155
      %s157 = ssub.s32 %s25, %s32
      %p158 = scmp.eq.s32.totalorder %s157, 0
      %s160 = sadd.s32 %s159, 1
      %s161 = scalar_select %p158, %s159, %s160
      %p164 = pneg %p158
      %p165 = scmp.eq.s32.totalorder %s17, 1
      %p166 = por %p164, %p165
      %p167 = scmp.ne.s32.totalorder %s159, %s162
      %p168 = scmp.eq.s32.totalorder %s17, 0
      %p169 = por %p167, %p168
      %p170 = scmp.ne.s32.totalorder %s159, %s162
      %p171 = scmp.eq.s32.totalorder %s22, 1
      %p172 = por %p170, %p171
      %p173 = scmp.ne.s32.totalorder %s162, %s163
      %p174 = scmp.eq.s32.totalorder %s22, 0
      %p175 = por %p173, %p174
      %p176 = scmp.ne.s32.totalorder %s162, %s163
      %p177 = scmp.eq.s32.totalorder %s23, 1
      %p178 = por %p176, %p177
      %p180 = scmp.ne.s32.totalorder %s163, %s179
      %p181 = scmp.eq.s32.totalorder %s23, 0
      %p182 = por %p180, %p181
      %s184 = sadd.s32 %s183, 1
      %p187 = scmp.eq.s32.totalorder %s17, 1
      %p188 = scmp.ne.s32.totalorder %s183, %s185
      %p189 = scmp.eq.s32.totalorder %s17, 0
      %p190 = por %p188, %p189
      %p191 = scmp.ne.s32.totalorder %s183, %s185
      %p192 = scmp.eq.s32.totalorder %s22, 1
      %p193 = por %p191, %p192
      %p194 = scmp.ne.s32.totalorder %s185, %s186
      %p195 = scmp.eq.s32.totalorder %s22, 0
      %p196 = por %p194, %p195
      %p197 = scmp.ne.s32.totalorder %s185, %s186
      %p198 = scmp.eq.s32.totalorder %s23, 1
      %p199 = por %p197, %p198
      %p201 = scmp.ne.s32.totalorder %s186, %s200
      %p202 = scmp.eq.s32.totalorder %s23, 0
      %p203 = por %p201, %p202
      %s205 = sadd.s32 %s204, 1
      %p208 = scmp.eq.s32.totalorder %s17, 1
      %p209 = scmp.ne.s32.totalorder %s204, %s206
      %p210 = scmp.eq.s32.totalorder %s17, 0
      %p211 = por %p209, %p210
      %p212 = scmp.ne.s32.totalorder %s204, %s206
      %p213 = scmp.eq.s32.totalorder %s22, 1
      %p214 = por %p212, %p213
      %p215 = scmp.ne.s32.totalorder %s206, %s207
      %p216 = scmp.eq.s32.totalorder %s22, 0
      %p217 = por %p215, %p216
      %p218 = scmp.ne.s32.totalorder %s206, %s207
      %p219 = scmp.eq.s32.totalorder %s23, 1
      %p220 = por %p218, %p219
      %p222 = scmp.ne.s32.totalorder %s207, %s221
      %p223 = scmp.eq.s32.totalorder %s23, 0
      %p224 = por %p222, %p223
      %s226 = sadd.s32 %s225, 1
      %p229 = scmp.eq.s32.totalorder %s17, 1
      %p230 = scmp.ne.s32.totalorder %s225, %s227
      %p231 = scmp.eq.s32.totalorder %s17, 0
      %p232 = por %p230, %p231
      %p233 = scmp.ne.s32.totalorder %s225, %s227
      %p234 = scmp.eq.s32.totalorder %s22, 1
      %p235 = por %p233, %p234
      %p236 = scmp.ne.s32.totalorder %s227, %s228
      %p237 = scmp.eq.s32.totalorder %s22, 0
      %p238 = por %p236, %p237
      %p239 = scmp.ne.s32.totalorder %s227, %s228
      %p240 = scmp.eq.s32.totalorder %s23, 1
      %p241 = por %p239, %p240
      %p243 = scmp.ne.s32.totalorder %s228, %s242
      %p244 = scmp.eq.s32.totalorder %s23, 0
      %p245 = por %p243, %p244
      %s247 = sadd.s32 %s246, 1
      %p250 = scmp.eq.s32.totalorder %s17, 1
      %p251 = scmp.ne.s32.totalorder %s246, %s248
      %p252 = scmp.eq.s32.totalorder %s17, 0
      %p253 = por %p251, %p252
      %p254 = scmp.ne.s32.totalorder %s246, %s248
      %p255 = scmp.eq.s32.totalorder %s22, 1
      %p256 = por %p254, %p255
      %p257 = scmp.ne.s32.totalorder %s248, %s249
      %p258 = scmp.eq.s32.totalorder %s22, 0
      %p259 = por %p257, %p258
      %p260 = scmp.ne.s32.totalorder %s248, %s249
      %p261 = scmp.eq.s32.totalorder %s23, 1
      %p262 = por %p260, %p261
      %p264 = scmp.ne.s32.totalorder %s249, %s263
      %p265 = scmp.eq.s32.totalorder %s23, 0
      %p266 = por %p264, %p265
      %s267 = ssub.s32 %s24, %s36
      %p268 = scmp.eq.s32.totalorder %s267, 0
      %s270 = sadd.s32 %s269, 1
      %s271 = scalar_select %p268, %s269, %s270
      %p274 = pneg %p268
      %p275 = scmp.eq.s32.totalorder %s17, 1
      %p276 = por %p274, %p275
      %p277 = scmp.ne.s32.totalorder %s269, %s272
      %p278 = scmp.eq.s32.totalorder %s17, 0
      %p279 = por %p277, %p278
      %p280 = scmp.ne.s32.totalorder %s269, %s272
      %p281 = scmp.eq.s32.totalorder %s22, 1
      %p282 = por %p280, %p281
      %p283 = scmp.ne.s32.totalorder %s272, %s273
      %p284 = scmp.eq.s32.totalorder %s22, 0
      %p285 = por %p283, %p284
      %p286 = scmp.ne.s32.totalorder %s272, %s273
      %p287 = scmp.eq.s32.totalorder %s23, 1
      %p288 = por %p286, %p287
      %p290 = scmp.ne.s32.totalorder %s273, %s289
      %p291 = scmp.eq.s32.totalorder %s23, 0
      %p292 = por %p290, %p291
      %p293 = scmp.le.s32.totalorder 1, %s17
      %p294 = scmp.lt.s32.totalorder %s17, 3
      %p295 = pnand %p293, %p294
      %p296 = pneg %p295
      // Predicated region
      $region9: #{tpu_custom_call.1} parent=5 // pred_check
        _
      $region10: #{tpu_custom_call.1} parent=5 // pred_check_branch
        %298 = sbr.rel (%p295) target = $region12
      $region11: #{tpu_custom_call.1} parent=5 // pred_region
        %s299 = ssub.s32 %s17, 1
        // Predicated region
        $region13: #{tpu_custom_call.1} parent=11 // pred_check
          %p300 = pneg %p55
        $region14: #{tpu_custom_call.1} parent=11 // pred_check_branch
          %302 = sbr.rel (%p300) target = $region16
        $region15: #{tpu_custom_call.1} parent=11 // pred_region
          %s303 = smul.u32 2, %s26
          %p304 = scmp.lt.s32.totalorder %s303, 1
          %s305 = scalar_select %p304, %s303, 1
          %s306 = smul.addr %s305, 4
          %s307 = smul.addr %s306, 8
          %s308 = scalar_lea.vmem %s0, %s307
          %s309 = smul.u32 2, %s26
        $region16: #{tpu_custom_call.1} parent=11 // pred_fallthru
          _
        // Predicated region
        $region17: #{tpu_custom_call.1} parent=11 // pred_check
          %p310 = pneg %p76
        $region18: #{tpu_custom_call.1} parent=11 // pred_check_branch
          %312 = sbr.rel (%p310) target = $region20
        $region19: #{tpu_custom_call.1} parent=11 // pred_region
          _
        $region20: #{tpu_custom_call.1} parent=11 // pred_fallthru
          _
        // Predicated region
        $region21: #{tpu_custom_call.1} parent=11 // pred_check
          %p313 = pneg %p97
        $region22: #{tpu_custom_call.1} parent=11 // pred_check_branch
          %315 = sbr.rel (%p313) target = $region24
        $region23: #{tpu_custom_call.1} parent=11 // pred_region
          _
        $region24: #{tpu_custom_call.1} parent=11 // pred_fallthru
          _
        // Predicated region
        $region25: #{tpu_custom_call.1} parent=11 // pred_check
          %p316 = pneg %p196
        $region26: #{tpu_custom_call.1} parent=11 // pred_check_branch
          %318 = sbr.rel (%p316) target = $region28
        $region27: #{tpu_custom_call.1} parent=11 // pred_region
          _
        $region28: #{tpu_custom_call.1} parent=11 // pred_fallthru
          _
        // Predicated region
        $region29: #{tpu_custom_call.1} parent=11 // pred_check
          %p319 = pneg %p217
        $region30: #{tpu_custom_call.1} parent=11 // pred_check_branch
          %321 = sbr.rel (%p319) target = $region32
        $region31: #{tpu_custom_call.1} parent=11 // pred_region
          _
        $region32: #{tpu_custom_call.1} parent=11 // pred_fallthru
          _
        // Predicated region
        $region33: #{tpu_custom_call.1} parent=11 // pred_check
          %p322 = pneg %p238
        $region34: #{tpu_custom_call.1} parent=11 // pred_check_branch
          %324 = sbr.rel (%p322) target = $region36
        $region35: #{tpu_custom_call.1} parent=11 // pred_region
          _
        $region36: #{tpu_custom_call.1} parent=11 // pred_fallthru
          _
        // Predicated region
        $region37: #{tpu_custom_call.1} parent=11 // pred_check
          %p325 = pneg %p259
        $region38: #{tpu_custom_call.1} parent=11 // pred_check_branch
          %327 = sbr.rel (%p325) target = $region40
        $region39: #{tpu_custom_call.1} parent=11 // pred_region
          _
        $region40: #{tpu_custom_call.1} parent=11 // pred_fallthru
          _
      $region12: #{tpu_custom_call.1} parent=5 // pred_fallthru
        _
      %p328 = scmp.lt.s32.totalorder %s17, 2
      // Predicated region
      $region41: #{tpu_custom_call.1} parent=5 // pred_check
        %p329 = pneg %p328
      $region42: #{tpu_custom_call.1} parent=5 // pred_check_branch
        %331 = sbr.rel (%p329) target = $region44
      $region43: #{tpu_custom_call.1} parent=5 // pred_region
        // Predicated region
        $region45: #{tpu_custom_call.1} parent=43 // pred_check
          %p332 = pneg %p117
        $region46: #{tpu_custom_call.1} parent=43 // pred_check_branch
          %334 = sbr.rel (%p332) target = $region48
        $region47: #{tpu_custom_call.1} parent=43 // pred_region
          %p335 = scmp.lt.s32.totalorder %s25, 1
          %s336 = scalar_select %p335, %s25, 1
          %s337 = smul.addr %s336, 8
          %s338 = smul.addr %s337, 4
          %s339 = scalar_lea.vmem %s3, %s338
        $region48: #{tpu_custom_call.1} parent=43 // pred_fallthru
          _
        // Predicated region
        $region49: #{tpu_custom_call.1} parent=43 // pred_check
          %p340 = pneg %p143
        $region50: #{tpu_custom_call.1} parent=43 // pred_check_branch
          %342 = sbr.rel (%p340) target = $region52
        $region51: #{tpu_custom_call.1} parent=43 // pred_region
          %p343 = scmp.lt.s32.totalorder %s25, 1
          %s344 = scalar_select %p343, %s25, 1
          %s345 = smul.addr %s344, 16
          %s346 = smul.addr %s345, 4
          %s347 = scalar_lea.vmem %s4, %s346
        $region52: #{tpu_custom_call.1} parent=43 // pred_fallthru
          _
        // Predicated region
        $region53: #{tpu_custom_call.1} parent=43 // pred_check
          %p348 = pneg %p169
        $region54: #{tpu_custom_call.1} parent=43 // pred_check_branch
          %350 = sbr.rel (%p348) target = $region56
        $region55: #{tpu_custom_call.1} parent=43 // pred_region
          %p351 = scmp.lt.s32.totalorder %s25, 1
          %s352 = scalar_select %p351, %s25, 1
          %s353 = smul.addr %s352, 8
          %s354 = scalar_lea.vmem %s5, %s353
        $region56: #{tpu_custom_call.1} parent=43 // pred_fallthru
          _
      $region44: #{tpu_custom_call.1} parent=5 // pred_fallthru
        _
      %p355 = scmp.le.s32.totalorder 1, %s17
      %p356 = scmp.lt.s32.totalorder %s17, 3
      %p357 = pnand %p355, %p356
      %p358 = pneg %p357
      // Predicated region
      $region57: #{tpu_custom_call.1} parent=5 // pred_check
        _
      $region58: #{tpu_custom_call.1} parent=5 // pred_check_branch
        %360 = sbr.rel (%p357) target = $region60
      $region59: #{tpu_custom_call.1} parent=5 // pred_region
        %s361 = ssub.s32 %s17, 1
        %s362 = smul.u32 2, %s26
        %p363 = scmp.lt.s32.totalorder %s362, 1
        %s364 = scalar_select %p363, %s362, 1
        %s365 = smul.addr %s364, 4
        %s366 = smul.addr %s365, 8
        %s367 = scalar_lea.vmem %s0, %s366
        %p368 = pneg %p55
        %p369 = pneg %p52
        %p370 = pneg %p76
        %p371 = pneg %p73
        %p372 = pneg %p97
        %p373 = pneg %p94
        %p374 = scmp.lt.s32.totalorder %s27, 1
        %s375 = scalar_select %p374, %s27, 1
        %s376 = smul.addr %s375, 8
        %s377 = smul.addr %s376, 4
        %s378 = scalar_lea.vmem %s3, %s377
        %p379 = pneg %p123
        %p380 = pneg %p120
        %p381 = scmp.lt.s32.totalorder %s27, 1
        %s382 = scalar_select %p381, %s27, 1
        %s383 = smul.addr %s382, 16
        %s384 = smul.addr %s383, 4
        %s385 = scalar_lea.vmem %s4, %s384
        %p386 = pneg %p149
        %p387 = pneg %p146
        %p388 = scmp.lt.s32.totalorder %s27, 1
        %s389 = scalar_select %p388, %s27, 1
        %s390 = smul.addr %s389, 8
        %s391 = scalar_lea.vmem %s5, %s390
        %p392 = pneg %p175
        %p393 = pneg %p172
        %p394 = pneg %p196
        %p395 = pneg %p193
        %p396 = pneg %p217
        %p397 = pneg %p214
        %p398 = pneg %p238
        %p399 = pneg %p235
        %p400 = pneg %p259
        %p401 = pneg %p256
        %p402 = pneg %p285
        %p403 = pneg %p282
        %s404 = smul.u32 2, %s26
        %p405 = scmp.lt.s32.totalorder %s404, 1
        %s406 = scalar_select %p405, %s404, 1
        %s407 = smul.addr %s406, 4
        %s408 = smul.addr %s407, 8
        %s409 = scalar_lea.vmem %s0, %s408
        %s410 = smul.u32 2, %s26
        %p411 = scmp.lt.s32.totalorder %s27, 1
        %s412 = scalar_select %p411, %s27, 1
        %s413 = smul.addr %s412, 8
        %s414 = smul.addr %s413, 4
        %s415 = scalar_lea.vmem %s3, %s414
        %p416 = scmp.lt.s32.totalorder %s27, 1
        %s417 = scalar_select %p416, %s27, 1
        %s418 = smul.addr %s417, 16
        %s419 = smul.addr %s418, 4
        %s420 = scalar_lea.vmem %s4, %s419
        %p421 = scmp.lt.s32.totalorder %s27, 1
        %s422 = scalar_select %p421, %s27, 1
        %s423 = smul.addr %s422, 8
        %s424 = scalar_lea.vmem %s5, %s423
        %p426 = scmp.eq.s32.totalorder %s27, 0
        // Predicated region
        $region61: #{tpu_custom_call.1} parent=59 // pred_check
          %p427 = pneg %p426
        $region62: #{tpu_custom_call.1} parent=59 // pred_check_branch
          %429 = sbr.rel (%p427) target = $region64
        $region63: #{tpu_custom_call.1} parent=59 // pred_region
          %v430 = vld [vmem:[%s409] sm:$0xff]
          %v431 = vld [vmem:[%s409 + $0x8] sm:$0xff]
          %v432 = vld [vmem:[%s409 + $0x10] sm:$0xff]
          %v433 = vld [vmem:[%s409 + $0x18] sm:$0xff]
          %v434 = vld [vmem:[%s409 + $0x20] sm:$0xff]
          %v435 = vld [vmem:[%s409 + $0x28] sm:$0xff]
          %v436 = vld [vmem:[%s409 + $0x30] sm:$0xff]
          %v437 = vld [vmem:[%s409 + $0x38] sm:$0xff]
          %v438 = vld [vmem:[%s1] sm:$0xff]
          %v439 = vld [vmem:[%s1 + $0x8] sm:$0xff]
          %v440 = vld [vmem:[%s1 + $0x10] sm:$0xff]
          %v441 = vld [vmem:[%s1 + $0x18] sm:$0xff]
          %v442 = vld [vmem:[%s1 + $0x20] sm:$0xff]
          %v443 = vld [vmem:[%s1 + $0x28] sm:$0xff]
          %v444 = vld [vmem:[%s1 + $0x30] sm:$0xff]
          %v445 = vld [vmem:[%s1 + $0x38] sm:$0xff]
          %v446 = vpack.c.bf16 %v431, %v430
          %v447 = vpack.c.bf16 %v433, %v432
          %v448 = vpack.c.bf16 %v435, %v434
          %v449 = vpack.c.bf16 %v437, %v436
          %v450 = vpack.c.bf16 %v439, %v438
          %v451 = vpack.c.bf16 %v441, %v440
          %v452 = vpack.c.bf16 %v443, %v442
          %v453 = vpack.c.bf16 %v445, %v444
          %vm454 = vcmask 523264
          %v456 = vsel %vm454, %v446, 0
          %v459 = vsel %vm454, %v447, 0
          %v462 = vsel %vm454, %v448, 0
          %v465 = vsel %vm454, %v449, 0
          %467 = vmatprep.subr.bf16.mxu0 0
          %468 = vmatpush1.bf16.msra.mxu0 0
          %469 = vmatprep.subr.bf16.mxu0 0
          %470 = vmatpush1.bf16.msra.mxu0 0
          %471 = vmatprep.subr.bf16.mxu0 0
          %472 = vmatpush1.bf16.msra.mxu0 0
          %473 = vmatprep.subr.bf16.mxu0 0
          %474 = vmatpush1.bf16.msra.mxu0 0
          %475 = vmatprep.subr.bf16.mxu0 0
          %476 = vmatpush1.bf16.msra.mxu0 %v453
          %477 = vmatprep.subr.bf16.mxu0 0
          %478 = vmatpush1.bf16.msra.mxu0 %v452
          %479 = vmatprep.subr.bf16.mxu0 0
          %480 = vmatpush1.bf16.msra.mxu0 %v451
          %481 = vmatprep.subr.bf16.mxu0 0
          %482 = vmatpush1.bf16.msra.mxu0 %v450
          %483 = vmatprep.subr.bf16.mxu0 0
          %484 = vmatpush2.bf16.msra.mxu0 0
          %485 = vmatprep.subr.bf16.mxu0 0
          %486 = vmatpush2.bf16.msra.mxu0 0
          %487 = vmatprep.subr.bf16.mxu0 0
          %488 = vmatpush2.bf16.msra.mxu0 0
          %489 = vmatprep.subr.bf16.mxu0 0
          %490 = vmatpush2.bf16.msra.mxu0 0
          %491 = vmatprep.subr.bf16.mxu0 0
          %492 = vmatpush2.bf16.msra.mxu0 0
          %493 = vmatprep.subr.bf16.mxu0 0
          %494 = vmatpush2.bf16.msra.mxu0 0
          %495 = vmatprep.subr.bf16.mxu0 0
          %496 = vmatpush2.bf16.msra.mxu0 0
          %497 = vmatprep.subr.bf16.mxu0 0
          %498 = vmatpush2.bf16.msra.mxu0 0
          %499 = vmatprep.mubr.bf16.mxu0 0
          %500 = vmatmul.mubr.bf16.gmra.mxu0 %v456
          %v501 = vpop.f32.mrf.mxu0
          %v502 = vadd.f32 0.0, %v501
          %v503 = vpop.f32.mrf.mxu0
          %v504 = vpop.f32.mrf.mxu0
          %v505 = vadd.f32 0.0, %v504
          %v506 = vpop.f32.mrf.mxu0
          %507 = vmatprep.mubr.bf16.mxu0 0
          %508 = vmatmul.mubr.bf16.gmra.mxu0 %v459
          %v509 = vpop.f32.mrf.mxu0
          %v510 = vadd.f32 0.0, %v509
          %v511 = vpop.f32.mrf.mxu0
          %v512 = vpop.f32.mrf.mxu0
          %v513 = vadd.f32 0.0, %v512
          %v514 = vpop.f32.mrf.mxu0
          %515 = vmatprep.mubr.bf16.mxu0 0
          %516 = vmatmul.mubr.bf16.gmra.mxu0 %v462
          %v517 = vpop.f32.mrf.mxu0
          %v518 = vadd.f32 0.0, %v517
          %v519 = vpop.f32.mrf.mxu0
          %v520 = vpop.f32.mrf.mxu0
          %v521 = vadd.f32 0.0, %v520
          %v522 = vpop.f32.mrf.mxu0
          %523 = vmatprep.mubr.bf16.mxu0 0
          %524 = vmatmul.mubr.bf16.gmra.mxu0 %v465
          %v525 = vpop.f32.mrf.mxu0
          %v526 = vadd.f32 0.0, %v525
          %v527 = vpop.f32.mrf.mxu0
          %v528 = vpop.f32.mrf.mxu0
          %v529 = vadd.f32 0.0, %v528
          %v530 = vpop.f32.mrf.mxu0
          %531 = vdwg.mxu0
          %v532 = vld [vmem:[%s2] sm:$0xff]
          %v533 = vld [vmem:[%s2 + $0x8] sm:$0xff]
          %v534 = vld [vmem:[%s2 + $0x10] sm:$0xff]
          %v535 = vld [vmem:[%s2 + $0x18] sm:$0xff]
          %v536 = vadd.f32 %v502, %v532
          %v537 = vadd.f32 %v505, %v533
          %v538 = vadd.f32 %v510, %v534
          %v539 = vadd.f32 %v513, %v535
          %v540 = vadd.f32 %v518, %v532
          %v541 = vadd.f32 %v521, %v533
          %v542 = vadd.f32 %v526, %v534
          %v543 = vadd.f32 %v529, %v535
          %vm544 = vcmask 261120
          %545 = vst.msk [vmem:[#allocation2] sm:$0xff] %vm544, %v536
          %546 = vst.msk [vmem:[#allocation2 + $0x8] sm:$0xff] %vm544, %v537
          %547 = vst.msk [vmem:[#allocation2 + $0x10] sm:$0xff] %vm544, %v538
          %548 = vst.msk [vmem:[#allocation2 + $0x18] sm:$0xff] %vm544, %v539
          %549 = vst.msk [vmem:[#allocation2 + $0x20] sm:$0xff] %vm544, %v540
          %550 = vst.msk [vmem:[#allocation2 + $0x28] sm:$0xff] %vm544, %v541
          %551 = vst.msk [vmem:[#allocation2 + $0x30] sm:$0xff] %vm544, %v542
          %552 = vst.msk [vmem:[#allocation2 + $0x38] sm:$0xff] %vm544, %v543
        $region64: #{tpu_custom_call.1} parent=59 // pred_fallthru
          _
        %v553 = vld [vmem:[%s415] sm:$0xff]
        %v554 = vld [vmem:[%s415 + $0x8] sm:$0xff]
        %v555 = vld [vmem:[%s415 + $0x10] sm:$0xff]
        %v556 = vld [vmem:[%s415 + $0x18] sm:$0xff]
        %v557 = vld [vmem:[%s420] sm:$0xf]
        %v558 = vld [vmem:[%s420 + $0x4] sm:$0xf]
        %v559 = vld [vmem:[%s420 + $0x8] sm:$0xf]
        %v560 = vld [vmem:[%s420 + $0xc] sm:$0xf]
        %v561 = vld [vmem:[%s420 + $0x10] sm:$0xf]
        %v562 = vld [vmem:[%s420 + $0x14] sm:$0xf]
        %v563 = vld [vmem:[%s420 + $0x18] sm:$0xf]
        %v564 = vld [vmem:[%s420 + $0x1c] sm:$0xf]
        %v565 = vld [vmem:[%s420 + $0x20] sm:$0xf]
        %v566 = vld [vmem:[%s420 + $0x24] sm:$0xf]
        %v567 = vld [vmem:[%s420 + $0x28] sm:$0xf]
        %v568 = vld [vmem:[%s420 + $0x2c] sm:$0xf]
        %v569 = vld [vmem:[%s420 + $0x30] sm:$0xf]
        %v570 = vld [vmem:[%s420 + $0x34] sm:$0xf]
        %v571 = vld [vmem:[%s420 + $0x38] sm:$0xf]
        %v572 = vld [vmem:[%s420 + $0x3c] sm:$0xf]
        %v573 = vld [vmem:[%s424] sm:$0xff]
        %v574 = vld [vmem:[#allocation2] sm:$0xff]
        %v575 = vld [vmem:[#allocation2 + $0x8] sm:$0xff]
        %v576 = vld [vmem:[#allocation2 + $0x10] sm:$0xff]
        %v577 = vld [vmem:[#allocation2 + $0x18] sm:$0xff]
        %v578 = vld [vmem:[#allocation2 + $0x20] sm:$0xff]
        %v579 = vld [vmem:[#allocation2 + $0x28] sm:$0xff]
        %v580 = vld [vmem:[#allocation2 + $0x30] sm:$0xff]
        %v581 = vld [vmem:[#allocation2 + $0x38] sm:$0xff]
        %vm582 = vcmask 261120
        %v583 = vsel %vm582, %v574, 0.0
        %584 = vadd.xlane.f32.xlu0 %v583
        %v585 = vpop.xlane.xlu0 %584
        %v586 = vsel %vm582, %v575, 0.0
        %587 = vadd.xlane.f32.xlu0 %v586
        %v588 = vpop.xlane.xlu0 %587
        %v589 = vsel %vm582, %v576, 0.0
        %590 = vadd.xlane.f32.xlu0 %v589
        %v591 = vpop.xlane.xlu0 %590
        %v592 = vsel %vm582, %v577, 0.0
        %593 = vadd.xlane.f32.xlu0 %v592
        %v594 = vpop.xlane.xlu0 %593
        %v595 = vsel %vm582, %v578, 0.0
        %596 = vadd.xlane.f32.xlu0 %v595
        %v597 = vpop.xlane.xlu0 %596
        %v598 = vsel %vm582, %v579, 0.0
        %599 = vadd.xlane.f32.xlu0 %v598
        %v600 = vpop.xlane.xlu0 %599
        %v601 = vsel %vm582, %v580, 0.0
        %602 = vadd.xlane.f32.xlu0 %v601
        %v603 = vpop.xlane.xlu0 %602
        %v604 = vsel %vm582, %v581, 0.0
        %605 = vadd.xlane.f32.xlu0 %v604
        %v606 = vpop.xlane.xlu0 %605
        %v607 = vrcp.pop 32.0
        %v608 = vmul.f32 %v585, %v607
        %v609 = vmul.f32 %v588, %v607
        %v610 = vmul.f32 %v591, %v607
        %v611 = vmul.f32 %v594, %v607
        %v612 = vmul.f32 %v597, %v607
        %v613 = vmul.f32 %v600, %v607
        %v614 = vmul.f32 %v603, %v607
        %v615 = vmul.f32 %v606, %v607
        %v616 = vsub.f32 %v574, %v608
        %v617 = vsub.f32 %v575, %v609
        %v618 = vsub.f32 %v576, %v610
        %v619 = vsub.f32 %v577, %v611
        %v620 = vsub.f32 %v578, %v612
        %v621 = vsub.f32 %v579, %v613
        %v622 = vsub.f32 %v580, %v614
        %v623 = vsub.f32 %v581, %v615
        %v624 = vmul.f32 %v616, %v616
        %v625 = vmul.f32 %v617, %v617
        %v626 = vmul.f32 %v618, %v618
        %v627 = vmul.f32 %v619, %v619
        %v628 = vmul.f32 %v620, %v620
        %v629 = vmul.f32 %v621, %v621
        %v630 = vmul.f32 %v622, %v622
        %v631 = vmul.f32 %v623, %v623
        %v632 = vsel %vm582, %v624, 0.0
        %633 = vadd.xlane.f32.xlu0 %v632
        %v634 = vpop.xlane.xlu0 %633
        %v635 = vsel %vm582, %v625, 0.0
        %636 = vadd.xlane.f32.xlu0 %v635
        %v637 = vpop.xlane.xlu0 %636
        %v638 = vsel %vm582, %v626, 0.0
        %639 = vadd.xlane.f32.xlu0 %v638
        %v640 = vpop.xlane.xlu0 %639
        %v641 = vsel %vm582, %v627, 0.0
        %642 = vadd.xlane.f32.xlu0 %v641
        %v643 = vpop.xlane.xlu0 %642
        %v644 = vsel %vm582, %v628, 0.0
        %645 = vadd.xlane.f32.xlu0 %v644
        %v646 = vpop.xlane.xlu0 %645
        %v647 = vsel %vm582, %v629, 0.0
        %648 = vadd.xlane.f32.xlu0 %v647
        %v649 = vpop.xlane.xlu0 %648
        %v650 = vsel %vm582, %v630, 0.0
        %651 = vadd.xlane.f32.xlu0 %v650
        %v652 = vpop.xlane.xlu0 %651
        %v653 = vsel %vm582, %v631, 0.0
        %654 = vadd.xlane.f32.xlu0 %v653
        %v655 = vpop.xlane.xlu0 %654
        %v656 = vmul.f32 %v634, %v607
        %v657 = vmul.f32 %v637, %v607
        %v658 = vmul.f32 %v640, %v607
        %v659 = vmul.f32 %v643, %v607
        %v660 = vmul.f32 %v646, %v607
        %v661 = vmul.f32 %v649, %v607
        %v662 = vmul.f32 %v652, %v607
        %v663 = vmul.f32 %v655, %v607
        %v664 = vadd.f32 %v656, 1e-05
        %v665 = vadd.f32 %v657, 1e-05
        %v666 = vadd.f32 %v658, 1e-05
        %v667 = vadd.f32 %v659, 1e-05
        %v668 = vadd.f32 %v660, 1e-05
        %v669 = vadd.f32 %v661, 1e-05
        %v670 = vadd.f32 %v662, 1e-05
        %v671 = vadd.f32 %v663, 1e-05
        %v672 = vrsqrt.pop %v664
        %v673 = vrsqrt.pop %v665
        %v674 = vrsqrt.pop %v666
        %v675 = vrsqrt.pop %v667
        %v676 = vrsqrt.pop %v668
        %v677 = vrsqrt.pop %v669
        %v678 = vrsqrt.pop %v670
        %v679 = vrsqrt.pop %v671
        %v680 = vmul.f32 %v616, %v672
        %v681 = vmul.f32 %v617, %v673
        %v682 = vmul.f32 %v618, %v674
        %v683 = vmul.f32 %v619, %v675
        %v684 = vmul.f32 %v620, %v676
        %v685 = vmul.f32 %v621, %v677
        %v686 = vmul.f32 %v622, %v678
        %v687 = vmul.f32 %v623, %v679
        %v688 = vlaneseq
        %v689 = vshrl.u32 %v688, 7
        %v690 = vsub.s32 0, %v689
        %v691 = vrot.slane %v573, %v690
        %v692 = vmul.f32 %v680, %v691
        %v693 = vmul.f32 %v681, %v691
        %v694 = vmul.f32 %v682, %v691
        %v695 = vmul.f32 %v683, %v691
        %v696 = vmul.f32 %v684, %v691
        %v697 = vmul.f32 %v685, %v691
        %v698 = vmul.f32 %v686, %v691
        %v699 = vmul.f32 %v687, %v691
        %v700 = vlaneseq
        %v701 = vshrl.u32 %v700, 7
        %v702 = vsub.s32 1, %v701
        %v703 = vrot.slane %v573, %v702
        %v704 = vadd.f32 %v692, %v703
        %v705 = vadd.f32 %v693, %v703
        %v706 = vadd.f32 %v694, %v703
        %v707 = vadd.f32 %v695, %v703
        %v708 = vadd.f32 %v696, %v703
        %v709 = vadd.f32 %v697, %v703
        %v710 = vadd.f32 %v698, %v703
        %v711 = vadd.f32 %v699, %v703
        %v712 = vpack.c.bf16 %v705, %v704
        %v713 = vpack.c.bf16 %v707, %v706
        %v714 = vpack.c.bf16 %v709, %v708
        %v715 = vpack.c.bf16 %v711, %v710
        %v716 = vlaneseq
        %v717 = vshrl.u32 %v716, 7
        %v718 = vsub.s32 2, %v717
        %v719 = vrot.slane %v573, %v718
        %v724 = vunpack.c.l.b16 %v553
        %v725 = vunpack.c.l.b16 %v554
        %v726 = vunpack.c.l.b16 %v555
        %v727 = vunpack.c.l.b16 %v556
        %v728 = vpack.c.b16 %v725, %v724
        %v729 = vpack.c.b16 %v727, %v726
        %v733 = vsel %vm582, %v712, 0
        %v736 = vsel %vm582, %v713, 0
        %v739 = vsel %vm582, %v714, 0
        %v742 = vsel %vm582, %v715, 0
        %744 = vmatprep.subr.bf16.mxu0 0
        %745 = vmatpush1.bf16.msra.mxu0 0
        %746 = vmatprep.subr.bf16.mxu0 0
        %747 = vmatpush1.bf16.msra.mxu0 0
        %748 = vmatprep.subr.bf16.mxu0 0
        %749 = vmatpush1.bf16.msra.mxu0 0
        %750 = vmatprep.subr.bf16.mxu0 0
        %751 = vmatpush1.bf16.msra.mxu0 0
        %752 = vmatprep.subr.bf16.mxu0 0
        %753 = vmatpush1.bf16.msra.mxu0 0
        %754 = vmatprep.subr.bf16.mxu0 0
        %755 = vmatpush1.bf16.msra.mxu0 0
        %756 = vmatprep.subr.bf16.mxu0 0
        %757 = vmatpush1.bf16.msra.mxu0 %v729
        %758 = vmatprep.subr.bf16.mxu0 0
        %759 = vmatpush1.bf16.msra.mxu0 %v728
        %760 = vmatprep.subr.bf16.mxu0 0
        %761 = vmatpush2.bf16.msra.mxu0 0
        %762 = vmatprep.subr.bf16.mxu0 0
        %763 = vmatpush2.bf16.msra.mxu0 0
        %764 = vmatprep.subr.bf16.mxu0 0
        %765 = vmatpush2.bf16.msra.mxu0 0
        %766 = vmatprep.subr.bf16.mxu0 0
        %767 = vmatpush2.bf16.msra.mxu0 0
        %768 = vmatprep.subr.bf16.mxu0 0
        %769 = vmatpush2.bf16.msra.mxu0 0
        %770 = vmatprep.subr.bf16.mxu0 0
        %771 = vmatpush2.bf16.msra.mxu0 0
        %772 = vmatprep.subr.bf16.mxu0 0
        %773 = vmatpush2.bf16.msra.mxu0 0
        %774 = vmatprep.subr.bf16.mxu0 0
        %775 = vmatpush2.bf16.msra.mxu0 0
        %776 = vmatprep.mubr.bf16.mxu0 0
        %777 = vmatmul.mubr.bf16.gmra.mxu0 %v733
        %v778 = vpop.f32.mrf.mxu0
        %v779 = vadd.f32 %v719, %v778
        %v780 = vpop.f32.mrf.mxu0
        %v781 = vpop.f32.mrf.mxu0
        %v782 = vadd.f32 %v719, %v781
        %v783 = vpop.f32.mrf.mxu0
        %784 = vmatprep.mubr.bf16.mxu0 0
        %785 = vmatmul.mubr.bf16.gmra.mxu0 %v736
        %v786 = vpop.f32.mrf.mxu0
        %v787 = vadd.f32 %v719, %v786
        %v788 = vpop.f32.mrf.mxu0
        %v789 = vpop.f32.mrf.mxu0
        %v790 = vadd.f32 %v719, %v789
        %v791 = vpop.f32.mrf.mxu0
        %792 = vmatprep.mubr.bf16.mxu0 0
        %793 = vmatmul.mubr.bf16.gmra.mxu0 %v739
        %v794 = vpop.f32.mrf.mxu0
        %v795 = vadd.f32 %v719, %v794
        %v796 = vpop.f32.mrf.mxu0
        %v797 = vpop.f32.mrf.mxu0
        %v798 = vadd.f32 %v719, %v797
        %v799 = vpop.f32.mrf.mxu0
        %800 = vmatprep.mubr.bf16.mxu0 0
        %801 = vmatmul.mubr.bf16.gmra.mxu0 %v742
        %v802 = vpop.f32.mrf.mxu0
        %v803 = vadd.f32 %v719, %v802
        %v804 = vpop.f32.mrf.mxu0
        %v805 = vpop.f32.mrf.mxu0
        %v806 = vadd.f32 %v719, %v805
        %v807 = vpop.f32.mrf.mxu0
        %808 = vdwg.mxu0
        %817 = vrot.lane.b32.xlu0 %v779, 120
        %v818 = vpop.permute.xlu0 %817
        %819 = vrot.lane.b32.xlu0 %v782, 120
        %v820 = vpop.permute.xlu0 %819
        %821 = vrot.lane.b32.xlu0 %v787, 120
        %v822 = vpop.permute.xlu0 %821
        %823 = vrot.lane.b32.xlu0 %v790, 120
        %v824 = vpop.permute.xlu0 %823
        %825 = vrot.lane.b32.xlu0 %v795, 120
        %v826 = vpop.permute.xlu0 %825
        %827 = vrot.lane.b32.xlu0 %v798, 120
        %v828 = vpop.permute.xlu0 %827
        %829 = vrot.lane.b32.xlu0 %v803, 120
        %v830 = vpop.permute.xlu0 %829
        %831 = vrot.lane.b32.xlu0 %v806, 120
        %v832 = vpop.permute.xlu0 %831
        %841 = vrot.lane.b32.xlu0 %v779, 112
        %v842 = vpop.permute.xlu0 %841
        %843 = vrot.lane.b32.xlu0 %v782, 112
        %v844 = vpop.permute.xlu0 %843
        %845 = vrot.lane.b32.xlu0 %v787, 112
        %v846 = vpop.permute.xlu0 %845
        %847 = vrot.lane.b32.xlu0 %v790, 112
        %v848 = vpop.permute.xlu0 %847
        %849 = vrot.lane.b32.xlu0 %v795, 112
        %v850 = vpop.permute.xlu0 %849
        %851 = vrot.lane.b32.xlu0 %v798, 112
        %v852 = vpop.permute.xlu0 %851
        %853 = vrot.lane.b32.xlu0 %v803, 112
        %v854 = vpop.permute.xlu0 %853
        %855 = vrot.lane.b32.xlu0 %v806, 112
        %v856 = vpop.permute.xlu0 %855
        %865 = vrot.lane.b32.xlu0 %v779, 104
        %v866 = vpop.permute.xlu0 %865
        %867 = vrot.lane.b32.xlu0 %v782, 104
        %v868 = vpop.permute.xlu0 %867
        %869 = vrot.lane.b32.xlu0 %v787, 104
        %v870 = vpop.permute.xlu0 %869
        %871 = vrot.lane.b32.xlu0 %v790, 104
        %v872 = vpop.permute.xlu0 %871
        %873 = vrot.lane.b32.xlu0 %v795, 104
        %v874 = vpop.permute.xlu0 %873
        %875 = vrot.lane.b32.xlu0 %v798, 104
        %v876 = vpop.permute.xlu0 %875
        %877 = vrot.lane.b32.xlu0 %v803, 104
        %v878 = vpop.permute.xlu0 %877
        %879 = vrot.lane.b32.xlu0 %v806, 104
        %v880 = vpop.permute.xlu0 %879
        %v889 = vcombine.low %v779, %v842
        %v890 = vcombine.high %v779, %v842
        %v892 = vunpack.c.l.s4 1983009808
        %v893 = vunpack.c.0.s8 %v892
        %v894 = vlaneseq
        %v895 = vshrl.u32 %v894, 7
        %v896 = vsub.s32 %v893, %v895
        %v897 = vrot.slane %v889, %v896
        %v899 = vunpack.c.l.s4 1983009808
        %v900 = vunpack.c.0.s8 %v899
        %v901 = vlaneseq
        %v902 = vshrl.u32 %v901, 7
        %v903 = vsub.s32 %v900, %v902
        %v904 = vrot.slane %v890, %v903
        %v905 = vcombine.low %v818, %v866
        %v906 = vcombine.high %v818, %v866
        %v908 = vunpack.c.l.s4 1983009808
        %v909 = vunpack.c.0.s8 %v908
        %v910 = vlaneseq
        %v911 = vshrl.u32 %v910, 7
        %v912 = vsub.s32 %v909, %v911
        %v913 = vrot.slane %v905, %v912
        %v915 = vunpack.c.l.s4 1983009808
        %v916 = vunpack.c.0.s8 %v915
        %v917 = vlaneseq
        %v918 = vshrl.u32 %v917, 7
        %v919 = vsub.s32 %v916, %v918
        %v920 = vrot.slane %v906, %v919
        %v921 = vcombine.low %v897, %v913
        %v922 = vcombine.high %v897, %v913
        %v924 = vunpack.c.l.s4 1934713408
        %v925 = vunpack.c.0.s8 %v924
        %v926 = vlaneseq
        %v927 = vshrl.u32 %v926, 7
        %v928 = vsub.s32 %v925, %v927
        %v929 = vrot.slane %v921, %v928
        %v931 = vunpack.c.l.s4 1934713408
        %v932 = vunpack.c.0.s8 %v931
        %v933 = vlaneseq
        %v934 = vshrl.u32 %v933, 7
        %v935 = vsub.s32 %v932, %v934
        %v936 = vrot.slane %v922, %v935
        %v937 = vcombine.low %v904, %v920
        %v938 = vcombine.high %v904, %v920
        %v940 = vunpack.c.l.s4 1934713408
        %v941 = vunpack.c.0.s8 %v940
        %v942 = vlaneseq
        %v943 = vshrl.u32 %v942, 7
        %v944 = vsub.s32 %v941, %v943
        %v945 = vrot.slane %v937, %v944
        %v947 = vunpack.c.l.s4 1934713408
        %v948 = vunpack.c.0.s8 %v947
        %v949 = vlaneseq
        %v950 = vshrl.u32 %v949, 7
        %v951 = vsub.s32 %v948, %v950
        %v952 = vrot.slane %v938, %v951
        %v953 = vcombine.high %v929, 0.0
        %v954 = vcombine.high %v936, 0.0
        %v955 = vcombine.high %v945, 0.0
        %v956 = vcombine.high %v952, 0.0
        %v957 = vcombine.low %v782, %v844
        %v958 = vcombine.high %v782, %v844
        %v960 = vunpack.c.l.s4 1983009808
        %v961 = vunpack.c.0.s8 %v960
        %v962 = vlaneseq
        %v963 = vshrl.u32 %v962, 7
        %v964 = vsub.s32 %v961, %v963
        %v965 = vrot.slane %v957, %v964
        %v967 = vunpack.c.l.s4 1983009808
        %v968 = vunpack.c.0.s8 %v967
        %v969 = vlaneseq
        %v970 = vshrl.u32 %v969, 7
        %v971 = vsub.s32 %v968, %v970
        %v972 = vrot.slane %v958, %v971
        %v973 = vcombine.low %v820, %v868
        %v974 = vcombine.high %v820, %v868
        %v976 = vunpack.c.l.s4 1983009808
        %v977 = vunpack.c.0.s8 %v976
        %v978 = vlaneseq
        %v979 = vshrl.u32 %v978, 7
        %v980 = vsub.s32 %v977, %v979
        %v981 = vrot.slane %v973, %v980
        %v983 = vunpack.c.l.s4 1983009808
        %v984 = vunpack.c.0.s8 %v983
        %v985 = vlaneseq
        %v986 = vshrl.u32 %v985, 7
        %v987 = vsub.s32 %v984, %v986
        %v988 = vrot.slane %v974, %v987
        %v989 = vcombine.low %v965, %v981
        %v990 = vcombine.high %v965, %v981
        %v992 = vunpack.c.l.s4 1934713408
        %v993 = vunpack.c.0.s8 %v992
        %v994 = vlaneseq
        %v995 = vshrl.u32 %v994, 7
        %v996 = vsub.s32 %v993, %v995
        %v997 = vrot.slane %v989, %v996
        %v999 = vunpack.c.l.s4 1934713408
        %v1000 = vunpack.c.0.s8 %v999
        %v1001 = vlaneseq
        %v1002 = vshrl.u32 %v1001, 7
        %v1003 = vsub.s32 %v1000, %v1002
        %v1004 = vrot.slane %v990, %v1003
        %v1005 = vcombine.low %v972, %v988
        %v1006 = vcombine.high %v972, %v988
        %v1008 = vunpack.c.l.s4 1934713408
        %v1009 = vunpack.c.0.s8 %v1008
        %v1010 = vlaneseq
        %v1011 = vshrl.u32 %v1010, 7
        %v1012 = vsub.s32 %v1009, %v1011
        %v1013 = vrot.slane %v1005, %v1012
        %v1015 = vunpack.c.l.s4 1934713408
        %v1016 = vunpack.c.0.s8 %v1015
        %v1017 = vlaneseq
        %v1018 = vshrl.u32 %v1017, 7
        %v1019 = vsub.s32 %v1016, %v1018
        %v1020 = vrot.slane %v1006, %v1019
        %v1021 = vcombine.high %v997, 0.0
        %v1022 = vcombine.high %v1004, 0.0
        %v1023 = vcombine.high %v1013, 0.0
        %v1024 = vcombine.high %v1020, 0.0
        %v1025 = vcombine.low %v787, %v846
        %v1026 = vcombine.high %v787, %v846
        %v1028 = vunpack.c.l.s4 1983009808
        %v1029 = vunpack.c.0.s8 %v1028
        %v1030 = vlaneseq
        %v1031 = vshrl.u32 %v1030, 7
        %v1032 = vsub.s32 %v1029, %v1031
        %v1033 = vrot.slane %v1025, %v1032
        %v1035 = vunpack.c.l.s4 1983009808
        %v1036 = vunpack.c.0.s8 %v1035
        %v1037 = vlaneseq
        %v1038 = vshrl.u32 %v1037, 7
        %v1039 = vsub.s32 %v1036, %v1038
        %v1040 = vrot.slane %v1026, %v1039
        %v1041 = vcombine.low %v822, %v870
        %v1042 = vcombine.high %v822, %v870
        %v1044 = vunpack.c.l.s4 1983009808
        %v1045 = vunpack.c.0.s8 %v1044
        %v1046 = vlaneseq
        %v1047 = vshrl.u32 %v1046, 7
        %v1048 = vsub.s32 %v1045, %v1047
        %v1049 = vrot.slane %v1041, %v1048
        %v1051 = vunpack.c.l.s4 1983009808
        %v1052 = vunpack.c.0.s8 %v1051
        %v1053 = vlaneseq
        %v1054 = vshrl.u32 %v1053, 7
        %v1055 = vsub.s32 %v1052, %v1054
        %v1056 = vrot.slane %v1042, %v1055
        %v1057 = vcombine.low %v1033, %v1049
        %v1058 = vcombine.high %v1033, %v1049
        %v1060 = vunpack.c.l.s4 1934713408
        %v1061 = vunpack.c.0.s8 %v1060
        %v1062 = vlaneseq
        %v1063 = vshrl.u32 %v1062, 7
        %v1064 = vsub.s32 %v1061, %v1063
        %v1065 = vrot.slane %v1057, %v1064
        %v1067 = vunpack.c.l.s4 1934713408
        %v1068 = vunpack.c.0.s8 %v1067
        %v1069 = vlaneseq
        %v1070 = vshrl.u32 %v1069, 7
        %v1071 = vsub.s32 %v1068, %v1070
        %v1072 = vrot.slane %v1058, %v1071
        %v1073 = vcombine.low %v1040, %v1056
        %v1074 = vcombine.high %v1040, %v1056
        %v1076 = vunpack.c.l.s4 1934713408
        %v1077 = vunpack.c.0.s8 %v1076
        %v1078 = vlaneseq
        %v1079 = vshrl.u32 %v1078, 7
        %v1080 = vsub.s32 %v1077, %v1079
        %v1081 = vrot.slane %v1073, %v1080
        %v1083 = vunpack.c.l.s4 1934713408
        %v1084 = vunpack.c.0.s8 %v1083
        %v1085 = vlaneseq
        %v1086 = vshrl.u32 %v1085, 7
        %v1087 = vsub.s32 %v1084, %v1086
        %v1088 = vrot.slane %v1074, %v1087
        %v1089 = vcombine.high %v1065, 0.0
        %v1090 = vcombine.high %v1072, 0.0
        %v1091 = vcombine.high %v1081, 0.0
        %v1092 = vcombine.high %v1088, 0.0
        %v1093 = vcombine.low %v790, %v848
        %v1094 = vcombine.high %v790, %v848
        %v1096 = vunpack.c.l.s4 1983009808
        %v1097 = vunpack.c.0.s8 %v1096
        %v1098 = vlaneseq
        %v1099 = vshrl.u32 %v1098, 7
        %v1100 = vsub.s32 %v1097, %v1099
        %v1101 = vrot.slane %v1093, %v1100
        %v1103 = vunpack.c.l.s4 1983009808
        %v1104 = vunpack.c.0.s8 %v1103
        %v1105 = vlaneseq
        %v1106 = vshrl.u32 %v1105, 7
        %v1107 = vsub.s32 %v1104, %v1106
        %v1108 = vrot.slane %v1094, %v1107
        %v1109 = vcombine.low %v824, %v872
        %v1110 = vcombine.high %v824, %v872
        %v1112 = vunpack.c.l.s4 1983009808
        %v1113 = vunpack.c.0.s8 %v1112
        %v1114 = vlaneseq
        %v1115 = vshrl.u32 %v1114, 7
        %v1116 = vsub.s32 %v1113, %v1115
        %v1117 = vrot.slane %v1109, %v1116
        %v1119 = vunpack.c.l.s4 1983009808
        %v1120 = vunpack.c.0.s8 %v1119
        %v1121 = vlaneseq
        %v1122 = vshrl.u32 %v1121, 7
        %v1123 = vsub.s32 %v1120, %v1122
        %v1124 = vrot.slane %v1110, %v1123
        %v1125 = vcombine.low %v1101, %v1117
        %v1126 = vcombine.high %v1101, %v1117
        %v1128 = vunpack.c.l.s4 1934713408
        %v1129 = vunpack.c.0.s8 %v1128
        %v1130 = vlaneseq
        %v1131 = vshrl.u32 %v1130, 7
        %v1132 = vsub.s32 %v1129, %v1131
        %v1133 = vrot.slane %v1125, %v1132
        %v1135 = vunpack.c.l.s4 1934713408
        %v1136 = vunpack.c.0.s8 %v1135
        %v1137 = vlaneseq
        %v1138 = vshrl.u32 %v1137, 7
        %v1139 = vsub.s32 %v1136, %v1138
        %v1140 = vrot.slane %v1126, %v1139
        %v1141 = vcombine.low %v1108, %v1124
        %v1142 = vcombine.high %v1108, %v1124
        %v1144 = vunpack.c.l.s4 1934713408
        %v1145 = vunpack.c.0.s8 %v1144
        %v1146 = vlaneseq
        %v1147 = vshrl.u32 %v1146, 7
        %v1148 = vsub.s32 %v1145, %v1147
        %v1149 = vrot.slane %v1141, %v1148
        %v1151 = vunpack.c.l.s4 1934713408
        %v1152 = vunpack.c.0.s8 %v1151
        %v1153 = vlaneseq
        %v1154 = vshrl.u32 %v1153, 7
        %v1155 = vsub.s32 %v1152, %v1154
        %v1156 = vrot.slane %v1142, %v1155
        %v1157 = vcombine.high %v1133, 0.0
        %v1158 = vcombine.high %v1140, 0.0
        %v1159 = vcombine.high %v1149, 0.0
        %v1160 = vcombine.high %v1156, 0.0
        %v1161 = vcombine.low %v795, %v850
        %v1162 = vcombine.high %v795, %v850
        %v1164 = vunpack.c.l.s4 1983009808
        %v1165 = vunpack.c.0.s8 %v1164
        %v1166 = vlaneseq
        %v1167 = vshrl.u32 %v1166, 7
        %v1168 = vsub.s32 %v1165, %v1167
        %v1169 = vrot.slane %v1161, %v1168
        %v1171 = vunpack.c.l.s4 1983009808
        %v1172 = vunpack.c.0.s8 %v1171
        %v1173 = vlaneseq
        %v1174 = vshrl.u32 %v1173, 7
        %v1175 = vsub.s32 %v1172, %v1174
        %v1176 = vrot.slane %v1162, %v1175
        %v1177 = vcombine.low %v826, %v874
        %v1178 = vcombine.high %v826, %v874
        %v1180 = vunpack.c.l.s4 1983009808
        %v1181 = vunpack.c.0.s8 %v1180
        %v1182 = vlaneseq
        %v1183 = vshrl.u32 %v1182, 7
        %v1184 = vsub.s32 %v1181, %v1183
        %v1185 = vrot.slane %v1177, %v1184
        %v1187 = vunpack.c.l.s4 1983009808
        %v1188 = vunpack.c.0.s8 %v1187
        %v1189 = vlaneseq
        %v1190 = vshrl.u32 %v1189, 7
        %v1191 = vsub.s32 %v1188, %v1190
        %v1192 = vrot.slane %v1178, %v1191
        %v1193 = vcombine.low %v1169, %v1185
        %v1194 = vcombine.high %v1169, %v1185
        %v1196 = vunpack.c.l.s4 1934713408
        %v1197 = vunpack.c.0.s8 %v1196
        %v1198 = vlaneseq
        %v1199 = vshrl.u32 %v1198, 7
        %v1200 = vsub.s32 %v1197, %v1199
        %v1201 = vrot.slane %v1193, %v1200
        %v1203 = vunpack.c.l.s4 1934713408
        %v1204 = vunpack.c.0.s8 %v1203
        %v1205 = vlaneseq
        %v1206 = vshrl.u32 %v1205, 7
        %v1207 = vsub.s32 %v1204, %v1206
        %v1208 = vrot.slane %v1194, %v1207
        %v1209 = vcombine.low %v1176, %v1192
        %v1210 = vcombine.high %v1176, %v1192
        %v1212 = vunpack.c.l.s4 1934713408
        %v1213 = vunpack.c.0.s8 %v1212
        %v1214 = vlaneseq
        %v1215 = vshrl.u32 %v1214, 7
        %v1216 = vsub.s32 %v1213, %v1215
        %v1217 = vrot.slane %v1209, %v1216
        %v1219 = vunpack.c.l.s4 1934713408
        %v1220 = vunpack.c.0.s8 %v1219
        %v1221 = vlaneseq
        %v1222 = vshrl.u32 %v1221, 7
        %v1223 = vsub.s32 %v1220, %v1222
        %v1224 = vrot.slane %v1210, %v1223
        %v1225 = vcombine.high %v1201, 0.0
        %v1226 = vcombine.high %v1208, 0.0
        %v1227 = vcombine.high %v1217, 0.0
        %v1228 = vcombine.high %v1224, 0.0
        %v1229 = vcombine.low %v798, %v852
        %v1230 = vcombine.high %v798, %v852
        %v1232 = vunpack.c.l.s4 1983009808
        %v1233 = vunpack.c.0.s8 %v1232
        %v1234 = vlaneseq
        %v1235 = vshrl.u32 %v1234, 7
        %v1236 = vsub.s32 %v1233, %v1235
        %v1237 = vrot.slane %v1229, %v1236
        %v1239 = vunpack.c.l.s4 1983009808
        %v1240 = vunpack.c.0.s8 %v1239
        %v1241 = vlaneseq
        %v1242 = vshrl.u32 %v1241, 7
        %v1243 = vsub.s32 %v1240, %v1242
        %v1244 = vrot.slane %v1230, %v1243
        %v1245 = vcombine.low %v828, %v876
        %v1246 = vcombine.high %v828, %v876
        %v1248 = vunpack.c.l.s4 1983009808
        %v1249 = vunpack.c.0.s8 %v1248
        %v1250 = vlaneseq
        %v1251 = vshrl.u32 %v1250, 7
        %v1252 = vsub.s32 %v1249, %v1251
        %v1253 = vrot.slane %v1245, %v1252
        %v1255 = vunpack.c.l.s4 1983009808
        %v1256 = vunpack.c.0.s8 %v1255
        %v1257 = vlaneseq
        %v1258 = vshrl.u32 %v1257, 7
        %v1259 = vsub.s32 %v1256, %v1258
        %v1260 = vrot.slane %v1246, %v1259
        %v1261 = vcombine.low %v1237, %v1253
        %v1262 = vcombine.high %v1237, %v1253
        %v1264 = vunpack.c.l.s4 1934713408
        %v1265 = vunpack.c.0.s8 %v1264
        %v1266 = vlaneseq
        %v1267 = vshrl.u32 %v1266, 7
        %v1268 = vsub.s32 %v1265, %v1267
        %v1269 = vrot.slane %v1261, %v1268
        %v1271 = vunpack.c.l.s4 1934713408
        %v1272 = vunpack.c.0.s8 %v1271
        %v1273 = vlaneseq
        %v1274 = vshrl.u32 %v1273, 7
        %v1275 = vsub.s32 %v1272, %v1274
        %v1276 = vrot.slane %v1262, %v1275
        %v1277 = vcombine.low %v1244, %v1260
        %v1278 = vcombine.high %v1244, %v1260
        %v1280 = vunpack.c.l.s4 1934713408
        %v1281 = vunpack.c.0.s8 %v1280
        %v1282 = vlaneseq
        %v1283 = vshrl.u32 %v1282, 7
        %v1284 = vsub.s32 %v1281, %v1283
        %v1285 = vrot.slane %v1277, %v1284
        %v1287 = vunpack.c.l.s4 1934713408
        %v1288 = vunpack.c.0.s8 %v1287
        %v1289 = vlaneseq
        %v1290 = vshrl.u32 %v1289, 7
        %v1291 = vsub.s32 %v1288, %v1290
        %v1292 = vrot.slane %v1278, %v1291
        %v1293 = vcombine.high %v1269, 0.0
        %v1294 = vcombine.high %v1276, 0.0
        %v1295 = vcombine.high %v1285, 0.0
        %v1296 = vcombine.high %v1292, 0.0
        %v1297 = vcombine.low %v803, %v854
        %v1298 = vcombine.high %v803, %v854
        %v1300 = vunpack.c.l.s4 1983009808
        %v1301 = vunpack.c.0.s8 %v1300
        %v1302 = vlaneseq
        %v1303 = vshrl.u32 %v1302, 7
        %v1304 = vsub.s32 %v1301, %v1303
        %v1305 = vrot.slane %v1297, %v1304
        %v1307 = vunpack.c.l.s4 1983009808
        %v1308 = vunpack.c.0.s8 %v1307
        %v1309 = vlaneseq
        %v1310 = vshrl.u32 %v1309, 7
        %v1311 = vsub.s32 %v1308, %v1310
        %v1312 = vrot.slane %v1298, %v1311
        %v1313 = vcombine.low %v830, %v878
        %v1314 = vcombine.high %v830, %v878
        %v1316 = vunpack.c.l.s4 1983009808
        %v1317 = vunpack.c.0.s8 %v1316
        %v1318 = vlaneseq
        %v1319 = vshrl.u32 %v1318, 7
        %v1320 = vsub.s32 %v1317, %v1319
        %v1321 = vrot.slane %v1313, %v1320
        %v1323 = vunpack.c.l.s4 1983009808
        %v1324 = vunpack.c.0.s8 %v1323
        %v1325 = vlaneseq
        %v1326 = vshrl.u32 %v1325, 7
        %v1327 = vsub.s32 %v1324, %v1326
        %v1328 = vrot.slane %v1314, %v1327
        %v1329 = vcombine.low %v1305, %v1321
        %v1330 = vcombine.high %v1305, %v1321
        %v1332 = vunpack.c.l.s4 1934713408
        %v1333 = vunpack.c.0.s8 %v1332
        %v1334 = vlaneseq
        %v1335 = vshrl.u32 %v1334, 7
        %v1336 = vsub.s32 %v1333, %v1335
        %v1337 = vrot.slane %v1329, %v1336
        %v1339 = vunpack.c.l.s4 1934713408
        %v1340 = vunpack.c.0.s8 %v1339
        %v1341 = vlaneseq
        %v1342 = vshrl.u32 %v1341, 7
        %v1343 = vsub.s32 %v1340, %v1342
        %v1344 = vrot.slane %v1330, %v1343
        %v1345 = vcombine.low %v1312, %v1328
        %v1346 = vcombine.high %v1312, %v1328
        %v1348 = vunpack.c.l.s4 1934713408
        %v1349 = vunpack.c.0.s8 %v1348
        %v1350 = vlaneseq
        %v1351 = vshrl.u32 %v1350, 7
        %v1352 = vsub.s32 %v1349, %v1351
        %v1353 = vrot.slane %v1345, %v1352
        %v1355 = vunpack.c.l.s4 1934713408
        %v1356 = vunpack.c.0.s8 %v1355
        %v1357 = vlaneseq
        %v1358 = vshrl.u32 %v1357, 7
        %v1359 = vsub.s32 %v1356, %v1358
        %v1360 = vrot.slane %v1346, %v1359
        %v1361 = vcombine.high %v1337, 0.0
        %v1362 = vcombine.high %v1344, 0.0
        %v1363 = vcombine.high %v1353, 0.0
        %v1364 = vcombine.high %v1360, 0.0
        %v1365 = vcombine.low %v806, %v856
        %v1366 = vcombine.high %v806, %v856
        %v1368 = vunpack.c.l.s4 1983009808
        %v1369 = vunpack.c.0.s8 %v1368
        %v1370 = vlaneseq
        %v1371 = vshrl.u32 %v1370, 7
        %v1372 = vsub.s32 %v1369, %v1371
        %v1373 = vrot.slane %v1365, %v1372
        %v1375 = vunpack.c.l.s4 1983009808
        %v1376 = vunpack.c.0.s8 %v1375
        %v1377 = vlaneseq
        %v1378 = vshrl.u32 %v1377, 7
        %v1379 = vsub.s32 %v1376, %v1378
        %v1380 = vrot.slane %v1366, %v1379
        %v1381 = vcombine.low %v832, %v880
        %v1382 = vcombine.high %v832, %v880
        %v1384 = vunpack.c.l.s4 1983009808
        %v1385 = vunpack.c.0.s8 %v1384
        %v1386 = vlaneseq
        %v1387 = vshrl.u32 %v1386, 7
        %v1388 = vsub.s32 %v1385, %v1387
        %v1389 = vrot.slane %v1381, %v1388
        %v1391 = vunpack.c.l.s4 1983009808
        %v1392 = vunpack.c.0.s8 %v1391
        %v1393 = vlaneseq
        %v1394 = vshrl.u32 %v1393, 7
        %v1395 = vsub.s32 %v1392, %v1394
        %v1396 = vrot.slane %v1382, %v1395
        %v1397 = vcombine.low %v1373, %v1389
        %v1398 = vcombine.high %v1373, %v1389
        %v1400 = vunpack.c.l.s4 1934713408
        %v1401 = vunpack.c.0.s8 %v1400
        %v1402 = vlaneseq
        %v1403 = vshrl.u32 %v1402, 7
        %v1404 = vsub.s32 %v1401, %v1403
        %v1405 = vrot.slane %v1397, %v1404
        %v1407 = vunpack.c.l.s4 1934713408
        %v1408 = vunpack.c.0.s8 %v1407
        %v1409 = vlaneseq
        %v1410 = vshrl.u32 %v1409, 7
        %v1411 = vsub.s32 %v1408, %v1410
        %v1412 = vrot.slane %v1398, %v1411
        %v1413 = vcombine.low %v1380, %v1396
        %v1414 = vcombine.high %v1380, %v1396
        %v1416 = vunpack.c.l.s4 1934713408
        %v1417 = vunpack.c.0.s8 %v1416
        %v1418 = vlaneseq
        %v1419 = vshrl.u32 %v1418, 7
        %v1420 = vsub.s32 %v1417, %v1419
        %v1421 = vrot.slane %v1413, %v1420
        %v1423 = vunpack.c.l.s4 1934713408
        %v1424 = vunpack.c.0.s8 %v1423
        %v1425 = vlaneseq
        %v1426 = vshrl.u32 %v1425, 7
        %v1427 = vsub.s32 %v1424, %v1426
        %v1428 = vrot.slane %v1414, %v1427
        %v1429 = vcombine.high %v1405, 0.0
        %v1430 = vcombine.high %v1412, 0.0
        %v1431 = vcombine.high %v1421, 0.0
        %v1432 = vcombine.high %v1428, 0.0
        %v1433 = vcombine.low %v929, %v936
        %v1435 = vunpack.c.l.s4 1983009808
        %v1436 = vunpack.c.0.s8 %v1435
        %v1437 = vlaneseq
        %v1438 = vshrl.u32 %v1437, 7
        %v1439 = vsub.s32 %v1436, %v1438
        %v1440 = vrot.slane %v1433, %v1439
        %v1441 = vcombine.low %v953, %v954
        %v1443 = vunpack.c.l.s4 1983009808
        %v1444 = vunpack.c.0.s8 %v1443
        %v1445 = vlaneseq
        %v1446 = vshrl.u32 %v1445, 7
        %v1447 = vsub.s32 %v1444, %v1446
        %v1448 = vrot.slane %v1441, %v1447
        %v1449 = vcombine.low %v945, %v952
        %v1451 = vunpack.c.l.s4 1983009808
        %v1452 = vunpack.c.0.s8 %v1451
        %v1453 = vlaneseq
        %v1454 = vshrl.u32 %v1453, 7
        %v1455 = vsub.s32 %v1452, %v1454
        %v1456 = vrot.slane %v1449, %v1455
        %v1457 = vcombine.low %v955, %v956
        %v1459 = vunpack.c.l.s4 1983009808
        %v1460 = vunpack.c.0.s8 %v1459
        %v1461 = vlaneseq
        %v1462 = vshrl.u32 %v1461, 7
        %v1463 = vsub.s32 %v1460, %v1462
        %v1464 = vrot.slane %v1457, %v1463
        %v1465 = vcombine.low %v1440, %v1448
        %v1466 = vcombine.high %v1440, %v1448
        %v1468 = vunpack.c.l.s4 1934713408
        %v1469 = vunpack.c.0.s8 %v1468
        %v1470 = vlaneseq
        %v1471 = vshrl.u32 %v1470, 7
        %v1472 = vsub.s32 %v1469, %v1471
        %v1473 = vrot.slane %v1465, %v1472
        %v1475 = vunpack.c.l.s4 1934713408
        %v1476 = vunpack.c.0.s8 %v1475
        %v1477 = vlaneseq
        %v1478 = vshrl.u32 %v1477, 7
        %v1479 = vsub.s32 %v1476, %v1478
        %v1480 = vrot.slane %v1466, %v1479
        %v1481 = vcombine.low %v1456, %v1464
        %v1482 = vcombine.high %v1456, %v1464
        %v1484 = vunpack.c.l.s4 1934713408
        %v1485 = vunpack.c.0.s8 %v1484
        %v1486 = vlaneseq
        %v1487 = vshrl.u32 %v1486, 7
        %v1488 = vsub.s32 %v1485, %v1487
        %v1489 = vrot.slane %v1481, %v1488
        %v1491 = vunpack.c.l.s4 1934713408
        %v1492 = vunpack.c.0.s8 %v1491
        %v1493 = vlaneseq
        %v1494 = vshrl.u32 %v1493, 7
        %v1495 = vsub.s32 %v1492, %v1494
        %v1496 = vrot.slane %v1482, %v1495
        %v1497 = vcombine.low %v1473, %v1489
        %v1498 = vcombine.high %v1473, %v1489
        %v1499 = vcombine.low %v1480, %v1496
        %v1500 = vcombine.high %v1480, %v1496
        %v1501 = vcombine.low %v997, %v1004
        %v1503 = vunpack.c.l.s4 1983009808
        %v1504 = vunpack.c.0.s8 %v1503
        %v1505 = vlaneseq
        %v1506 = vshrl.u32 %v1505, 7
        %v1507 = vsub.s32 %v1504, %v1506
        %v1508 = vrot.slane %v1501, %v1507
        %v1509 = vcombine.low %v1021, %v1022
        %v1511 = vunpack.c.l.s4 1983009808
        %v1512 = vunpack.c.0.s8 %v1511
        %v1513 = vlaneseq
        %v1514 = vshrl.u32 %v1513, 7
        %v1515 = vsub.s32 %v1512, %v1514
        %v1516 = vrot.slane %v1509, %v1515
        %v1517 = vcombine.low %v1013, %v1020
        %v1519 = vunpack.c.l.s4 1983009808
        %v1520 = vunpack.c.0.s8 %v1519
        %v1521 = vlaneseq
        %v1522 = vshrl.u32 %v1521, 7
        %v1523 = vsub.s32 %v1520, %v1522
        %v1524 = vrot.slane %v1517, %v1523
        %v1525 = vcombine.low %v1023, %v1024
        %v1527 = vunpack.c.l.s4 1983009808
        %v1528 = vunpack.c.0.s8 %v1527
        %v1529 = vlaneseq
        %v1530 = vshrl.u32 %v1529, 7
        %v1531 = vsub.s32 %v1528, %v1530
        %v1532 = vrot.slane %v1525, %v1531
        %v1533 = vcombine.low %v1508, %v1516
        %v1534 = vcombine.high %v1508, %v1516
        %v1536 = vunpack.c.l.s4 1934713408
        %v1537 = vunpack.c.0.s8 %v1536
        %v1538 = vlaneseq
        %v1539 = vshrl.u32 %v1538, 7
        %v1540 = vsub.s32 %v1537, %v1539
        %v1541 = vrot.slane %v1533, %v1540
        %v1543 = vunpack.c.l.s4 1934713408
        %v1544 = vunpack.c.0.s8 %v1543
        %v1545 = vlaneseq
        %v1546 = vshrl.u32 %v1545, 7
        %v1547 = vsub.s32 %v1544, %v1546
        %v1548 = vrot.slane %v1534, %v1547
        %v1549 = vcombine.low %v1524, %v1532
        %v1550 = vcombine.high %v1524, %v1532
        %v1552 = vunpack.c.l.s4 1934713408
        %v1553 = vunpack.c.0.s8 %v1552
        %v1554 = vlaneseq
        %v1555 = vshrl.u32 %v1554, 7
        %v1556 = vsub.s32 %v1553, %v1555
        %v1557 = vrot.slane %v1549, %v1556
        %v1559 = vunpack.c.l.s4 1934713408
        %v1560 = vunpack.c.0.s8 %v1559
        %v1561 = vlaneseq
        %v1562 = vshrl.u32 %v1561, 7
        %v1563 = vsub.s32 %v1560, %v1562
        %v1564 = vrot.slane %v1550, %v1563
        %v1565 = vcombine.low %v1541, %v1557
        %v1566 = vcombine.high %v1541, %v1557
        %v1567 = vcombine.low %v1548, %v1564
        %v1568 = vcombine.high %v1548, %v1564
        %v1569 = vcombine.low %v1065, %v1072
        %v1571 = vunpack.c.l.s4 1983009808
        %v1572 = vunpack.c.0.s8 %v1571
        %v1573 = vlaneseq
        %v1574 = vshrl.u32 %v1573, 7
        %v1575 = vsub.s32 %v1572, %v1574
        %v1576 = vrot.slane %v1569, %v1575
        %v1577 = vcombine.low %v1089, %v1090
        %v1579 = vunpack.c.l.s4 1983009808
        %v1580 = vunpack.c.0.s8 %v1579
        %v1581 = vlaneseq
        %v1582 = vshrl.u32 %v1581, 7
        %v1583 = vsub.s32 %v1580, %v1582
        %v1584 = vrot.slane %v1577, %v1583
        %v1585 = vcombine.low %v1081, %v1088
        %v1587 = vunpack.c.l.s4 1983009808
        %v1588 = vunpack.c.0.s8 %v1587
        %v1589 = vlaneseq
        %v1590 = vshrl.u32 %v1589, 7
        %v1591 = vsub.s32 %v1588, %v1590
        %v1592 = vrot.slane %v1585, %v1591
        %v1593 = vcombine.low %v1091, %v1092
        %v1595 = vunpack.c.l.s4 1983009808
        %v1596 = vunpack.c.0.s8 %v1595
        %v1597 = vlaneseq
        %v1598 = vshrl.u32 %v1597, 7
        %v1599 = vsub.s32 %v1596, %v1598
        %v1600 = vrot.slane %v1593, %v1599
        %v1601 = vcombine.low %v1576, %v1584
        %v1602 = vcombine.high %v1576, %v1584
        %v1604 = vunpack.c.l.s4 1934713408
        %v1605 = vunpack.c.0.s8 %v1604
        %v1606 = vlaneseq
        %v1607 = vshrl.u32 %v1606, 7
        %v1608 = vsub.s32 %v1605, %v1607
        %v1609 = vrot.slane %v1601, %v1608
        %v1611 = vunpack.c.l.s4 1934713408
        %v1612 = vunpack.c.0.s8 %v1611
        %v1613 = vlaneseq
        %v1614 = vshrl.u32 %v1613, 7
        %v1615 = vsub.s32 %v1612, %v1614
        %v1616 = vrot.slane %v1602, %v1615
        %v1617 = vcombine.low %v1592, %v1600
        %v1618 = vcombine.high %v1592, %v1600
        %v1620 = vunpack.c.l.s4 1934713408
        %v1621 = vunpack.c.0.s8 %v1620
        %v1622 = vlaneseq
        %v1623 = vshrl.u32 %v1622, 7
        %v1624 = vsub.s32 %v1621, %v1623
        %v1625 = vrot.slane %v1617, %v1624
        %v1627 = vunpack.c.l.s4 1934713408
        %v1628 = vunpack.c.0.s8 %v1627
        %v1629 = vlaneseq
        %v1630 = vshrl.u32 %v1629, 7
        %v1631 = vsub.s32 %v1628, %v1630
        %v1632 = vrot.slane %v1618, %v1631
        %v1633 = vcombine.low %v1609, %v1625
        %v1634 = vcombine.high %v1609, %v1625
        %v1635 = vcombine.low %v1616, %v1632
        %v1636 = vcombine.high %v1616, %v1632
        %v1637 = vcombine.low %v1133, %v1140
        %v1639 = vunpack.c.l.s4 1983009808
        %v1640 = vunpack.c.0.s8 %v1639
        %v1641 = vlaneseq
        %v1642 = vshrl.u32 %v1641, 7
        %v1643 = vsub.s32 %v1640, %v1642
        %v1644 = vrot.slane %v1637, %v1643
        %v1645 = vcombine.low %v1157, %v1158
        %v1647 = vunpack.c.l.s4 1983009808
        %v1648 = vunpack.c.0.s8 %v1647
        %v1649 = vlaneseq
        %v1650 = vshrl.u32 %v1649, 7
        %v1651 = vsub.s32 %v1648, %v1650
        %v1652 = vrot.slane %v1645, %v1651
        %v1653 = vcombine.low %v1149, %v1156
        %v1655 = vunpack.c.l.s4 1983009808
        %v1656 = vunpack.c.0.s8 %v1655
        %v1657 = vlaneseq
        %v1658 = vshrl.u32 %v1657, 7
        %v1659 = vsub.s32 %v1656, %v1658
        %v1660 = vrot.slane %v1653, %v1659
        %v1661 = vcombine.low %v1159, %v1160
        %v1663 = vunpack.c.l.s4 1983009808
        %v1664 = vunpack.c.0.s8 %v1663
        %v1665 = vlaneseq
        %v1666 = vshrl.u32 %v1665, 7
        %v1667 = vsub.s32 %v1664, %v1666
        %v1668 = vrot.slane %v1661, %v1667
        %v1669 = vcombine.low %v1644, %v1652
        %v1670 = vcombine.high %v1644, %v1652
        %v1672 = vunpack.c.l.s4 1934713408
        %v1673 = vunpack.c.0.s8 %v1672
        %v1674 = vlaneseq
        %v1675 = vshrl.u32 %v1674, 7
        %v1676 = vsub.s32 %v1673, %v1675
        %v1677 = vrot.slane %v1669, %v1676
        %v1679 = vunpack.c.l.s4 1934713408
        %v1680 = vunpack.c.0.s8 %v1679
        %v1681 = vlaneseq
        %v1682 = vshrl.u32 %v1681, 7
        %v1683 = vsub.s32 %v1680, %v1682
        %v1684 = vrot.slane %v1670, %v1683
        %v1685 = vcombine.low %v1660, %v1668
        %v1686 = vcombine.high %v1660, %v1668
        %v1688 = vunpack.c.l.s4 1934713408
        %v1689 = vunpack.c.0.s8 %v1688
        %v1690 = vlaneseq
        %v1691 = vshrl.u32 %v1690, 7
        %v1692 = vsub.s32 %v1689, %v1691
        %v1693 = vrot.slane %v1685, %v1692
        %v1695 = vunpack.c.l.s4 1934713408
        %v1696 = vunpack.c.0.s8 %v1695
        %v1697 = vlaneseq
        %v1698 = vshrl.u32 %v1697, 7
        %v1699 = vsub.s32 %v1696, %v1698
        %v1700 = vrot.slane %v1686, %v1699
        %v1701 = vcombine.low %v1677, %v1693
        %v1702 = vcombine.high %v1677, %v1693
        %v1703 = vcombine.low %v1684, %v1700
        %v1704 = vcombine.high %v1684, %v1700
        %v1705 = vcombine.low %v1201, %v1208
        %v1707 = vunpack.c.l.s4 1983009808
        %v1708 = vunpack.c.0.s8 %v1707
        %v1709 = vlaneseq
        %v1710 = vshrl.u32 %v1709, 7
        %v1711 = vsub.s32 %v1708, %v1710
        %v1712 = vrot.slane %v1705, %v1711
        %v1713 = vcombine.low %v1225, %v1226
        %v1715 = vunpack.c.l.s4 1983009808
        %v1716 = vunpack.c.0.s8 %v1715
        %v1717 = vlaneseq
        %v1718 = vshrl.u32 %v1717, 7
        %v1719 = vsub.s32 %v1716, %v1718
        %v1720 = vrot.slane %v1713, %v1719
        %v1721 = vcombine.low %v1217, %v1224
        %v1723 = vunpack.c.l.s4 1983009808
        %v1724 = vunpack.c.0.s8 %v1723
        %v1725 = vlaneseq
        %v1726 = vshrl.u32 %v1725, 7
        %v1727 = vsub.s32 %v1724, %v1726
        %v1728 = vrot.slane %v1721, %v1727
        %v1729 = vcombine.low %v1227, %v1228
        %v1731 = vunpack.c.l.s4 1983009808
        %v1732 = vunpack.c.0.s8 %v1731
        %v1733 = vlaneseq
        %v1734 = vshrl.u32 %v1733, 7
        %v1735 = vsub.s32 %v1732, %v1734
        %v1736 = vrot.slane %v1729, %v1735
        %v1737 = vcombine.low %v1712, %v1720
        %v1738 = vcombine.high %v1712, %v1720
        %v1740 = vunpack.c.l.s4 1934713408
        %v1741 = vunpack.c.0.s8 %v1740
        %v1742 = vlaneseq
        %v1743 = vshrl.u32 %v1742, 7
        %v1744 = vsub.s32 %v1741, %v1743
        %v1745 = vrot.slane %v1737, %v1744
        %v1747 = vunpack.c.l.s4 1934713408
        %v1748 = vunpack.c.0.s8 %v1747
        %v1749 = vlaneseq
        %v1750 = vshrl.u32 %v1749, 7
        %v1751 = vsub.s32 %v1748, %v1750
        %v1752 = vrot.slane %v1738, %v1751
        %v1753 = vcombine.low %v1728, %v1736
        %v1754 = vcombine.high %v1728, %v1736
        %v1756 = vunpack.c.l.s4 1934713408
        %v1757 = vunpack.c.0.s8 %v1756
        %v1758 = vlaneseq
        %v1759 = vshrl.u32 %v1758, 7
        %v1760 = vsub.s32 %v1757, %v1759
        %v1761 = vrot.slane %v1753, %v1760
        %v1763 = vunpack.c.l.s4 1934713408
        %v1764 = vunpack.c.0.s8 %v1763
        %v1765 = vlaneseq
        %v1766 = vshrl.u32 %v1765, 7
        %v1767 = vsub.s32 %v1764, %v1766
        %v1768 = vrot.slane %v1754, %v1767
        %v1769 = vcombine.low %v1745, %v1761
        %v1770 = vcombine.high %v1745, %v1761
        %v1771 = vcombine.low %v1752, %v1768
        %v1772 = vcombine.high %v1752, %v1768
        %v1773 = vcombine.low %v1269, %v1276
        %v1775 = vunpack.c.l.s4 1983009808
        %v1776 = vunpack.c.0.s8 %v1775
        %v1777 = vlaneseq
        %v1778 = vshrl.u32 %v1777, 7
        %v1779 = vsub.s32 %v1776, %v1778
        %v1780 = vrot.slane %v1773, %v1779
        %v1781 = vcombine.low %v1293, %v1294
        %v1783 = vunpack.c.l.s4 1983009808
        %v1784 = vunpack.c.0.s8 %v1783
        %v1785 = vlaneseq
        %v1786 = vshrl.u32 %v1785, 7
        %v1787 = vsub.s32 %v1784, %v1786
        %v1788 = vrot.slane %v1781, %v1787
        %v1789 = vcombine.low %v1285, %v1292
        %v1791 = vunpack.c.l.s4 1983009808
        %v1792 = vunpack.c.0.s8 %v1791
        %v1793 = vlaneseq
        %v1794 = vshrl.u32 %v1793, 7
        %v1795 = vsub.s32 %v1792, %v1794
        %v1796 = vrot.slane %v1789, %v1795
        %v1797 = vcombine.low %v1295, %v1296
        %v1799 = vunpack.c.l.s4 1983009808
        %v1800 = vunpack.c.0.s8 %v1799
        %v1801 = vlaneseq
        %v1802 = vshrl.u32 %v1801, 7
        %v1803 = vsub.s32 %v1800, %v1802
        %v1804 = vrot.slane %v1797, %v1803
        %v1805 = vcombine.low %v1780, %v1788
        %v1806 = vcombine.high %v1780, %v1788
        %v1808 = vunpack.c.l.s4 1934713408
        %v1809 = vunpack.c.0.s8 %v1808
        %v1810 = vlaneseq
        %v1811 = vshrl.u32 %v1810, 7
        %v1812 = vsub.s32 %v1809, %v1811
        %v1813 = vrot.slane %v1805, %v1812
        %v1815 = vunpack.c.l.s4 1934713408
        %v1816 = vunpack.c.0.s8 %v1815
        %v1817 = vlaneseq
        %v1818 = vshrl.u32 %v1817, 7
        %v1819 = vsub.s32 %v1816, %v1818
        %v1820 = vrot.slane %v1806, %v1819
        %v1821 = vcombine.low %v1796, %v1804
        %v1822 = vcombine.high %v1796, %v1804
        %v1824 = vunpack.c.l.s4 1934713408
        %v1825 = vunpack.c.0.s8 %v1824
        %v1826 = vlaneseq
        %v1827 = vshrl.u32 %v1826, 7
        %v1828 = vsub.s32 %v1825, %v1827
        %v1829 = vrot.slane %v1821, %v1828
        %v1831 = vunpack.c.l.s4 1934713408
        %v1832 = vunpack.c.0.s8 %v1831
        %v1833 = vlaneseq
        %v1834 = vshrl.u32 %v1833, 7
        %v1835 = vsub.s32 %v1832, %v1834
        %v1836 = vrot.slane %v1822, %v1835
        %v1837 = vcombine.low %v1813, %v1829
        %v1838 = vcombine.high %v1813, %v1829
        %v1839 = vcombine.low %v1820, %v1836
        %v1840 = vcombine.high %v1820, %v1836
        %v1841 = vcombine.low %v1337, %v1344
        %v1843 = vunpack.c.l.s4 1983009808
        %v1844 = vunpack.c.0.s8 %v1843
        %v1845 = vlaneseq
        %v1846 = vshrl.u32 %v1845, 7
        %v1847 = vsub.s32 %v1844, %v1846
        %v1848 = vrot.slane %v1841, %v1847
        %v1849 = vcombine.low %v1361, %v1362
        %v1851 = vunpack.c.l.s4 1983009808
        %v1852 = vunpack.c.0.s8 %v1851
        %v1853 = vlaneseq
        %v1854 = vshrl.u32 %v1853, 7
        %v1855 = vsub.s32 %v1852, %v1854
        %v1856 = vrot.slane %v1849, %v1855
        %v1857 = vcombine.low %v1353, %v1360
        %v1859 = vunpack.c.l.s4 1983009808
        %v1860 = vunpack.c.0.s8 %v1859
        %v1861 = vlaneseq
        %v1862 = vshrl.u32 %v1861, 7
        %v1863 = vsub.s32 %v1860, %v1862
        %v1864 = vrot.slane %v1857, %v1863
        %v1865 = vcombine.low %v1363, %v1364
        %v1867 = vunpack.c.l.s4 1983009808
        %v1868 = vunpack.c.0.s8 %v1867
        %v1869 = vlaneseq
        %v1870 = vshrl.u32 %v1869, 7
        %v1871 = vsub.s32 %v1868, %v1870
        %v1872 = vrot.slane %v1865, %v1871
        %v1873 = vcombine.low %v1848, %v1856
        %v1874 = vcombine.high %v1848, %v1856
        %v1876 = vunpack.c.l.s4 1934713408
        %v1877 = vunpack.c.0.s8 %v1876
        %v1878 = vlaneseq
        %v1879 = vshrl.u32 %v1878, 7
        %v1880 = vsub.s32 %v1877, %v1879
        %v1881 = vrot.slane %v1873, %v1880
        %v1883 = vunpack.c.l.s4 1934713408
        %v1884 = vunpack.c.0.s8 %v1883
        %v1885 = vlaneseq
        %v1886 = vshrl.u32 %v1885, 7
        %v1887 = vsub.s32 %v1884, %v1886
        %v1888 = vrot.slane %v1874, %v1887
        %v1889 = vcombine.low %v1864, %v1872
        %v1890 = vcombine.high %v1864, %v1872
        %v1892 = vunpack.c.l.s4 1934713408
        %v1893 = vunpack.c.0.s8 %v1892
        %v1894 = vlaneseq
        %v1895 = vshrl.u32 %v1894, 7
        %v1896 = vsub.s32 %v1893, %v1895
        %v1897 = vrot.slane %v1889, %v1896
        %v1899 = vunpack.c.l.s4 1934713408
        %v1900 = vunpack.c.0.s8 %v1899
        %v1901 = vlaneseq
        %v1902 = vshrl.u32 %v1901, 7
        %v1903 = vsub.s32 %v1900, %v1902
        %v1904 = vrot.slane %v1890, %v1903
        %v1905 = vcombine.low %v1881, %v1897
        %v1906 = vcombine.high %v1881, %v1897
        %v1907 = vcombine.low %v1888, %v1904
        %v1908 = vcombine.high %v1888, %v1904
        %v1909 = vcombine.low %v1405, %v1412
        %v1911 = vunpack.c.l.s4 1983009808
        %v1912 = vunpack.c.0.s8 %v1911
        %v1913 = vlaneseq
        %v1914 = vshrl.u32 %v1913, 7
        %v1915 = vsub.s32 %v1912, %v1914
        %v1916 = vrot.slane %v1909, %v1915
        %v1917 = vcombine.low %v1429, %v1430
        %v1919 = vunpack.c.l.s4 1983009808
        %v1920 = vunpack.c.0.s8 %v1919
        %v1921 = vlaneseq
        %v1922 = vshrl.u32 %v1921, 7
        %v1923 = vsub.s32 %v1920, %v1922
        %v1924 = vrot.slane %v1917, %v1923
        %v1925 = vcombine.low %v1421, %v1428
        %v1927 = vunpack.c.l.s4 1983009808
        %v1928 = vunpack.c.0.s8 %v1927
        %v1929 = vlaneseq
        %v1930 = vshrl.u32 %v1929, 7
        %v1931 = vsub.s32 %v1928, %v1930
        %v1932 = vrot.slane %v1925, %v1931
        %v1933 = vcombine.low %v1431, %v1432
        %v1935 = vunpack.c.l.s4 1983009808
        %v1936 = vunpack.c.0.s8 %v1935
        %v1937 = vlaneseq
        %v1938 = vshrl.u32 %v1937, 7
        %v1939 = vsub.s32 %v1936, %v1938
        %v1940 = vrot.slane %v1933, %v1939
        %v1941 = vcombine.low %v1916, %v1924
        %v1942 = vcombine.high %v1916, %v1924
        %v1944 = vunpack.c.l.s4 1934713408
        %v1945 = vunpack.c.0.s8 %v1944
        %v1946 = vlaneseq
        %v1947 = vshrl.u32 %v1946, 7
        %v1948 = vsub.s32 %v1945, %v1947
        %v1949 = vrot.slane %v1941, %v1948
        %v1951 = vunpack.c.l.s4 1934713408
        %v1952 = vunpack.c.0.s8 %v1951
        %v1953 = vlaneseq
        %v1954 = vshrl.u32 %v1953, 7
        %v1955 = vsub.s32 %v1952, %v1954
        %v1956 = vrot.slane %v1942, %v1955
        %v1957 = vcombine.low %v1932, %v1940
        %v1958 = vcombine.high %v1932, %v1940
        %v1960 = vunpack.c.l.s4 1934713408
        %v1961 = vunpack.c.0.s8 %v1960
        %v1962 = vlaneseq
        %v1963 = vshrl.u32 %v1962, 7
        %v1964 = vsub.s32 %v1961, %v1963
        %v1965 = vrot.slane %v1957, %v1964
        %v1967 = vunpack.c.l.s4 1934713408
        %v1968 = vunpack.c.0.s8 %v1967
        %v1969 = vlaneseq
        %v1970 = vshrl.u32 %v1969, 7
        %v1971 = vsub.s32 %v1968, %v1970
        %v1972 = vrot.slane %v1958, %v1971
        %v1973 = vcombine.low %v1949, %v1965
        %v1974 = vcombine.high %v1949, %v1965
        %v1975 = vcombine.low %v1956, %v1972
        %v1976 = vcombine.high %v1956, %v1972
        %1977 = vrot.lane.b32.xlu0 %v779, 96
        %v1978 = vpop.permute.xlu0 %1977
        %1979 = vrot.lane.b32.xlu0 %v782, 96
        %v1980 = vpop.permute.xlu0 %1979
        %1981 = vrot.lane.b32.xlu0 %v787, 96
        %v1982 = vpop.permute.xlu0 %1981
        %1983 = vrot.lane.b32.xlu0 %v790, 96
        %v1984 = vpop.permute.xlu0 %1983
        %1985 = vrot.lane.b32.xlu0 %v795, 96
        %v1986 = vpop.permute.xlu0 %1985
        %1987 = vrot.lane.b32.xlu0 %v798, 96
        %v1988 = vpop.permute.xlu0 %1987
        %1989 = vrot.lane.b32.xlu0 %v803, 96
        %v1990 = vpop.permute.xlu0 %1989
        %1991 = vrot.lane.b32.xlu0 %v806, 96
        %v1992 = vpop.permute.xlu0 %1991
        %1993 = vrot.lane.b32.xlu0 %v818, 96
        %v1994 = vpop.permute.xlu0 %1993
        %1995 = vrot.lane.b32.xlu0 %v820, 96
        %v1996 = vpop.permute.xlu0 %1995
        %1997 = vrot.lane.b32.xlu0 %v822, 96
        %v1998 = vpop.permute.xlu0 %1997
        %1999 = vrot.lane.b32.xlu0 %v824, 96
        %v2000 = vpop.permute.xlu0 %1999
        %2001 = vrot.lane.b32.xlu0 %v826, 96
        %v2002 = vpop.permute.xlu0 %2001
        %2003 = vrot.lane.b32.xlu0 %v828, 96
        %v2004 = vpop.permute.xlu0 %2003
        %2005 = vrot.lane.b32.xlu0 %v830, 96
        %v2006 = vpop.permute.xlu0 %2005
        %2007 = vrot.lane.b32.xlu0 %v832, 96
        %v2008 = vpop.permute.xlu0 %2007
        %2009 = vrot.lane.b32.xlu0 %v842, 96
        %v2010 = vpop.permute.xlu0 %2009
        %2011 = vrot.lane.b32.xlu0 %v844, 96
        %v2012 = vpop.permute.xlu0 %2011
        %2013 = vrot.lane.b32.xlu0 %v846, 96
        %v2014 = vpop.permute.xlu0 %2013
        %2015 = vrot.lane.b32.xlu0 %v848, 96
        %v2016 = vpop.permute.xlu0 %2015
        %2017 = vrot.lane.b32.xlu0 %v850, 96
        %v2018 = vpop.permute.xlu0 %2017
        %2019 = vrot.lane.b32.xlu0 %v852, 96
        %v2020 = vpop.permute.xlu0 %2019
        %2021 = vrot.lane.b32.xlu0 %v854, 96
        %v2022 = vpop.permute.xlu0 %2021
        %2023 = vrot.lane.b32.xlu0 %v856, 96
        %v2024 = vpop.permute.xlu0 %2023
        %2025 = vrot.lane.b32.xlu0 %v866, 96
        %v2026 = vpop.permute.xlu0 %2025
        %2027 = vrot.lane.b32.xlu0 %v868, 96
        %v2028 = vpop.permute.xlu0 %2027
        %2029 = vrot.lane.b32.xlu0 %v870, 96
        %v2030 = vpop.permute.xlu0 %2029
        %2031 = vrot.lane.b32.xlu0 %v872, 96
        %v2032 = vpop.permute.xlu0 %2031
        %2033 = vrot.lane.b32.xlu0 %v874, 96
        %v2034 = vpop.permute.xlu0 %2033
        %2035 = vrot.lane.b32.xlu0 %v876, 96
        %v2036 = vpop.permute.xlu0 %2035
        %2037 = vrot.lane.b32.xlu0 %v878, 96
        %v2038 = vpop.permute.xlu0 %2037
        %2039 = vrot.lane.b32.xlu0 %v880, 96
        %v2040 = vpop.permute.xlu0 %2039
        %v2073 = vcombine.low %v1978, %v2010
        %v2074 = vcombine.high %v1978, %v2010
        %v2076 = vunpack.c.l.s4 1983009808
        %v2077 = vunpack.c.0.s8 %v2076
        %v2078 = vlaneseq
        %v2079 = vshrl.u32 %v2078, 7
        %v2080 = vsub.s32 %v2077, %v2079
        %v2081 = vrot.slane %v2073, %v2080
        %v2083 = vunpack.c.l.s4 1983009808
        %v2084 = vunpack.c.0.s8 %v2083
        %v2085 = vlaneseq
        %v2086 = vshrl.u32 %v2085, 7
        %v2087 = vsub.s32 %v2084, %v2086
        %v2088 = vrot.slane %v2074, %v2087
        %v2089 = vcombine.low %v1994, %v2026
        %v2090 = vcombine.high %v1994, %v2026
        %v2092 = vunpack.c.l.s4 1983009808
        %v2093 = vunpack.c.0.s8 %v2092
        %v2094 = vlaneseq
        %v2095 = vshrl.u32 %v2094, 7
        %v2096 = vsub.s32 %v2093, %v2095
        %v2097 = vrot.slane %v2089, %v2096
        %v2099 = vunpack.c.l.s4 1983009808
        %v2100 = vunpack.c.0.s8 %v2099
        %v2101 = vlaneseq
        %v2102 = vshrl.u32 %v2101, 7
        %v2103 = vsub.s32 %v2100, %v2102
        %v2104 = vrot.slane %v2090, %v2103
        %v2105 = vcombine.low %v2081, %v2097
        %v2106 = vcombine.high %v2081, %v2097
        %v2108 = vunpack.c.l.s4 1934713408
        %v2109 = vunpack.c.0.s8 %v2108
        %v2110 = vlaneseq
        %v2111 = vshrl.u32 %v2110, 7
        %v2112 = vsub.s32 %v2109, %v2111
        %v2113 = vrot.slane %v2105, %v2112
        %v2115 = vunpack.c.l.s4 1934713408
        %v2116 = vunpack.c.0.s8 %v2115
        %v2117 = vlaneseq
        %v2118 = vshrl.u32 %v2117, 7
        %v2119 = vsub.s32 %v2116, %v2118
        %v2120 = vrot.slane %v2106, %v2119
        %v2121 = vcombine.low %v2088, %v2104
        %v2122 = vcombine.high %v2088, %v2104
        %v2124 = vunpack.c.l.s4 1934713408
        %v2125 = vunpack.c.0.s8 %v2124
        %v2126 = vlaneseq
        %v2127 = vshrl.u32 %v2126, 7
        %v2128 = vsub.s32 %v2125, %v2127
        %v2129 = vrot.slane %v2121, %v2128
        %v2131 = vunpack.c.l.s4 1934713408
        %v2132 = vunpack.c.0.s8 %v2131
        %v2133 = vlaneseq
        %v2134 = vshrl.u32 %v2133, 7
        %v2135 = vsub.s32 %v2132, %v2134
        %v2136 = vrot.slane %v2122, %v2135
        %v2137 = vcombine.high %v2113, 0.0
        %v2138 = vcombine.high %v2120, 0.0
        %v2139 = vcombine.high %v2129, 0.0
        %v2140 = vcombine.high %v2136, 0.0
        %v2141 = vcombine.low %v1980, %v2012
        %v2142 = vcombine.high %v1980, %v2012
        %v2144 = vunpack.c.l.s4 1983009808
        %v2145 = vunpack.c.0.s8 %v2144
        %v2146 = vlaneseq
        %v2147 = vshrl.u32 %v2146, 7
        %v2148 = vsub.s32 %v2145, %v2147
        %v2149 = vrot.slane %v2141, %v2148
        %v2151 = vunpack.c.l.s4 1983009808
        %v2152 = vunpack.c.0.s8 %v2151
        %v2153 = vlaneseq
        %v2154 = vshrl.u32 %v2153, 7
        %v2155 = vsub.s32 %v2152, %v2154
        %v2156 = vrot.slane %v2142, %v2155
        %v2157 = vcombine.low %v1996, %v2028
        %v2158 = vcombine.high %v1996, %v2028
        %v2160 = vunpack.c.l.s4 1983009808
        %v2161 = vunpack.c.0.s8 %v2160
        %v2162 = vlaneseq
        %v2163 = vshrl.u32 %v2162, 7
        %v2164 = vsub.s32 %v2161, %v2163
        %v2165 = vrot.slane %v2157, %v2164
        %v2167 = vunpack.c.l.s4 1983009808
        %v2168 = vunpack.c.0.s8 %v2167
        %v2169 = vlaneseq
        %v2170 = vshrl.u32 %v2169, 7
        %v2171 = vsub.s32 %v2168, %v2170
        %v2172 = vrot.slane %v2158, %v2171
        %v2173 = vcombine.low %v2149, %v2165
        %v2174 = vcombine.high %v2149, %v2165
        %v2176 = vunpack.c.l.s4 1934713408
        %v2177 = vunpack.c.0.s8 %v2176
        %v2178 = vlaneseq
        %v2179 = vshrl.u32 %v2178, 7
        %v2180 = vsub.s32 %v2177, %v2179
        %v2181 = vrot.slane %v2173, %v2180
        %v2183 = vunpack.c.l.s4 1934713408
        %v2184 = vunpack.c.0.s8 %v2183
        %v2185 = vlaneseq
        %v2186 = vshrl.u32 %v2185, 7
        %v2187 = vsub.s32 %v2184, %v2186
        %v2188 = vrot.slane %v2174, %v2187
        %v2189 = vcombine.low %v2156, %v2172
        %v2190 = vcombine.high %v2156, %v2172
        %v2192 = vunpack.c.l.s4 1934713408
        %v2193 = vunpack.c.0.s8 %v2192
        %v2194 = vlaneseq
        %v2195 = vshrl.u32 %v2194, 7
        %v2196 = vsub.s32 %v2193, %v2195
        %v2197 = vrot.slane %v2189, %v2196
        %v2199 = vunpack.c.l.s4 1934713408
        %v2200 = vunpack.c.0.s8 %v2199
        %v2201 = vlaneseq
        %v2202 = vshrl.u32 %v2201, 7
        %v2203 = vsub.s32 %v2200, %v2202
        %v2204 = vrot.slane %v2190, %v2203
        %v2205 = vcombine.high %v2181, 0.0
        %v2206 = vcombine.high %v2188, 0.0
        %v2207 = vcombine.high %v2197, 0.0
        %v2208 = vcombine.high %v2204, 0.0
        %v2209 = vcombine.low %v1982, %v2014
        %v2210 = vcombine.high %v1982, %v2014
        %v2212 = vunpack.c.l.s4 1983009808
        %v2213 = vunpack.c.0.s8 %v2212
        %v2214 = vlaneseq
        %v2215 = vshrl.u32 %v2214, 7
        %v2216 = vsub.s32 %v2213, %v2215
        %v2217 = vrot.slane %v2209, %v2216
        %v2219 = vunpack.c.l.s4 1983009808
        %v2220 = vunpack.c.0.s8 %v2219
        %v2221 = vlaneseq
        %v2222 = vshrl.u32 %v2221, 7
        %v2223 = vsub.s32 %v2220, %v2222
        %v2224 = vrot.slane %v2210, %v2223
        %v2225 = vcombine.low %v1998, %v2030
        %v2226 = vcombine.high %v1998, %v2030
        %v2228 = vunpack.c.l.s4 1983009808
        %v2229 = vunpack.c.0.s8 %v2228
        %v2230 = vlaneseq
        %v2231 = vshrl.u32 %v2230, 7
        %v2232 = vsub.s32 %v2229, %v2231
        %v2233 = vrot.slane %v2225, %v2232
        %v2235 = vunpack.c.l.s4 1983009808
        %v2236 = vunpack.c.0.s8 %v2235
        %v2237 = vlaneseq
        %v2238 = vshrl.u32 %v2237, 7
        %v2239 = vsub.s32 %v2236, %v2238
        %v2240 = vrot.slane %v2226, %v2239
        %v2241 = vcombine.low %v2217, %v2233
        %v2242 = vcombine.high %v2217, %v2233
        %v2244 = vunpack.c.l.s4 1934713408
        %v2245 = vunpack.c.0.s8 %v2244
        %v2246 = vlaneseq
        %v2247 = vshrl.u32 %v2246, 7
        %v2248 = vsub.s32 %v2245, %v2247
        %v2249 = vrot.slane %v2241, %v2248
        %v2251 = vunpack.c.l.s4 1934713408
        %v2252 = vunpack.c.0.s8 %v2251
        %v2253 = vlaneseq
        %v2254 = vshrl.u32 %v2253, 7
        %v2255 = vsub.s32 %v2252, %v2254
        %v2256 = vrot.slane %v2242, %v2255
        %v2257 = vcombine.low %v2224, %v2240
        %v2258 = vcombine.high %v2224, %v2240
        %v2260 = vunpack.c.l.s4 1934713408
        %v2261 = vunpack.c.0.s8 %v2260
        %v2262 = vlaneseq
        %v2263 = vshrl.u32 %v2262, 7
        %v2264 = vsub.s32 %v2261, %v2263
        %v2265 = vrot.slane %v2257, %v2264
        %v2267 = vunpack.c.l.s4 1934713408
        %v2268 = vunpack.c.0.s8 %v2267
        %v2269 = vlaneseq
        %v2270 = vshrl.u32 %v2269, 7
        %v2271 = vsub.s32 %v2268, %v2270
        %v2272 = vrot.slane %v2258, %v2271
        %v2273 = vcombine.high %v2249, 0.0
        %v2274 = vcombine.high %v2256, 0.0
        %v2275 = vcombine.high %v2265, 0.0
        %v2276 = vcombine.high %v2272, 0.0
        %v2277 = vcombine.low %v1984, %v2016
        %v2278 = vcombine.high %v1984, %v2016
        %v2280 = vunpack.c.l.s4 1983009808
        %v2281 = vunpack.c.0.s8 %v2280
        %v2282 = vlaneseq
        %v2283 = vshrl.u32 %v2282, 7
        %v2284 = vsub.s32 %v2281, %v2283
        %v2285 = vrot.slane %v2277, %v2284
        %v2287 = vunpack.c.l.s4 1983009808
        %v2288 = vunpack.c.0.s8 %v2287
        %v2289 = vlaneseq
        %v2290 = vshrl.u32 %v2289, 7
        %v2291 = vsub.s32 %v2288, %v2290
        %v2292 = vrot.slane %v2278, %v2291
        %v2293 = vcombine.low %v2000, %v2032
        %v2294 = vcombine.high %v2000, %v2032
        %v2296 = vunpack.c.l.s4 1983009808
        %v2297 = vunpack.c.0.s8 %v2296
        %v2298 = vlaneseq
        %v2299 = vshrl.u32 %v2298, 7
        %v2300 = vsub.s32 %v2297, %v2299
        %v2301 = vrot.slane %v2293, %v2300
        %v2303 = vunpack.c.l.s4 1983009808
        %v2304 = vunpack.c.0.s8 %v2303
        %v2305 = vlaneseq
        %v2306 = vshrl.u32 %v2305, 7
        %v2307 = vsub.s32 %v2304, %v2306
        %v2308 = vrot.slane %v2294, %v2307
        %v2309 = vcombine.low %v2285, %v2301
        %v2310 = vcombine.high %v2285, %v2301
        %v2312 = vunpack.c.l.s4 1934713408
        %v2313 = vunpack.c.0.s8 %v2312
        %v2314 = vlaneseq
        %v2315 = vshrl.u32 %v2314, 7
        %v2316 = vsub.s32 %v2313, %v2315
        %v2317 = vrot.slane %v2309, %v2316
        %v2319 = vunpack.c.l.s4 1934713408
        %v2320 = vunpack.c.0.s8 %v2319
        %v2321 = vlaneseq
        %v2322 = vshrl.u32 %v2321, 7
        %v2323 = vsub.s32 %v2320, %v2322
        %v2324 = vrot.slane %v2310, %v2323
        %v2325 = vcombine.low %v2292, %v2308
        %v2326 = vcombine.high %v2292, %v2308
        %v2328 = vunpack.c.l.s4 1934713408
        %v2329 = vunpack.c.0.s8 %v2328
        %v2330 = vlaneseq
        %v2331 = vshrl.u32 %v2330, 7
        %v2332 = vsub.s32 %v2329, %v2331
        %v2333 = vrot.slane %v2325, %v2332
        %v2335 = vunpack.c.l.s4 1934713408
        %v2336 = vunpack.c.0.s8 %v2335
        %v2337 = vlaneseq
        %v2338 = vshrl.u32 %v2337, 7
        %v2339 = vsub.s32 %v2336, %v2338
        %v2340 = vrot.slane %v2326, %v2339
        %v2341 = vcombine.high %v2317, 0.0
        %v2342 = vcombine.high %v2324, 0.0
        %v2343 = vcombine.high %v2333, 0.0
        %v2344 = vcombine.high %v2340, 0.0
        %v2345 = vcombine.low %v1986, %v2018
        %v2346 = vcombine.high %v1986, %v2018
        %v2348 = vunpack.c.l.s4 1983009808
        %v2349 = vunpack.c.0.s8 %v2348
        %v2350 = vlaneseq
        %v2351 = vshrl.u32 %v2350, 7
        %v2352 = vsub.s32 %v2349, %v2351
        %v2353 = vrot.slane %v2345, %v2352
        %v2355 = vunpack.c.l.s4 1983009808
        %v2356 = vunpack.c.0.s8 %v2355
        %v2357 = vlaneseq
        %v2358 = vshrl.u32 %v2357, 7
        %v2359 = vsub.s32 %v2356, %v2358
        %v2360 = vrot.slane %v2346, %v2359
        %v2361 = vcombine.low %v2002, %v2034
        %v2362 = vcombine.high %v2002, %v2034
        %v2364 = vunpack.c.l.s4 1983009808
        %v2365 = vunpack.c.0.s8 %v2364
        %v2366 = vlaneseq
        %v2367 = vshrl.u32 %v2366, 7
        %v2368 = vsub.s32 %v2365, %v2367
        %v2369 = vrot.slane %v2361, %v2368
        %v2371 = vunpack.c.l.s4 1983009808
        %v2372 = vunpack.c.0.s8 %v2371
        %v2373 = vlaneseq
        %v2374 = vshrl.u32 %v2373, 7
        %v2375 = vsub.s32 %v2372, %v2374
        %v2376 = vrot.slane %v2362, %v2375
        %v2377 = vcombine.low %v2353, %v2369
        %v2378 = vcombine.high %v2353, %v2369
        %v2380 = vunpack.c.l.s4 1934713408
        %v2381 = vunpack.c.0.s8 %v2380
        %v2382 = vlaneseq
        %v2383 = vshrl.u32 %v2382, 7
        %v2384 = vsub.s32 %v2381, %v2383
        %v2385 = vrot.slane %v2377, %v2384
        %v2387 = vunpack.c.l.s4 1934713408
        %v2388 = vunpack.c.0.s8 %v2387
        %v2389 = vlaneseq
        %v2390 = vshrl.u32 %v2389, 7
        %v2391 = vsub.s32 %v2388, %v2390
        %v2392 = vrot.slane %v2378, %v2391
        %v2393 = vcombine.low %v2360, %v2376
        %v2394 = vcombine.high %v2360, %v2376
        %v2396 = vunpack.c.l.s4 1934713408
        %v2397 = vunpack.c.0.s8 %v2396
        %v2398 = vlaneseq
        %v2399 = vshrl.u32 %v2398, 7
        %v2400 = vsub.s32 %v2397, %v2399
        %v2401 = vrot.slane %v2393, %v2400
        %v2403 = vunpack.c.l.s4 1934713408
        %v2404 = vunpack.c.0.s8 %v2403
        %v2405 = vlaneseq
        %v2406 = vshrl.u32 %v2405, 7
        %v2407 = vsub.s32 %v2404, %v2406
        %v2408 = vrot.slane %v2394, %v2407
        %v2409 = vcombine.high %v2385, 0.0
        %v2410 = vcombine.high %v2392, 0.0
        %v2411 = vcombine.high %v2401, 0.0
        %v2412 = vcombine.high %v2408, 0.0
        %v2413 = vcombine.low %v1988, %v2020
        %v2414 = vcombine.high %v1988, %v2020
        %v2416 = vunpack.c.l.s4 1983009808
        %v2417 = vunpack.c.0.s8 %v2416
        %v2418 = vlaneseq
        %v2419 = vshrl.u32 %v2418, 7
        %v2420 = vsub.s32 %v2417, %v2419
        %v2421 = vrot.slane %v2413, %v2420
        %v2423 = vunpack.c.l.s4 1983009808
        %v2424 = vunpack.c.0.s8 %v2423
        %v2425 = vlaneseq
        %v2426 = vshrl.u32 %v2425, 7
        %v2427 = vsub.s32 %v2424, %v2426
        %v2428 = vrot.slane %v2414, %v2427
        %v2429 = vcombine.low %v2004, %v2036
        %v2430 = vcombine.high %v2004, %v2036
        %v2432 = vunpack.c.l.s4 1983009808
        %v2433 = vunpack.c.0.s8 %v2432
        %v2434 = vlaneseq
        %v2435 = vshrl.u32 %v2434, 7
        %v2436 = vsub.s32 %v2433, %v2435
        %v2437 = vrot.slane %v2429, %v2436
        %v2439 = vunpack.c.l.s4 1983009808
        %v2440 = vunpack.c.0.s8 %v2439
        %v2441 = vlaneseq
        %v2442 = vshrl.u32 %v2441, 7
        %v2443 = vsub.s32 %v2440, %v2442
        %v2444 = vrot.slane %v2430, %v2443
        %v2445 = vcombine.low %v2421, %v2437
        %v2446 = vcombine.high %v2421, %v2437
        %v2448 = vunpack.c.l.s4 1934713408
        %v2449 = vunpack.c.0.s8 %v2448
        %v2450 = vlaneseq
        %v2451 = vshrl.u32 %v2450, 7
        %v2452 = vsub.s32 %v2449, %v2451
        %v2453 = vrot.slane %v2445, %v2452
        %v2455 = vunpack.c.l.s4 1934713408
        %v2456 = vunpack.c.0.s8 %v2455
        %v2457 = vlaneseq
        %v2458 = vshrl.u32 %v2457, 7
        %v2459 = vsub.s32 %v2456, %v2458
        %v2460 = vrot.slane %v2446, %v2459
        %v2461 = vcombine.low %v2428, %v2444
        %v2462 = vcombine.high %v2428, %v2444
        %v2464 = vunpack.c.l.s4 1934713408
        %v2465 = vunpack.c.0.s8 %v2464
        %v2466 = vlaneseq
        %v2467 = vshrl.u32 %v2466, 7
        %v2468 = vsub.s32 %v2465, %v2467
        %v2469 = vrot.slane %v2461, %v2468
        %v2471 = vunpack.c.l.s4 1934713408
        %v2472 = vunpack.c.0.s8 %v2471
        %v2473 = vlaneseq
        %v2474 = vshrl.u32 %v2473, 7
        %v2475 = vsub.s32 %v2472, %v2474
        %v2476 = vrot.slane %v2462, %v2475
        %v2477 = vcombine.high %v2453, 0.0
        %v2478 = vcombine.high %v2460, 0.0
        %v2479 = vcombine.high %v2469, 0.0
        %v2480 = vcombine.high %v2476, 0.0
        %v2481 = vcombine.low %v1990, %v2022
        %v2482 = vcombine.high %v1990, %v2022
        %v2484 = vunpack.c.l.s4 1983009808
        %v2485 = vunpack.c.0.s8 %v2484
        %v2486 = vlaneseq
        %v2487 = vshrl.u32 %v2486, 7
        %v2488 = vsub.s32 %v2485, %v2487
        %v2489 = vrot.slane %v2481, %v2488
        %v2491 = vunpack.c.l.s4 1983009808
        %v2492 = vunpack.c.0.s8 %v2491
        %v2493 = vlaneseq
        %v2494 = vshrl.u32 %v2493, 7
        %v2495 = vsub.s32 %v2492, %v2494
        %v2496 = vrot.slane %v2482, %v2495
        %v2497 = vcombine.low %v2006, %v2038
        %v2498 = vcombine.high %v2006, %v2038
        %v2500 = vunpack.c.l.s4 1983009808
        %v2501 = vunpack.c.0.s8 %v2500
        %v2502 = vlaneseq
        %v2503 = vshrl.u32 %v2502, 7
        %v2504 = vsub.s32 %v2501, %v2503
        %v2505 = vrot.slane %v2497, %v2504
        %v2507 = vunpack.c.l.s4 1983009808
        %v2508 = vunpack.c.0.s8 %v2507
        %v2509 = vlaneseq
        %v2510 = vshrl.u32 %v2509, 7
        %v2511 = vsub.s32 %v2508, %v2510
        %v2512 = vrot.slane %v2498, %v2511
        %v2513 = vcombine.low %v2489, %v2505
        %v2514 = vcombine.high %v2489, %v2505
        %v2516 = vunpack.c.l.s4 1934713408
        %v2517 = vunpack.c.0.s8 %v2516
        %v2518 = vlaneseq
        %v2519 = vshrl.u32 %v2518, 7
        %v2520 = vsub.s32 %v2517, %v2519
        %v2521 = vrot.slane %v2513, %v2520
        %v2523 = vunpack.c.l.s4 1934713408
        %v2524 = vunpack.c.0.s8 %v2523
        %v2525 = vlaneseq
        %v2526 = vshrl.u32 %v2525, 7
        %v2527 = vsub.s32 %v2524, %v2526
        %v2528 = vrot.slane %v2514, %v2527
        %v2529 = vcombine.low %v2496, %v2512
        %v2530 = vcombine.high %v2496, %v2512
        %v2532 = vunpack.c.l.s4 1934713408
        %v2533 = vunpack.c.0.s8 %v2532
        %v2534 = vlaneseq
        %v2535 = vshrl.u32 %v2534, 7
        %v2536 = vsub.s32 %v2533, %v2535
        %v2537 = vrot.slane %v2529, %v2536
        %v2539 = vunpack.c.l.s4 1934713408
        %v2540 = vunpack.c.0.s8 %v2539
        %v2541 = vlaneseq
        %v2542 = vshrl.u32 %v2541, 7
        %v2543 = vsub.s32 %v2540, %v2542
        %v2544 = vrot.slane %v2530, %v2543
        %v2545 = vcombine.high %v2521, 0.0
        %v2546 = vcombine.high %v2528, 0.0
        %v2547 = vcombine.high %v2537, 0.0
        %v2548 = vcombine.high %v2544, 0.0
        %v2549 = vcombine.low %v1992, %v2024
        %v2550 = vcombine.high %v1992, %v2024
        %v2552 = vunpack.c.l.s4 1983009808
        %v2553 = vunpack.c.0.s8 %v2552
        %v2554 = vlaneseq
        %v2555 = vshrl.u32 %v2554, 7
        %v2556 = vsub.s32 %v2553, %v2555
        %v2557 = vrot.slane %v2549, %v2556
        %v2559 = vunpack.c.l.s4 1983009808
        %v2560 = vunpack.c.0.s8 %v2559
        %v2561 = vlaneseq
        %v2562 = vshrl.u32 %v2561, 7
        %v2563 = vsub.s32 %v2560, %v2562
        %v2564 = vrot.slane %v2550, %v2563
        %v2565 = vcombine.low %v2008, %v2040
        %v2566 = vcombine.high %v2008, %v2040
        %v2568 = vunpack.c.l.s4 1983009808
        %v2569 = vunpack.c.0.s8 %v2568
        %v2570 = vlaneseq
        %v2571 = vshrl.u32 %v2570, 7
        %v2572 = vsub.s32 %v2569, %v2571
        %v2573 = vrot.slane %v2565, %v2572
        %v2575 = vunpack.c.l.s4 1983009808
        %v2576 = vunpack.c.0.s8 %v2575
        %v2577 = vlaneseq
        %v2578 = vshrl.u32 %v2577, 7
        %v2579 = vsub.s32 %v2576, %v2578
        %v2580 = vrot.slane %v2566, %v2579
        %v2581 = vcombine.low %v2557, %v2573
        %v2582 = vcombine.high %v2557, %v2573
        %v2584 = vunpack.c.l.s4 1934713408
        %v2585 = vunpack.c.0.s8 %v2584
        %v2586 = vlaneseq
        %v2587 = vshrl.u32 %v2586, 7
        %v2588 = vsub.s32 %v2585, %v2587
        %v2589 = vrot.slane %v2581, %v2588
        %v2591 = vunpack.c.l.s4 1934713408
        %v2592 = vunpack.c.0.s8 %v2591
        %v2593 = vlaneseq
        %v2594 = vshrl.u32 %v2593, 7
        %v2595 = vsub.s32 %v2592, %v2594
        %v2596 = vrot.slane %v2582, %v2595
        %v2597 = vcombine.low %v2564, %v2580
        %v2598 = vcombine.high %v2564, %v2580
        %v2600 = vunpack.c.l.s4 1934713408
        %v2601 = vunpack.c.0.s8 %v2600
        %v2602 = vlaneseq
        %v2603 = vshrl.u32 %v2602, 7
        %v2604 = vsub.s32 %v2601, %v2603
        %v2605 = vrot.slane %v2597, %v2604
        %v2607 = vunpack.c.l.s4 1934713408
        %v2608 = vunpack.c.0.s8 %v2607
        %v2609 = vlaneseq
        %v2610 = vshrl.u32 %v2609, 7
        %v2611 = vsub.s32 %v2608, %v2610
        %v2612 = vrot.slane %v2598, %v2611
        %v2613 = vcombine.high %v2589, 0.0
        %v2614 = vcombine.high %v2596, 0.0
        %v2615 = vcombine.high %v2605, 0.0
        %v2616 = vcombine.high %v2612, 0.0
        %v2617 = vcombine.low %v2113, %v2120
        %v2619 = vunpack.c.l.s4 1983009808
        %v2620 = vunpack.c.0.s8 %v2619
        %v2621 = vlaneseq
        %v2622 = vshrl.u32 %v2621, 7
        %v2623 = vsub.s32 %v2620, %v2622
        %v2624 = vrot.slane %v2617, %v2623
        %v2625 = vcombine.low %v2137, %v2138
        %v2627 = vunpack.c.l.s4 1983009808
        %v2628 = vunpack.c.0.s8 %v2627
        %v2629 = vlaneseq
        %v2630 = vshrl.u32 %v2629, 7
        %v2631 = vsub.s32 %v2628, %v2630
        %v2632 = vrot.slane %v2625, %v2631
        %v2633 = vcombine.low %v2129, %v2136
        %v2635 = vunpack.c.l.s4 1983009808
        %v2636 = vunpack.c.0.s8 %v2635
        %v2637 = vlaneseq
        %v2638 = vshrl.u32 %v2637, 7
        %v2639 = vsub.s32 %v2636, %v2638
        %v2640 = vrot.slane %v2633, %v2639
        %v2641 = vcombine.low %v2139, %v2140
        %v2643 = vunpack.c.l.s4 1983009808
        %v2644 = vunpack.c.0.s8 %v2643
        %v2645 = vlaneseq
        %v2646 = vshrl.u32 %v2645, 7
        %v2647 = vsub.s32 %v2644, %v2646
        %v2648 = vrot.slane %v2641, %v2647
        %v2649 = vcombine.low %v2624, %v2632
        %v2650 = vcombine.high %v2624, %v2632
        %v2652 = vunpack.c.l.s4 1934713408
        %v2653 = vunpack.c.0.s8 %v2652
        %v2654 = vlaneseq
        %v2655 = vshrl.u32 %v2654, 7
        %v2656 = vsub.s32 %v2653, %v2655
        %v2657 = vrot.slane %v2649, %v2656
        %v2659 = vunpack.c.l.s4 1934713408
        %v2660 = vunpack.c.0.s8 %v2659
        %v2661 = vlaneseq
        %v2662 = vshrl.u32 %v2661, 7
        %v2663 = vsub.s32 %v2660, %v2662
        %v2664 = vrot.slane %v2650, %v2663
        %v2665 = vcombine.low %v2640, %v2648
        %v2666 = vcombine.high %v2640, %v2648
        %v2668 = vunpack.c.l.s4 1934713408
        %v2669 = vunpack.c.0.s8 %v2668
        %v2670 = vlaneseq
        %v2671 = vshrl.u32 %v2670, 7
        %v2672 = vsub.s32 %v2669, %v2671
        %v2673 = vrot.slane %v2665, %v2672
        %v2675 = vunpack.c.l.s4 1934713408
        %v2676 = vunpack.c.0.s8 %v2675
        %v2677 = vlaneseq
        %v2678 = vshrl.u32 %v2677, 7
        %v2679 = vsub.s32 %v2676, %v2678
        %v2680 = vrot.slane %v2666, %v2679
        %v2681 = vcombine.low %v2657, %v2673
        %v2682 = vcombine.high %v2657, %v2673
        %v2683 = vcombine.low %v2664, %v2680
        %v2684 = vcombine.high %v2664, %v2680
        %v2685 = vcombine.low %v2181, %v2188
        %v2687 = vunpack.c.l.s4 1983009808
        %v2688 = vunpack.c.0.s8 %v2687
        %v2689 = vlaneseq
        %v2690 = vshrl.u32 %v2689, 7
        %v2691 = vsub.s32 %v2688, %v2690
        %v2692 = vrot.slane %v2685, %v2691
        %v2693 = vcombine.low %v2205, %v2206
        %v2695 = vunpack.c.l.s4 1983009808
        %v2696 = vunpack.c.0.s8 %v2695
        %v2697 = vlaneseq
        %v2698 = vshrl.u32 %v2697, 7
        %v2699 = vsub.s32 %v2696, %v2698
        %v2700 = vrot.slane %v2693, %v2699
        %v2701 = vcombine.low %v2197, %v2204
        %v2703 = vunpack.c.l.s4 1983009808
        %v2704 = vunpack.c.0.s8 %v2703
        %v2705 = vlaneseq
        %v2706 = vshrl.u32 %v2705, 7
        %v2707 = vsub.s32 %v2704, %v2706
        %v2708 = vrot.slane %v2701, %v2707
        %v2709 = vcombine.low %v2207, %v2208
        %v2711 = vunpack.c.l.s4 1983009808
        %v2712 = vunpack.c.0.s8 %v2711
        %v2713 = vlaneseq
        %v2714 = vshrl.u32 %v2713, 7
        %v2715 = vsub.s32 %v2712, %v2714
        %v2716 = vrot.slane %v2709, %v2715
        %v2717 = vcombine.low %v2692, %v2700
        %v2718 = vcombine.high %v2692, %v2700
        %v2720 = vunpack.c.l.s4 1934713408
        %v2721 = vunpack.c.0.s8 %v2720
        %v2722 = vlaneseq
        %v2723 = vshrl.u32 %v2722, 7
        %v2724 = vsub.s32 %v2721, %v2723
        %v2725 = vrot.slane %v2717, %v2724
        %v2727 = vunpack.c.l.s4 1934713408
        %v2728 = vunpack.c.0.s8 %v2727
        %v2729 = vlaneseq
        %v2730 = vshrl.u32 %v2729, 7
        %v2731 = vsub.s32 %v2728, %v2730
        %v2732 = vrot.slane %v2718, %v2731
        %v2733 = vcombine.low %v2708, %v2716
        %v2734 = vcombine.high %v2708, %v2716
        %v2736 = vunpack.c.l.s4 1934713408
        %v2737 = vunpack.c.0.s8 %v2736
        %v2738 = vlaneseq
        %v2739 = vshrl.u32 %v2738, 7
        %v2740 = vsub.s32 %v2737, %v2739
        %v2741 = vrot.slane %v2733, %v2740
        %v2743 = vunpack.c.l.s4 1934713408
        %v2744 = vunpack.c.0.s8 %v2743
        %v2745 = vlaneseq
        %v2746 = vshrl.u32 %v2745, 7
        %v2747 = vsub.s32 %v2744, %v2746
        %v2748 = vrot.slane %v2734, %v2747
        %v2749 = vcombine.low %v2725, %v2741
        %v2750 = vcombine.high %v2725, %v2741
        %v2751 = vcombine.low %v2732, %v2748
        %v2752 = vcombine.high %v2732, %v2748
        %v2753 = vcombine.low %v2249, %v2256
        %v2755 = vunpack.c.l.s4 1983009808
        %v2756 = vunpack.c.0.s8 %v2755
        %v2757 = vlaneseq
        %v2758 = vshrl.u32 %v2757, 7
        %v2759 = vsub.s32 %v2756, %v2758
        %v2760 = vrot.slane %v2753, %v2759
        %v2761 = vcombine.low %v2273, %v2274
        %v2763 = vunpack.c.l.s4 1983009808
        %v2764 = vunpack.c.0.s8 %v2763
        %v2765 = vlaneseq
        %v2766 = vshrl.u32 %v2765, 7
        %v2767 = vsub.s32 %v2764, %v2766
        %v2768 = vrot.slane %v2761, %v2767
        %v2769 = vcombine.low %v2265, %v2272
        %v2771 = vunpack.c.l.s4 1983009808
        %v2772 = vunpack.c.0.s8 %v2771
        %v2773 = vlaneseq
        %v2774 = vshrl.u32 %v2773, 7
        %v2775 = vsub.s32 %v2772, %v2774
        %v2776 = vrot.slane %v2769, %v2775
        %v2777 = vcombine.low %v2275, %v2276
        %v2779 = vunpack.c.l.s4 1983009808
        %v2780 = vunpack.c.0.s8 %v2779
        %v2781 = vlaneseq
        %v2782 = vshrl.u32 %v2781, 7
        %v2783 = vsub.s32 %v2780, %v2782
        %v2784 = vrot.slane %v2777, %v2783
        %v2785 = vcombine.low %v2760, %v2768
        %v2786 = vcombine.high %v2760, %v2768
        %v2788 = vunpack.c.l.s4 1934713408
        %v2789 = vunpack.c.0.s8 %v2788
        %v2790 = vlaneseq
        %v2791 = vshrl.u32 %v2790, 7
        %v2792 = vsub.s32 %v2789, %v2791
        %v2793 = vrot.slane %v2785, %v2792
        %v2795 = vunpack.c.l.s4 1934713408
        %v2796 = vunpack.c.0.s8 %v2795
        %v2797 = vlaneseq
        %v2798 = vshrl.u32 %v2797, 7
        %v2799 = vsub.s32 %v2796, %v2798
        %v2800 = vrot.slane %v2786, %v2799
        %v2801 = vcombine.low %v2776, %v2784
        %v2802 = vcombine.high %v2776, %v2784
        %v2804 = vunpack.c.l.s4 1934713408
        %v2805 = vunpack.c.0.s8 %v2804
        %v2806 = vlaneseq
        %v2807 = vshrl.u32 %v2806, 7
        %v2808 = vsub.s32 %v2805, %v2807
        %v2809 = vrot.slane %v2801, %v2808
        %v2811 = vunpack.c.l.s4 1934713408
        %v2812 = vunpack.c.0.s8 %v2811
        %v2813 = vlaneseq
        %v2814 = vshrl.u32 %v2813, 7
        %v2815 = vsub.s32 %v2812, %v2814
        %v2816 = vrot.slane %v2802, %v2815
        %v2817 = vcombine.low %v2793, %v2809
        %v2818 = vcombine.high %v2793, %v2809
        %v2819 = vcombine.low %v2800, %v2816
        %v2820 = vcombine.high %v2800, %v2816
        %v2821 = vcombine.low %v2317, %v2324
        %v2823 = vunpack.c.l.s4 1983009808
        %v2824 = vunpack.c.0.s8 %v2823
        %v2825 = vlaneseq
        %v2826 = vshrl.u32 %v2825, 7
        %v2827 = vsub.s32 %v2824, %v2826
        %v2828 = vrot.slane %v2821, %v2827
        %v2829 = vcombine.low %v2341, %v2342
        %v2831 = vunpack.c.l.s4 1983009808
        %v2832 = vunpack.c.0.s8 %v2831
        %v2833 = vlaneseq
        %v2834 = vshrl.u32 %v2833, 7
        %v2835 = vsub.s32 %v2832, %v2834
        %v2836 = vrot.slane %v2829, %v2835
        %v2837 = vcombine.low %v2333, %v2340
        %v2839 = vunpack.c.l.s4 1983009808
        %v2840 = vunpack.c.0.s8 %v2839
        %v2841 = vlaneseq
        %v2842 = vshrl.u32 %v2841, 7
        %v2843 = vsub.s32 %v2840, %v2842
        %v2844 = vrot.slane %v2837, %v2843
        %v2845 = vcombine.low %v2343, %v2344
        %v2847 = vunpack.c.l.s4 1983009808
        %v2848 = vunpack.c.0.s8 %v2847
        %v2849 = vlaneseq
        %v2850 = vshrl.u32 %v2849, 7
        %v2851 = vsub.s32 %v2848, %v2850
        %v2852 = vrot.slane %v2845, %v2851
        %v2853 = vcombine.low %v2828, %v2836
        %v2854 = vcombine.high %v2828, %v2836
        %v2856 = vunpack.c.l.s4 1934713408
        %v2857 = vunpack.c.0.s8 %v2856
        %v2858 = vlaneseq
        %v2859 = vshrl.u32 %v2858, 7
        %v2860 = vsub.s32 %v2857, %v2859
        %v2861 = vrot.slane %v2853, %v2860
        %v2863 = vunpack.c.l.s4 1934713408
        %v2864 = vunpack.c.0.s8 %v2863
        %v2865 = vlaneseq
        %v2866 = vshrl.u32 %v2865, 7
        %v2867 = vsub.s32 %v2864, %v2866
        %v2868 = vrot.slane %v2854, %v2867
        %v2869 = vcombine.low %v2844, %v2852
        %v2870 = vcombine.high %v2844, %v2852
        %v2872 = vunpack.c.l.s4 1934713408
        %v2873 = vunpack.c.0.s8 %v2872
        %v2874 = vlaneseq
        %v2875 = vshrl.u32 %v2874, 7
        %v2876 = vsub.s32 %v2873, %v2875
        %v2877 = vrot.slane %v2869, %v2876
        %v2879 = vunpack.c.l.s4 1934713408
        %v2880 = vunpack.c.0.s8 %v2879
        %v2881 = vlaneseq
        %v2882 = vshrl.u32 %v2881, 7
        %v2883 = vsub.s32 %v2880, %v2882
        %v2884 = vrot.slane %v2870, %v2883
        %v2885 = vcombine.low %v2861, %v2877
        %v2886 = vcombine.high %v2861, %v2877
        %v2887 = vcombine.low %v2868, %v2884
        %v2888 = vcombine.high %v2868, %v2884
        %v2889 = vcombine.low %v2385, %v2392
        %v2891 = vunpack.c.l.s4 1983009808
        %v2892 = vunpack.c.0.s8 %v2891
        %v2893 = vlaneseq
        %v2894 = vshrl.u32 %v2893, 7
        %v2895 = vsub.s32 %v2892, %v2894
        %v2896 = vrot.slane %v2889, %v2895
        %v2897 = vcombine.low %v2409, %v2410
        %v2899 = vunpack.c.l.s4 1983009808
        %v2900 = vunpack.c.0.s8 %v2899
        %v2901 = vlaneseq
        %v2902 = vshrl.u32 %v2901, 7
        %v2903 = vsub.s32 %v2900, %v2902
        %v2904 = vrot.slane %v2897, %v2903
        %v2905 = vcombine.low %v2401, %v2408
        %v2907 = vunpack.c.l.s4 1983009808
        %v2908 = vunpack.c.0.s8 %v2907
        %v2909 = vlaneseq
        %v2910 = vshrl.u32 %v2909, 7
        %v2911 = vsub.s32 %v2908, %v2910
        %v2912 = vrot.slane %v2905, %v2911
        %v2913 = vcombine.low %v2411, %v2412
        %v2915 = vunpack.c.l.s4 1983009808
        %v2916 = vunpack.c.0.s8 %v2915
        %v2917 = vlaneseq
        %v2918 = vshrl.u32 %v2917, 7
        %v2919 = vsub.s32 %v2916, %v2918
        %v2920 = vrot.slane %v2913, %v2919
        %v2921 = vcombine.low %v2896, %v2904
        %v2922 = vcombine.high %v2896, %v2904
        %v2924 = vunpack.c.l.s4 1934713408
        %v2925 = vunpack.c.0.s8 %v2924
        %v2926 = vlaneseq
        %v2927 = vshrl.u32 %v2926, 7
        %v2928 = vsub.s32 %v2925, %v2927
        %v2929 = vrot.slane %v2921, %v2928
        %v2931 = vunpack.c.l.s4 1934713408
        %v2932 = vunpack.c.0.s8 %v2931
        %v2933 = vlaneseq
        %v2934 = vshrl.u32 %v2933, 7
        %v2935 = vsub.s32 %v2932, %v2934
        %v2936 = vrot.slane %v2922, %v2935
        %v2937 = vcombine.low %v2912, %v2920
        %v2938 = vcombine.high %v2912, %v2920
        %v2940 = vunpack.c.l.s4 1934713408
        %v2941 = vunpack.c.0.s8 %v2940
        %v2942 = vlaneseq
        %v2943 = vshrl.u32 %v2942, 7
        %v2944 = vsub.s32 %v2941, %v2943
        %v2945 = vrot.slane %v2937, %v2944
        %v2947 = vunpack.c.l.s4 1934713408
        %v2948 = vunpack.c.0.s8 %v2947
        %v2949 = vlaneseq
        %v2950 = vshrl.u32 %v2949, 7
        %v2951 = vsub.s32 %v2948, %v2950
        %v2952 = vrot.slane %v2938, %v2951
        %v2953 = vcombine.low %v2929, %v2945
        %v2954 = vcombine.high %v2929, %v2945
        %v2955 = vcombine.low %v2936, %v2952
        %v2956 = vcombine.high %v2936, %v2952
        %v2957 = vcombine.low %v2453, %v2460
        %v2959 = vunpack.c.l.s4 1983009808
        %v2960 = vunpack.c.0.s8 %v2959
        %v2961 = vlaneseq
        %v2962 = vshrl.u32 %v2961, 7
        %v2963 = vsub.s32 %v2960, %v2962
        %v2964 = vrot.slane %v2957, %v2963
        %v2965 = vcombine.low %v2477, %v2478
        %v2967 = vunpack.c.l.s4 1983009808
        %v2968 = vunpack.c.0.s8 %v2967
        %v2969 = vlaneseq
        %v2970 = vshrl.u32 %v2969, 7
        %v2971 = vsub.s32 %v2968, %v2970
        %v2972 = vrot.slane %v2965, %v2971
        %v2973 = vcombine.low %v2469, %v2476
        %v2975 = vunpack.c.l.s4 1983009808
        %v2976 = vunpack.c.0.s8 %v2975
        %v2977 = vlaneseq
        %v2978 = vshrl.u32 %v2977, 7
        %v2979 = vsub.s32 %v2976, %v2978
        %v2980 = vrot.slane %v2973, %v2979
        %v2981 = vcombine.low %v2479, %v2480
        %v2983 = vunpack.c.l.s4 1983009808
        %v2984 = vunpack.c.0.s8 %v2983
        %v2985 = vlaneseq
        %v2986 = vshrl.u32 %v2985, 7
        %v2987 = vsub.s32 %v2984, %v2986
        %v2988 = vrot.slane %v2981, %v2987
        %v2989 = vcombine.low %v2964, %v2972
        %v2990 = vcombine.high %v2964, %v2972
        %v2992 = vunpack.c.l.s4 1934713408
        %v2993 = vunpack.c.0.s8 %v2992
        %v2994 = vlaneseq
        %v2995 = vshrl.u32 %v2994, 7
        %v2996 = vsub.s32 %v2993, %v2995
        %v2997 = vrot.slane %v2989, %v2996
        %v2999 = vunpack.c.l.s4 1934713408
        %v3000 = vunpack.c.0.s8 %v2999
        %v3001 = vlaneseq
        %v3002 = vshrl.u32 %v3001, 7
        %v3003 = vsub.s32 %v3000, %v3002
        %v3004 = vrot.slane %v2990, %v3003
        %v3005 = vcombine.low %v2980, %v2988
        %v3006 = vcombine.high %v2980, %v2988
        %v3008 = vunpack.c.l.s4 1934713408
        %v3009 = vunpack.c.0.s8 %v3008
        %v3010 = vlaneseq
        %v3011 = vshrl.u32 %v3010, 7
        %v3012 = vsub.s32 %v3009, %v3011
        %v3013 = vrot.slane %v3005, %v3012
        %v3015 = vunpack.c.l.s4 1934713408
        %v3016 = vunpack.c.0.s8 %v3015
        %v3017 = vlaneseq
        %v3018 = vshrl.u32 %v3017, 7
        %v3019 = vsub.s32 %v3016, %v3018
        %v3020 = vrot.slane %v3006, %v3019
        %v3021 = vcombine.low %v2997, %v3013
        %v3022 = vcombine.high %v2997, %v3013
        %v3023 = vcombine.low %v3004, %v3020
        %v3024 = vcombine.high %v3004, %v3020
        %v3025 = vcombine.low %v2521, %v2528
        %v3027 = vunpack.c.l.s4 1983009808
        %v3028 = vunpack.c.0.s8 %v3027
        %v3029 = vlaneseq
        %v3030 = vshrl.u32 %v3029, 7
        %v3031 = vsub.s32 %v3028, %v3030
        %v3032 = vrot.slane %v3025, %v3031
        %v3033 = vcombine.low %v2545, %v2546
        %v3035 = vunpack.c.l.s4 1983009808
        %v3036 = vunpack.c.0.s8 %v3035
        %v3037 = vlaneseq
        %v3038 = vshrl.u32 %v3037, 7
        %v3039 = vsub.s32 %v3036, %v3038
        %v3040 = vrot.slane %v3033, %v3039
        %v3041 = vcombine.low %v2537, %v2544
        %v3043 = vunpack.c.l.s4 1983009808
        %v3044 = vunpack.c.0.s8 %v3043
        %v3045 = vlaneseq
        %v3046 = vshrl.u32 %v3045, 7
        %v3047 = vsub.s32 %v3044, %v3046
        %v3048 = vrot.slane %v3041, %v3047
        %v3049 = vcombine.low %v2547, %v2548
        %v3051 = vunpack.c.l.s4 1983009808
        %v3052 = vunpack.c.0.s8 %v3051
        %v3053 = vlaneseq
        %v3054 = vshrl.u32 %v3053, 7
        %v3055 = vsub.s32 %v3052, %v3054
        %v3056 = vrot.slane %v3049, %v3055
        %v3057 = vcombine.low %v3032, %v3040
        %v3058 = vcombine.high %v3032, %v3040
        %v3060 = vunpack.c.l.s4 1934713408
        %v3061 = vunpack.c.0.s8 %v3060
        %v3062 = vlaneseq
        %v3063 = vshrl.u32 %v3062, 7
        %v3064 = vsub.s32 %v3061, %v3063
        %v3065 = vrot.slane %v3057, %v3064
        %v3067 = vunpack.c.l.s4 1934713408
        %v3068 = vunpack.c.0.s8 %v3067
        %v3069 = vlaneseq
        %v3070 = vshrl.u32 %v3069, 7
        %v3071 = vsub.s32 %v3068, %v3070
        %v3072 = vrot.slane %v3058, %v3071
        %v3073 = vcombine.low %v3048, %v3056
        %v3074 = vcombine.high %v3048, %v3056
        %v3076 = vunpack.c.l.s4 1934713408
        %v3077 = vunpack.c.0.s8 %v3076
        %v3078 = vlaneseq
        %v3079 = vshrl.u32 %v3078, 7
        %v3080 = vsub.s32 %v3077, %v3079
        %v3081 = vrot.slane %v3073, %v3080
        %v3083 = vunpack.c.l.s4 1934713408
        %v3084 = vunpack.c.0.s8 %v3083
        %v3085 = vlaneseq
        %v3086 = vshrl.u32 %v3085, 7
        %v3087 = vsub.s32 %v3084, %v3086
        %v3088 = vrot.slane %v3074, %v3087
        %v3089 = vcombine.low %v3065, %v3081
        %v3090 = vcombine.high %v3065, %v3081
        %v3091 = vcombine.low %v3072, %v3088
        %v3092 = vcombine.high %v3072, %v3088
        %v3093 = vcombine.low %v2589, %v2596
        %v3095 = vunpack.c.l.s4 1983009808
        %v3096 = vunpack.c.0.s8 %v3095
        %v3097 = vlaneseq
        %v3098 = vshrl.u32 %v3097, 7
        %v3099 = vsub.s32 %v3096, %v3098
        %v3100 = vrot.slane %v3093, %v3099
        %v3101 = vcombine.low %v2613, %v2614
        %v3103 = vunpack.c.l.s4 1983009808
        %v3104 = vunpack.c.0.s8 %v3103
        %v3105 = vlaneseq
        %v3106 = vshrl.u32 %v3105, 7
        %v3107 = vsub.s32 %v3104, %v3106
        %v3108 = vrot.slane %v3101, %v3107
        %v3109 = vcombine.low %v2605, %v2612
        %v3111 = vunpack.c.l.s4 1983009808
        %v3112 = vunpack.c.0.s8 %v3111
        %v3113 = vlaneseq
        %v3114 = vshrl.u32 %v3113, 7
        %v3115 = vsub.s32 %v3112, %v3114
        %v3116 = vrot.slane %v3109, %v3115
        %v3117 = vcombine.low %v2615, %v2616
        %v3119 = vunpack.c.l.s4 1983009808
        %v3120 = vunpack.c.0.s8 %v3119
        %v3121 = vlaneseq
        %v3122 = vshrl.u32 %v3121, 7
        %v3123 = vsub.s32 %v3120, %v3122
        %v3124 = vrot.slane %v3117, %v3123
        %v3125 = vcombine.low %v3100, %v3108
        %v3126 = vcombine.high %v3100, %v3108
        %v3128 = vunpack.c.l.s4 1934713408
        %v3129 = vunpack.c.0.s8 %v3128
        %v3130 = vlaneseq
        %v3131 = vshrl.u32 %v3130, 7
        %v3132 = vsub.s32 %v3129, %v3131
        %v3133 = vrot.slane %v3125, %v3132
        %v3135 = vunpack.c.l.s4 1934713408
        %v3136 = vunpack.c.0.s8 %v3135
        %v3137 = vlaneseq
        %v3138 = vshrl.u32 %v3137, 7
        %v3139 = vsub.s32 %v3136, %v3138
        %v3140 = vrot.slane %v3126, %v3139
        %v3141 = vcombine.low %v3116, %v3124
        %v3142 = vcombine.high %v3116, %v3124
        %v3144 = vunpack.c.l.s4 1934713408
        %v3145 = vunpack.c.0.s8 %v3144
        %v3146 = vlaneseq
        %v3147 = vshrl.u32 %v3146, 7
        %v3148 = vsub.s32 %v3145, %v3147
        %v3149 = vrot.slane %v3141, %v3148
        %v3151 = vunpack.c.l.s4 1934713408
        %v3152 = vunpack.c.0.s8 %v3151
        %v3153 = vlaneseq
        %v3154 = vshrl.u32 %v3153, 7
        %v3155 = vsub.s32 %v3152, %v3154
        %v3156 = vrot.slane %v3142, %v3155
        %v3157 = vcombine.low %v3133, %v3149
        %v3158 = vcombine.high %v3133, %v3149
        %v3159 = vcombine.low %v3140, %v3156
        %v3160 = vcombine.high %v3140, %v3156
        %3161 = vrot.lane.b32.xlu0 %v779, 64
        %v3162 = vpop.permute.xlu0 %3161
        %3163 = vrot.lane.b32.xlu0 %v782, 64
        %v3164 = vpop.permute.xlu0 %3163
        %3165 = vrot.lane.b32.xlu0 %v787, 64
        %v3166 = vpop.permute.xlu0 %3165
        %3167 = vrot.lane.b32.xlu0 %v790, 64
        %v3168 = vpop.permute.xlu0 %3167
        %3169 = vrot.lane.b32.xlu0 %v795, 64
        %v3170 = vpop.permute.xlu0 %3169
        %3171 = vrot.lane.b32.xlu0 %v798, 64
        %v3172 = vpop.permute.xlu0 %3171
        %3173 = vrot.lane.b32.xlu0 %v803, 64
        %v3174 = vpop.permute.xlu0 %3173
        %3175 = vrot.lane.b32.xlu0 %v806, 64
        %v3176 = vpop.permute.xlu0 %3175
        %3177 = vrot.lane.b32.xlu0 %v818, 64
        %v3178 = vpop.permute.xlu0 %3177
        %3179 = vrot.lane.b32.xlu0 %v820, 64
        %v3180 = vpop.permute.xlu0 %3179
        %3181 = vrot.lane.b32.xlu0 %v822, 64
        %v3182 = vpop.permute.xlu0 %3181
        %3183 = vrot.lane.b32.xlu0 %v824, 64
        %v3184 = vpop.permute.xlu0 %3183
        %3185 = vrot.lane.b32.xlu0 %v826, 64
        %v3186 = vpop.permute.xlu0 %3185
        %3187 = vrot.lane.b32.xlu0 %v828, 64
        %v3188 = vpop.permute.xlu0 %3187
        %3189 = vrot.lane.b32.xlu0 %v830, 64
        %v3190 = vpop.permute.xlu0 %3189
        %3191 = vrot.lane.b32.xlu0 %v832, 64
        %v3192 = vpop.permute.xlu0 %3191
        %3193 = vrot.lane.b32.xlu0 %v842, 64
        %v3194 = vpop.permute.xlu0 %3193
        %3195 = vrot.lane.b32.xlu0 %v844, 64
        %v3196 = vpop.permute.xlu0 %3195
        %3197 = vrot.lane.b32.xlu0 %v846, 64
        %v3198 = vpop.permute.xlu0 %3197
        %3199 = vrot.lane.b32.xlu0 %v848, 64
        %v3200 = vpop.permute.xlu0 %3199
        %3201 = vrot.lane.b32.xlu0 %v850, 64
        %v3202 = vpop.permute.xlu0 %3201
        %3203 = vrot.lane.b32.xlu0 %v852, 64
        %v3204 = vpop.permute.xlu0 %3203
        %3205 = vrot.lane.b32.xlu0 %v854, 64
        %v3206 = vpop.permute.xlu0 %3205
        %3207 = vrot.lane.b32.xlu0 %v856, 64
        %v3208 = vpop.permute.xlu0 %3207
        %3209 = vrot.lane.b32.xlu0 %v866, 64
        %v3210 = vpop.permute.xlu0 %3209
        %3211 = vrot.lane.b32.xlu0 %v868, 64
        %v3212 = vpop.permute.xlu0 %3211
        %3213 = vrot.lane.b32.xlu0 %v870, 64
        %v3214 = vpop.permute.xlu0 %3213
        %3215 = vrot.lane.b32.xlu0 %v872, 64
        %v3216 = vpop.permute.xlu0 %3215
        %3217 = vrot.lane.b32.xlu0 %v874, 64
        %v3218 = vpop.permute.xlu0 %3217
        %3219 = vrot.lane.b32.xlu0 %v876, 64
        %v3220 = vpop.permute.xlu0 %3219
        %3221 = vrot.lane.b32.xlu0 %v878, 64
        %v3222 = vpop.permute.xlu0 %3221
        %3223 = vrot.lane.b32.xlu0 %v880, 64
        %v3224 = vpop.permute.xlu0 %3223
        %v3257 = vcombine.low %v3162, %v3194
        %v3258 = vcombine.high %v3162, %v3194
        %v3260 = vunpack.c.l.s4 1983009808
        %v3261 = vunpack.c.0.s8 %v3260
        %v3262 = vlaneseq
        %v3263 = vshrl.u32 %v3262, 7
        %v3264 = vsub.s32 %v3261, %v3263
        %v3265 = vrot.slane %v3257, %v3264
        %v3267 = vunpack.c.l.s4 1983009808
        %v3268 = vunpack.c.0.s8 %v3267
        %v3269 = vlaneseq
        %v3270 = vshrl.u32 %v3269, 7
        %v3271 = vsub.s32 %v3268, %v3270
        %v3272 = vrot.slane %v3258, %v3271
        %v3273 = vcombine.low %v3178, %v3210
        %v3274 = vcombine.high %v3178, %v3210
        %v3276 = vunpack.c.l.s4 1983009808
        %v3277 = vunpack.c.0.s8 %v3276
        %v3278 = vlaneseq
        %v3279 = vshrl.u32 %v3278, 7
        %v3280 = vsub.s32 %v3277, %v3279
        %v3281 = vrot.slane %v3273, %v3280
        %v3283 = vunpack.c.l.s4 1983009808
        %v3284 = vunpack.c.0.s8 %v3283
        %v3285 = vlaneseq
        %v3286 = vshrl.u32 %v3285, 7
        %v3287 = vsub.s32 %v3284, %v3286
        %v3288 = vrot.slane %v3274, %v3287
        %v3289 = vcombine.low %v3265, %v3281
        %v3290 = vcombine.high %v3265, %v3281
        %v3292 = vunpack.c.l.s4 1934713408
        %v3293 = vunpack.c.0.s8 %v3292
        %v3294 = vlaneseq
        %v3295 = vshrl.u32 %v3294, 7
        %v3296 = vsub.s32 %v3293, %v3295
        %v3297 = vrot.slane %v3289, %v3296
        %v3299 = vunpack.c.l.s4 1934713408
        %v3300 = vunpack.c.0.s8 %v3299
        %v3301 = vlaneseq
        %v3302 = vshrl.u32 %v3301, 7
        %v3303 = vsub.s32 %v3300, %v3302
        %v3304 = vrot.slane %v3290, %v3303
        %v3305 = vcombine.low %v3272, %v3288
        %v3306 = vcombine.high %v3272, %v3288
        %v3308 = vunpack.c.l.s4 1934713408
        %v3309 = vunpack.c.0.s8 %v3308
        %v3310 = vlaneseq
        %v3311 = vshrl.u32 %v3310, 7
        %v3312 = vsub.s32 %v3309, %v3311
        %v3313 = vrot.slane %v3305, %v3312
        %v3315 = vunpack.c.l.s4 1934713408
        %v3316 = vunpack.c.0.s8 %v3315
        %v3317 = vlaneseq
        %v3318 = vshrl.u32 %v3317, 7
        %v3319 = vsub.s32 %v3316, %v3318
        %v3320 = vrot.slane %v3306, %v3319
        %v3321 = vcombine.high %v3297, 0.0
        %v3322 = vcombine.high %v3304, 0.0
        %v3323 = vcombine.high %v3313, 0.0
        %v3324 = vcombine.high %v3320, 0.0
        %v3325 = vcombine.low %v3164, %v3196
        %v3326 = vcombine.high %v3164, %v3196
        %v3328 = vunpack.c.l.s4 1983009808
        %v3329 = vunpack.c.0.s8 %v3328
        %v3330 = vlaneseq
        %v3331 = vshrl.u32 %v3330, 7
        %v3332 = vsub.s32 %v3329, %v3331
        %v3333 = vrot.slane %v3325, %v3332
        %v3335 = vunpack.c.l.s4 1983009808
        %v3336 = vunpack.c.0.s8 %v3335
        %v3337 = vlaneseq
        %v3338 = vshrl.u32 %v3337, 7
        %v3339 = vsub.s32 %v3336, %v3338
        %v3340 = vrot.slane %v3326, %v3339
        %v3341 = vcombine.low %v3180, %v3212
        %v3342 = vcombine.high %v3180, %v3212
        %v3344 = vunpack.c.l.s4 1983009808
        %v3345 = vunpack.c.0.s8 %v3344
        %v3346 = vlaneseq
        %v3347 = vshrl.u32 %v3346, 7
        %v3348 = vsub.s32 %v3345, %v3347
        %v3349 = vrot.slane %v3341, %v3348
        %v3351 = vunpack.c.l.s4 1983009808
        %v3352 = vunpack.c.0.s8 %v3351
        %v3353 = vlaneseq
        %v3354 = vshrl.u32 %v3353, 7
        %v3355 = vsub.s32 %v3352, %v3354
        %v3356 = vrot.slane %v3342, %v3355
        %v3357 = vcombine.low %v3333, %v3349
        %v3358 = vcombine.high %v3333, %v3349
        %v3360 = vunpack.c.l.s4 1934713408
        %v3361 = vunpack.c.0.s8 %v3360
        %v3362 = vlaneseq
        %v3363 = vshrl.u32 %v3362, 7
        %v3364 = vsub.s32 %v3361, %v3363
        %v3365 = vrot.slane %v3357, %v3364
        %v3367 = vunpack.c.l.s4 1934713408
        %v3368 = vunpack.c.0.s8 %v3367
        %v3369 = vlaneseq
        %v3370 = vshrl.u32 %v3369, 7
        %v3371 = vsub.s32 %v3368, %v3370
        %v3372 = vrot.slane %v3358, %v3371
        %v3373 = vcombine.low %v3340, %v3356
        %v3374 = vcombine.high %v3340, %v3356
        %v3376 = vunpack.c.l.s4 1934713408
        %v3377 = vunpack.c.0.s8 %v3376
        %v3378 = vlaneseq
        %v3379 = vshrl.u32 %v3378, 7
        %v3380 = vsub.s32 %v3377, %v3379
        %v3381 = vrot.slane %v3373, %v3380
        %v3383 = vunpack.c.l.s4 1934713408
        %v3384 = vunpack.c.0.s8 %v3383
        %v3385 = vlaneseq
        %v3386 = vshrl.u32 %v3385, 7
        %v3387 = vsub.s32 %v3384, %v3386
        %v3388 = vrot.slane %v3374, %v3387
        %v3389 = vcombine.high %v3365, 0.0
        %v3390 = vcombine.high %v3372, 0.0
        %v3391 = vcombine.high %v3381, 0.0
        %v3392 = vcombine.high %v3388, 0.0
        %v3393 = vcombine.low %v3166, %v3198
        %v3394 = vcombine.high %v3166, %v3198
        %v3396 = vunpack.c.l.s4 1983009808
        %v3397 = vunpack.c.0.s8 %v3396
        %v3398 = vlaneseq
        %v3399 = vshrl.u32 %v3398, 7
        %v3400 = vsub.s32 %v3397, %v3399
        %v3401 = vrot.slane %v3393, %v3400
        %v3403 = vunpack.c.l.s4 1983009808
        %v3404 = vunpack.c.0.s8 %v3403
        %v3405 = vlaneseq
        %v3406 = vshrl.u32 %v3405, 7
        %v3407 = vsub.s32 %v3404, %v3406
        %v3408 = vrot.slane %v3394, %v3407
        %v3409 = vcombine.low %v3182, %v3214
        %v3410 = vcombine.high %v3182, %v3214
        %v3412 = vunpack.c.l.s4 1983009808
        %v3413 = vunpack.c.0.s8 %v3412
        %v3414 = vlaneseq
        %v3415 = vshrl.u32 %v3414, 7
        %v3416 = vsub.s32 %v3413, %v3415
        %v3417 = vrot.slane %v3409, %v3416
        %v3419 = vunpack.c.l.s4 1983009808
        %v3420 = vunpack.c.0.s8 %v3419
        %v3421 = vlaneseq
        %v3422 = vshrl.u32 %v3421, 7
        %v3423 = vsub.s32 %v3420, %v3422
        %v3424 = vrot.slane %v3410, %v3423
        %v3425 = vcombine.low %v3401, %v3417
        %v3426 = vcombine.high %v3401, %v3417
        %v3428 = vunpack.c.l.s4 1934713408
        %v3429 = vunpack.c.0.s8 %v3428
        %v3430 = vlaneseq
        %v3431 = vshrl.u32 %v3430, 7
        %v3432 = vsub.s32 %v3429, %v3431
        %v3433 = vrot.slane %v3425, %v3432
        %v3435 = vunpack.c.l.s4 1934713408
        %v3436 = vunpack.c.0.s8 %v3435
        %v3437 = vlaneseq
        %v3438 = vshrl.u32 %v3437, 7
        %v3439 = vsub.s32 %v3436, %v3438
        %v3440 = vrot.slane %v3426, %v3439
        %v3441 = vcombine.low %v3408, %v3424
        %v3442 = vcombine.high %v3408, %v3424
        %v3444 = vunpack.c.l.s4 1934713408
        %v3445 = vunpack.c.0.s8 %v3444
        %v3446 = vlaneseq
        %v3447 = vshrl.u32 %v3446, 7
        %v3448 = vsub.s32 %v3445, %v3447
        %v3449 = vrot.slane %v3441, %v3448
        %v3451 = vunpack.c.l.s4 1934713408
        %v3452 = vunpack.c.0.s8 %v3451
        %v3453 = vlaneseq
        %v3454 = vshrl.u32 %v3453, 7
        %v3455 = vsub.s32 %v3452, %v3454
        %v3456 = vrot.slane %v3442, %v3455
        %v3457 = vcombine.high %v3433, 0.0
        %v3458 = vcombine.high %v3440, 0.0
        %v3459 = vcombine.high %v3449, 0.0
        %v3460 = vcombine.high %v3456, 0.0
        %v3461 = vcombine.low %v3168, %v3200
        %v3462 = vcombine.high %v3168, %v3200
        %v3464 = vunpack.c.l.s4 1983009808
        %v3465 = vunpack.c.0.s8 %v3464
        %v3466 = vlaneseq
        %v3467 = vshrl.u32 %v3466, 7
        %v3468 = vsub.s32 %v3465, %v3467
        %v3469 = vrot.slane %v3461, %v3468
        %v3471 = vunpack.c.l.s4 1983009808
        %v3472 = vunpack.c.0.s8 %v3471
        %v3473 = vlaneseq
        %v3474 = vshrl.u32 %v3473, 7
        %v3475 = vsub.s32 %v3472, %v3474
        %v3476 = vrot.slane %v3462, %v3475
        %v3477 = vcombine.low %v3184, %v3216
        %v3478 = vcombine.high %v3184, %v3216
        %v3480 = vunpack.c.l.s4 1983009808
        %v3481 = vunpack.c.0.s8 %v3480
        %v3482 = vlaneseq
        %v3483 = vshrl.u32 %v3482, 7
        %v3484 = vsub.s32 %v3481, %v3483
        %v3485 = vrot.slane %v3477, %v3484
        %v3487 = vunpack.c.l.s4 1983009808
        %v3488 = vunpack.c.0.s8 %v3487
        %v3489 = vlaneseq
        %v3490 = vshrl.u32 %v3489, 7
        %v3491 = vsub.s32 %v3488, %v3490
        %v3492 = vrot.slane %v3478, %v3491
        %v3493 = vcombine.low %v3469, %v3485
        %v3494 = vcombine.high %v3469, %v3485
        %v3496 = vunpack.c.l.s4 1934713408
        %v3497 = vunpack.c.0.s8 %v3496
        %v3498 = vlaneseq
        %v3499 = vshrl.u32 %v3498, 7
        %v3500 = vsub.s32 %v3497, %v3499
        %v3501 = vrot.slane %v3493, %v3500
        %v3503 = vunpack.c.l.s4 1934713408
        %v3504 = vunpack.c.0.s8 %v3503
        %v3505 = vlaneseq
        %v3506 = vshrl.u32 %v3505, 7
        %v3507 = vsub.s32 %v3504, %v3506
        %v3508 = vrot.slane %v3494, %v3507
        %v3509 = vcombine.low %v3476, %v3492
        %v3510 = vcombine.high %v3476, %v3492
        %v3512 = vunpack.c.l.s4 1934713408
        %v3513 = vunpack.c.0.s8 %v3512
        %v3514 = vlaneseq
        %v3515 = vshrl.u32 %v3514, 7
        %v3516 = vsub.s32 %v3513, %v3515
        %v3517 = vrot.slane %v3509, %v3516
        %v3519 = vunpack.c.l.s4 1934713408
        %v3520 = vunpack.c.0.s8 %v3519
        %v3521 = vlaneseq
        %v3522 = vshrl.u32 %v3521, 7
        %v3523 = vsub.s32 %v3520, %v3522
        %v3524 = vrot.slane %v3510, %v3523
        %v3525 = vcombine.high %v3501, 0.0
        %v3526 = vcombine.high %v3508, 0.0
        %v3527 = vcombine.high %v3517, 0.0
        %v3528 = vcombine.high %v3524, 0.0
        %v3529 = vcombine.low %v3170, %v3202
        %v3530 = vcombine.high %v3170, %v3202
        %v3532 = vunpack.c.l.s4 1983009808
        %v3533 = vunpack.c.0.s8 %v3532
        %v3534 = vlaneseq
        %v3535 = vshrl.u32 %v3534, 7
        %v3536 = vsub.s32 %v3533, %v3535
        %v3537 = vrot.slane %v3529, %v3536
        %v3539 = vunpack.c.l.s4 1983009808
        %v3540 = vunpack.c.0.s8 %v3539
        %v3541 = vlaneseq
        %v3542 = vshrl.u32 %v3541, 7
        %v3543 = vsub.s32 %v3540, %v3542
        %v3544 = vrot.slane %v3530, %v3543
        %v3545 = vcombine.low %v3186, %v3218
        %v3546 = vcombine.high %v3186, %v3218
        %v3548 = vunpack.c.l.s4 1983009808
        %v3549 = vunpack.c.0.s8 %v3548
        %v3550 = vlaneseq
        %v3551 = vshrl.u32 %v3550, 7
        %v3552 = vsub.s32 %v3549, %v3551
        %v3553 = vrot.slane %v3545, %v3552
        %v3555 = vunpack.c.l.s4 1983009808
        %v3556 = vunpack.c.0.s8 %v3555
        %v3557 = vlaneseq
        %v3558 = vshrl.u32 %v3557, 7
        %v3559 = vsub.s32 %v3556, %v3558
        %v3560 = vrot.slane %v3546, %v3559
        %v3561 = vcombine.low %v3537, %v3553
        %v3562 = vcombine.high %v3537, %v3553
        %v3564 = vunpack.c.l.s4 1934713408
        %v3565 = vunpack.c.0.s8 %v3564
        %v3566 = vlaneseq
        %v3567 = vshrl.u32 %v3566, 7
        %v3568 = vsub.s32 %v3565, %v3567
        %v3569 = vrot.slane %v3561, %v3568
        %v3571 = vunpack.c.l.s4 1934713408
        %v3572 = vunpack.c.0.s8 %v3571
        %v3573 = vlaneseq
        %v3574 = vshrl.u32 %v3573, 7
        %v3575 = vsub.s32 %v3572, %v3574
        %v3576 = vrot.slane %v3562, %v3575
        %v3577 = vcombine.low %v3544, %v3560
        %v3578 = vcombine.high %v3544, %v3560
        %v3580 = vunpack.c.l.s4 1934713408
        %v3581 = vunpack.c.0.s8 %v3580
        %v3582 = vlaneseq
        %v3583 = vshrl.u32 %v3582, 7
        %v3584 = vsub.s32 %v3581, %v3583
        %v3585 = vrot.slane %v3577, %v3584
        %v3587 = vunpack.c.l.s4 1934713408
        %v3588 = vunpack.c.0.s8 %v3587
        %v3589 = vlaneseq
        %v3590 = vshrl.u32 %v3589, 7
        %v3591 = vsub.s32 %v3588, %v3590
        %v3592 = vrot.slane %v3578, %v3591
        %v3593 = vcombine.high %v3569, 0.0
        %v3594 = vcombine.high %v3576, 0.0
        %v3595 = vcombine.high %v3585, 0.0
        %v3596 = vcombine.high %v3592, 0.0
        %v3597 = vcombine.low %v3172, %v3204
        %v3598 = vcombine.high %v3172, %v3204
        %v3600 = vunpack.c.l.s4 1983009808
        %v3601 = vunpack.c.0.s8 %v3600
        %v3602 = vlaneseq
        %v3603 = vshrl.u32 %v3602, 7
        %v3604 = vsub.s32 %v3601, %v3603
        %v3605 = vrot.slane %v3597, %v3604
        %v3607 = vunpack.c.l.s4 1983009808
        %v3608 = vunpack.c.0.s8 %v3607
        %v3609 = vlaneseq
        %v3610 = vshrl.u32 %v3609, 7
        %v3611 = vsub.s32 %v3608, %v3610
        %v3612 = vrot.slane %v3598, %v3611
        %v3613 = vcombine.low %v3188, %v3220
        %v3614 = vcombine.high %v3188, %v3220
        %v3616 = vunpack.c.l.s4 1983009808
        %v3617 = vunpack.c.0.s8 %v3616
        %v3618 = vlaneseq
        %v3619 = vshrl.u32 %v3618, 7
        %v3620 = vsub.s32 %v3617, %v3619
        %v3621 = vrot.slane %v3613, %v3620
        %v3623 = vunpack.c.l.s4 1983009808
        %v3624 = vunpack.c.0.s8 %v3623
        %v3625 = vlaneseq
        %v3626 = vshrl.u32 %v3625, 7
        %v3627 = vsub.s32 %v3624, %v3626
        %v3628 = vrot.slane %v3614, %v3627
        %v3629 = vcombine.low %v3605, %v3621
        %v3630 = vcombine.high %v3605, %v3621
        %v3632 = vunpack.c.l.s4 1934713408
        %v3633 = vunpack.c.0.s8 %v3632
        %v3634 = vlaneseq
        %v3635 = vshrl.u32 %v3634, 7
        %v3636 = vsub.s32 %v3633, %v3635
        %v3637 = vrot.slane %v3629, %v3636
        %v3639 = vunpack.c.l.s4 1934713408
        %v3640 = vunpack.c.0.s8 %v3639
        %v3641 = vlaneseq
        %v3642 = vshrl.u32 %v3641, 7
        %v3643 = vsub.s32 %v3640, %v3642
        %v3644 = vrot.slane %v3630, %v3643
        %v3645 = vcombine.low %v3612, %v3628
        %v3646 = vcombine.high %v3612, %v3628
        %v3648 = vunpack.c.l.s4 1934713408
        %v3649 = vunpack.c.0.s8 %v3648
        %v3650 = vlaneseq
        %v3651 = vshrl.u32 %v3650, 7
        %v3652 = vsub.s32 %v3649, %v3651
        %v3653 = vrot.slane %v3645, %v3652
        %v3655 = vunpack.c.l.s4 1934713408
        %v3656 = vunpack.c.0.s8 %v3655
        %v3657 = vlaneseq
        %v3658 = vshrl.u32 %v3657, 7
        %v3659 = vsub.s32 %v3656, %v3658
        %v3660 = vrot.slane %v3646, %v3659
        %v3661 = vcombine.high %v3637, 0.0
        %v3662 = vcombine.high %v3644, 0.0
        %v3663 = vcombine.high %v3653, 0.0
        %v3664 = vcombine.high %v3660, 0.0
        %v3665 = vcombine.low %v3174, %v3206
        %v3666 = vcombine.high %v3174, %v3206
        %v3668 = vunpack.c.l.s4 1983009808
        %v3669 = vunpack.c.0.s8 %v3668
        %v3670 = vlaneseq
        %v3671 = vshrl.u32 %v3670, 7
        %v3672 = vsub.s32 %v3669, %v3671
        %v3673 = vrot.slane %v3665, %v3672
        %v3675 = vunpack.c.l.s4 1983009808
        %v3676 = vunpack.c.0.s8 %v3675
        %v3677 = vlaneseq
        %v3678 = vshrl.u32 %v3677, 7
        %v3679 = vsub.s32 %v3676, %v3678
        %v3680 = vrot.slane %v3666, %v3679
        %v3681 = vcombine.low %v3190, %v3222
        %v3682 = vcombine.high %v3190, %v3222
        %v3684 = vunpack.c.l.s4 1983009808
        %v3685 = vunpack.c.0.s8 %v3684
        %v3686 = vlaneseq
        %v3687 = vshrl.u32 %v3686, 7
        %v3688 = vsub.s32 %v3685, %v3687
        %v3689 = vrot.slane %v3681, %v3688
        %v3691 = vunpack.c.l.s4 1983009808
        %v3692 = vunpack.c.0.s8 %v3691
        %v3693 = vlaneseq
        %v3694 = vshrl.u32 %v3693, 7
        %v3695 = vsub.s32 %v3692, %v3694
        %v3696 = vrot.slane %v3682, %v3695
        %v3697 = vcombine.low %v3673, %v3689
        %v3698 = vcombine.high %v3673, %v3689
        %v3700 = vunpack.c.l.s4 1934713408
        %v3701 = vunpack.c.0.s8 %v3700
        %v3702 = vlaneseq
        %v3703 = vshrl.u32 %v3702, 7
        %v3704 = vsub.s32 %v3701, %v3703
        %v3705 = vrot.slane %v3697, %v3704
        %v3707 = vunpack.c.l.s4 1934713408
        %v3708 = vunpack.c.0.s8 %v3707
        %v3709 = vlaneseq
        %v3710 = vshrl.u32 %v3709, 7
        %v3711 = vsub.s32 %v3708, %v3710
        %v3712 = vrot.slane %v3698, %v3711
        %v3713 = vcombine.low %v3680, %v3696
        %v3714 = vcombine.high %v3680, %v3696
        %v3716 = vunpack.c.l.s4 1934713408
        %v3717 = vunpack.c.0.s8 %v3716
        %v3718 = vlaneseq
        %v3719 = vshrl.u32 %v3718, 7
        %v3720 = vsub.s32 %v3717, %v3719
        %v3721 = vrot.slane %v3713, %v3720
        %v3723 = vunpack.c.l.s4 1934713408
        %v3724 = vunpack.c.0.s8 %v3723
        %v3725 = vlaneseq
        %v3726 = vshrl.u32 %v3725, 7
        %v3727 = vsub.s32 %v3724, %v3726
        %v3728 = vrot.slane %v3714, %v3727
        %v3729 = vcombine.high %v3705, 0.0
        %v3730 = vcombine.high %v3712, 0.0
        %v3731 = vcombine.high %v3721, 0.0
        %v3732 = vcombine.high %v3728, 0.0
        %v3733 = vcombine.low %v3176, %v3208
        %v3734 = vcombine.high %v3176, %v3208
        %v3736 = vunpack.c.l.s4 1983009808
        %v3737 = vunpack.c.0.s8 %v3736
        %v3738 = vlaneseq
        %v3739 = vshrl.u32 %v3738, 7
        %v3740 = vsub.s32 %v3737, %v3739
        %v3741 = vrot.slane %v3733, %v3740
        %v3743 = vunpack.c.l.s4 1983009808
        %v3744 = vunpack.c.0.s8 %v3743
        %v3745 = vlaneseq
        %v3746 = vshrl.u32 %v3745, 7
        %v3747 = vsub.s32 %v3744, %v3746
        %v3748 = vrot.slane %v3734, %v3747
        %v3749 = vcombine.low %v3192, %v3224
        %v3750 = vcombine.high %v3192, %v3224
        %v3752 = vunpack.c.l.s4 1983009808
        %v3753 = vunpack.c.0.s8 %v3752
        %v3754 = vlaneseq
        %v3755 = vshrl.u32 %v3754, 7
        %v3756 = vsub.s32 %v3753, %v3755
        %v3757 = vrot.slane %v3749, %v3756
        %v3759 = vunpack.c.l.s4 1983009808
        %v3760 = vunpack.c.0.s8 %v3759
        %v3761 = vlaneseq
        %v3762 = vshrl.u32 %v3761, 7
        %v3763 = vsub.s32 %v3760, %v3762
        %v3764 = vrot.slane %v3750, %v3763
        %v3765 = vcombine.low %v3741, %v3757
        %v3766 = vcombine.high %v3741, %v3757
        %v3768 = vunpack.c.l.s4 1934713408
        %v3769 = vunpack.c.0.s8 %v3768
        %v3770 = vlaneseq
        %v3771 = vshrl.u32 %v3770, 7
        %v3772 = vsub.s32 %v3769, %v3771
        %v3773 = vrot.slane %v3765, %v3772
        %v3775 = vunpack.c.l.s4 1934713408
        %v3776 = vunpack.c.0.s8 %v3775
        %v3777 = vlaneseq
        %v3778 = vshrl.u32 %v3777, 7
        %v3779 = vsub.s32 %v3776, %v3778
        %v3780 = vrot.slane %v3766, %v3779
        %v3781 = vcombine.low %v3748, %v3764
        %v3782 = vcombine.high %v3748, %v3764
        %v3784 = vunpack.c.l.s4 1934713408
        %v3785 = vunpack.c.0.s8 %v3784
        %v3786 = vlaneseq
        %v3787 = vshrl.u32 %v3786, 7
        %v3788 = vsub.s32 %v3785, %v3787
        %v3789 = vrot.slane %v3781, %v3788
        %v3791 = vunpack.c.l.s4 1934713408
        %v3792 = vunpack.c.0.s8 %v3791
        %v3793 = vlaneseq
        %v3794 = vshrl.u32 %v3793, 7
        %v3795 = vsub.s32 %v3792, %v3794
        %v3796 = vrot.slane %v3782, %v3795
        %v3797 = vcombine.high %v3773, 0.0
        %v3798 = vcombine.high %v3780, 0.0
        %v3799 = vcombine.high %v3789, 0.0
        %v3800 = vcombine.high %v3796, 0.0
        %v3801 = vcombine.low %v3297, %v3304
        %v3803 = vunpack.c.l.s4 1983009808
        %v3804 = vunpack.c.0.s8 %v3803
        %v3805 = vlaneseq
        %v3806 = vshrl.u32 %v3805, 7
        %v3807 = vsub.s32 %v3804, %v3806
        %v3808 = vrot.slane %v3801, %v3807
        %v3809 = vcombine.low %v3321, %v3322
        %v3811 = vunpack.c.l.s4 1983009808
        %v3812 = vunpack.c.0.s8 %v3811
        %v3813 = vlaneseq
        %v3814 = vshrl.u32 %v3813, 7
        %v3815 = vsub.s32 %v3812, %v3814
        %v3816 = vrot.slane %v3809, %v3815
        %v3817 = vcombine.low %v3313, %v3320
        %v3819 = vunpack.c.l.s4 1983009808
        %v3820 = vunpack.c.0.s8 %v3819
        %v3821 = vlaneseq
        %v3822 = vshrl.u32 %v3821, 7
        %v3823 = vsub.s32 %v3820, %v3822
        %v3824 = vrot.slane %v3817, %v3823
        %v3825 = vcombine.low %v3323, %v3324
        %v3827 = vunpack.c.l.s4 1983009808
        %v3828 = vunpack.c.0.s8 %v3827
        %v3829 = vlaneseq
        %v3830 = vshrl.u32 %v3829, 7
        %v3831 = vsub.s32 %v3828, %v3830
        %v3832 = vrot.slane %v3825, %v3831
        %v3833 = vcombine.low %v3808, %v3816
        %v3834 = vcombine.high %v3808, %v3816
        %v3836 = vunpack.c.l.s4 1934713408
        %v3837 = vunpack.c.0.s8 %v3836
        %v3838 = vlaneseq
        %v3839 = vshrl.u32 %v3838, 7
        %v3840 = vsub.s32 %v3837, %v3839
        %v3841 = vrot.slane %v3833, %v3840
        %v3843 = vunpack.c.l.s4 1934713408
        %v3844 = vunpack.c.0.s8 %v3843
        %v3845 = vlaneseq
        %v3846 = vshrl.u32 %v3845, 7
        %v3847 = vsub.s32 %v3844, %v3846
        %v3848 = vrot.slane %v3834, %v3847
        %v3849 = vcombine.low %v3824, %v3832
        %v3850 = vcombine.high %v3824, %v3832
        %v3852 = vunpack.c.l.s4 1934713408
        %v3853 = vunpack.c.0.s8 %v3852
        %v3854 = vlaneseq
        %v3855 = vshrl.u32 %v3854, 7
        %v3856 = vsub.s32 %v3853, %v3855
        %v3857 = vrot.slane %v3849, %v3856
        %v3859 = vunpack.c.l.s4 1934713408
        %v3860 = vunpack.c.0.s8 %v3859
        %v3861 = vlaneseq
        %v3862 = vshrl.u32 %v3861, 7
        %v3863 = vsub.s32 %v3860, %v3862
        %v3864 = vrot.slane %v3850, %v3863
        %v3865 = vcombine.low %v3841, %v3857
        %v3866 = vcombine.high %v3841, %v3857
        %v3867 = vcombine.low %v3848, %v3864
        %v3868 = vcombine.high %v3848, %v3864
        %v3869 = vcombine.low %v3365, %v3372
        %v3871 = vunpack.c.l.s4 1983009808
        %v3872 = vunpack.c.0.s8 %v3871
        %v3873 = vlaneseq
        %v3874 = vshrl.u32 %v3873, 7
        %v3875 = vsub.s32 %v3872, %v3874
        %v3876 = vrot.slane %v3869, %v3875
        %v3877 = vcombine.low %v3389, %v3390
        %v3879 = vunpack.c.l.s4 1983009808
        %v3880 = vunpack.c.0.s8 %v3879
        %v3881 = vlaneseq
        %v3882 = vshrl.u32 %v3881, 7
        %v3883 = vsub.s32 %v3880, %v3882
        %v3884 = vrot.slane %v3877, %v3883
        %v3885 = vcombine.low %v3381, %v3388
        %v3887 = vunpack.c.l.s4 1983009808
        %v3888 = vunpack.c.0.s8 %v3887
        %v3889 = vlaneseq
        %v3890 = vshrl.u32 %v3889, 7
        %v3891 = vsub.s32 %v3888, %v3890
        %v3892 = vrot.slane %v3885, %v3891
        %v3893 = vcombine.low %v3391, %v3392
        %v3895 = vunpack.c.l.s4 1983009808
        %v3896 = vunpack.c.0.s8 %v3895
        %v3897 = vlaneseq
        %v3898 = vshrl.u32 %v3897, 7
        %v3899 = vsub.s32 %v3896, %v3898
        %v3900 = vrot.slane %v3893, %v3899
        %v3901 = vcombine.low %v3876, %v3884
        %v3902 = vcombine.high %v3876, %v3884
        %v3904 = vunpack.c.l.s4 1934713408
        %v3905 = vunpack.c.0.s8 %v3904
        %v3906 = vlaneseq
        %v3907 = vshrl.u32 %v3906, 7
        %v3908 = vsub.s32 %v3905, %v3907
        %v3909 = vrot.slane %v3901, %v3908
        %v3911 = vunpack.c.l.s4 1934713408
        %v3912 = vunpack.c.0.s8 %v3911
        %v3913 = vlaneseq
        %v3914 = vshrl.u32 %v3913, 7
        %v3915 = vsub.s32 %v3912, %v3914
        %v3916 = vrot.slane %v3902, %v3915
        %v3917 = vcombine.low %v3892, %v3900
        %v3918 = vcombine.high %v3892, %v3900
        %v3920 = vunpack.c.l.s4 1934713408
        %v3921 = vunpack.c.0.s8 %v3920
        %v3922 = vlaneseq
        %v3923 = vshrl.u32 %v3922, 7
        %v3924 = vsub.s32 %v3921, %v3923
        %v3925 = vrot.slane %v3917, %v3924
        %v3927 = vunpack.c.l.s4 1934713408
        %v3928 = vunpack.c.0.s8 %v3927
        %v3929 = vlaneseq
        %v3930 = vshrl.u32 %v3929, 7
        %v3931 = vsub.s32 %v3928, %v3930
        %v3932 = vrot.slane %v3918, %v3931
        %v3933 = vcombine.low %v3909, %v3925
        %v3934 = vcombine.high %v3909, %v3925
        %v3935 = vcombine.low %v3916, %v3932
        %v3936 = vcombine.high %v3916, %v3932
        %v3937 = vcombine.low %v3433, %v3440
        %v3939 = vunpack.c.l.s4 1983009808
        %v3940 = vunpack.c.0.s8 %v3939
        %v3941 = vlaneseq
        %v3942 = vshrl.u32 %v3941, 7
        %v3943 = vsub.s32 %v3940, %v3942
        %v3944 = vrot.slane %v3937, %v3943
        %v3945 = vcombine.low %v3457, %v3458
        %v3947 = vunpack.c.l.s4 1983009808
        %v3948 = vunpack.c.0.s8 %v3947
        %v3949 = vlaneseq
        %v3950 = vshrl.u32 %v3949, 7
        %v3951 = vsub.s32 %v3948, %v3950
        %v3952 = vrot.slane %v3945, %v3951
        %v3953 = vcombine.low %v3449, %v3456
        %v3955 = vunpack.c.l.s4 1983009808
        %v3956 = vunpack.c.0.s8 %v3955
        %v3957 = vlaneseq
        %v3958 = vshrl.u32 %v3957, 7
        %v3959 = vsub.s32 %v3956, %v3958
        %v3960 = vrot.slane %v3953, %v3959
        %v3961 = vcombine.low %v3459, %v3460
        %v3963 = vunpack.c.l.s4 1983009808
        %v3964 = vunpack.c.0.s8 %v3963
        %v3965 = vlaneseq
        %v3966 = vshrl.u32 %v3965, 7
        %v3967 = vsub.s32 %v3964, %v3966
        %v3968 = vrot.slane %v3961, %v3967
        %v3969 = vcombine.low %v3944, %v3952
        %v3970 = vcombine.high %v3944, %v3952
        %v3972 = vunpack.c.l.s4 1934713408
        %v3973 = vunpack.c.0.s8 %v3972
        %v3974 = vlaneseq
        %v3975 = vshrl.u32 %v3974, 7
        %v3976 = vsub.s32 %v3973, %v3975
        %v3977 = vrot.slane %v3969, %v3976
        %v3979 = vunpack.c.l.s4 1934713408
        %v3980 = vunpack.c.0.s8 %v3979
        %v3981 = vlaneseq
        %v3982 = vshrl.u32 %v3981, 7
        %v3983 = vsub.s32 %v3980, %v3982
        %v3984 = vrot.slane %v3970, %v3983
        %v3985 = vcombine.low %v3960, %v3968
        %v3986 = vcombine.high %v3960, %v3968
        %v3988 = vunpack.c.l.s4 1934713408
        %v3989 = vunpack.c.0.s8 %v3988
        %v3990 = vlaneseq
        %v3991 = vshrl.u32 %v3990, 7
        %v3992 = vsub.s32 %v3989, %v3991
        %v3993 = vrot.slane %v3985, %v3992
        %v3995 = vunpack.c.l.s4 1934713408
        %v3996 = vunpack.c.0.s8 %v3995
        %v3997 = vlaneseq
        %v3998 = vshrl.u32 %v3997, 7
        %v3999 = vsub.s32 %v3996, %v3998
        %v4000 = vrot.slane %v3986, %v3999
        %v4001 = vcombine.low %v3977, %v3993
        %v4002 = vcombine.high %v3977, %v3993
        %v4003 = vcombine.low %v3984, %v4000
        %v4004 = vcombine.high %v3984, %v4000
        %v4005 = vcombine.low %v3501, %v3508
        %v4007 = vunpack.c.l.s4 1983009808
        %v4008 = vunpack.c.0.s8 %v4007
        %v4009 = vlaneseq
        %v4010 = vshrl.u32 %v4009, 7
        %v4011 = vsub.s32 %v4008, %v4010
        %v4012 = vrot.slane %v4005, %v4011
        %v4013 = vcombine.low %v3525, %v3526
        %v4015 = vunpack.c.l.s4 1983009808
        %v4016 = vunpack.c.0.s8 %v4015
        %v4017 = vlaneseq
        %v4018 = vshrl.u32 %v4017, 7
        %v4019 = vsub.s32 %v4016, %v4018
        %v4020 = vrot.slane %v4013, %v4019
        %v4021 = vcombine.low %v3517, %v3524
        %v4023 = vunpack.c.l.s4 1983009808
        %v4024 = vunpack.c.0.s8 %v4023
        %v4025 = vlaneseq
        %v4026 = vshrl.u32 %v4025, 7
        %v4027 = vsub.s32 %v4024, %v4026
        %v4028 = vrot.slane %v4021, %v4027
        %v4029 = vcombine.low %v3527, %v3528
        %v4031 = vunpack.c.l.s4 1983009808
        %v4032 = vunpack.c.0.s8 %v4031
        %v4033 = vlaneseq
        %v4034 = vshrl.u32 %v4033, 7
        %v4035 = vsub.s32 %v4032, %v4034
        %v4036 = vrot.slane %v4029, %v4035
        %v4037 = vcombine.low %v4012, %v4020
        %v4038 = vcombine.high %v4012, %v4020
        %v4040 = vunpack.c.l.s4 1934713408
        %v4041 = vunpack.c.0.s8 %v4040
        %v4042 = vlaneseq
        %v4043 = vshrl.u32 %v4042, 7
        %v4044 = vsub.s32 %v4041, %v4043
        %v4045 = vrot.slane %v4037, %v4044
        %v4047 = vunpack.c.l.s4 1934713408
        %v4048 = vunpack.c.0.s8 %v4047
        %v4049 = vlaneseq
        %v4050 = vshrl.u32 %v4049, 7
        %v4051 = vsub.s32 %v4048, %v4050
        %v4052 = vrot.slane %v4038, %v4051
        %v4053 = vcombine.low %v4028, %v4036
        %v4054 = vcombine.high %v4028, %v4036
        %v4056 = vunpack.c.l.s4 1934713408
        %v4057 = vunpack.c.0.s8 %v4056
        %v4058 = vlaneseq
        %v4059 = vshrl.u32 %v4058, 7
        %v4060 = vsub.s32 %v4057, %v4059
        %v4061 = vrot.slane %v4053, %v4060
        %v4063 = vunpack.c.l.s4 1934713408
        %v4064 = vunpack.c.0.s8 %v4063
        %v4065 = vlaneseq
        %v4066 = vshrl.u32 %v4065, 7
        %v4067 = vsub.s32 %v4064, %v4066
        %v4068 = vrot.slane %v4054, %v4067
        %v4069 = vcombine.low %v4045, %v4061
        %v4070 = vcombine.high %v4045, %v4061
        %v4071 = vcombine.low %v4052, %v4068
        %v4072 = vcombine.high %v4052, %v4068
        %v4073 = vcombine.low %v3569, %v3576
        %v4075 = vunpack.c.l.s4 1983009808
        %v4076 = vunpack.c.0.s8 %v4075
        %v4077 = vlaneseq
        %v4078 = vshrl.u32 %v4077, 7
        %v4079 = vsub.s32 %v4076, %v4078
        %v4080 = vrot.slane %v4073, %v4079
        %v4081 = vcombine.low %v3593, %v3594
        %v4083 = vunpack.c.l.s4 1983009808
        %v4084 = vunpack.c.0.s8 %v4083
        %v4085 = vlaneseq
        %v4086 = vshrl.u32 %v4085, 7
        %v4087 = vsub.s32 %v4084, %v4086
        %v4088 = vrot.slane %v4081, %v4087
        %v4089 = vcombine.low %v3585, %v3592
        %v4091 = vunpack.c.l.s4 1983009808
        %v4092 = vunpack.c.0.s8 %v4091
        %v4093 = vlaneseq
        %v4094 = vshrl.u32 %v4093, 7
        %v4095 = vsub.s32 %v4092, %v4094
        %v4096 = vrot.slane %v4089, %v4095
        %v4097 = vcombine.low %v3595, %v3596
        %v4099 = vunpack.c.l.s4 1983009808
        %v4100 = vunpack.c.0.s8 %v4099
        %v4101 = vlaneseq
        %v4102 = vshrl.u32 %v4101, 7
        %v4103 = vsub.s32 %v4100, %v4102
        %v4104 = vrot.slane %v4097, %v4103
        %v4105 = vcombine.low %v4080, %v4088
        %v4106 = vcombine.high %v4080, %v4088
        %v4108 = vunpack.c.l.s4 1934713408
        %v4109 = vunpack.c.0.s8 %v4108
        %v4110 = vlaneseq
        %v4111 = vshrl.u32 %v4110, 7
        %v4112 = vsub.s32 %v4109, %v4111
        %v4113 = vrot.slane %v4105, %v4112
        %v4115 = vunpack.c.l.s4 1934713408
        %v4116 = vunpack.c.0.s8 %v4115
        %v4117 = vlaneseq
        %v4118 = vshrl.u32 %v4117, 7
        %v4119 = vsub.s32 %v4116, %v4118
        %v4120 = vrot.slane %v4106, %v4119
        %v4121 = vcombine.low %v4096, %v4104
        %v4122 = vcombine.high %v4096, %v4104
        %v4124 = vunpack.c.l.s4 1934713408
        %v4125 = vunpack.c.0.s8 %v4124
        %v4126 = vlaneseq
        %v4127 = vshrl.u32 %v4126, 7
        %v4128 = vsub.s32 %v4125, %v4127
        %v4129 = vrot.slane %v4121, %v4128
        %v4131 = vunpack.c.l.s4 1934713408
        %v4132 = vunpack.c.0.s8 %v4131
        %v4133 = vlaneseq
        %v4134 = vshrl.u32 %v4133, 7
        %v4135 = vsub.s32 %v4132, %v4134
        %v4136 = vrot.slane %v4122, %v4135
        %v4137 = vcombine.low %v4113, %v4129
        %v4138 = vcombine.high %v4113, %v4129
        %v4139 = vcombine.low %v4120, %v4136
        %v4140 = vcombine.high %v4120, %v4136
        %v4141 = vcombine.low %v3637, %v3644
        %v4143 = vunpack.c.l.s4 1983009808
        %v4144 = vunpack.c.0.s8 %v4143
        %v4145 = vlaneseq
        %v4146 = vshrl.u32 %v4145, 7
        %v4147 = vsub.s32 %v4144, %v4146
        %v4148 = vrot.slane %v4141, %v4147
        %v4149 = vcombine.low %v3661, %v3662
        %v4151 = vunpack.c.l.s4 1983009808
        %v4152 = vunpack.c.0.s8 %v4151
        %v4153 = vlaneseq
        %v4154 = vshrl.u32 %v4153, 7
        %v4155 = vsub.s32 %v4152, %v4154
        %v4156 = vrot.slane %v4149, %v4155
        %v4157 = vcombine.low %v3653, %v3660
        %v4159 = vunpack.c.l.s4 1983009808
        %v4160 = vunpack.c.0.s8 %v4159
        %v4161 = vlaneseq
        %v4162 = vshrl.u32 %v4161, 7
        %v4163 = vsub.s32 %v4160, %v4162
        %v4164 = vrot.slane %v4157, %v4163
        %v4165 = vcombine.low %v3663, %v3664
        %v4167 = vunpack.c.l.s4 1983009808
        %v4168 = vunpack.c.0.s8 %v4167
        %v4169 = vlaneseq
        %v4170 = vshrl.u32 %v4169, 7
        %v4171 = vsub.s32 %v4168, %v4170
        %v4172 = vrot.slane %v4165, %v4171
        %v4173 = vcombine.low %v4148, %v4156
        %v4174 = vcombine.high %v4148, %v4156
        %v4176 = vunpack.c.l.s4 1934713408
        %v4177 = vunpack.c.0.s8 %v4176
        %v4178 = vlaneseq
        %v4179 = vshrl.u32 %v4178, 7
        %v4180 = vsub.s32 %v4177, %v4179
        %v4181 = vrot.slane %v4173, %v4180
        %v4183 = vunpack.c.l.s4 1934713408
        %v4184 = vunpack.c.0.s8 %v4183
        %v4185 = vlaneseq
        %v4186 = vshrl.u32 %v4185, 7
        %v4187 = vsub.s32 %v4184, %v4186
        %v4188 = vrot.slane %v4174, %v4187
        %v4189 = vcombine.low %v4164, %v4172
        %v4190 = vcombine.high %v4164, %v4172
        %v4192 = vunpack.c.l.s4 1934713408
        %v4193 = vunpack.c.0.s8 %v4192
        %v4194 = vlaneseq
        %v4195 = vshrl.u32 %v4194, 7
        %v4196 = vsub.s32 %v4193, %v4195
        %v4197 = vrot.slane %v4189, %v4196
        %v4199 = vunpack.c.l.s4 1934713408
        %v4200 = vunpack.c.0.s8 %v4199
        %v4201 = vlaneseq
        %v4202 = vshrl.u32 %v4201, 7
        %v4203 = vsub.s32 %v4200, %v4202
        %v4204 = vrot.slane %v4190, %v4203
        %v4205 = vcombine.low %v4181, %v4197
        %v4206 = vcombine.high %v4181, %v4197
        %v4207 = vcombine.low %v4188, %v4204
        %v4208 = vcombine.high %v4188, %v4204
        %v4209 = vcombine.low %v3705, %v3712
        %v4211 = vunpack.c.l.s4 1983009808
        %v4212 = vunpack.c.0.s8 %v4211
        %v4213 = vlaneseq
        %v4214 = vshrl.u32 %v4213, 7
        %v4215 = vsub.s32 %v4212, %v4214
        %v4216 = vrot.slane %v4209, %v4215
        %v4217 = vcombine.low %v3729, %v3730
        %v4219 = vunpack.c.l.s4 1983009808
        %v4220 = vunpack.c.0.s8 %v4219
        %v4221 = vlaneseq
        %v4222 = vshrl.u32 %v4221, 7
        %v4223 = vsub.s32 %v4220, %v4222
        %v4224 = vrot.slane %v4217, %v4223
        %v4225 = vcombine.low %v3721, %v3728
        %v4227 = vunpack.c.l.s4 1983009808
        %v4228 = vunpack.c.0.s8 %v4227
        %v4229 = vlaneseq
        %v4230 = vshrl.u32 %v4229, 7
        %v4231 = vsub.s32 %v4228, %v4230
        %v4232 = vrot.slane %v4225, %v4231
        %v4233 = vcombine.low %v3731, %v3732
        %v4235 = vunpack.c.l.s4 1983009808
        %v4236 = vunpack.c.0.s8 %v4235
        %v4237 = vlaneseq
        %v4238 = vshrl.u32 %v4237, 7
        %v4239 = vsub.s32 %v4236, %v4238
        %v4240 = vrot.slane %v4233, %v4239
        %v4241 = vcombine.low %v4216, %v4224
        %v4242 = vcombine.high %v4216, %v4224
        %v4244 = vunpack.c.l.s4 1934713408
        %v4245 = vunpack.c.0.s8 %v4244
        %v4246 = vlaneseq
        %v4247 = vshrl.u32 %v4246, 7
        %v4248 = vsub.s32 %v4245, %v4247
        %v4249 = vrot.slane %v4241, %v4248
        %v4251 = vunpack.c.l.s4 1934713408
        %v4252 = vunpack.c.0.s8 %v4251
        %v4253 = vlaneseq
        %v4254 = vshrl.u32 %v4253, 7
        %v4255 = vsub.s32 %v4252, %v4254
        %v4256 = vrot.slane %v4242, %v4255
        %v4257 = vcombine.low %v4232, %v4240
        %v4258 = vcombine.high %v4232, %v4240
        %v4260 = vunpack.c.l.s4 1934713408
        %v4261 = vunpack.c.0.s8 %v4260
        %v4262 = vlaneseq
        %v4263 = vshrl.u32 %v4262, 7
        %v4264 = vsub.s32 %v4261, %v4263
        %v4265 = vrot.slane %v4257, %v4264
        %v4267 = vunpack.c.l.s4 1934713408
        %v4268 = vunpack.c.0.s8 %v4267
        %v4269 = vlaneseq
        %v4270 = vshrl.u32 %v4269, 7
        %v4271 = vsub.s32 %v4268, %v4270
        %v4272 = vrot.slane %v4258, %v4271
        %v4273 = vcombine.low %v4249, %v4265
        %v4274 = vcombine.high %v4249, %v4265
        %v4275 = vcombine.low %v4256, %v4272
        %v4276 = vcombine.high %v4256, %v4272
        %v4277 = vcombine.low %v3773, %v3780
        %v4279 = vunpack.c.l.s4 1983009808
        %v4280 = vunpack.c.0.s8 %v4279
        %v4281 = vlaneseq
        %v4282 = vshrl.u32 %v4281, 7
        %v4283 = vsub.s32 %v4280, %v4282
        %v4284 = vrot.slane %v4277, %v4283
        %v4285 = vcombine.low %v3797, %v3798
        %v4287 = vunpack.c.l.s4 1983009808
        %v4288 = vunpack.c.0.s8 %v4287
        %v4289 = vlaneseq
        %v4290 = vshrl.u32 %v4289, 7
        %v4291 = vsub.s32 %v4288, %v4290
        %v4292 = vrot.slane %v4285, %v4291
        %v4293 = vcombine.low %v3789, %v3796
        %v4295 = vunpack.c.l.s4 1983009808
        %v4296 = vunpack.c.0.s8 %v4295
        %v4297 = vlaneseq
        %v4298 = vshrl.u32 %v4297, 7
        %v4299 = vsub.s32 %v4296, %v4298
        %v4300 = vrot.slane %v4293, %v4299
        %v4301 = vcombine.low %v3799, %v3800
        %v4303 = vunpack.c.l.s4 1983009808
        %v4304 = vunpack.c.0.s8 %v4303
        %v4305 = vlaneseq
        %v4306 = vshrl.u32 %v4305, 7
        %v4307 = vsub.s32 %v4304, %v4306
        %v4308 = vrot.slane %v4301, %v4307
        %v4309 = vcombine.low %v4284, %v4292
        %v4310 = vcombine.high %v4284, %v4292
        %v4312 = vunpack.c.l.s4 1934713408
        %v4313 = vunpack.c.0.s8 %v4312
        %v4314 = vlaneseq
        %v4315 = vshrl.u32 %v4314, 7
        %v4316 = vsub.s32 %v4313, %v4315
        %v4317 = vrot.slane %v4309, %v4316
        %v4319 = vunpack.c.l.s4 1934713408
        %v4320 = vunpack.c.0.s8 %v4319
        %v4321 = vlaneseq
        %v4322 = vshrl.u32 %v4321, 7
        %v4323 = vsub.s32 %v4320, %v4322
        %v4324 = vrot.slane %v4310, %v4323
        %v4325 = vcombine.low %v4300, %v4308
        %v4326 = vcombine.high %v4300, %v4308
        %v4328 = vunpack.c.l.s4 1934713408
        %v4329 = vunpack.c.0.s8 %v4328
        %v4330 = vlaneseq
        %v4331 = vshrl.u32 %v4330, 7
        %v4332 = vsub.s32 %v4329, %v4331
        %v4333 = vrot.slane %v4325, %v4332
        %v4335 = vunpack.c.l.s4 1934713408
        %v4336 = vunpack.c.0.s8 %v4335
        %v4337 = vlaneseq
        %v4338 = vshrl.u32 %v4337, 7
        %v4339 = vsub.s32 %v4336, %v4338
        %v4340 = vrot.slane %v4326, %v4339
        %v4341 = vcombine.low %v4317, %v4333
        %v4342 = vcombine.high %v4317, %v4333
        %v4343 = vcombine.low %v4324, %v4340
        %v4344 = vcombine.high %v4324, %v4340
        %v4345 = vpack.c.bf16 %v1565, %v1497
        %v4346 = vpack.c.bf16 %v1701, %v1633
        %v4347 = vpack.c.bf16 %v1566, %v1498
        %v4348 = vpack.c.bf16 %v1702, %v1634
        %v4349 = vpack.c.bf16 %v1567, %v1499
        %v4350 = vpack.c.bf16 %v1703, %v1635
        %v4351 = vpack.c.bf16 %v1568, %v1500
        %v4352 = vpack.c.bf16 %v1704, %v1636
        %v4353 = vpack.c.bf16 %v1837, %v1769
        %v4354 = vpack.c.bf16 %v1973, %v1905
        %v4355 = vpack.c.bf16 %v1838, %v1770
        %v4356 = vpack.c.bf16 %v1974, %v1906
        %v4357 = vpack.c.bf16 %v1839, %v1771
        %v4358 = vpack.c.bf16 %v1975, %v1907
        %v4359 = vpack.c.bf16 %v1840, %v1772
        %v4360 = vpack.c.bf16 %v1976, %v1908
        %v4361 = vpack.c.bf16 %v2749, %v2681
        %v4362 = vpack.c.bf16 %v2885, %v2817
        %v4363 = vpack.c.bf16 %v2750, %v2682
        %v4364 = vpack.c.bf16 %v2886, %v2818
        %v4365 = vpack.c.bf16 %v2751, %v2683
        %v4366 = vpack.c.bf16 %v2887, %v2819
        %v4367 = vpack.c.bf16 %v2752, %v2684
        %v4368 = vpack.c.bf16 %v2888, %v2820
        %v4369 = vpack.c.bf16 %v3021, %v2953
        %v4370 = vpack.c.bf16 %v3157, %v3089
        %v4371 = vpack.c.bf16 %v3022, %v2954
        %v4372 = vpack.c.bf16 %v3158, %v3090
        %v4373 = vpack.c.bf16 %v3023, %v2955
        %v4374 = vpack.c.bf16 %v3159, %v3091
        %v4375 = vpack.c.bf16 %v3024, %v2956
        %v4376 = vpack.c.bf16 %v3160, %v3092
        %vm4377 = vcmask 64512
        %v4379 = vsel %vm4377, %v4345, 0
        %v4382 = vsel %vm4377, %v4346, 0
        %v4385 = vsel %vm4377, %v4361, 0
        %v4388 = vsel %vm4377, %v4362, 0
        %4390 = vmatprep.subr.bf16.mxu0 0
        %4391 = vmatpush1.bf16.xpose.msra.mxu0 0
        %4392 = vmatprep.subr.bf16.mxu0 0
        %4393 = vmatpush1.bf16.xpose.msra.mxu0 0
        %4394 = vmatprep.subr.bf16.mxu0 0
        %4395 = vmatpush1.bf16.xpose.msra.mxu0 0
        %4396 = vmatprep.subr.bf16.mxu0 0
        %4397 = vmatpush1.bf16.xpose.msra.mxu0 0
        %4398 = vmatprep.subr.bf16.mxu0 0
        %4399 = vmatpush1.bf16.xpose.msra.mxu0 0
        %4400 = vmatprep.subr.bf16.mxu0 0
        %4401 = vmatpush1.bf16.xpose.msra.mxu0 0
        %4402 = vmatprep.subr.bf16.mxu0 0
        %4403 = vmatpush1.bf16.xpose.msra.mxu0 %v4388
        %4404 = vmatprep.subr.bf16.mxu0 0
        %4405 = vmatpush1.bf16.xpose.msra.mxu0 %v4385
        %4406 = vmatprep.subr.bf16.mxu0 0
        %4407 = vmatpush2.bf16.xpose.msra.mxu0 0
        %4408 = vmatprep.subr.bf16.mxu0 0
        %4409 = vmatpush2.bf16.xpose.msra.mxu0 0
        %4410 = vmatprep.subr.bf16.mxu0 0
        %4411 = vmatpush2.bf16.xpose.msra.mxu0 0
        %4412 = vmatprep.subr.bf16.mxu0 0
        %4413 = vmatpush2.bf16.xpose.msra.mxu0 0
        %4414 = vmatprep.subr.bf16.mxu0 0
        %4415 = vmatpush2.bf16.xpose.msra.mxu0 0
        %4416 = vmatprep.subr.bf16.mxu0 0
        %4417 = vmatpush2.bf16.xpose.msra.mxu0 0
        %4418 = vmatprep.subr.bf16.mxu0 0
        %4419 = vmatpush2.bf16.xpose.msra.mxu0 0
        %4420 = vmatprep.subr.bf16.mxu0 0
        %4421 = vmatpush2.bf16.xpose.msra.mxu0 0
        %4422 = vmatprep.mubr.bf16.mxu0 0
        %4423 = vmatmul.mubr.bf16.gmra.mxu0 %v4379
        %v4424 = vpop.f32.mrf.mxu0
        %v4425 = vadd.f32 0.0, %v4424
        %v4426 = vpop.f32.mrf.mxu0
        %v4427 = vpop.f32.mrf.mxu0
        %v4428 = vadd.f32 0.0, %v4427
        %v4429 = vpop.f32.mrf.mxu0
        %4430 = vmatprep.mubr.bf16.mxu0 0
        %4431 = vmatmul.mubr.bf16.gmra.mxu0 %v4382
        %v4432 = vpop.f32.mrf.mxu0
        %v4433 = vadd.f32 0.0, %v4432
        %v4434 = vpop.f32.mrf.mxu0
        %v4435 = vpop.f32.mrf.mxu0
        %v4436 = vadd.f32 0.0, %v4435
        %v4437 = vpop.f32.mrf.mxu0
        %4438 = vdwg.mxu0
        %v4440 = vsel %vm4377, %v4347, 0
        %v4443 = vsel %vm4377, %v4348, 0
        %v4446 = vsel %vm4377, %v4363, 0
        %v4449 = vsel %vm4377, %v4364, 0
        %4451 = vmatprep.subr.bf16.mxu0 0
        %4452 = vmatpush1.bf16.xpose.msra.mxu0 0
        %4453 = vmatprep.subr.bf16.mxu0 0
        %4454 = vmatpush1.bf16.xpose.msra.mxu0 0
        %4455 = vmatprep.subr.bf16.mxu0 0
        %4456 = vmatpush1.bf16.xpose.msra.mxu0 0
        %4457 = vmatprep.subr.bf16.mxu0 0
        %4458 = vmatpush1.bf16.xpose.msra.mxu0 0
        %4459 = vmatprep.subr.bf16.mxu0 0
        %4460 = vmatpush1.bf16.xpose.msra.mxu0 0
        %4461 = vmatprep.subr.bf16.mxu0 0
        %4462 = vmatpush1.bf16.xpose.msra.mxu0 0
        %4463 = vmatprep.subr.bf16.mxu0 0
        %4464 = vmatpush1.bf16.xpose.msra.mxu0 %v4449
        %4465 = vmatprep.subr.bf16.mxu0 0
        %4466 = vmatpush1.bf16.xpose.msra.mxu0 %v4446
        %4467 = vmatprep.subr.bf16.mxu0 0
        %4468 = vmatpush2.bf16.xpose.msra.mxu0 0
        %4469 = vmatprep.subr.bf16.mxu0 0
        %4470 = vmatpush2.bf16.xpose.msra.mxu0 0
        %4471 = vmatprep.subr.bf16.mxu0 0
        %4472 = vmatpush2.bf16.xpose.msra.mxu0 0
        %4473 = vmatprep.subr.bf16.mxu0 0
        %4474 = vmatpush2.bf16.xpose.msra.mxu0 0
        %4475 = vmatprep.subr.bf16.mxu0 0
        %4476 = vmatpush2.bf16.xpose.msra.mxu0 0
        %4477 = vmatprep.subr.bf16.mxu0 0
        %4478 = vmatpush2.bf16.xpose.msra.mxu0 0
        %4479 = vmatprep.subr.bf16.mxu0 0
        %4480 = vmatpush2.bf16.xpose.msra.mxu0 0
        %4481 = vmatprep.subr.bf16.mxu0 0
        %4482 = vmatpush2.bf16.xpose.msra.mxu0 0
        %4483 = vmatprep.mubr.bf16.mxu0 0
        %4484 = vmatmul.mubr.bf16.gmra.mxu0 %v4440
        %v4485 = vpop.f32.mrf.mxu0
        %v4486 = vadd.f32 0.0, %v4485
        %v4487 = vpop.f32.mrf.mxu0
        %v4488 = vpop.f32.mrf.mxu0
        %v4489 = vadd.f32 0.0, %v4488
        %v4490 = vpop.f32.mrf.mxu0
        %4491 = vmatprep.mubr.bf16.mxu0 0
        %4492 = vmatmul.mubr.bf16.gmra.mxu0 %v4443
        %v4493 = vpop.f32.mrf.mxu0
        %v4494 = vadd.f32 0.0, %v4493
        %v4495 = vpop.f32.mrf.mxu0
        %v4496 = vpop.f32.mrf.mxu0
        %v4497 = vadd.f32 0.0, %v4496
        %v4498 = vpop.f32.mrf.mxu0
        %4499 = vdwg.mxu0
        %v4501 = vsel %vm4377, %v4349, 0
        %v4504 = vsel %vm4377, %v4350, 0
        %v4507 = vsel %vm4377, %v4365, 0
        %v4510 = vsel %vm4377, %v4366, 0
        %4512 = vmatprep.subr.bf16.mxu0 0
        %4513 = vmatpush1.bf16.xpose.msra.mxu0 0
        %4514 = vmatprep.subr.bf16.mxu0 0
        %4515 = vmatpush1.bf16.xpose.msra.mxu0 0
        %4516 = vmatprep.subr.bf16.mxu0 0
        %4517 = vmatpush1.bf16.xpose.msra.mxu0 0
        %4518 = vmatprep.subr.bf16.mxu0 0
        %4519 = vmatpush1.bf16.xpose.msra.mxu0 0
        %4520 = vmatprep.subr.bf16.mxu0 0
        %4521 = vmatpush1.bf16.xpose.msra.mxu0 0
        %4522 = vmatprep.subr.bf16.mxu0 0
        %4523 = vmatpush1.bf16.xpose.msra.mxu0 0
        %4524 = vmatprep.subr.bf16.mxu0 0
        %4525 = vmatpush1.bf16.xpose.msra.mxu0 %v4510
        %4526 = vmatprep.subr.bf16.mxu0 0
        %4527 = vmatpush1.bf16.xpose.msra.mxu0 %v4507
        %4528 = vmatprep.subr.bf16.mxu0 0
        %4529 = vmatpush2.bf16.xpose.msra.mxu0 0
        %4530 = vmatprep.subr.bf16.mxu0 0
        %4531 = vmatpush2.bf16.xpose.msra.mxu0 0
        %4532 = vmatprep.subr.bf16.mxu0 0
        %4533 = vmatpush2.bf16.xpose.msra.mxu0 0
        %4534 = vmatprep.subr.bf16.mxu0 0
        %4535 = vmatpush2.bf16.xpose.msra.mxu0 0
        %4536 = vmatprep.subr.bf16.mxu0 0
        %4537 = vmatpush2.bf16.xpose.msra.mxu0 0
        %4538 = vmatprep.subr.bf16.mxu0 0
        %4539 = vmatpush2.bf16.xpose.msra.mxu0 0
        %4540 = vmatprep.subr.bf16.mxu0 0
        %4541 = vmatpush2.bf16.xpose.msra.mxu0 0
        %4542 = vmatprep.subr.bf16.mxu0 0
        %4543 = vmatpush2.bf16.xpose.msra.mxu0 0
        %4544 = vmatprep.mubr.bf16.mxu0 0
        %4545 = vmatmul.mubr.bf16.gmra.mxu0 %v4501
        %v4546 = vpop.f32.mrf.mxu0
        %v4547 = vadd.f32 0.0, %v4546
        %v4548 = vpop.f32.mrf.mxu0
        %v4549 = vpop.f32.mrf.mxu0
        %v4550 = vadd.f32 0.0, %v4549
        %v4551 = vpop.f32.mrf.mxu0
        %4552 = vmatprep.mubr.bf16.mxu0 0
        %4553 = vmatmul.mubr.bf16.gmra.mxu0 %v4504
        %v4554 = vpop.f32.mrf.mxu0
        %v4555 = vadd.f32 0.0, %v4554
        %v4556 = vpop.f32.mrf.mxu0
        %v4557 = vpop.f32.mrf.mxu0
        %v4558 = vadd.f32 0.0, %v4557
        %v4559 = vpop.f32.mrf.mxu0
        %4560 = vdwg.mxu0
        %v4562 = vsel %vm4377, %v4351, 0
        %v4565 = vsel %vm4377, %v4352, 0
        %v4568 = vsel %vm4377, %v4367, 0
        %v4571 = vsel %vm4377, %v4368, 0
        %4573 = vmatprep.subr.bf16.mxu0 0
        %4574 = vmatpush1.bf16.xpose.msra.mxu0 0
        %4575 = vmatprep.subr.bf16.mxu0 0
        %4576 = vmatpush1.bf16.xpose.msra.mxu0 0
        %4577 = vmatprep.subr.bf16.mxu0 0
        %4578 = vmatpush1.bf16.xpose.msra.mxu0 0
        %4579 = vmatprep.subr.bf16.mxu0 0
        %4580 = vmatpush1.bf16.xpose.msra.mxu0 0
        %4581 = vmatprep.subr.bf16.mxu0 0
        %4582 = vmatpush1.bf16.xpose.msra.mxu0 0
        %4583 = vmatprep.subr.bf16.mxu0 0
        %4584 = vmatpush1.bf16.xpose.msra.mxu0 0
        %4585 = vmatprep.subr.bf16.mxu0 0
        %4586 = vmatpush1.bf16.xpose.msra.mxu0 %v4571
        %4587 = vmatprep.subr.bf16.mxu0 0
        %4588 = vmatpush1.bf16.xpose.msra.mxu0 %v4568
        %4589 = vmatprep.subr.bf16.mxu0 0
        %4590 = vmatpush2.bf16.xpose.msra.mxu0 0
        %4591 = vmatprep.subr.bf16.mxu0 0
        %4592 = vmatpush2.bf16.xpose.msra.mxu0 0
        %4593 = vmatprep.subr.bf16.mxu0 0
        %4594 = vmatpush2.bf16.xpose.msra.mxu0 0
        %4595 = vmatprep.subr.bf16.mxu0 0
        %4596 = vmatpush2.bf16.xpose.msra.mxu0 0
        %4597 = vmatprep.subr.bf16.mxu0 0
        %4598 = vmatpush2.bf16.xpose.msra.mxu0 0
        %4599 = vmatprep.subr.bf16.mxu0 0
        %4600 = vmatpush2.bf16.xpose.msra.mxu0 0
        %4601 = vmatprep.subr.bf16.mxu0 0
        %4602 = vmatpush2.bf16.xpose.msra.mxu0 0
        %4603 = vmatprep.subr.bf16.mxu0 0
        %4604 = vmatpush2.bf16.xpose.msra.mxu0 0
        %4605 = vmatprep.mubr.bf16.mxu0 0
        %4606 = vmatmul.mubr.bf16.gmra.mxu0 %v4562
        %v4607 = vpop.f32.mrf.mxu0
        %v4608 = vadd.f32 0.0, %v4607
        %v4609 = vpop.f32.mrf.mxu0
        %v4610 = vpop.f32.mrf.mxu0
        %v4611 = vadd.f32 0.0, %v4610
        %v4612 = vpop.f32.mrf.mxu0
        %4613 = vmatprep.mubr.bf16.mxu0 0
        %4614 = vmatmul.mubr.bf16.gmra.mxu0 %v4565
        %v4615 = vpop.f32.mrf.mxu0
        %v4616 = vadd.f32 0.0, %v4615
        %v4617 = vpop.f32.mrf.mxu0
        %v4618 = vpop.f32.mrf.mxu0
        %v4619 = vadd.f32 0.0, %v4618
        %v4620 = vpop.f32.mrf.mxu0
        %4621 = vdwg.mxu0
        %v4623 = vsel %vm4377, %v4353, 0
        %v4626 = vsel %vm4377, %v4354, 0
        %v4629 = vsel %vm4377, %v4369, 0
        %v4632 = vsel %vm4377, %v4370, 0
        %4634 = vmatprep.subr.bf16.mxu0 0
        %4635 = vmatpush1.bf16.xpose.msra.mxu0 0
        %4636 = vmatprep.subr.bf16.mxu0 0
        %4637 = vmatpush1.bf16.xpose.msra.mxu0 0
        %4638 = vmatprep.subr.bf16.mxu0 0
        %4639 = vmatpush1.bf16.xpose.msra.mxu0 0
        %4640 = vmatprep.subr.bf16.mxu0 0
        %4641 = vmatpush1.bf16.xpose.msra.mxu0 0
        %4642 = vmatprep.subr.bf16.mxu0 0
        %4643 = vmatpush1.bf16.xpose.msra.mxu0 0
        %4644 = vmatprep.subr.bf16.mxu0 0
        %4645 = vmatpush1.bf16.xpose.msra.mxu0 0
        %4646 = vmatprep.subr.bf16.mxu0 0
        %4647 = vmatpush1.bf16.xpose.msra.mxu0 %v4632
        %4648 = vmatprep.subr.bf16.mxu0 0
        %4649 = vmatpush1.bf16.xpose.msra.mxu0 %v4629
        %4650 = vmatprep.subr.bf16.mxu0 0
        %4651 = vmatpush2.bf16.xpose.msra.mxu0 0
        %4652 = vmatprep.subr.bf16.mxu0 0
        %4653 = vmatpush2.bf16.xpose.msra.mxu0 0
        %4654 = vmatprep.subr.bf16.mxu0 0
        %4655 = vmatpush2.bf16.xpose.msra.mxu0 0
        %4656 = vmatprep.subr.bf16.mxu0 0
        %4657 = vmatpush2.bf16.xpose.msra.mxu0 0
        %4658 = vmatprep.subr.bf16.mxu0 0
        %4659 = vmatpush2.bf16.xpose.msra.mxu0 0
        %4660 = vmatprep.subr.bf16.mxu0 0
        %4661 = vmatpush2.bf16.xpose.msra.mxu0 0
        %4662 = vmatprep.subr.bf16.mxu0 0
        %4663 = vmatpush2.bf16.xpose.msra.mxu0 0
        %4664 = vmatprep.subr.bf16.mxu0 0
        %4665 = vmatpush2.bf16.xpose.msra.mxu0 0
        %4666 = vmatprep.mubr.bf16.mxu0 0
        %4667 = vmatmul.mubr.bf16.gmra.mxu0 %v4623
        %v4668 = vpop.f32.mrf.mxu0
        %v4669 = vadd.f32 0.0, %v4668
        %v4670 = vpop.f32.mrf.mxu0
        %v4671 = vpop.f32.mrf.mxu0
        %v4672 = vadd.f32 0.0, %v4671
        %v4673 = vpop.f32.mrf.mxu0
        %4674 = vmatprep.mubr.bf16.mxu0 0
        %4675 = vmatmul.mubr.bf16.gmra.mxu0 %v4626
        %v4676 = vpop.f32.mrf.mxu0
        %v4677 = vadd.f32 0.0, %v4676
        %v4678 = vpop.f32.mrf.mxu0
        %v4679 = vpop.f32.mrf.mxu0
        %v4680 = vadd.f32 0.0, %v4679
        %v4681 = vpop.f32.mrf.mxu0
        %4682 = vdwg.mxu0
        %v4684 = vsel %vm4377, %v4355, 0
        %v4687 = vsel %vm4377, %v4356, 0
        %v4690 = vsel %vm4377, %v4371, 0
        %v4693 = vsel %vm4377, %v4372, 0
        %4695 = vmatprep.subr.bf16.mxu0 0
        %4696 = vmatpush1.bf16.xpose.msra.mxu0 0
        %4697 = vmatprep.subr.bf16.mxu0 0
        %4698 = vmatpush1.bf16.xpose.msra.mxu0 0
        %4699 = vmatprep.subr.bf16.mxu0 0
        %4700 = vmatpush1.bf16.xpose.msra.mxu0 0
        %4701 = vmatprep.subr.bf16.mxu0 0
        %4702 = vmatpush1.bf16.xpose.msra.mxu0 0
        %4703 = vmatprep.subr.bf16.mxu0 0
        %4704 = vmatpush1.bf16.xpose.msra.mxu0 0
        %4705 = vmatprep.subr.bf16.mxu0 0
        %4706 = vmatpush1.bf16.xpose.msra.mxu0 0
        %4707 = vmatprep.subr.bf16.mxu0 0
        %4708 = vmatpush1.bf16.xpose.msra.mxu0 %v4693
        %4709 = vmatprep.subr.bf16.mxu0 0
        %4710 = vmatpush1.bf16.xpose.msra.mxu0 %v4690
        %4711 = vmatprep.subr.bf16.mxu0 0
        %4712 = vmatpush2.bf16.xpose.msra.mxu0 0
        %4713 = vmatprep.subr.bf16.mxu0 0
        %4714 = vmatpush2.bf16.xpose.msra.mxu0 0
        %4715 = vmatprep.subr.bf16.mxu0 0
        %4716 = vmatpush2.bf16.xpose.msra.mxu0 0
        %4717 = vmatprep.subr.bf16.mxu0 0
        %4718 = vmatpush2.bf16.xpose.msra.mxu0 0
        %4719 = vmatprep.subr.bf16.mxu0 0
        %4720 = vmatpush2.bf16.xpose.msra.mxu0 0
        %4721 = vmatprep.subr.bf16.mxu0 0
        %4722 = vmatpush2.bf16.xpose.msra.mxu0 0
        %4723 = vmatprep.subr.bf16.mxu0 0
        %4724 = vmatpush2.bf16.xpose.msra.mxu0 0
        %4725 = vmatprep.subr.bf16.mxu0 0
        %4726 = vmatpush2.bf16.xpose.msra.mxu0 0
        %4727 = vmatprep.mubr.bf16.mxu0 0
        %4728 = vmatmul.mubr.bf16.gmra.mxu0 %v4684
        %v4729 = vpop.f32.mrf.mxu0
        %v4730 = vadd.f32 0.0, %v4729
        %v4731 = vpop.f32.mrf.mxu0
        %v4732 = vpop.f32.mrf.mxu0
        %v4733 = vadd.f32 0.0, %v4732
        %v4734 = vpop.f32.mrf.mxu0
        %4735 = vmatprep.mubr.bf16.mxu0 0
        %4736 = vmatmul.mubr.bf16.gmra.mxu0 %v4687
        %v4737 = vpop.f32.mrf.mxu0
        %v4738 = vadd.f32 0.0, %v4737
        %v4739 = vpop.f32.mrf.mxu0
        %v4740 = vpop.f32.mrf.mxu0
        %v4741 = vadd.f32 0.0, %v4740
        %v4742 = vpop.f32.mrf.mxu0
        %4743 = vdwg.mxu0
        %v4745 = vsel %vm4377, %v4357, 0
        %v4748 = vsel %vm4377, %v4358, 0
        %v4751 = vsel %vm4377, %v4373, 0
        %v4754 = vsel %vm4377, %v4374, 0
        %4756 = vmatprep.subr.bf16.mxu0 0
        %4757 = vmatpush1.bf16.xpose.msra.mxu0 0
        %4758 = vmatprep.subr.bf16.mxu0 0
        %4759 = vmatpush1.bf16.xpose.msra.mxu0 0
        %4760 = vmatprep.subr.bf16.mxu0 0
        %4761 = vmatpush1.bf16.xpose.msra.mxu0 0
        %4762 = vmatprep.subr.bf16.mxu0 0
        %4763 = vmatpush1.bf16.xpose.msra.mxu0 0
        %4764 = vmatprep.subr.bf16.mxu0 0
        %4765 = vmatpush1.bf16.xpose.msra.mxu0 0
        %4766 = vmatprep.subr.bf16.mxu0 0
        %4767 = vmatpush1.bf16.xpose.msra.mxu0 0
        %4768 = vmatprep.subr.bf16.mxu0 0
        %4769 = vmatpush1.bf16.xpose.msra.mxu0 %v4754
        %4770 = vmatprep.subr.bf16.mxu0 0
        %4771 = vmatpush1.bf16.xpose.msra.mxu0 %v4751
        %4772 = vmatprep.subr.bf16.mxu0 0
        %4773 = vmatpush2.bf16.xpose.msra.mxu0 0
        %4774 = vmatprep.subr.bf16.mxu0 0
        %4775 = vmatpush2.bf16.xpose.msra.mxu0 0
        %4776 = vmatprep.subr.bf16.mxu0 0
        %4777 = vmatpush2.bf16.xpose.msra.mxu0 0
        %4778 = vmatprep.subr.bf16.mxu0 0
        %4779 = vmatpush2.bf16.xpose.msra.mxu0 0
        %4780 = vmatprep.subr.bf16.mxu0 0
        %4781 = vmatpush2.bf16.xpose.msra.mxu0 0
        %4782 = vmatprep.subr.bf16.mxu0 0
        %4783 = vmatpush2.bf16.xpose.msra.mxu0 0
        %4784 = vmatprep.subr.bf16.mxu0 0
        %4785 = vmatpush2.bf16.xpose.msra.mxu0 0
        %4786 = vmatprep.subr.bf16.mxu0 0
        %4787 = vmatpush2.bf16.xpose.msra.mxu0 0
        %4788 = vmatprep.mubr.bf16.mxu0 0
        %4789 = vmatmul.mubr.bf16.gmra.mxu0 %v4745
        %v4790 = vpop.f32.mrf.mxu0
        %v4791 = vadd.f32 0.0, %v4790
        %v4792 = vpop.f32.mrf.mxu0
        %v4793 = vpop.f32.mrf.mxu0
        %v4794 = vadd.f32 0.0, %v4793
        %v4795 = vpop.f32.mrf.mxu0
        %4796 = vmatprep.mubr.bf16.mxu0 0
        %4797 = vmatmul.mubr.bf16.gmra.mxu0 %v4748
        %v4798 = vpop.f32.mrf.mxu0
        %v4799 = vadd.f32 0.0, %v4798
        %v4800 = vpop.f32.mrf.mxu0
        %v4801 = vpop.f32.mrf.mxu0
        %v4802 = vadd.f32 0.0, %v4801
        %v4803 = vpop.f32.mrf.mxu0
        %4804 = vdwg.mxu0
        %v4806 = vsel %vm4377, %v4359, 0
        %v4809 = vsel %vm4377, %v4360, 0
        %v4812 = vsel %vm4377, %v4375, 0
        %v4815 = vsel %vm4377, %v4376, 0
        %4817 = vmatprep.subr.bf16.mxu0 0
        %4818 = vmatpush1.bf16.xpose.msra.mxu0 0
        %4819 = vmatprep.subr.bf16.mxu0 0
        %4820 = vmatpush1.bf16.xpose.msra.mxu0 0
        %4821 = vmatprep.subr.bf16.mxu0 0
        %4822 = vmatpush1.bf16.xpose.msra.mxu0 0
        %4823 = vmatprep.subr.bf16.mxu0 0
        %4824 = vmatpush1.bf16.xpose.msra.mxu0 0
        %4825 = vmatprep.subr.bf16.mxu0 0
        %4826 = vmatpush1.bf16.xpose.msra.mxu0 0
        %4827 = vmatprep.subr.bf16.mxu0 0
        %4828 = vmatpush1.bf16.xpose.msra.mxu0 0
        %4829 = vmatprep.subr.bf16.mxu0 0
        %4830 = vmatpush1.bf16.xpose.msra.mxu0 %v4815
        %4831 = vmatprep.subr.bf16.mxu0 0
        %4832 = vmatpush1.bf16.xpose.msra.mxu0 %v4812
        %4833 = vmatprep.subr.bf16.mxu0 0
        %4834 = vmatpush2.bf16.xpose.msra.mxu0 0
        %4835 = vmatprep.subr.bf16.mxu0 0
        %4836 = vmatpush2.bf16.xpose.msra.mxu0 0
        %4837 = vmatprep.subr.bf16.mxu0 0
        %4838 = vmatpush2.bf16.xpose.msra.mxu0 0
        %4839 = vmatprep.subr.bf16.mxu0 0
        %4840 = vmatpush2.bf16.xpose.msra.mxu0 0
        %4841 = vmatprep.subr.bf16.mxu0 0
        %4842 = vmatpush2.bf16.xpose.msra.mxu0 0
        %4843 = vmatprep.subr.bf16.mxu0 0
        %4844 = vmatpush2.bf16.xpose.msra.mxu0 0
        %4845 = vmatprep.subr.bf16.mxu0 0
        %4846 = vmatpush2.bf16.xpose.msra.mxu0 0
        %4847 = vmatprep.subr.bf16.mxu0 0
        %4848 = vmatpush2.bf16.xpose.msra.mxu0 0
        %4849 = vmatprep.mubr.bf16.mxu0 0
        %4850 = vmatmul.mubr.bf16.gmra.mxu0 %v4806
        %v4851 = vpop.f32.mrf.mxu0
        %v4852 = vadd.f32 0.0, %v4851
        %v4853 = vpop.f32.mrf.mxu0
        %v4854 = vpop.f32.mrf.mxu0
        %v4855 = vadd.f32 0.0, %v4854
        %v4856 = vpop.f32.mrf.mxu0
        %4857 = vmatprep.mubr.bf16.mxu0 0
        %4858 = vmatmul.mubr.bf16.gmra.mxu0 %v4809
        %v4859 = vpop.f32.mrf.mxu0
        %v4860 = vadd.f32 0.0, %v4859
        %v4861 = vpop.f32.mrf.mxu0
        %v4862 = vpop.f32.mrf.mxu0
        %v4863 = vadd.f32 0.0, %v4862
        %v4864 = vpop.f32.mrf.mxu0
        %4865 = vdwg.mxu0
        %v4866 = vmul.f32 %v4425, 0.35355338
        %v4867 = vmul.f32 %v4428, 0.35355338
        %v4868 = vmul.f32 %v4433, 0.35355338
        %v4869 = vmul.f32 %v4436, 0.35355338
        %v4870 = vmul.f32 %v4486, 0.35355338
        %v4871 = vmul.f32 %v4489, 0.35355338
        %v4872 = vmul.f32 %v4494, 0.35355338
        %v4873 = vmul.f32 %v4497, 0.35355338
        %v4874 = vmul.f32 %v4547, 0.35355338
        %v4875 = vmul.f32 %v4550, 0.35355338
        %v4876 = vmul.f32 %v4555, 0.35355338
        %v4877 = vmul.f32 %v4558, 0.35355338
        %v4878 = vmul.f32 %v4608, 0.35355338
        %v4879 = vmul.f32 %v4611, 0.35355338
        %v4880 = vmul.f32 %v4616, 0.35355338
        %v4881 = vmul.f32 %v4619, 0.35355338
        %v4882 = vmul.f32 %v4669, 0.35355338
        %v4883 = vmul.f32 %v4672, 0.35355338
        %v4884 = vmul.f32 %v4677, 0.35355338
        %v4885 = vmul.f32 %v4680, 0.35355338
        %v4886 = vmul.f32 %v4730, 0.35355338
        %v4887 = vmul.f32 %v4733, 0.35355338
        %v4888 = vmul.f32 %v4738, 0.35355338
        %v4889 = vmul.f32 %v4741, 0.35355338
        %v4890 = vmul.f32 %v4791, 0.35355338
        %v4891 = vmul.f32 %v4794, 0.35355338
        %v4892 = vmul.f32 %v4799, 0.35355338
        %v4893 = vmul.f32 %v4802, 0.35355338
        %v4894 = vmul.f32 %v4852, 0.35355338
        %v4895 = vmul.f32 %v4855, 0.35355338
        %v4896 = vmul.f32 %v4860, 0.35355338
        %v4897 = vmul.f32 %v4863, 0.35355338
        %v4898 = vlaneseq
        %v4899 = vand.u32 %v4898, 127
        %vm4900 = vcmp.lt.s32.totalorder %v4899, 17
        %v4901 = vsel %vm4900, 1, 0
        %vm4902 = vcmp.eq.s32.totalorder %v4901, 1
        %v4903 = vsel %vm4902, %v4866, -1e+30
        %v4904 = vsel %vm4902, %v4867, -1e+30
        %v4905 = vsel %vm4902, %v4868, -1e+30
        %v4906 = vsel %vm4902, %v4869, -1e+30
        %v4907 = vsel %vm4902, %v4870, -1e+30
        %v4908 = vsel %vm4902, %v4871, -1e+30
        %v4909 = vsel %vm4902, %v4872, -1e+30
        %v4910 = vsel %vm4902, %v4873, -1e+30
        %v4911 = vsel %vm4902, %v4874, -1e+30
        %v4912 = vsel %vm4902, %v4875, -1e+30
        %v4913 = vsel %vm4902, %v4876, -1e+30
        %v4914 = vsel %vm4902, %v4877, -1e+30
        %v4915 = vsel %vm4902, %v4878, -1e+30
        %v4916 = vsel %vm4902, %v4879, -1e+30
        %v4917 = vsel %vm4902, %v4880, -1e+30
        %v4918 = vsel %vm4902, %v4881, -1e+30
        %v4919 = vsel %vm4902, %v4882, -1e+30
        %v4920 = vsel %vm4902, %v4883, -1e+30
        %v4921 = vsel %vm4902, %v4884, -1e+30
        %v4922 = vsel %vm4902, %v4885, -1e+30
        %v4923 = vsel %vm4902, %v4886, -1e+30
        %v4924 = vsel %vm4902, %v4887, -1e+30
        %v4925 = vsel %vm4902, %v4888, -1e+30
        %v4926 = vsel %vm4902, %v4889, -1e+30
        %v4927 = vsel %vm4902, %v4890, -1e+30
        %v4928 = vsel %vm4902, %v4891, -1e+30
        %v4929 = vsel %vm4902, %v4892, -1e+30
        %v4930 = vsel %vm4902, %v4893, -1e+30
        %v4931 = vsel %vm4902, %v4894, -1e+30
        %v4932 = vsel %vm4902, %v4895, -1e+30
        %v4933 = vsel %vm4902, %v4896, -1e+30
        %v4934 = vsel %vm4902, %v4897, -1e+30
        %v4935 = vsel %vm582, %v4903, -inf
        %4936 = vmax.xlane.f32.xlu0 %v4935
        %v4937 = vpop.xlane.xlu0 %4936
        %v4938 = vsel %vm582, %v4904, -inf
        %4939 = vmax.xlane.f32.xlu0 %v4938
        %v4940 = vpop.xlane.xlu0 %4939
        %v4941 = vsel %vm582, %v4905, -inf
        %4942 = vmax.xlane.f32.xlu0 %v4941
        %v4943 = vpop.xlane.xlu0 %4942
        %v4944 = vsel %vm582, %v4906, -inf
        %4945 = vmax.xlane.f32.xlu0 %v4944
        %v4946 = vpop.xlane.xlu0 %4945
        %v4947 = vsel %vm582, %v4907, -inf
        %4948 = vmax.xlane.f32.xlu0 %v4947
        %v4949 = vpop.xlane.xlu0 %4948
        %v4950 = vsel %vm582, %v4908, -inf
        %4951 = vmax.xlane.f32.xlu0 %v4950
        %v4952 = vpop.xlane.xlu0 %4951
        %v4953 = vsel %vm582, %v4909, -inf
        %4954 = vmax.xlane.f32.xlu0 %v4953
        %v4955 = vpop.xlane.xlu0 %4954
        %v4956 = vsel %vm582, %v4910, -inf
        %4957 = vmax.xlane.f32.xlu0 %v4956
        %v4958 = vpop.xlane.xlu0 %4957
        %v4959 = vsel %vm582, %v4911, -inf
        %4960 = vmax.xlane.f32.xlu0 %v4959
        %v4961 = vpop.xlane.xlu0 %4960
        %v4962 = vsel %vm582, %v4912, -inf
        %4963 = vmax.xlane.f32.xlu0 %v4962
        %v4964 = vpop.xlane.xlu0 %4963
        %v4965 = vsel %vm582, %v4913, -inf
        %4966 = vmax.xlane.f32.xlu0 %v4965
        %v4967 = vpop.xlane.xlu0 %4966
        %v4968 = vsel %vm582, %v4914, -inf
        %4969 = vmax.xlane.f32.xlu0 %v4968
        %v4970 = vpop.xlane.xlu0 %4969
        %v4971 = vsel %vm582, %v4915, -inf
        %4972 = vmax.xlane.f32.xlu0 %v4971
        %v4973 = vpop.xlane.xlu0 %4972
        %v4974 = vsel %vm582, %v4916, -inf
        %4975 = vmax.xlane.f32.xlu0 %v4974
        %v4976 = vpop.xlane.xlu0 %4975
        %v4977 = vsel %vm582, %v4917, -inf
        %4978 = vmax.xlane.f32.xlu0 %v4977
        %v4979 = vpop.xlane.xlu0 %4978
        %v4980 = vsel %vm582, %v4918, -inf
        %4981 = vmax.xlane.f32.xlu0 %v4980
        %v4982 = vpop.xlane.xlu0 %4981
        %v4983 = vsel %vm582, %v4919, -inf
        %4984 = vmax.xlane.f32.xlu0 %v4983
        %v4985 = vpop.xlane.xlu0 %4984
        %v4986 = vsel %vm582, %v4920, -inf
        %4987 = vmax.xlane.f32.xlu0 %v4986
        %v4988 = vpop.xlane.xlu0 %4987
        %v4989 = vsel %vm582, %v4921, -inf
        %4990 = vmax.xlane.f32.xlu0 %v4989
        %v4991 = vpop.xlane.xlu0 %4990
        %v4992 = vsel %vm582, %v4922, -inf
        %4993 = vmax.xlane.f32.xlu0 %v4992
        %v4994 = vpop.xlane.xlu0 %4993
        %v4995 = vsel %vm582, %v4923, -inf
        %4996 = vmax.xlane.f32.xlu0 %v4995
        %v4997 = vpop.xlane.xlu0 %4996
        %v4998 = vsel %vm582, %v4924, -inf
        %4999 = vmax.xlane.f32.xlu0 %v4998
        %v5000 = vpop.xlane.xlu0 %4999
        %v5001 = vsel %vm582, %v4925, -inf
        %5002 = vmax.xlane.f32.xlu0 %v5001
        %v5003 = vpop.xlane.xlu0 %5002
        %v5004 = vsel %vm582, %v4926, -inf
        %5005 = vmax.xlane.f32.xlu0 %v5004
        %v5006 = vpop.xlane.xlu0 %5005
        %v5007 = vsel %vm582, %v4927, -inf
        %5008 = vmax.xlane.f32.xlu0 %v5007
        %v5009 = vpop.xlane.xlu0 %5008
        %v5010 = vsel %vm582, %v4928, -inf
        %5011 = vmax.xlane.f32.xlu0 %v5010
        %v5012 = vpop.xlane.xlu0 %5011
        %v5013 = vsel %vm582, %v4929, -inf
        %5014 = vmax.xlane.f32.xlu0 %v5013
        %v5015 = vpop.xlane.xlu0 %5014
        %v5016 = vsel %vm582, %v4930, -inf
        %5017 = vmax.xlane.f32.xlu0 %v5016
        %v5018 = vpop.xlane.xlu0 %5017
        %v5019 = vsel %vm582, %v4931, -inf
        %5020 = vmax.xlane.f32.xlu0 %v5019
        %v5021 = vpop.xlane.xlu0 %5020
        %v5022 = vsel %vm582, %v4932, -inf
        %5023 = vmax.xlane.f32.xlu0 %v5022
        %v5024 = vpop.xlane.xlu0 %5023
        %v5025 = vsel %vm582, %v4933, -inf
        %5026 = vmax.xlane.f32.xlu0 %v5025
        %v5027 = vpop.xlane.xlu0 %5026
        %v5028 = vsel %vm582, %v4934, -inf
        %5029 = vmax.xlane.f32.xlu0 %v5028
        %v5030 = vpop.xlane.xlu0 %5029
        %v5031 = vsub.f32 %v4903, %v4937
        %v5032 = vsub.f32 %v4904, %v4940
        %v5033 = vsub.f32 %v4905, %v4943
        %v5034 = vsub.f32 %v4906, %v4946
        %v5035 = vsub.f32 %v4907, %v4949
        %v5036 = vsub.f32 %v4908, %v4952
        %v5037 = vsub.f32 %v4909, %v4955
        %v5038 = vsub.f32 %v4910, %v4958
        %v5039 = vsub.f32 %v4911, %v4961
        %v5040 = vsub.f32 %v4912, %v4964
        %v5041 = vsub.f32 %v4913, %v4967
        %v5042 = vsub.f32 %v4914, %v4970
        %v5043 = vsub.f32 %v4915, %v4973
        %v5044 = vsub.f32 %v4916, %v4976
        %v5045 = vsub.f32 %v4917, %v4979
        %v5046 = vsub.f32 %v4918, %v4982
        %v5047 = vsub.f32 %v4919, %v4985
        %v5048 = vsub.f32 %v4920, %v4988
        %v5049 = vsub.f32 %v4921, %v4991
        %v5050 = vsub.f32 %v4922, %v4994
        %v5051 = vsub.f32 %v4923, %v4997
        %v5052 = vsub.f32 %v4924, %v5000
        %v5053 = vsub.f32 %v4925, %v5003
        %v5054 = vsub.f32 %v4926, %v5006
        %v5055 = vsub.f32 %v4927, %v5009
        %v5056 = vsub.f32 %v4928, %v5012
        %v5057 = vsub.f32 %v4929, %v5015
        %v5058 = vsub.f32 %v4930, %v5018
        %v5059 = vsub.f32 %v4931, %v5021
        %v5060 = vsub.f32 %v4932, %v5024
        %v5061 = vsub.f32 %v4933, %v5027
        %v5062 = vsub.f32 %v4934, %v5030
        %v5063 = vmul.f32 %v5031, 1.442695
        %v5064 = vpow.pop %v5063
        %v5065 = vmul.f32 %v5032, 1.442695
        %v5066 = vpow.pop %v5065
        %v5067 = vmul.f32 %v5033, 1.442695
        %v5068 = vpow.pop %v5067
        %v5069 = vmul.f32 %v5034, 1.442695
        %v5070 = vpow.pop %v5069
        %v5071 = vmul.f32 %v5035, 1.442695
        %v5072 = vpow.pop %v5071
        %v5073 = vmul.f32 %v5036, 1.442695
        %v5074 = vpow.pop %v5073
        %v5075 = vmul.f32 %v5037, 1.442695
        %v5076 = vpow.pop %v5075
        %v5077 = vmul.f32 %v5038, 1.442695
        %v5078 = vpow.pop %v5077
        %v5079 = vmul.f32 %v5039, 1.442695
        %v5080 = vpow.pop %v5079
        %v5081 = vmul.f32 %v5040, 1.442695
        %v5082 = vpow.pop %v5081
        %v5083 = vmul.f32 %v5041, 1.442695
        %v5084 = vpow.pop %v5083
        %v5085 = vmul.f32 %v5042, 1.442695
        %v5086 = vpow.pop %v5085
        %v5087 = vmul.f32 %v5043, 1.442695
        %v5088 = vpow.pop %v5087
        %v5089 = vmul.f32 %v5044, 1.442695
        %v5090 = vpow.pop %v5089
        %v5091 = vmul.f32 %v5045, 1.442695
        %v5092 = vpow.pop %v5091
        %v5093 = vmul.f32 %v5046, 1.442695
        %v5094 = vpow.pop %v5093
        %v5095 = vmul.f32 %v5047, 1.442695
        %v5096 = vpow.pop %v5095
        %v5097 = vmul.f32 %v5048, 1.442695
        %v5098 = vpow.pop %v5097
        %v5099 = vmul.f32 %v5049, 1.442695
        %v5100 = vpow.pop %v5099
        %v5101 = vmul.f32 %v5050, 1.442695
        %v5102 = vpow.pop %v5101
        %v5103 = vmul.f32 %v5051, 1.442695
        %v5104 = vpow.pop %v5103
        %v5105 = vmul.f32 %v5052, 1.442695
        %v5106 = vpow.pop %v5105
        %v5107 = vmul.f32 %v5053, 1.442695
        %v5108 = vpow.pop %v5107
        %v5109 = vmul.f32 %v5054, 1.442695
        %v5110 = vpow.pop %v5109
        %v5111 = vmul.f32 %v5055, 1.442695
        %v5112 = vpow.pop %v5111
        %v5113 = vmul.f32 %v5056, 1.442695
        %v5114 = vpow.pop %v5113
        %v5115 = vmul.f32 %v5057, 1.442695
        %v5116 = vpow.pop %v5115
        %v5117 = vmul.f32 %v5058, 1.442695
        %v5118 = vpow.pop %v5117
        %v5119 = vmul.f32 %v5059, 1.442695
        %v5120 = vpow.pop %v5119
        %v5121 = vmul.f32 %v5060, 1.442695
        %v5122 = vpow.pop %v5121
        %v5123 = vmul.f32 %v5061, 1.442695
        %v5124 = vpow.pop %v5123
        %v5125 = vmul.f32 %v5062, 1.442695
        %v5126 = vpow.pop %v5125
        %v5127 = vsel %vm582, %v5064, 0.0
        %5128 = vadd.xlane.f32.xlu0 %v5127
        %v5129 = vpop.xlane.xlu0 %5128
        %v5130 = vsel %vm582, %v5066, 0.0
        %5131 = vadd.xlane.f32.xlu0 %v5130
        %v5132 = vpop.xlane.xlu0 %5131
        %v5133 = vsel %vm582, %v5068, 0.0
        %5134 = vadd.xlane.f32.xlu0 %v5133
        %v5135 = vpop.xlane.xlu0 %5134
        %v5136 = vsel %vm582, %v5070, 0.0
        %5137 = vadd.xlane.f32.xlu0 %v5136
        %v5138 = vpop.xlane.xlu0 %5137
        %v5139 = vsel %vm582, %v5072, 0.0
        %5140 = vadd.xlane.f32.xlu0 %v5139
        %v5141 = vpop.xlane.xlu0 %5140
        %v5142 = vsel %vm582, %v5074, 0.0
        %5143 = vadd.xlane.f32.xlu0 %v5142
        %v5144 = vpop.xlane.xlu0 %5143
        %v5145 = vsel %vm582, %v5076, 0.0
        %5146 = vadd.xlane.f32.xlu0 %v5145
        %v5147 = vpop.xlane.xlu0 %5146
        %v5148 = vsel %vm582, %v5078, 0.0
        %5149 = vadd.xlane.f32.xlu0 %v5148
        %v5150 = vpop.xlane.xlu0 %5149
        %v5151 = vsel %vm582, %v5080, 0.0
        %5152 = vadd.xlane.f32.xlu0 %v5151
        %v5153 = vpop.xlane.xlu0 %5152
        %v5154 = vsel %vm582, %v5082, 0.0
        %5155 = vadd.xlane.f32.xlu0 %v5154
        %v5156 = vpop.xlane.xlu0 %5155
        %v5157 = vsel %vm582, %v5084, 0.0
        %5158 = vadd.xlane.f32.xlu0 %v5157
        %v5159 = vpop.xlane.xlu0 %5158
        %v5160 = vsel %vm582, %v5086, 0.0
        %5161 = vadd.xlane.f32.xlu0 %v5160
        %v5162 = vpop.xlane.xlu0 %5161
        %v5163 = vsel %vm582, %v5088, 0.0
        %5164 = vadd.xlane.f32.xlu0 %v5163
        %v5165 = vpop.xlane.xlu0 %5164
        %v5166 = vsel %vm582, %v5090, 0.0
        %5167 = vadd.xlane.f32.xlu0 %v5166
        %v5168 = vpop.xlane.xlu0 %5167
        %v5169 = vsel %vm582, %v5092, 0.0
        %5170 = vadd.xlane.f32.xlu0 %v5169
        %v5171 = vpop.xlane.xlu0 %5170
        %v5172 = vsel %vm582, %v5094, 0.0
        %5173 = vadd.xlane.f32.xlu0 %v5172
        %v5174 = vpop.xlane.xlu0 %5173
        %v5175 = vsel %vm582, %v5096, 0.0
        %5176 = vadd.xlane.f32.xlu0 %v5175
        %v5177 = vpop.xlane.xlu0 %5176
        %v5178 = vsel %vm582, %v5098, 0.0
        %5179 = vadd.xlane.f32.xlu0 %v5178
        %v5180 = vpop.xlane.xlu0 %5179
        %v5181 = vsel %vm582, %v5100, 0.0
        %5182 = vadd.xlane.f32.xlu0 %v5181
        %v5183 = vpop.xlane.xlu0 %5182
        %v5184 = vsel %vm582, %v5102, 0.0
        %5185 = vadd.xlane.f32.xlu0 %v5184
        %v5186 = vpop.xlane.xlu0 %5185
        %v5187 = vsel %vm582, %v5104, 0.0
        %5188 = vadd.xlane.f32.xlu0 %v5187
        %v5189 = vpop.xlane.xlu0 %5188
        %v5190 = vsel %vm582, %v5106, 0.0
        %5191 = vadd.xlane.f32.xlu0 %v5190
        %v5192 = vpop.xlane.xlu0 %5191
        %v5193 = vsel %vm582, %v5108, 0.0
        %5194 = vadd.xlane.f32.xlu0 %v5193
        %v5195 = vpop.xlane.xlu0 %5194
        %v5196 = vsel %vm582, %v5110, 0.0
        %5197 = vadd.xlane.f32.xlu0 %v5196
        %v5198 = vpop.xlane.xlu0 %5197
        %v5199 = vsel %vm582, %v5112, 0.0
        %5200 = vadd.xlane.f32.xlu0 %v5199
        %v5201 = vpop.xlane.xlu0 %5200
        %v5202 = vsel %vm582, %v5114, 0.0
        %5203 = vadd.xlane.f32.xlu0 %v5202
        %v5204 = vpop.xlane.xlu0 %5203
        %v5205 = vsel %vm582, %v5116, 0.0
        %5206 = vadd.xlane.f32.xlu0 %v5205
        %v5207 = vpop.xlane.xlu0 %5206
        %v5208 = vsel %vm582, %v5118, 0.0
        %5209 = vadd.xlane.f32.xlu0 %v5208
        %v5210 = vpop.xlane.xlu0 %5209
        %v5211 = vsel %vm582, %v5120, 0.0
        %5212 = vadd.xlane.f32.xlu0 %v5211
        %v5213 = vpop.xlane.xlu0 %5212
        %v5214 = vsel %vm582, %v5122, 0.0
        %5215 = vadd.xlane.f32.xlu0 %v5214
        %v5216 = vpop.xlane.xlu0 %5215
        %v5217 = vsel %vm582, %v5124, 0.0
        %5218 = vadd.xlane.f32.xlu0 %v5217
        %v5219 = vpop.xlane.xlu0 %5218
        %v5220 = vsel %vm582, %v5126, 0.0
        %5221 = vadd.xlane.f32.xlu0 %v5220
        %v5222 = vpop.xlane.xlu0 %5221
        %v5223 = vrcp.pop %v5129
        %v5224 = vrcp.pop %v5132
        %v5225 = vrcp.pop %v5135
        %v5226 = vrcp.pop %v5138
        %v5227 = vrcp.pop %v5141
        %v5228 = vrcp.pop %v5144
        %v5229 = vrcp.pop %v5147
        %v5230 = vrcp.pop %v5150
        %v5231 = vrcp.pop %v5153
        %v5232 = vrcp.pop %v5156
        %v5233 = vrcp.pop %v5159
        %v5234 = vrcp.pop %v5162
        %v5235 = vrcp.pop %v5165
        %v5236 = vrcp.pop %v5168
        %v5237 = vrcp.pop %v5171
        %v5238 = vrcp.pop %v5174
        %v5239 = vrcp.pop %v5177
        %v5240 = vrcp.pop %v5180
        %v5241 = vrcp.pop %v5183
        %v5242 = vrcp.pop %v5186
        %v5243 = vrcp.pop %v5189
        %v5244 = vrcp.pop %v5192
        %v5245 = vrcp.pop %v5195
        %v5246 = vrcp.pop %v5198
        %v5247 = vrcp.pop %v5201
        %v5248 = vrcp.pop %v5204
        %v5249 = vrcp.pop %v5207
        %v5250 = vrcp.pop %v5210
        %v5251 = vrcp.pop %v5213
        %v5252 = vrcp.pop %v5216
        %v5253 = vrcp.pop %v5219
        %v5254 = vrcp.pop %v5222
        %v5255 = vmul.f32 %v5064, %v5223
        %v5256 = vmul.f32 %v5066, %v5224
        %v5257 = vmul.f32 %v5068, %v5225
        %v5258 = vmul.f32 %v5070, %v5226
        %v5259 = vmul.f32 %v5072, %v5227
        %v5260 = vmul.f32 %v5074, %v5228
        %v5261 = vmul.f32 %v5076, %v5229
        %v5262 = vmul.f32 %v5078, %v5230
        %v5263 = vmul.f32 %v5080, %v5231
        %v5264 = vmul.f32 %v5082, %v5232
        %v5265 = vmul.f32 %v5084, %v5233
        %v5266 = vmul.f32 %v5086, %v5234
        %v5267 = vmul.f32 %v5088, %v5235
        %v5268 = vmul.f32 %v5090, %v5236
        %v5269 = vmul.f32 %v5092, %v5237
        %v5270 = vmul.f32 %v5094, %v5238
        %v5271 = vmul.f32 %v5096, %v5239
        %v5272 = vmul.f32 %v5098, %v5240
        %v5273 = vmul.f32 %v5100, %v5241
        %v5274 = vmul.f32 %v5102, %v5242
        %v5275 = vmul.f32 %v5104, %v5243
        %v5276 = vmul.f32 %v5106, %v5244
        %v5277 = vmul.f32 %v5108, %v5245
        %v5278 = vmul.f32 %v5110, %v5246
        %v5279 = vmul.f32 %v5112, %v5247
        %v5280 = vmul.f32 %v5114, %v5248
        %v5281 = vmul.f32 %v5116, %v5249
        %v5282 = vmul.f32 %v5118, %v5250
        %v5283 = vmul.f32 %v5120, %v5251
        %v5284 = vmul.f32 %v5122, %v5252
        %v5285 = vmul.f32 %v5124, %v5253
        %v5286 = vmul.f32 %v5126, %v5254
        %v5287 = vpack.c.bf16 %v5256, %v5255
        %v5288 = vpack.c.bf16 %v5258, %v5257
        %v5289 = vpack.c.bf16 %v5260, %v5259
        %v5290 = vpack.c.bf16 %v5262, %v5261
        %v5291 = vpack.c.bf16 %v5264, %v5263
        %v5292 = vpack.c.bf16 %v5266, %v5265
        %v5293 = vpack.c.bf16 %v5268, %v5267
        %v5294 = vpack.c.bf16 %v5270, %v5269
        %v5295 = vpack.c.bf16 %v5272, %v5271
        %v5296 = vpack.c.bf16 %v5274, %v5273
        %v5297 = vpack.c.bf16 %v5276, %v5275
        %v5298 = vpack.c.bf16 %v5278, %v5277
        %v5299 = vpack.c.bf16 %v5280, %v5279
        %v5300 = vpack.c.bf16 %v5282, %v5281
        %v5301 = vpack.c.bf16 %v5284, %v5283
        %v5302 = vpack.c.bf16 %v5286, %v5285
        %v5303 = vpack.c.bf16 %v3933, %v3865
        %v5304 = vpack.c.bf16 %v4069, %v4001
        %v5305 = vpack.c.bf16 %v3934, %v3866
        %v5306 = vpack.c.bf16 %v4070, %v4002
        %v5307 = vpack.c.bf16 %v3935, %v3867
        %v5308 = vpack.c.bf16 %v4071, %v4003
        %v5309 = vpack.c.bf16 %v3936, %v3868
        %v5310 = vpack.c.bf16 %v4072, %v4004
        %v5311 = vpack.c.bf16 %v4205, %v4137
        %v5312 = vpack.c.bf16 %v4341, %v4273
        %v5313 = vpack.c.bf16 %v4206, %v4138
        %v5314 = vpack.c.bf16 %v4342, %v4274
        %v5315 = vpack.c.bf16 %v4207, %v4139
        %v5316 = vpack.c.bf16 %v4343, %v4275
        %v5317 = vpack.c.bf16 %v4208, %v4140
        %v5318 = vpack.c.bf16 %v4344, %v4276
        %v5320 = vsel %vm582, %v5287, 0
        %v5323 = vsel %vm582, %v5288, 0
        %5325 = vmatprep.subr.bf16.mxu0 0
        %5326 = vmatpush1.bf16.msra.mxu0 0
        %5327 = vmatprep.subr.bf16.mxu0 0
        %5328 = vmatpush1.bf16.msra.mxu0 0
        %5329 = vmatprep.subr.bf16.mxu0 0
        %5330 = vmatpush1.bf16.msra.mxu0 0
        %5331 = vmatprep.subr.bf16.mxu0 0
        %5332 = vmatpush1.bf16.msra.mxu0 0
        %5333 = vmatprep.subr.bf16.mxu0 0
        %5334 = vmatpush1.bf16.msra.mxu0 0
        %5335 = vmatprep.subr.bf16.mxu0 0
        %5336 = vmatpush1.bf16.msra.mxu0 0
        %5337 = vmatprep.subr.bf16.mxu0 0
        %5338 = vmatpush1.bf16.msra.mxu0 %v5304
        %5339 = vmatprep.subr.bf16.mxu0 0
        %5340 = vmatpush1.bf16.msra.mxu0 %v5303
        %5341 = vmatprep.subr.bf16.mxu0 0
        %5342 = vmatpush2.bf16.msra.mxu0 0
        %5343 = vmatprep.subr.bf16.mxu0 0
        %5344 = vmatpush2.bf16.msra.mxu0 0
        %5345 = vmatprep.subr.bf16.mxu0 0
        %5346 = vmatpush2.bf16.msra.mxu0 0
        %5347 = vmatprep.subr.bf16.mxu0 0
        %5348 = vmatpush2.bf16.msra.mxu0 0
        %5349 = vmatprep.subr.bf16.mxu0 0
        %5350 = vmatpush2.bf16.msra.mxu0 0
        %5351 = vmatprep.subr.bf16.mxu0 0
        %5352 = vmatpush2.bf16.msra.mxu0 0
        %5353 = vmatprep.subr.bf16.mxu0 0
        %5354 = vmatpush2.bf16.msra.mxu0 0
        %5355 = vmatprep.subr.bf16.mxu0 0
        %5356 = vmatpush2.bf16.msra.mxu0 0
        %5357 = vmatprep.mubr.bf16.mxu0 0
        %5358 = vmatmul.mubr.bf16.gmra.mxu0 %v5320
        %v5359 = vpop.f32.mrf.mxu0
        %v5360 = vadd.f32 0.0, %v5359
        %v5361 = vpop.f32.mrf.mxu0
        %v5362 = vpop.f32.mrf.mxu0
        %v5363 = vadd.f32 0.0, %v5362
        %v5364 = vpop.f32.mrf.mxu0
        %5365 = vmatprep.mubr.bf16.mxu0 0
        %5366 = vmatmul.mubr.bf16.gmra.mxu0 %v5323
        %v5367 = vpop.f32.mrf.mxu0
        %v5368 = vadd.f32 0.0, %v5367
        %v5369 = vpop.f32.mrf.mxu0
        %v5370 = vpop.f32.mrf.mxu0
        %v5371 = vadd.f32 0.0, %v5370
        %v5372 = vpop.f32.mrf.mxu0
        %5373 = vdwg.mxu0
        %v5375 = vsel %vm582, %v5289, 0
        %v5378 = vsel %vm582, %v5290, 0
        %5380 = vmatprep.subr.bf16.mxu0 0
        %5381 = vmatpush1.bf16.msra.mxu0 0
        %5382 = vmatprep.subr.bf16.mxu0 0
        %5383 = vmatpush1.bf16.msra.mxu0 0
        %5384 = vmatprep.subr.bf16.mxu0 0
        %5385 = vmatpush1.bf16.msra.mxu0 0
        %5386 = vmatprep.subr.bf16.mxu0 0
        %5387 = vmatpush1.bf16.msra.mxu0 0
        %5388 = vmatprep.subr.bf16.mxu0 0
        %5389 = vmatpush1.bf16.msra.mxu0 0
        %5390 = vmatprep.subr.bf16.mxu0 0
        %5391 = vmatpush1.bf16.msra.mxu0 0
        %5392 = vmatprep.subr.bf16.mxu0 0
        %5393 = vmatpush1.bf16.msra.mxu0 %v5306
        %5394 = vmatprep.subr.bf16.mxu0 0
        %5395 = vmatpush1.bf16.msra.mxu0 %v5305
        %5396 = vmatprep.subr.bf16.mxu0 0
        %5397 = vmatpush2.bf16.msra.mxu0 0
        %5398 = vmatprep.subr.bf16.mxu0 0
        %5399 = vmatpush2.bf16.msra.mxu0 0
        %5400 = vmatprep.subr.bf16.mxu0 0
        %5401 = vmatpush2.bf16.msra.mxu0 0
        %5402 = vmatprep.subr.bf16.mxu0 0
        %5403 = vmatpush2.bf16.msra.mxu0 0
        %5404 = vmatprep.subr.bf16.mxu0 0
        %5405 = vmatpush2.bf16.msra.mxu0 0
        %5406 = vmatprep.subr.bf16.mxu0 0
        %5407 = vmatpush2.bf16.msra.mxu0 0
        %5408 = vmatprep.subr.bf16.mxu0 0
        %5409 = vmatpush2.bf16.msra.mxu0 0
        %5410 = vmatprep.subr.bf16.mxu0 0
        %5411 = vmatpush2.bf16.msra.mxu0 0
        %5412 = vmatprep.mubr.bf16.mxu0 0
        %5413 = vmatmul.mubr.bf16.gmra.mxu0 %v5375
        %v5414 = vpop.f32.mrf.mxu0
        %v5415 = vadd.f32 0.0, %v5414
        %v5416 = vpop.f32.mrf.mxu0
        %v5417 = vpop.f32.mrf.mxu0
        %v5418 = vadd.f32 0.0, %v5417
        %v5419 = vpop.f32.mrf.mxu0
        %5420 = vmatprep.mubr.bf16.mxu0 0
        %5421 = vmatmul.mubr.bf16.gmra.mxu0 %v5378
        %v5422 = vpop.f32.mrf.mxu0
        %v5423 = vadd.f32 0.0, %v5422
        %v5424 = vpop.f32.mrf.mxu0
        %v5425 = vpop.f32.mrf.mxu0
        %v5426 = vadd.f32 0.0, %v5425
        %v5427 = vpop.f32.mrf.mxu0
        %5428 = vdwg.mxu0
        %v5430 = vsel %vm582, %v5291, 0
        %v5433 = vsel %vm582, %v5292, 0
        %5435 = vmatprep.subr.bf16.mxu0 0
        %5436 = vmatpush1.bf16.msra.mxu0 0
        %5437 = vmatprep.subr.bf16.mxu0 0
        %5438 = vmatpush1.bf16.msra.mxu0 0
        %5439 = vmatprep.subr.bf16.mxu0 0
        %5440 = vmatpush1.bf16.msra.mxu0 0
        %5441 = vmatprep.subr.bf16.mxu0 0
        %5442 = vmatpush1.bf16.msra.mxu0 0
        %5443 = vmatprep.subr.bf16.mxu0 0
        %5444 = vmatpush1.bf16.msra.mxu0 0
        %5445 = vmatprep.subr.bf16.mxu0 0
        %5446 = vmatpush1.bf16.msra.mxu0 0
        %5447 = vmatprep.subr.bf16.mxu0 0
        %5448 = vmatpush1.bf16.msra.mxu0 %v5308
        %5449 = vmatprep.subr.bf16.mxu0 0
        %5450 = vmatpush1.bf16.msra.mxu0 %v5307
        %5451 = vmatprep.subr.bf16.mxu0 0
        %5452 = vmatpush2.bf16.msra.mxu0 0
        %5453 = vmatprep.subr.bf16.mxu0 0
        %5454 = vmatpush2.bf16.msra.mxu0 0
        %5455 = vmatprep.subr.bf16.mxu0 0
        %5456 = vmatpush2.bf16.msra.mxu0 0
        %5457 = vmatprep.subr.bf16.mxu0 0
        %5458 = vmatpush2.bf16.msra.mxu0 0
        %5459 = vmatprep.subr.bf16.mxu0 0
        %5460 = vmatpush2.bf16.msra.mxu0 0
        %5461 = vmatprep.subr.bf16.mxu0 0
        %5462 = vmatpush2.bf16.msra.mxu0 0
        %5463 = vmatprep.subr.bf16.mxu0 0
        %5464 = vmatpush2.bf16.msra.mxu0 0
        %5465 = vmatprep.subr.bf16.mxu0 0
        %5466 = vmatpush2.bf16.msra.mxu0 0
        %5467 = vmatprep.mubr.bf16.mxu0 0
        %5468 = vmatmul.mubr.bf16.gmra.mxu0 %v5430
        %v5469 = vpop.f32.mrf.mxu0
        %v5470 = vadd.f32 0.0, %v5469
        %v5471 = vpop.f32.mrf.mxu0
        %v5472 = vpop.f32.mrf.mxu0
        %v5473 = vadd.f32 0.0, %v5472
        %v5474 = vpop.f32.mrf.mxu0
        %5475 = vmatprep.mubr.bf16.mxu0 0
        %5476 = vmatmul.mubr.bf16.gmra.mxu0 %v5433
        %v5477 = vpop.f32.mrf.mxu0
        %v5478 = vadd.f32 0.0, %v5477
        %v5479 = vpop.f32.mrf.mxu0
        %v5480 = vpop.f32.mrf.mxu0
        %v5481 = vadd.f32 0.0, %v5480
        %v5482 = vpop.f32.mrf.mxu0
        %5483 = vdwg.mxu0
        %v5485 = vsel %vm582, %v5293, 0
        %v5488 = vsel %vm582, %v5294, 0
        %5490 = vmatprep.subr.bf16.mxu0 0
        %5491 = vmatpush1.bf16.msra.mxu0 0
        %5492 = vmatprep.subr.bf16.mxu0 0
        %5493 = vmatpush1.bf16.msra.mxu0 0
        %5494 = vmatprep.subr.bf16.mxu0 0
        %5495 = vmatpush1.bf16.msra.mxu0 0
        %5496 = vmatprep.subr.bf16.mxu0 0
        %5497 = vmatpush1.bf16.msra.mxu0 0
        %5498 = vmatprep.subr.bf16.mxu0 0
        %5499 = vmatpush1.bf16.msra.mxu0 0
        %5500 = vmatprep.subr.bf16.mxu0 0
        %5501 = vmatpush1.bf16.msra.mxu0 0
        %5502 = vmatprep.subr.bf16.mxu0 0
        %5503 = vmatpush1.bf16.msra.mxu0 %v5310
        %5504 = vmatprep.subr.bf16.mxu0 0
        %5505 = vmatpush1.bf16.msra.mxu0 %v5309
        %5506 = vmatprep.subr.bf16.mxu0 0
        %5507 = vmatpush2.bf16.msra.mxu0 0
        %5508 = vmatprep.subr.bf16.mxu0 0
        %5509 = vmatpush2.bf16.msra.mxu0 0
        %5510 = vmatprep.subr.bf16.mxu0 0
        %5511 = vmatpush2.bf16.msra.mxu0 0
        %5512 = vmatprep.subr.bf16.mxu0 0
        %5513 = vmatpush2.bf16.msra.mxu0 0
        %5514 = vmatprep.subr.bf16.mxu0 0
        %5515 = vmatpush2.bf16.msra.mxu0 0
        %5516 = vmatprep.subr.bf16.mxu0 0
        %5517 = vmatpush2.bf16.msra.mxu0 0
        %5518 = vmatprep.subr.bf16.mxu0 0
        %5519 = vmatpush2.bf16.msra.mxu0 0
        %5520 = vmatprep.subr.bf16.mxu0 0
        %5521 = vmatpush2.bf16.msra.mxu0 0
        %5522 = vmatprep.mubr.bf16.mxu0 0
        %5523 = vmatmul.mubr.bf16.gmra.mxu0 %v5485
        %v5524 = vpop.f32.mrf.mxu0
        %v5525 = vadd.f32 0.0, %v5524
        %v5526 = vpop.f32.mrf.mxu0
        %v5527 = vpop.f32.mrf.mxu0
        %v5528 = vadd.f32 0.0, %v5527
        %v5529 = vpop.f32.mrf.mxu0
        %5530 = vmatprep.mubr.bf16.mxu0 0
        %5531 = vmatmul.mubr.bf16.gmra.mxu0 %v5488
        %v5532 = vpop.f32.mrf.mxu0
        %v5533 = vadd.f32 0.0, %v5532
        %v5534 = vpop.f32.mrf.mxu0
        %v5535 = vpop.f32.mrf.mxu0
        %v5536 = vadd.f32 0.0, %v5535
        %v5537 = vpop.f32.mrf.mxu0
        %5538 = vdwg.mxu0
        %v5540 = vsel %vm582, %v5295, 0
        %v5543 = vsel %vm582, %v5296, 0
        %5545 = vmatprep.subr.bf16.mxu0 0
        %5546 = vmatpush1.bf16.msra.mxu0 0
        %5547 = vmatprep.subr.bf16.mxu0 0
        %5548 = vmatpush1.bf16.msra.mxu0 0
        %5549 = vmatprep.subr.bf16.mxu0 0
        %5550 = vmatpush1.bf16.msra.mxu0 0
        %5551 = vmatprep.subr.bf16.mxu0 0
        %5552 = vmatpush1.bf16.msra.mxu0 0
        %5553 = vmatprep.subr.bf16.mxu0 0
        %5554 = vmatpush1.bf16.msra.mxu0 0
        %5555 = vmatprep.subr.bf16.mxu0 0
        %5556 = vmatpush1.bf16.msra.mxu0 0
        %5557 = vmatprep.subr.bf16.mxu0 0
        %5558 = vmatpush1.bf16.msra.mxu0 %v5312
        %5559 = vmatprep.subr.bf16.mxu0 0
        %5560 = vmatpush1.bf16.msra.mxu0 %v5311
        %5561 = vmatprep.subr.bf16.mxu0 0
        %5562 = vmatpush2.bf16.msra.mxu0 0
        %5563 = vmatprep.subr.bf16.mxu0 0
        %5564 = vmatpush2.bf16.msra.mxu0 0
        %5565 = vmatprep.subr.bf16.mxu0 0
        %5566 = vmatpush2.bf16.msra.mxu0 0
        %5567 = vmatprep.subr.bf16.mxu0 0
        %5568 = vmatpush2.bf16.msra.mxu0 0
        %5569 = vmatprep.subr.bf16.mxu0 0
        %5570 = vmatpush2.bf16.msra.mxu0 0
        %5571 = vmatprep.subr.bf16.mxu0 0
        %5572 = vmatpush2.bf16.msra.mxu0 0
        %5573 = vmatprep.subr.bf16.mxu0 0
        %5574 = vmatpush2.bf16.msra.mxu0 0
        %5575 = vmatprep.subr.bf16.mxu0 0
        %5576 = vmatpush2.bf16.msra.mxu0 0
        %5577 = vmatprep.mubr.bf16.mxu0 0
        %5578 = vmatmul.mubr.bf16.gmra.mxu0 %v5540
        %v5579 = vpop.f32.mrf.mxu0
        %v5580 = vadd.f32 0.0, %v5579
        %v5581 = vpop.f32.mrf.mxu0
        %v5582 = vpop.f32.mrf.mxu0
        %v5583 = vadd.f32 0.0, %v5582
        %v5584 = vpop.f32.mrf.mxu0
        %5585 = vmatprep.mubr.bf16.mxu0 0
        %5586 = vmatmul.mubr.bf16.gmra.mxu0 %v5543
        %v5587 = vpop.f32.mrf.mxu0
        %v5588 = vadd.f32 0.0, %v5587
        %v5589 = vpop.f32.mrf.mxu0
        %v5590 = vpop.f32.mrf.mxu0
        %v5591 = vadd.f32 0.0, %v5590
        %v5592 = vpop.f32.mrf.mxu0
        %5593 = vdwg.mxu0
        %v5595 = vsel %vm582, %v5297, 0
        %v5598 = vsel %vm582, %v5298, 0
        %5600 = vmatprep.subr.bf16.mxu0 0
        %5601 = vmatpush1.bf16.msra.mxu0 0
        %5602 = vmatprep.subr.bf16.mxu0 0
        %5603 = vmatpush1.bf16.msra.mxu0 0
        %5604 = vmatprep.subr.bf16.mxu0 0
        %5605 = vmatpush1.bf16.msra.mxu0 0
        %5606 = vmatprep.subr.bf16.mxu0 0
        %5607 = vmatpush1.bf16.msra.mxu0 0
        %5608 = vmatprep.subr.bf16.mxu0 0
        %5609 = vmatpush1.bf16.msra.mxu0 0
        %5610 = vmatprep.subr.bf16.mxu0 0
        %5611 = vmatpush1.bf16.msra.mxu0 0
        %5612 = vmatprep.subr.bf16.mxu0 0
        %5613 = vmatpush1.bf16.msra.mxu0 %v5314
        %5614 = vmatprep.subr.bf16.mxu0 0
        %5615 = vmatpush1.bf16.msra.mxu0 %v5313
        %5616 = vmatprep.subr.bf16.mxu0 0
        %5617 = vmatpush2.bf16.msra.mxu0 0
        %5618 = vmatprep.subr.bf16.mxu0 0
        %5619 = vmatpush2.bf16.msra.mxu0 0
        %5620 = vmatprep.subr.bf16.mxu0 0
        %5621 = vmatpush2.bf16.msra.mxu0 0
        %5622 = vmatprep.subr.bf16.mxu0 0
        %5623 = vmatpush2.bf16.msra.mxu0 0
        %5624 = vmatprep.subr.bf16.mxu0 0
        %5625 = vmatpush2.bf16.msra.mxu0 0
        %5626 = vmatprep.subr.bf16.mxu0 0
        %5627 = vmatpush2.bf16.msra.mxu0 0
        %5628 = vmatprep.subr.bf16.mxu0 0
        %5629 = vmatpush2.bf16.msra.mxu0 0
        %5630 = vmatprep.subr.bf16.mxu0 0
        %5631 = vmatpush2.bf16.msra.mxu0 0
        %5632 = vmatprep.mubr.bf16.mxu0 0
        %5633 = vmatmul.mubr.bf16.gmra.mxu0 %v5595
        %v5634 = vpop.f32.mrf.mxu0
        %v5635 = vadd.f32 0.0, %v5634
        %v5636 = vpop.f32.mrf.mxu0
        %v5637 = vpop.f32.mrf.mxu0
        %v5638 = vadd.f32 0.0, %v5637
        %v5639 = vpop.f32.mrf.mxu0
        %5640 = vmatprep.mubr.bf16.mxu0 0
        %5641 = vmatmul.mubr.bf16.gmra.mxu0 %v5598
        %v5642 = vpop.f32.mrf.mxu0
        %v5643 = vadd.f32 0.0, %v5642
        %v5644 = vpop.f32.mrf.mxu0
        %v5645 = vpop.f32.mrf.mxu0
        %v5646 = vadd.f32 0.0, %v5645
        %v5647 = vpop.f32.mrf.mxu0
        %5648 = vdwg.mxu0
        %v5650 = vsel %vm582, %v5299, 0
        %v5653 = vsel %vm582, %v5300, 0
        %5655 = vmatprep.subr.bf16.mxu0 0
        %5656 = vmatpush1.bf16.msra.mxu0 0
        %5657 = vmatprep.subr.bf16.mxu0 0
        %5658 = vmatpush1.bf16.msra.mxu0 0
        %5659 = vmatprep.subr.bf16.mxu0 0
        %5660 = vmatpush1.bf16.msra.mxu0 0
        %5661 = vmatprep.subr.bf16.mxu0 0
        %5662 = vmatpush1.bf16.msra.mxu0 0
        %5663 = vmatprep.subr.bf16.mxu0 0
        %5664 = vmatpush1.bf16.msra.mxu0 0
        %5665 = vmatprep.subr.bf16.mxu0 0
        %5666 = vmatpush1.bf16.msra.mxu0 0
        %5667 = vmatprep.subr.bf16.mxu0 0
        %5668 = vmatpush1.bf16.msra.mxu0 %v5316
        %5669 = vmatprep.subr.bf16.mxu0 0
        %5670 = vmatpush1.bf16.msra.mxu0 %v5315
        %5671 = vmatprep.subr.bf16.mxu0 0
        %5672 = vmatpush2.bf16.msra.mxu0 0
        %5673 = vmatprep.subr.bf16.mxu0 0
        %5674 = vmatpush2.bf16.msra.mxu0 0
        %5675 = vmatprep.subr.bf16.mxu0 0
        %5676 = vmatpush2.bf16.msra.mxu0 0
        %5677 = vmatprep.subr.bf16.mxu0 0
        %5678 = vmatpush2.bf16.msra.mxu0 0
        %5679 = vmatprep.subr.bf16.mxu0 0
        %5680 = vmatpush2.bf16.msra.mxu0 0
        %5681 = vmatprep.subr.bf16.mxu0 0
        %5682 = vmatpush2.bf16.msra.mxu0 0
        %5683 = vmatprep.subr.bf16.mxu0 0
        %5684 = vmatpush2.bf16.msra.mxu0 0
        %5685 = vmatprep.subr.bf16.mxu0 0
        %5686 = vmatpush2.bf16.msra.mxu0 0
        %5687 = vmatprep.mubr.bf16.mxu0 0
        %5688 = vmatmul.mubr.bf16.gmra.mxu0 %v5650
        %v5689 = vpop.f32.mrf.mxu0
        %v5690 = vadd.f32 0.0, %v5689
        %v5691 = vpop.f32.mrf.mxu0
        %v5692 = vpop.f32.mrf.mxu0
        %v5693 = vadd.f32 0.0, %v5692
        %v5694 = vpop.f32.mrf.mxu0
        %5695 = vmatprep.mubr.bf16.mxu0 0
        %5696 = vmatmul.mubr.bf16.gmra.mxu0 %v5653
        %v5697 = vpop.f32.mrf.mxu0
        %v5698 = vadd.f32 0.0, %v5697
        %v5699 = vpop.f32.mrf.mxu0
        %v5700 = vpop.f32.mrf.mxu0
        %v5701 = vadd.f32 0.0, %v5700
        %v5702 = vpop.f32.mrf.mxu0
        %5703 = vdwg.mxu0
        %v5705 = vsel %vm582, %v5301, 0
        %v5708 = vsel %vm582, %v5302, 0
        %5710 = vmatprep.subr.bf16.mxu0 0
        %5711 = vmatpush1.bf16.msra.mxu0 0
        %5712 = vmatprep.subr.bf16.mxu0 0
        %5713 = vmatpush1.bf16.msra.mxu0 0
        %5714 = vmatprep.subr.bf16.mxu0 0
        %5715 = vmatpush1.bf16.msra.mxu0 0
        %5716 = vmatprep.subr.bf16.mxu0 0
        %5717 = vmatpush1.bf16.msra.mxu0 0
        %5718 = vmatprep.subr.bf16.mxu0 0
        %5719 = vmatpush1.bf16.msra.mxu0 0
        %5720 = vmatprep.subr.bf16.mxu0 0
        %5721 = vmatpush1.bf16.msra.mxu0 0
        %5722 = vmatprep.subr.bf16.mxu0 0
        %5723 = vmatpush1.bf16.msra.mxu0 %v5318
        %5724 = vmatprep.subr.bf16.mxu0 0
        %5725 = vmatpush1.bf16.msra.mxu0 %v5317
        %5726 = vmatprep.subr.bf16.mxu0 0
        %5727 = vmatpush2.bf16.msra.mxu0 0
        %5728 = vmatprep.subr.bf16.mxu0 0
        %5729 = vmatpush2.bf16.msra.mxu0 0
        %5730 = vmatprep.subr.bf16.mxu0 0
        %5731 = vmatpush2.bf16.msra.mxu0 0
        %5732 = vmatprep.subr.bf16.mxu0 0
        %5733 = vmatpush2.bf16.msra.mxu0 0
        %5734 = vmatprep.subr.bf16.mxu0 0
        %5735 = vmatpush2.bf16.msra.mxu0 0
        %5736 = vmatprep.subr.bf16.mxu0 0
        %5737 = vmatpush2.bf16.msra.mxu0 0
        %5738 = vmatprep.subr.bf16.mxu0 0
        %5739 = vmatpush2.bf16.msra.mxu0 0
        %5740 = vmatprep.subr.bf16.mxu0 0
        %5741 = vmatpush2.bf16.msra.mxu0 0
        %5742 = vmatprep.mubr.bf16.mxu0 0
        %5743 = vmatmul.mubr.bf16.gmra.mxu0 %v5705
        %v5744 = vpop.f32.mrf.mxu0
        %v5745 = vadd.f32 0.0, %v5744
        %v5746 = vpop.f32.mrf.mxu0
        %v5747 = vpop.f32.mrf.mxu0
        %v5748 = vadd.f32 0.0, %v5747
        %v5749 = vpop.f32.mrf.mxu0
        %5750 = vmatprep.mubr.bf16.mxu0 0
        %5751 = vmatmul.mubr.bf16.gmra.mxu0 %v5708
        %v5752 = vpop.f32.mrf.mxu0
        %v5753 = vadd.f32 0.0, %v5752
        %v5754 = vpop.f32.mrf.mxu0
        %v5755 = vpop.f32.mrf.mxu0
        %v5756 = vadd.f32 0.0, %v5755
        %v5757 = vpop.f32.mrf.mxu0
        %5758 = vdwg.mxu0
        %v5759 = vcombine.low %v5360, %v5470
        %v5760 = vcombine.high %v5360, %v5470
        %v5762 = vunpack.c.l.s4 1983009808
        %v5763 = vunpack.c.0.s8 %v5762
        %v5764 = vlaneseq
        %v5765 = vshrl.u32 %v5764, 7
        %v5766 = vsub.s32 %v5763, %v5765
        %v5767 = vrot.slane %v5759, %v5766
        %v5769 = vunpack.c.l.s4 1983009808
        %v5770 = vunpack.c.0.s8 %v5769
        %v5771 = vlaneseq
        %v5772 = vshrl.u32 %v5771, 7
        %v5773 = vsub.s32 %v5770, %v5772
        %v5774 = vrot.slane %v5760, %v5773
        %v5775 = vcombine.low %v5415, %v5525
        %v5776 = vcombine.high %v5415, %v5525
        %v5778 = vunpack.c.l.s4 1983009808
        %v5779 = vunpack.c.0.s8 %v5778
        %v5780 = vlaneseq
        %v5781 = vshrl.u32 %v5780, 7
        %v5782 = vsub.s32 %v5779, %v5781
        %v5783 = vrot.slane %v5775, %v5782
        %v5785 = vunpack.c.l.s4 1983009808
        %v5786 = vunpack.c.0.s8 %v5785
        %v5787 = vlaneseq
        %v5788 = vshrl.u32 %v5787, 7
        %v5789 = vsub.s32 %v5786, %v5788
        %v5790 = vrot.slane %v5776, %v5789
        %v5791 = vcombine.low %v5767, %v5783
        %v5792 = vcombine.high %v5767, %v5783
        %v5794 = vunpack.c.l.s4 1934713408
        %v5795 = vunpack.c.0.s8 %v5794
        %v5796 = vlaneseq
        %v5797 = vshrl.u32 %v5796, 7
        %v5798 = vsub.s32 %v5795, %v5797
        %v5799 = vrot.slane %v5791, %v5798
        %v5801 = vunpack.c.l.s4 1934713408
        %v5802 = vunpack.c.0.s8 %v5801
        %v5803 = vlaneseq
        %v5804 = vshrl.u32 %v5803, 7
        %v5805 = vsub.s32 %v5802, %v5804
        %v5806 = vrot.slane %v5792, %v5805
        %v5807 = vcombine.low %v5774, %v5790
        %v5808 = vcombine.high %v5774, %v5790
        %v5810 = vunpack.c.l.s4 1934713408
        %v5811 = vunpack.c.0.s8 %v5810
        %v5812 = vlaneseq
        %v5813 = vshrl.u32 %v5812, 7
        %v5814 = vsub.s32 %v5811, %v5813
        %v5815 = vrot.slane %v5807, %v5814
        %v5817 = vunpack.c.l.s4 1934713408
        %v5818 = vunpack.c.0.s8 %v5817
        %v5819 = vlaneseq
        %v5820 = vshrl.u32 %v5819, 7
        %v5821 = vsub.s32 %v5818, %v5820
        %v5822 = vrot.slane %v5808, %v5821
        %v5823 = vcombine.high %v5799, 0.0
        %v5824 = vcombine.high %v5806, 0.0
        %v5825 = vcombine.high %v5815, 0.0
        %v5826 = vcombine.high %v5822, 0.0
        %v5827 = vcombine.low %v5363, %v5473
        %v5828 = vcombine.high %v5363, %v5473
        %v5830 = vunpack.c.l.s4 1983009808
        %v5831 = vunpack.c.0.s8 %v5830
        %v5832 = vlaneseq
        %v5833 = vshrl.u32 %v5832, 7
        %v5834 = vsub.s32 %v5831, %v5833
        %v5835 = vrot.slane %v5827, %v5834
        %v5837 = vunpack.c.l.s4 1983009808
        %v5838 = vunpack.c.0.s8 %v5837
        %v5839 = vlaneseq
        %v5840 = vshrl.u32 %v5839, 7
        %v5841 = vsub.s32 %v5838, %v5840
        %v5842 = vrot.slane %v5828, %v5841
        %v5843 = vcombine.low %v5418, %v5528
        %v5844 = vcombine.high %v5418, %v5528
        %v5846 = vunpack.c.l.s4 1983009808
        %v5847 = vunpack.c.0.s8 %v5846
        %v5848 = vlaneseq
        %v5849 = vshrl.u32 %v5848, 7
        %v5850 = vsub.s32 %v5847, %v5849
        %v5851 = vrot.slane %v5843, %v5850
        %v5853 = vunpack.c.l.s4 1983009808
        %v5854 = vunpack.c.0.s8 %v5853
        %v5855 = vlaneseq
        %v5856 = vshrl.u32 %v5855, 7
        %v5857 = vsub.s32 %v5854, %v5856
        %v5858 = vrot.slane %v5844, %v5857
        %v5859 = vcombine.low %v5835, %v5851
        %v5860 = vcombine.high %v5835, %v5851
        %v5862 = vunpack.c.l.s4 1934713408
        %v5863 = vunpack.c.0.s8 %v5862
        %v5864 = vlaneseq
        %v5865 = vshrl.u32 %v5864, 7
        %v5866 = vsub.s32 %v5863, %v5865
        %v5867 = vrot.slane %v5859, %v5866
        %v5869 = vunpack.c.l.s4 1934713408
        %v5870 = vunpack.c.0.s8 %v5869
        %v5871 = vlaneseq
        %v5872 = vshrl.u32 %v5871, 7
        %v5873 = vsub.s32 %v5870, %v5872
        %v5874 = vrot.slane %v5860, %v5873
        %v5875 = vcombine.low %v5842, %v5858
        %v5876 = vcombine.high %v5842, %v5858
        %v5878 = vunpack.c.l.s4 1934713408
        %v5879 = vunpack.c.0.s8 %v5878
        %v5880 = vlaneseq
        %v5881 = vshrl.u32 %v5880, 7
        %v5882 = vsub.s32 %v5879, %v5881
        %v5883 = vrot.slane %v5875, %v5882
        %v5885 = vunpack.c.l.s4 1934713408
        %v5886 = vunpack.c.0.s8 %v5885
        %v5887 = vlaneseq
        %v5888 = vshrl.u32 %v5887, 7
        %v5889 = vsub.s32 %v5886, %v5888
        %v5890 = vrot.slane %v5876, %v5889
        %v5891 = vcombine.high %v5867, 0.0
        %v5892 = vcombine.high %v5874, 0.0
        %v5893 = vcombine.high %v5883, 0.0
        %v5894 = vcombine.high %v5890, 0.0
        %v5895 = vcombine.low %v5368, %v5478
        %v5896 = vcombine.high %v5368, %v5478
        %v5898 = vunpack.c.l.s4 1983009808
        %v5899 = vunpack.c.0.s8 %v5898
        %v5900 = vlaneseq
        %v5901 = vshrl.u32 %v5900, 7
        %v5902 = vsub.s32 %v5899, %v5901
        %v5903 = vrot.slane %v5895, %v5902
        %v5905 = vunpack.c.l.s4 1983009808
        %v5906 = vunpack.c.0.s8 %v5905
        %v5907 = vlaneseq
        %v5908 = vshrl.u32 %v5907, 7
        %v5909 = vsub.s32 %v5906, %v5908
        %v5910 = vrot.slane %v5896, %v5909
        %v5911 = vcombine.low %v5423, %v5533
        %v5912 = vcombine.high %v5423, %v5533
        %v5914 = vunpack.c.l.s4 1983009808
        %v5915 = vunpack.c.0.s8 %v5914
        %v5916 = vlaneseq
        %v5917 = vshrl.u32 %v5916, 7
        %v5918 = vsub.s32 %v5915, %v5917
        %v5919 = vrot.slane %v5911, %v5918
        %v5921 = vunpack.c.l.s4 1983009808
        %v5922 = vunpack.c.0.s8 %v5921
        %v5923 = vlaneseq
        %v5924 = vshrl.u32 %v5923, 7
        %v5925 = vsub.s32 %v5922, %v5924
        %v5926 = vrot.slane %v5912, %v5925
        %v5927 = vcombine.low %v5903, %v5919
        %v5928 = vcombine.high %v5903, %v5919
        %v5930 = vunpack.c.l.s4 1934713408
        %v5931 = vunpack.c.0.s8 %v5930
        %v5932 = vlaneseq
        %v5933 = vshrl.u32 %v5932, 7
        %v5934 = vsub.s32 %v5931, %v5933
        %v5935 = vrot.slane %v5927, %v5934
        %v5937 = vunpack.c.l.s4 1934713408
        %v5938 = vunpack.c.0.s8 %v5937
        %v5939 = vlaneseq
        %v5940 = vshrl.u32 %v5939, 7
        %v5941 = vsub.s32 %v5938, %v5940
        %v5942 = vrot.slane %v5928, %v5941
        %v5943 = vcombine.low %v5910, %v5926
        %v5944 = vcombine.high %v5910, %v5926
        %v5946 = vunpack.c.l.s4 1934713408
        %v5947 = vunpack.c.0.s8 %v5946
        %v5948 = vlaneseq
        %v5949 = vshrl.u32 %v5948, 7
        %v5950 = vsub.s32 %v5947, %v5949
        %v5951 = vrot.slane %v5943, %v5950
        %v5953 = vunpack.c.l.s4 1934713408
        %v5954 = vunpack.c.0.s8 %v5953
        %v5955 = vlaneseq
        %v5956 = vshrl.u32 %v5955, 7
        %v5957 = vsub.s32 %v5954, %v5956
        %v5958 = vrot.slane %v5944, %v5957
        %v5959 = vcombine.high %v5935, 0.0
        %v5960 = vcombine.high %v5942, 0.0
        %v5961 = vcombine.high %v5951, 0.0
        %v5962 = vcombine.high %v5958, 0.0
        %v5963 = vcombine.low %v5371, %v5481
        %v5964 = vcombine.high %v5371, %v5481
        %v5966 = vunpack.c.l.s4 1983009808
        %v5967 = vunpack.c.0.s8 %v5966
        %v5968 = vlaneseq
        %v5969 = vshrl.u32 %v5968, 7
        %v5970 = vsub.s32 %v5967, %v5969
        %v5971 = vrot.slane %v5963, %v5970
        %v5973 = vunpack.c.l.s4 1983009808
        %v5974 = vunpack.c.0.s8 %v5973
        %v5975 = vlaneseq
        %v5976 = vshrl.u32 %v5975, 7
        %v5977 = vsub.s32 %v5974, %v5976
        %v5978 = vrot.slane %v5964, %v5977
        %v5979 = vcombine.low %v5426, %v5536
        %v5980 = vcombine.high %v5426, %v5536
        %v5982 = vunpack.c.l.s4 1983009808
        %v5983 = vunpack.c.0.s8 %v5982
        %v5984 = vlaneseq
        %v5985 = vshrl.u32 %v5984, 7
        %v5986 = vsub.s32 %v5983, %v5985
        %v5987 = vrot.slane %v5979, %v5986
        %v5989 = vunpack.c.l.s4 1983009808
        %v5990 = vunpack.c.0.s8 %v5989
        %v5991 = vlaneseq
        %v5992 = vshrl.u32 %v5991, 7
        %v5993 = vsub.s32 %v5990, %v5992
        %v5994 = vrot.slane %v5980, %v5993
        %v5995 = vcombine.low %v5971, %v5987
        %v5996 = vcombine.high %v5971, %v5987
        %v5998 = vunpack.c.l.s4 1934713408
        %v5999 = vunpack.c.0.s8 %v5998
        %v6000 = vlaneseq
        %v6001 = vshrl.u32 %v6000, 7
        %v6002 = vsub.s32 %v5999, %v6001
        %v6003 = vrot.slane %v5995, %v6002
        %v6005 = vunpack.c.l.s4 1934713408
        %v6006 = vunpack.c.0.s8 %v6005
        %v6007 = vlaneseq
        %v6008 = vshrl.u32 %v6007, 7
        %v6009 = vsub.s32 %v6006, %v6008
        %v6010 = vrot.slane %v5996, %v6009
        %v6011 = vcombine.low %v5978, %v5994
        %v6012 = vcombine.high %v5978, %v5994
        %v6014 = vunpack.c.l.s4 1934713408
        %v6015 = vunpack.c.0.s8 %v6014
        %v6016 = vlaneseq
        %v6017 = vshrl.u32 %v6016, 7
        %v6018 = vsub.s32 %v6015, %v6017
        %v6019 = vrot.slane %v6011, %v6018
        %v6021 = vunpack.c.l.s4 1934713408
        %v6022 = vunpack.c.0.s8 %v6021
        %v6023 = vlaneseq
        %v6024 = vshrl.u32 %v6023, 7
        %v6025 = vsub.s32 %v6022, %v6024
        %v6026 = vrot.slane %v6012, %v6025
        %v6027 = vcombine.high %v6003, 0.0
        %v6028 = vcombine.high %v6010, 0.0
        %v6029 = vcombine.high %v6019, 0.0
        %v6030 = vcombine.high %v6026, 0.0
        %v6031 = vcombine.low %v5580, %v5690
        %v6032 = vcombine.high %v5580, %v5690
        %v6034 = vunpack.c.l.s4 1983009808
        %v6035 = vunpack.c.0.s8 %v6034
        %v6036 = vlaneseq
        %v6037 = vshrl.u32 %v6036, 7
        %v6038 = vsub.s32 %v6035, %v6037
        %v6039 = vrot.slane %v6031, %v6038
        %v6041 = vunpack.c.l.s4 1983009808
        %v6042 = vunpack.c.0.s8 %v6041
        %v6043 = vlaneseq
        %v6044 = vshrl.u32 %v6043, 7
        %v6045 = vsub.s32 %v6042, %v6044
        %v6046 = vrot.slane %v6032, %v6045
        %v6047 = vcombine.low %v5635, %v5745
        %v6048 = vcombine.high %v5635, %v5745
        %v6050 = vunpack.c.l.s4 1983009808
        %v6051 = vunpack.c.0.s8 %v6050
        %v6052 = vlaneseq
        %v6053 = vshrl.u32 %v6052, 7
        %v6054 = vsub.s32 %v6051, %v6053
        %v6055 = vrot.slane %v6047, %v6054
        %v6057 = vunpack.c.l.s4 1983009808
        %v6058 = vunpack.c.0.s8 %v6057
        %v6059 = vlaneseq
        %v6060 = vshrl.u32 %v6059, 7
        %v6061 = vsub.s32 %v6058, %v6060
        %v6062 = vrot.slane %v6048, %v6061
        %v6063 = vcombine.low %v6039, %v6055
        %v6064 = vcombine.high %v6039, %v6055
        %v6066 = vunpack.c.l.s4 1934713408
        %v6067 = vunpack.c.0.s8 %v6066
        %v6068 = vlaneseq
        %v6069 = vshrl.u32 %v6068, 7
        %v6070 = vsub.s32 %v6067, %v6069
        %v6071 = vrot.slane %v6063, %v6070
        %v6073 = vunpack.c.l.s4 1934713408
        %v6074 = vunpack.c.0.s8 %v6073
        %v6075 = vlaneseq
        %v6076 = vshrl.u32 %v6075, 7
        %v6077 = vsub.s32 %v6074, %v6076
        %v6078 = vrot.slane %v6064, %v6077
        %v6079 = vcombine.low %v6046, %v6062
        %v6080 = vcombine.high %v6046, %v6062
        %v6082 = vunpack.c.l.s4 1934713408
        %v6083 = vunpack.c.0.s8 %v6082
        %v6084 = vlaneseq
        %v6085 = vshrl.u32 %v6084, 7
        %v6086 = vsub.s32 %v6083, %v6085
        %v6087 = vrot.slane %v6079, %v6086
        %v6089 = vunpack.c.l.s4 1934713408
        %v6090 = vunpack.c.0.s8 %v6089
        %v6091 = vlaneseq
        %v6092 = vshrl.u32 %v6091, 7
        %v6093 = vsub.s32 %v6090, %v6092
        %v6094 = vrot.slane %v6080, %v6093
        %v6095 = vcombine.high %v6071, 0.0
        %v6096 = vcombine.high %v6078, 0.0
        %v6097 = vcombine.high %v6087, 0.0
        %v6098 = vcombine.high %v6094, 0.0
        %v6099 = vcombine.low %v5583, %v5693
        %v6100 = vcombine.high %v5583, %v5693
        %v6102 = vunpack.c.l.s4 1983009808
        %v6103 = vunpack.c.0.s8 %v6102
        %v6104 = vlaneseq
        %v6105 = vshrl.u32 %v6104, 7
        %v6106 = vsub.s32 %v6103, %v6105
        %v6107 = vrot.slane %v6099, %v6106
        %v6109 = vunpack.c.l.s4 1983009808
        %v6110 = vunpack.c.0.s8 %v6109
        %v6111 = vlaneseq
        %v6112 = vshrl.u32 %v6111, 7
        %v6113 = vsub.s32 %v6110, %v6112
        %v6114 = vrot.slane %v6100, %v6113
        %v6115 = vcombine.low %v5638, %v5748
        %v6116 = vcombine.high %v5638, %v5748
        %v6118 = vunpack.c.l.s4 1983009808
        %v6119 = vunpack.c.0.s8 %v6118
        %v6120 = vlaneseq
        %v6121 = vshrl.u32 %v6120, 7
        %v6122 = vsub.s32 %v6119, %v6121
        %v6123 = vrot.slane %v6115, %v6122
        %v6125 = vunpack.c.l.s4 1983009808
        %v6126 = vunpack.c.0.s8 %v6125
        %v6127 = vlaneseq
        %v6128 = vshrl.u32 %v6127, 7
        %v6129 = vsub.s32 %v6126, %v6128
        %v6130 = vrot.slane %v6116, %v6129
        %v6131 = vcombine.low %v6107, %v6123
        %v6132 = vcombine.high %v6107, %v6123
        %v6134 = vunpack.c.l.s4 1934713408
        %v6135 = vunpack.c.0.s8 %v6134
        %v6136 = vlaneseq
        %v6137 = vshrl.u32 %v6136, 7
        %v6138 = vsub.s32 %v6135, %v6137
        %v6139 = vrot.slane %v6131, %v6138
        %v6141 = vunpack.c.l.s4 1934713408
        %v6142 = vunpack.c.0.s8 %v6141
        %v6143 = vlaneseq
        %v6144 = vshrl.u32 %v6143, 7
        %v6145 = vsub.s32 %v6142, %v6144
        %v6146 = vrot.slane %v6132, %v6145
        %v6147 = vcombine.low %v6114, %v6130
        %v6148 = vcombine.high %v6114, %v6130
        %v6150 = vunpack.c.l.s4 1934713408
        %v6151 = vunpack.c.0.s8 %v6150
        %v6152 = vlaneseq
        %v6153 = vshrl.u32 %v6152, 7
        %v6154 = vsub.s32 %v6151, %v6153
        %v6155 = vrot.slane %v6147, %v6154
        %v6157 = vunpack.c.l.s4 1934713408
        %v6158 = vunpack.c.0.s8 %v6157
        %v6159 = vlaneseq
        %v6160 = vshrl.u32 %v6159, 7
        %v6161 = vsub.s32 %v6158, %v6160
        %v6162 = vrot.slane %v6148, %v6161
        %v6163 = vcombine.high %v6139, 0.0
        %v6164 = vcombine.high %v6146, 0.0
        %v6165 = vcombine.high %v6155, 0.0
        %v6166 = vcombine.high %v6162, 0.0
        %v6167 = vcombine.low %v5588, %v5698
        %v6168 = vcombine.high %v5588, %v5698
        %v6170 = vunpack.c.l.s4 1983009808
        %v6171 = vunpack.c.0.s8 %v6170
        %v6172 = vlaneseq
        %v6173 = vshrl.u32 %v6172, 7
        %v6174 = vsub.s32 %v6171, %v6173
        %v6175 = vrot.slane %v6167, %v6174
        %v6177 = vunpack.c.l.s4 1983009808
        %v6178 = vunpack.c.0.s8 %v6177
        %v6179 = vlaneseq
        %v6180 = vshrl.u32 %v6179, 7
        %v6181 = vsub.s32 %v6178, %v6180
        %v6182 = vrot.slane %v6168, %v6181
        %v6183 = vcombine.low %v5643, %v5753
        %v6184 = vcombine.high %v5643, %v5753
        %v6186 = vunpack.c.l.s4 1983009808
        %v6187 = vunpack.c.0.s8 %v6186
        %v6188 = vlaneseq
        %v6189 = vshrl.u32 %v6188, 7
        %v6190 = vsub.s32 %v6187, %v6189
        %v6191 = vrot.slane %v6183, %v6190
        %v6193 = vunpack.c.l.s4 1983009808
        %v6194 = vunpack.c.0.s8 %v6193
        %v6195 = vlaneseq
        %v6196 = vshrl.u32 %v6195, 7
        %v6197 = vsub.s32 %v6194, %v6196
        %v6198 = vrot.slane %v6184, %v6197
        %v6199 = vcombine.low %v6175, %v6191
        %v6200 = vcombine.high %v6175, %v6191
        %v6202 = vunpack.c.l.s4 1934713408
        %v6203 = vunpack.c.0.s8 %v6202
        %v6204 = vlaneseq
        %v6205 = vshrl.u32 %v6204, 7
        %v6206 = vsub.s32 %v6203, %v6205
        %v6207 = vrot.slane %v6199, %v6206
        %v6209 = vunpack.c.l.s4 1934713408
        %v6210 = vunpack.c.0.s8 %v6209
        %v6211 = vlaneseq
        %v6212 = vshrl.u32 %v6211, 7
        %v6213 = vsub.s32 %v6210, %v6212
        %v6214 = vrot.slane %v6200, %v6213
        %v6215 = vcombine.low %v6182, %v6198
        %v6216 = vcombine.high %v6182, %v6198
        %v6218 = vunpack.c.l.s4 1934713408
        %v6219 = vunpack.c.0.s8 %v6218
        %v6220 = vlaneseq
        %v6221 = vshrl.u32 %v6220, 7
        %v6222 = vsub.s32 %v6219, %v6221
        %v6223 = vrot.slane %v6215, %v6222
        %v6225 = vunpack.c.l.s4 1934713408
        %v6226 = vunpack.c.0.s8 %v6225
        %v6227 = vlaneseq
        %v6228 = vshrl.u32 %v6227, 7
        %v6229 = vsub.s32 %v6226, %v6228
        %v6230 = vrot.slane %v6216, %v6229
        %v6231 = vcombine.high %v6207, 0.0
        %v6232 = vcombine.high %v6214, 0.0
        %v6233 = vcombine.high %v6223, 0.0
        %v6234 = vcombine.high %v6230, 0.0
        %v6235 = vcombine.low %v5591, %v5701
        %v6236 = vcombine.high %v5591, %v5701
        %v6238 = vunpack.c.l.s4 1983009808
        %v6239 = vunpack.c.0.s8 %v6238
        %v6240 = vlaneseq
        %v6241 = vshrl.u32 %v6240, 7
        %v6242 = vsub.s32 %v6239, %v6241
        %v6243 = vrot.slane %v6235, %v6242
        %v6245 = vunpack.c.l.s4 1983009808
        %v6246 = vunpack.c.0.s8 %v6245
        %v6247 = vlaneseq
        %v6248 = vshrl.u32 %v6247, 7
        %v6249 = vsub.s32 %v6246, %v6248
        %v6250 = vrot.slane %v6236, %v6249
        %v6251 = vcombine.low %v5646, %v5756
        %v6252 = vcombine.high %v5646, %v5756
        %v6254 = vunpack.c.l.s4 1983009808
        %v6255 = vunpack.c.0.s8 %v6254
        %v6256 = vlaneseq
        %v6257 = vshrl.u32 %v6256, 7
        %v6258 = vsub.s32 %v6255, %v6257
        %v6259 = vrot.slane %v6251, %v6258
        %v6261 = vunpack.c.l.s4 1983009808
        %v6262 = vunpack.c.0.s8 %v6261
        %v6263 = vlaneseq
        %v6264 = vshrl.u32 %v6263, 7
        %v6265 = vsub.s32 %v6262, %v6264
        %v6266 = vrot.slane %v6252, %v6265
        %v6267 = vcombine.low %v6243, %v6259
        %v6268 = vcombine.high %v6243, %v6259
        %v6270 = vunpack.c.l.s4 1934713408
        %v6271 = vunpack.c.0.s8 %v6270
        %v6272 = vlaneseq
        %v6273 = vshrl.u32 %v6272, 7
        %v6274 = vsub.s32 %v6271, %v6273
        %v6275 = vrot.slane %v6267, %v6274
        %v6277 = vunpack.c.l.s4 1934713408
        %v6278 = vunpack.c.0.s8 %v6277
        %v6279 = vlaneseq
        %v6280 = vshrl.u32 %v6279, 7
        %v6281 = vsub.s32 %v6278, %v6280
        %v6282 = vrot.slane %v6268, %v6281
        %v6283 = vcombine.low %v6250, %v6266
        %v6284 = vcombine.high %v6250, %v6266
        %v6286 = vunpack.c.l.s4 1934713408
        %v6287 = vunpack.c.0.s8 %v6286
        %v6288 = vlaneseq
        %v6289 = vshrl.u32 %v6288, 7
        %v6290 = vsub.s32 %v6287, %v6289
        %v6291 = vrot.slane %v6283, %v6290
        %v6293 = vunpack.c.l.s4 1934713408
        %v6294 = vunpack.c.0.s8 %v6293
        %v6295 = vlaneseq
        %v6296 = vshrl.u32 %v6295, 7
        %v6297 = vsub.s32 %v6294, %v6296
        %v6298 = vrot.slane %v6284, %v6297
        %v6299 = vcombine.high %v6275, 0.0
        %v6300 = vcombine.high %v6282, 0.0
        %v6301 = vcombine.high %v6291, 0.0
        %v6302 = vcombine.high %v6298, 0.0
        %v6303 = vcombine.low %v5799, %v5806
        %v6305 = vunpack.c.l.s4 1983009808
        %v6306 = vunpack.c.0.s8 %v6305
        %v6307 = vlaneseq
        %v6308 = vshrl.u32 %v6307, 7
        %v6309 = vsub.s32 %v6306, %v6308
        %v6310 = vrot.slane %v6303, %v6309
        %v6311 = vcombine.low %v5823, %v5824
        %v6313 = vunpack.c.l.s4 1983009808
        %v6314 = vunpack.c.0.s8 %v6313
        %v6315 = vlaneseq
        %v6316 = vshrl.u32 %v6315, 7
        %v6317 = vsub.s32 %v6314, %v6316
        %v6318 = vrot.slane %v6311, %v6317
        %v6319 = vcombine.low %v5815, %v5822
        %v6321 = vunpack.c.l.s4 1983009808
        %v6322 = vunpack.c.0.s8 %v6321
        %v6323 = vlaneseq
        %v6324 = vshrl.u32 %v6323, 7
        %v6325 = vsub.s32 %v6322, %v6324
        %v6326 = vrot.slane %v6319, %v6325
        %v6327 = vcombine.low %v5825, %v5826
        %v6329 = vunpack.c.l.s4 1983009808
        %v6330 = vunpack.c.0.s8 %v6329
        %v6331 = vlaneseq
        %v6332 = vshrl.u32 %v6331, 7
        %v6333 = vsub.s32 %v6330, %v6332
        %v6334 = vrot.slane %v6327, %v6333
        %v6335 = vcombine.low %v6310, %v6318
        %v6336 = vcombine.high %v6310, %v6318
        %v6338 = vunpack.c.l.s4 1934713408
        %v6339 = vunpack.c.0.s8 %v6338
        %v6340 = vlaneseq
        %v6341 = vshrl.u32 %v6340, 7
        %v6342 = vsub.s32 %v6339, %v6341
        %v6343 = vrot.slane %v6335, %v6342
        %v6345 = vunpack.c.l.s4 1934713408
        %v6346 = vunpack.c.0.s8 %v6345
        %v6347 = vlaneseq
        %v6348 = vshrl.u32 %v6347, 7
        %v6349 = vsub.s32 %v6346, %v6348
        %v6350 = vrot.slane %v6336, %v6349
        %v6351 = vcombine.low %v6326, %v6334
        %v6352 = vcombine.high %v6326, %v6334
        %v6354 = vunpack.c.l.s4 1934713408
        %v6355 = vunpack.c.0.s8 %v6354
        %v6356 = vlaneseq
        %v6357 = vshrl.u32 %v6356, 7
        %v6358 = vsub.s32 %v6355, %v6357
        %v6359 = vrot.slane %v6351, %v6358
        %v6361 = vunpack.c.l.s4 1934713408
        %v6362 = vunpack.c.0.s8 %v6361
        %v6363 = vlaneseq
        %v6364 = vshrl.u32 %v6363, 7
        %v6365 = vsub.s32 %v6362, %v6364
        %v6366 = vrot.slane %v6352, %v6365
        %v6367 = vcombine.low %v6343, %v6359
        %v6368 = vcombine.high %v6343, %v6359
        %v6369 = vcombine.low %v6350, %v6366
        %v6370 = vcombine.high %v6350, %v6366
        %v6371 = vcombine.low %v5867, %v5874
        %v6373 = vunpack.c.l.s4 1983009808
        %v6374 = vunpack.c.0.s8 %v6373
        %v6375 = vlaneseq
        %v6376 = vshrl.u32 %v6375, 7
        %v6377 = vsub.s32 %v6374, %v6376
        %v6378 = vrot.slane %v6371, %v6377
        %v6379 = vcombine.low %v5891, %v5892
        %v6381 = vunpack.c.l.s4 1983009808
        %v6382 = vunpack.c.0.s8 %v6381
        %v6383 = vlaneseq
        %v6384 = vshrl.u32 %v6383, 7
        %v6385 = vsub.s32 %v6382, %v6384
        %v6386 = vrot.slane %v6379, %v6385
        %v6387 = vcombine.low %v5883, %v5890
        %v6389 = vunpack.c.l.s4 1983009808
        %v6390 = vunpack.c.0.s8 %v6389
        %v6391 = vlaneseq
        %v6392 = vshrl.u32 %v6391, 7
        %v6393 = vsub.s32 %v6390, %v6392
        %v6394 = vrot.slane %v6387, %v6393
        %v6395 = vcombine.low %v5893, %v5894
        %v6397 = vunpack.c.l.s4 1983009808
        %v6398 = vunpack.c.0.s8 %v6397
        %v6399 = vlaneseq
        %v6400 = vshrl.u32 %v6399, 7
        %v6401 = vsub.s32 %v6398, %v6400
        %v6402 = vrot.slane %v6395, %v6401
        %v6403 = vcombine.low %v6378, %v6386
        %v6404 = vcombine.high %v6378, %v6386
        %v6406 = vunpack.c.l.s4 1934713408
        %v6407 = vunpack.c.0.s8 %v6406
        %v6408 = vlaneseq
        %v6409 = vshrl.u32 %v6408, 7
        %v6410 = vsub.s32 %v6407, %v6409
        %v6411 = vrot.slane %v6403, %v6410
        %v6413 = vunpack.c.l.s4 1934713408
        %v6414 = vunpack.c.0.s8 %v6413
        %v6415 = vlaneseq
        %v6416 = vshrl.u32 %v6415, 7
        %v6417 = vsub.s32 %v6414, %v6416
        %v6418 = vrot.slane %v6404, %v6417
        %v6419 = vcombine.low %v6394, %v6402
        %v6420 = vcombine.high %v6394, %v6402
        %v6422 = vunpack.c.l.s4 1934713408
        %v6423 = vunpack.c.0.s8 %v6422
        %v6424 = vlaneseq
        %v6425 = vshrl.u32 %v6424, 7
        %v6426 = vsub.s32 %v6423, %v6425
        %v6427 = vrot.slane %v6419, %v6426
        %v6429 = vunpack.c.l.s4 1934713408
        %v6430 = vunpack.c.0.s8 %v6429
        %v6431 = vlaneseq
        %v6432 = vshrl.u32 %v6431, 7
        %v6433 = vsub.s32 %v6430, %v6432
        %v6434 = vrot.slane %v6420, %v6433
        %v6435 = vcombine.low %v6411, %v6427
        %v6436 = vcombine.high %v6411, %v6427
        %v6437 = vcombine.low %v6418, %v6434
        %v6438 = vcombine.high %v6418, %v6434
        %v6439 = vcombine.low %v5935, %v5942
        %v6441 = vunpack.c.l.s4 1983009808
        %v6442 = vunpack.c.0.s8 %v6441
        %v6443 = vlaneseq
        %v6444 = vshrl.u32 %v6443, 7
        %v6445 = vsub.s32 %v6442, %v6444
        %v6446 = vrot.slane %v6439, %v6445
        %v6447 = vcombine.low %v5959, %v5960
        %v6449 = vunpack.c.l.s4 1983009808
        %v6450 = vunpack.c.0.s8 %v6449
        %v6451 = vlaneseq
        %v6452 = vshrl.u32 %v6451, 7
        %v6453 = vsub.s32 %v6450, %v6452
        %v6454 = vrot.slane %v6447, %v6453
        %v6455 = vcombine.low %v5951, %v5958
        %v6457 = vunpack.c.l.s4 1983009808
        %v6458 = vunpack.c.0.s8 %v6457
        %v6459 = vlaneseq
        %v6460 = vshrl.u32 %v6459, 7
        %v6461 = vsub.s32 %v6458, %v6460
        %v6462 = vrot.slane %v6455, %v6461
        %v6463 = vcombine.low %v5961, %v5962
        %v6465 = vunpack.c.l.s4 1983009808
        %v6466 = vunpack.c.0.s8 %v6465
        %v6467 = vlaneseq
        %v6468 = vshrl.u32 %v6467, 7
        %v6469 = vsub.s32 %v6466, %v6468
        %v6470 = vrot.slane %v6463, %v6469
        %v6471 = vcombine.low %v6446, %v6454
        %v6472 = vcombine.high %v6446, %v6454
        %v6474 = vunpack.c.l.s4 1934713408
        %v6475 = vunpack.c.0.s8 %v6474
        %v6476 = vlaneseq
        %v6477 = vshrl.u32 %v6476, 7
        %v6478 = vsub.s32 %v6475, %v6477
        %v6479 = vrot.slane %v6471, %v6478
        %v6481 = vunpack.c.l.s4 1934713408
        %v6482 = vunpack.c.0.s8 %v6481
        %v6483 = vlaneseq
        %v6484 = vshrl.u32 %v6483, 7
        %v6485 = vsub.s32 %v6482, %v6484
        %v6486 = vrot.slane %v6472, %v6485
        %v6487 = vcombine.low %v6462, %v6470
        %v6488 = vcombine.high %v6462, %v6470
        %v6490 = vunpack.c.l.s4 1934713408
        %v6491 = vunpack.c.0.s8 %v6490
        %v6492 = vlaneseq
        %v6493 = vshrl.u32 %v6492, 7
        %v6494 = vsub.s32 %v6491, %v6493
        %v6495 = vrot.slane %v6487, %v6494
        %v6497 = vunpack.c.l.s4 1934713408
        %v6498 = vunpack.c.0.s8 %v6497
        %v6499 = vlaneseq
        %v6500 = vshrl.u32 %v6499, 7
        %v6501 = vsub.s32 %v6498, %v6500
        %v6502 = vrot.slane %v6488, %v6501
        %v6503 = vcombine.low %v6479, %v6495
        %v6504 = vcombine.high %v6479, %v6495
        %v6505 = vcombine.low %v6486, %v6502
        %v6506 = vcombine.high %v6486, %v6502
        %v6507 = vcombine.low %v6003, %v6010
        %v6509 = vunpack.c.l.s4 1983009808
        %v6510 = vunpack.c.0.s8 %v6509
        %v6511 = vlaneseq
        %v6512 = vshrl.u32 %v6511, 7
        %v6513 = vsub.s32 %v6510, %v6512
        %v6514 = vrot.slane %v6507, %v6513
        %v6515 = vcombine.low %v6027, %v6028
        %v6517 = vunpack.c.l.s4 1983009808
        %v6518 = vunpack.c.0.s8 %v6517
        %v6519 = vlaneseq
        %v6520 = vshrl.u32 %v6519, 7
        %v6521 = vsub.s32 %v6518, %v6520
        %v6522 = vrot.slane %v6515, %v6521
        %v6523 = vcombine.low %v6019, %v6026
        %v6525 = vunpack.c.l.s4 1983009808
        %v6526 = vunpack.c.0.s8 %v6525
        %v6527 = vlaneseq
        %v6528 = vshrl.u32 %v6527, 7
        %v6529 = vsub.s32 %v6526, %v6528
        %v6530 = vrot.slane %v6523, %v6529
        %v6531 = vcombine.low %v6029, %v6030
        %v6533 = vunpack.c.l.s4 1983009808
        %v6534 = vunpack.c.0.s8 %v6533
        %v6535 = vlaneseq
        %v6536 = vshrl.u32 %v6535, 7
        %v6537 = vsub.s32 %v6534, %v6536
        %v6538 = vrot.slane %v6531, %v6537
        %v6539 = vcombine.low %v6514, %v6522
        %v6540 = vcombine.high %v6514, %v6522
        %v6542 = vunpack.c.l.s4 1934713408
        %v6543 = vunpack.c.0.s8 %v6542
        %v6544 = vlaneseq
        %v6545 = vshrl.u32 %v6544, 7
        %v6546 = vsub.s32 %v6543, %v6545
        %v6547 = vrot.slane %v6539, %v6546
        %v6549 = vunpack.c.l.s4 1934713408
        %v6550 = vunpack.c.0.s8 %v6549
        %v6551 = vlaneseq
        %v6552 = vshrl.u32 %v6551, 7
        %v6553 = vsub.s32 %v6550, %v6552
        %v6554 = vrot.slane %v6540, %v6553
        %v6555 = vcombine.low %v6530, %v6538
        %v6556 = vcombine.high %v6530, %v6538
        %v6558 = vunpack.c.l.s4 1934713408
        %v6559 = vunpack.c.0.s8 %v6558
        %v6560 = vlaneseq
        %v6561 = vshrl.u32 %v6560, 7
        %v6562 = vsub.s32 %v6559, %v6561
        %v6563 = vrot.slane %v6555, %v6562
        %v6565 = vunpack.c.l.s4 1934713408
        %v6566 = vunpack.c.0.s8 %v6565
        %v6567 = vlaneseq
        %v6568 = vshrl.u32 %v6567, 7
        %v6569 = vsub.s32 %v6566, %v6568
        %v6570 = vrot.slane %v6556, %v6569
        %v6571 = vcombine.low %v6547, %v6563
        %v6572 = vcombine.high %v6547, %v6563
        %v6573 = vcombine.low %v6554, %v6570
        %v6574 = vcombine.high %v6554, %v6570
        %v6575 = vcombine.low %v6071, %v6078
        %v6577 = vunpack.c.l.s4 1983009808
        %v6578 = vunpack.c.0.s8 %v6577
        %v6579 = vlaneseq
        %v6580 = vshrl.u32 %v6579, 7
        %v6581 = vsub.s32 %v6578, %v6580
        %v6582 = vrot.slane %v6575, %v6581
        %v6583 = vcombine.low %v6095, %v6096
        %v6585 = vunpack.c.l.s4 1983009808
        %v6586 = vunpack.c.0.s8 %v6585
        %v6587 = vlaneseq
        %v6588 = vshrl.u32 %v6587, 7
        %v6589 = vsub.s32 %v6586, %v6588
        %v6590 = vrot.slane %v6583, %v6589
        %v6591 = vcombine.low %v6087, %v6094
        %v6593 = vunpack.c.l.s4 1983009808
        %v6594 = vunpack.c.0.s8 %v6593
        %v6595 = vlaneseq
        %v6596 = vshrl.u32 %v6595, 7
        %v6597 = vsub.s32 %v6594, %v6596
        %v6598 = vrot.slane %v6591, %v6597
        %v6599 = vcombine.low %v6097, %v6098
        %v6601 = vunpack.c.l.s4 1983009808
        %v6602 = vunpack.c.0.s8 %v6601
        %v6603 = vlaneseq
        %v6604 = vshrl.u32 %v6603, 7
        %v6605 = vsub.s32 %v6602, %v6604
        %v6606 = vrot.slane %v6599, %v6605
        %v6607 = vcombine.low %v6582, %v6590
        %v6608 = vcombine.high %v6582, %v6590
        %v6610 = vunpack.c.l.s4 1934713408
        %v6611 = vunpack.c.0.s8 %v6610
        %v6612 = vlaneseq
        %v6613 = vshrl.u32 %v6612, 7
        %v6614 = vsub.s32 %v6611, %v6613
        %v6615 = vrot.slane %v6607, %v6614
        %v6617 = vunpack.c.l.s4 1934713408
        %v6618 = vunpack.c.0.s8 %v6617
        %v6619 = vlaneseq
        %v6620 = vshrl.u32 %v6619, 7
        %v6621 = vsub.s32 %v6618, %v6620
        %v6622 = vrot.slane %v6608, %v6621
        %v6623 = vcombine.low %v6598, %v6606
        %v6624 = vcombine.high %v6598, %v6606
        %v6626 = vunpack.c.l.s4 1934713408
        %v6627 = vunpack.c.0.s8 %v6626
        %v6628 = vlaneseq
        %v6629 = vshrl.u32 %v6628, 7
        %v6630 = vsub.s32 %v6627, %v6629
        %v6631 = vrot.slane %v6623, %v6630
        %v6633 = vunpack.c.l.s4 1934713408
        %v6634 = vunpack.c.0.s8 %v6633
        %v6635 = vlaneseq
        %v6636 = vshrl.u32 %v6635, 7
        %v6637 = vsub.s32 %v6634, %v6636
        %v6638 = vrot.slane %v6624, %v6637
        %v6639 = vcombine.low %v6615, %v6631
        %v6640 = vcombine.high %v6615, %v6631
        %v6641 = vcombine.low %v6622, %v6638
        %v6642 = vcombine.high %v6622, %v6638
        %v6643 = vcombine.low %v6139, %v6146
        %v6645 = vunpack.c.l.s4 1983009808
        %v6646 = vunpack.c.0.s8 %v6645
        %v6647 = vlaneseq
        %v6648 = vshrl.u32 %v6647, 7
        %v6649 = vsub.s32 %v6646, %v6648
        %v6650 = vrot.slane %v6643, %v6649
        %v6651 = vcombine.low %v6163, %v6164
        %v6653 = vunpack.c.l.s4 1983009808
        %v6654 = vunpack.c.0.s8 %v6653
        %v6655 = vlaneseq
        %v6656 = vshrl.u32 %v6655, 7
        %v6657 = vsub.s32 %v6654, %v6656
        %v6658 = vrot.slane %v6651, %v6657
        %v6659 = vcombine.low %v6155, %v6162
        %v6661 = vunpack.c.l.s4 1983009808
        %v6662 = vunpack.c.0.s8 %v6661
        %v6663 = vlaneseq
        %v6664 = vshrl.u32 %v6663, 7
        %v6665 = vsub.s32 %v6662, %v6664
        %v6666 = vrot.slane %v6659, %v6665
        %v6667 = vcombine.low %v6165, %v6166
        %v6669 = vunpack.c.l.s4 1983009808
        %v6670 = vunpack.c.0.s8 %v6669
        %v6671 = vlaneseq
        %v6672 = vshrl.u32 %v6671, 7
        %v6673 = vsub.s32 %v6670, %v6672
        %v6674 = vrot.slane %v6667, %v6673
        %v6675 = vcombine.low %v6650, %v6658
        %v6676 = vcombine.high %v6650, %v6658
        %v6678 = vunpack.c.l.s4 1934713408
        %v6679 = vunpack.c.0.s8 %v6678
        %v6680 = vlaneseq
        %v6681 = vshrl.u32 %v6680, 7
        %v6682 = vsub.s32 %v6679, %v6681
        %v6683 = vrot.slane %v6675, %v6682
        %v6685 = vunpack.c.l.s4 1934713408
        %v6686 = vunpack.c.0.s8 %v6685
        %v6687 = vlaneseq
        %v6688 = vshrl.u32 %v6687, 7
        %v6689 = vsub.s32 %v6686, %v6688
        %v6690 = vrot.slane %v6676, %v6689
        %v6691 = vcombine.low %v6666, %v6674
        %v6692 = vcombine.high %v6666, %v6674
        %v6694 = vunpack.c.l.s4 1934713408
        %v6695 = vunpack.c.0.s8 %v6694
        %v6696 = vlaneseq
        %v6697 = vshrl.u32 %v6696, 7
        %v6698 = vsub.s32 %v6695, %v6697
        %v6699 = vrot.slane %v6691, %v6698
        %v6701 = vunpack.c.l.s4 1934713408
        %v6702 = vunpack.c.0.s8 %v6701
        %v6703 = vlaneseq
        %v6704 = vshrl.u32 %v6703, 7
        %v6705 = vsub.s32 %v6702, %v6704
        %v6706 = vrot.slane %v6692, %v6705
        %v6707 = vcombine.low %v6683, %v6699
        %v6708 = vcombine.high %v6683, %v6699
        %v6709 = vcombine.low %v6690, %v6706
        %v6710 = vcombine.high %v6690, %v6706
        %v6711 = vcombine.low %v6207, %v6214
        %v6713 = vunpack.c.l.s4 1983009808
        %v6714 = vunpack.c.0.s8 %v6713
        %v6715 = vlaneseq
        %v6716 = vshrl.u32 %v6715, 7
        %v6717 = vsub.s32 %v6714, %v6716
        %v6718 = vrot.slane %v6711, %v6717
        %v6719 = vcombine.low %v6231, %v6232
        %v6721 = vunpack.c.l.s4 1983009808
        %v6722 = vunpack.c.0.s8 %v6721
        %v6723 = vlaneseq
        %v6724 = vshrl.u32 %v6723, 7
        %v6725 = vsub.s32 %v6722, %v6724
        %v6726 = vrot.slane %v6719, %v6725
        %v6727 = vcombine.low %v6223, %v6230
        %v6729 = vunpack.c.l.s4 1983009808
        %v6730 = vunpack.c.0.s8 %v6729
        %v6731 = vlaneseq
        %v6732 = vshrl.u32 %v6731, 7
        %v6733 = vsub.s32 %v6730, %v6732
        %v6734 = vrot.slane %v6727, %v6733
        %v6735 = vcombine.low %v6233, %v6234
        %v6737 = vunpack.c.l.s4 1983009808
        %v6738 = vunpack.c.0.s8 %v6737
        %v6739 = vlaneseq
        %v6740 = vshrl.u32 %v6739, 7
        %v6741 = vsub.s32 %v6738, %v6740
        %v6742 = vrot.slane %v6735, %v6741
        %v6743 = vcombine.low %v6718, %v6726
        %v6744 = vcombine.high %v6718, %v6726
        %v6746 = vunpack.c.l.s4 1934713408
        %v6747 = vunpack.c.0.s8 %v6746
        %v6748 = vlaneseq
        %v6749 = vshrl.u32 %v6748, 7
        %v6750 = vsub.s32 %v6747, %v6749
        %v6751 = vrot.slane %v6743, %v6750
        %v6753 = vunpack.c.l.s4 1934713408
        %v6754 = vunpack.c.0.s8 %v6753
        %v6755 = vlaneseq
        %v6756 = vshrl.u32 %v6755, 7
        %v6757 = vsub.s32 %v6754, %v6756
        %v6758 = vrot.slane %v6744, %v6757
        %v6759 = vcombine.low %v6734, %v6742
        %v6760 = vcombine.high %v6734, %v6742
        %v6762 = vunpack.c.l.s4 1934713408
        %v6763 = vunpack.c.0.s8 %v6762
        %v6764 = vlaneseq
        %v6765 = vshrl.u32 %v6764, 7
        %v6766 = vsub.s32 %v6763, %v6765
        %v6767 = vrot.slane %v6759, %v6766
        %v6769 = vunpack.c.l.s4 1934713408
        %v6770 = vunpack.c.0.s8 %v6769
        %v6771 = vlaneseq
        %v6772 = vshrl.u32 %v6771, 7
        %v6773 = vsub.s32 %v6770, %v6772
        %v6774 = vrot.slane %v6760, %v6773
        %v6775 = vcombine.low %v6751, %v6767
        %v6776 = vcombine.high %v6751, %v6767
        %v6777 = vcombine.low %v6758, %v6774
        %v6778 = vcombine.high %v6758, %v6774
        %v6779 = vcombine.low %v6275, %v6282
        %v6781 = vunpack.c.l.s4 1983009808
        %v6782 = vunpack.c.0.s8 %v6781
        %v6783 = vlaneseq
        %v6784 = vshrl.u32 %v6783, 7
        %v6785 = vsub.s32 %v6782, %v6784
        %v6786 = vrot.slane %v6779, %v6785
        %v6787 = vcombine.low %v6299, %v6300
        %v6789 = vunpack.c.l.s4 1983009808
        %v6790 = vunpack.c.0.s8 %v6789
        %v6791 = vlaneseq
        %v6792 = vshrl.u32 %v6791, 7
        %v6793 = vsub.s32 %v6790, %v6792
        %v6794 = vrot.slane %v6787, %v6793
        %v6795 = vcombine.low %v6291, %v6298
        %v6797 = vunpack.c.l.s4 1983009808
        %v6798 = vunpack.c.0.s8 %v6797
        %v6799 = vlaneseq
        %v6800 = vshrl.u32 %v6799, 7
        %v6801 = vsub.s32 %v6798, %v6800
        %v6802 = vrot.slane %v6795, %v6801
        %v6803 = vcombine.low %v6301, %v6302
        %v6805 = vunpack.c.l.s4 1983009808
        %v6806 = vunpack.c.0.s8 %v6805
        %v6807 = vlaneseq
        %v6808 = vshrl.u32 %v6807, 7
        %v6809 = vsub.s32 %v6806, %v6808
        %v6810 = vrot.slane %v6803, %v6809
        %v6811 = vcombine.low %v6786, %v6794
        %v6812 = vcombine.high %v6786, %v6794
        %v6814 = vunpack.c.l.s4 1934713408
        %v6815 = vunpack.c.0.s8 %v6814
        %v6816 = vlaneseq
        %v6817 = vshrl.u32 %v6816, 7
        %v6818 = vsub.s32 %v6815, %v6817
        %v6819 = vrot.slane %v6811, %v6818
        %v6821 = vunpack.c.l.s4 1934713408
        %v6822 = vunpack.c.0.s8 %v6821
        %v6823 = vlaneseq
        %v6824 = vshrl.u32 %v6823, 7
        %v6825 = vsub.s32 %v6822, %v6824
        %v6826 = vrot.slane %v6812, %v6825
        %v6827 = vcombine.low %v6802, %v6810
        %v6828 = vcombine.high %v6802, %v6810
        %v6830 = vunpack.c.l.s4 1934713408
        %v6831 = vunpack.c.0.s8 %v6830
        %v6832 = vlaneseq
        %v6833 = vshrl.u32 %v6832, 7
        %v6834 = vsub.s32 %v6831, %v6833
        %v6835 = vrot.slane %v6827, %v6834
        %v6837 = vunpack.c.l.s4 1934713408
        %v6838 = vunpack.c.0.s8 %v6837
        %v6839 = vlaneseq
        %v6840 = vshrl.u32 %v6839, 7
        %v6841 = vsub.s32 %v6838, %v6840
        %v6842 = vrot.slane %v6828, %v6841
        %v6843 = vcombine.low %v6819, %v6835
        %v6844 = vcombine.high %v6819, %v6835
        %v6845 = vcombine.low %v6826, %v6842
        %v6846 = vcombine.high %v6826, %v6842
        %6855 = vrot.lane.b32.xlu0 %v6368, 8
        %v6856 = vpop.permute.xlu0 %6855
        %6857 = vrot.lane.b32.xlu0 %v6436, 8
        %v6858 = vpop.permute.xlu0 %6857
        %6859 = vrot.lane.b32.xlu0 %v6504, 8
        %v6860 = vpop.permute.xlu0 %6859
        %6861 = vrot.lane.b32.xlu0 %v6572, 8
        %v6862 = vpop.permute.xlu0 %6861
        %6863 = vrot.lane.b32.xlu0 %v6640, 8
        %v6864 = vpop.permute.xlu0 %6863
        %6865 = vrot.lane.b32.xlu0 %v6708, 8
        %v6866 = vpop.permute.xlu0 %6865
        %6867 = vrot.lane.b32.xlu0 %v6776, 8
        %v6868 = vpop.permute.xlu0 %6867
        %6869 = vrot.lane.b32.xlu0 %v6844, 8
        %v6870 = vpop.permute.xlu0 %6869
        %6887 = vrot.lane.b32.xlu0 %v6369, 16
        %v6888 = vpop.permute.xlu0 %6887
        %6889 = vrot.lane.b32.xlu0 %v6437, 16
        %v6890 = vpop.permute.xlu0 %6889
        %6891 = vrot.lane.b32.xlu0 %v6505, 16
        %v6892 = vpop.permute.xlu0 %6891
        %6893 = vrot.lane.b32.xlu0 %v6573, 16
        %v6894 = vpop.permute.xlu0 %6893
        %6895 = vrot.lane.b32.xlu0 %v6641, 16
        %v6896 = vpop.permute.xlu0 %6895
        %6897 = vrot.lane.b32.xlu0 %v6709, 16
        %v6898 = vpop.permute.xlu0 %6897
        %6899 = vrot.lane.b32.xlu0 %v6777, 16
        %v6900 = vpop.permute.xlu0 %6899
        %6901 = vrot.lane.b32.xlu0 %v6845, 16
        %v6902 = vpop.permute.xlu0 %6901
        %6919 = vrot.lane.b32.xlu0 %v6370, 24
        %v6920 = vpop.permute.xlu0 %6919
        %6921 = vrot.lane.b32.xlu0 %v6438, 24
        %v6922 = vpop.permute.xlu0 %6921
        %6923 = vrot.lane.b32.xlu0 %v6506, 24
        %v6924 = vpop.permute.xlu0 %6923
        %6925 = vrot.lane.b32.xlu0 %v6574, 24
        %v6926 = vpop.permute.xlu0 %6925
        %6927 = vrot.lane.b32.xlu0 %v6642, 24
        %v6928 = vpop.permute.xlu0 %6927
        %6929 = vrot.lane.b32.xlu0 %v6710, 24
        %v6930 = vpop.permute.xlu0 %6929
        %6931 = vrot.lane.b32.xlu0 %v6778, 24
        %v6932 = vpop.permute.xlu0 %6931
        %6933 = vrot.lane.b32.xlu0 %v6846, 24
        %v6934 = vpop.permute.xlu0 %6933
        %v6943 = vsel %vm4377, %v6367, %v6856
        %v6944 = vsel %vm4377, %v6435, %v6858
        %v6945 = vsel %vm4377, %v6503, %v6860
        %v6946 = vsel %vm4377, %v6571, %v6862
        %v6947 = vsel %vm4377, %v6639, %v6864
        %v6948 = vsel %vm4377, %v6707, %v6866
        %v6949 = vsel %vm4377, %v6775, %v6868
        %v6950 = vsel %vm4377, %v6843, %v6870
        %vm6951 = vcmask 130048
        %v6952 = vsel %vm6951, %v6943, %v6888
        %v6953 = vsel %vm6951, %v6944, %v6890
        %v6954 = vsel %vm6951, %v6945, %v6892
        %v6955 = vsel %vm6951, %v6946, %v6894
        %v6956 = vsel %vm6951, %v6947, %v6896
        %v6957 = vsel %vm6951, %v6948, %v6898
        %v6958 = vsel %vm6951, %v6949, %v6900
        %v6959 = vsel %vm6951, %v6950, %v6902
        %vm6960 = vcmask 195584
        %v6961 = vsel %vm6960, %v6952, %v6920
        %v6962 = vsel %vm6960, %v6953, %v6922
        %v6963 = vsel %vm6960, %v6954, %v6924
        %v6964 = vsel %vm6960, %v6955, %v6926
        %v6965 = vsel %vm6960, %v6956, %v6928
        %v6966 = vsel %vm6960, %v6957, %v6930
        %v6967 = vsel %vm6960, %v6958, %v6932
        %v6968 = vsel %vm6960, %v6959, %v6934
        %v6969 = vpack.c.bf16 %v6962, %v6961
        %v6970 = vpack.c.bf16 %v6964, %v6963
        %v6971 = vpack.c.bf16 %v6966, %v6965
        %v6972 = vpack.c.bf16 %v6968, %v6967
        %v6973 = vlaneseq
        %v6974 = vshrl.u32 %v6973, 7
        %v6975 = vsub.s32 3, %v6974
        %v6976 = vrot.slane %v573, %v6975
        %6977 = vrot.lane.b32.xlu0 %v728, 32
        %v6978 = vpop.permute.xlu0 %6977
        %6979 = vrot.lane.b32.xlu0 %v729, 32
        %v6980 = vpop.permute.xlu0 %6979
        %v6984 = vsel %vm582, %v6969, 0
        %v6987 = vsel %vm582, %v6970, 0
        %v6990 = vsel %vm582, %v6971, 0
        %v6993 = vsel %vm582, %v6972, 0
        %6995 = vmatprep.subr.bf16.mxu0 0
        %6996 = vmatpush1.bf16.msra.mxu0 0
        %6997 = vmatprep.subr.bf16.mxu0 0
        %6998 = vmatpush1.bf16.msra.mxu0 0
        %6999 = vmatprep.subr.bf16.mxu0 0
        %7000 = vmatpush1.bf16.msra.mxu0 0
        %7001 = vmatprep.subr.bf16.mxu0 0
        %7002 = vmatpush1.bf16.msra.mxu0 0
        %7003 = vmatprep.subr.bf16.mxu0 0
        %7004 = vmatpush1.bf16.msra.mxu0 0
        %7005 = vmatprep.subr.bf16.mxu0 0
        %7006 = vmatpush1.bf16.msra.mxu0 0
        %7007 = vmatprep.subr.bf16.mxu0 0
        %7008 = vmatpush1.bf16.msra.mxu0 %v6980
        %7009 = vmatprep.subr.bf16.mxu0 0
        %7010 = vmatpush1.bf16.msra.mxu0 %v6978
        %7011 = vmatprep.subr.bf16.mxu0 0
        %7012 = vmatpush2.bf16.msra.mxu0 0
        %7013 = vmatprep.subr.bf16.mxu0 0
        %7014 = vmatpush2.bf16.msra.mxu0 0
        %7015 = vmatprep.subr.bf16.mxu0 0
        %7016 = vmatpush2.bf16.msra.mxu0 0
        %7017 = vmatprep.subr.bf16.mxu0 0
        %7018 = vmatpush2.bf16.msra.mxu0 0
        %7019 = vmatprep.subr.bf16.mxu0 0
        %7020 = vmatpush2.bf16.msra.mxu0 0
        %7021 = vmatprep.subr.bf16.mxu0 0
        %7022 = vmatpush2.bf16.msra.mxu0 0
        %7023 = vmatprep.subr.bf16.mxu0 0
        %7024 = vmatpush2.bf16.msra.mxu0 0
        %7025 = vmatprep.subr.bf16.mxu0 0
        %7026 = vmatpush2.bf16.msra.mxu0 0
        %7027 = vmatprep.mubr.bf16.mxu0 0
        %7028 = vmatmul.mubr.bf16.gmra.mxu0 %v6984
        %v7029 = vpop.f32.mrf.mxu0
        %v7030 = vadd.f32 %v6976, %v7029
        %v7031 = vpop.f32.mrf.mxu0
        %v7032 = vpop.f32.mrf.mxu0
        %v7033 = vadd.f32 %v6976, %v7032
        %v7034 = vpop.f32.mrf.mxu0
        %7035 = vmatprep.mubr.bf16.mxu0 0
        %7036 = vmatmul.mubr.bf16.gmra.mxu0 %v6987
        %v7037 = vpop.f32.mrf.mxu0
        %v7038 = vadd.f32 %v6976, %v7037
        %v7039 = vpop.f32.mrf.mxu0
        %v7040 = vpop.f32.mrf.mxu0
        %v7041 = vadd.f32 %v6976, %v7040
        %v7042 = vpop.f32.mrf.mxu0
        %7043 = vmatprep.mubr.bf16.mxu0 0
        %7044 = vmatmul.mubr.bf16.gmra.mxu0 %v6990
        %v7045 = vpop.f32.mrf.mxu0
        %v7046 = vadd.f32 %v6976, %v7045
        %v7047 = vpop.f32.mrf.mxu0
        %v7048 = vpop.f32.mrf.mxu0
        %v7049 = vadd.f32 %v6976, %v7048
        %v7050 = vpop.f32.mrf.mxu0
        %7051 = vmatprep.mubr.bf16.mxu0 0
        %7052 = vmatmul.mubr.bf16.gmra.mxu0 %v6993
        %v7053 = vpop.f32.mrf.mxu0
        %v7054 = vadd.f32 %v6976, %v7053
        %v7055 = vpop.f32.mrf.mxu0
        %v7056 = vpop.f32.mrf.mxu0
        %v7057 = vadd.f32 %v6976, %v7056
        %v7058 = vpop.f32.mrf.mxu0
        %7059 = vdwg.mxu0
        %v7060 = vadd.f32 %v574, %v7030
        %v7061 = vadd.f32 %v575, %v7033
        %v7062 = vadd.f32 %v576, %v7038
        %v7063 = vadd.f32 %v577, %v7041
        %v7064 = vadd.f32 %v578, %v7046
        %v7065 = vadd.f32 %v579, %v7049
        %v7066 = vadd.f32 %v580, %v7054
        %v7067 = vadd.f32 %v581, %v7057
        %v7068 = vsel %vm582, %v7060, 0.0
        %7069 = vadd.xlane.f32.xlu0 %v7068
        %v7070 = vpop.xlane.xlu0 %7069
        %v7071 = vsel %vm582, %v7061, 0.0
        %7072 = vadd.xlane.f32.xlu0 %v7071
        %v7073 = vpop.xlane.xlu0 %7072
        %v7074 = vsel %vm582, %v7062, 0.0
        %7075 = vadd.xlane.f32.xlu0 %v7074
        %v7076 = vpop.xlane.xlu0 %7075
        %v7077 = vsel %vm582, %v7063, 0.0
        %7078 = vadd.xlane.f32.xlu0 %v7077
        %v7079 = vpop.xlane.xlu0 %7078
        %v7080 = vsel %vm582, %v7064, 0.0
        %7081 = vadd.xlane.f32.xlu0 %v7080
        %v7082 = vpop.xlane.xlu0 %7081
        %v7083 = vsel %vm582, %v7065, 0.0
        %7084 = vadd.xlane.f32.xlu0 %v7083
        %v7085 = vpop.xlane.xlu0 %7084
        %v7086 = vsel %vm582, %v7066, 0.0
        %7087 = vadd.xlane.f32.xlu0 %v7086
        %v7088 = vpop.xlane.xlu0 %7087
        %v7089 = vsel %vm582, %v7067, 0.0
        %7090 = vadd.xlane.f32.xlu0 %v7089
        %v7091 = vpop.xlane.xlu0 %7090
        %v7092 = vmul.f32 %v7070, %v607
        %v7093 = vmul.f32 %v7073, %v607
        %v7094 = vmul.f32 %v7076, %v607
        %v7095 = vmul.f32 %v7079, %v607
        %v7096 = vmul.f32 %v7082, %v607
        %v7097 = vmul.f32 %v7085, %v607
        %v7098 = vmul.f32 %v7088, %v607
        %v7099 = vmul.f32 %v7091, %v607
        %v7100 = vsub.f32 %v7060, %v7092
        %v7101 = vsub.f32 %v7061, %v7093
        %v7102 = vsub.f32 %v7062, %v7094
        %v7103 = vsub.f32 %v7063, %v7095
        %v7104 = vsub.f32 %v7064, %v7096
        %v7105 = vsub.f32 %v7065, %v7097
        %v7106 = vsub.f32 %v7066, %v7098
        %v7107 = vsub.f32 %v7067, %v7099
        %v7108 = vmul.f32 %v7100, %v7100
        %v7109 = vmul.f32 %v7101, %v7101
        %v7110 = vmul.f32 %v7102, %v7102
        %v7111 = vmul.f32 %v7103, %v7103
        %v7112 = vmul.f32 %v7104, %v7104
        %v7113 = vmul.f32 %v7105, %v7105
        %v7114 = vmul.f32 %v7106, %v7106
        %v7115 = vmul.f32 %v7107, %v7107
        %v7116 = vsel %vm582, %v7108, 0.0
        %7117 = vadd.xlane.f32.xlu0 %v7116
        %v7118 = vpop.xlane.xlu0 %7117
        %v7119 = vsel %vm582, %v7109, 0.0
        %7120 = vadd.xlane.f32.xlu0 %v7119
        %v7121 = vpop.xlane.xlu0 %7120
        %v7122 = vsel %vm582, %v7110, 0.0
        %7123 = vadd.xlane.f32.xlu0 %v7122
        %v7124 = vpop.xlane.xlu0 %7123
        %v7125 = vsel %vm582, %v7111, 0.0
        %7126 = vadd.xlane.f32.xlu0 %v7125
        %v7127 = vpop.xlane.xlu0 %7126
        %v7128 = vsel %vm582, %v7112, 0.0
        %7129 = vadd.xlane.f32.xlu0 %v7128
        %v7130 = vpop.xlane.xlu0 %7129
        %v7131 = vsel %vm582, %v7113, 0.0
        %7132 = vadd.xlane.f32.xlu0 %v7131
        %v7133 = vpop.xlane.xlu0 %7132
        %v7134 = vsel %vm582, %v7114, 0.0
        %7135 = vadd.xlane.f32.xlu0 %v7134
        %v7136 = vpop.xlane.xlu0 %7135
        %v7137 = vsel %vm582, %v7115, 0.0
        %7138 = vadd.xlane.f32.xlu0 %v7137
        %v7139 = vpop.xlane.xlu0 %7138
        %v7140 = vmul.f32 %v7118, %v607
        %v7141 = vmul.f32 %v7121, %v607
        %v7142 = vmul.f32 %v7124, %v607
        %v7143 = vmul.f32 %v7127, %v607
        %v7144 = vmul.f32 %v7130, %v607
        %v7145 = vmul.f32 %v7133, %v607
        %v7146 = vmul.f32 %v7136, %v607
        %v7147 = vmul.f32 %v7139, %v607
        %v7148 = vadd.f32 %v7140, 1e-05
        %v7149 = vadd.f32 %v7141, 1e-05
        %v7150 = vadd.f32 %v7142, 1e-05
        %v7151 = vadd.f32 %v7143, 1e-05
        %v7152 = vadd.f32 %v7144, 1e-05
        %v7153 = vadd.f32 %v7145, 1e-05
        %v7154 = vadd.f32 %v7146, 1e-05
        %v7155 = vadd.f32 %v7147, 1e-05
        %v7156 = vrsqrt.pop %v7148
        %v7157 = vrsqrt.pop %v7149
        %v7158 = vrsqrt.pop %v7150
        %v7159 = vrsqrt.pop %v7151
        %v7160 = vrsqrt.pop %v7152
        %v7161 = vrsqrt.pop %v7153
        %v7162 = vrsqrt.pop %v7154
        %v7163 = vrsqrt.pop %v7155
        %v7164 = vmul.f32 %v7100, %v7156
        %v7165 = vmul.f32 %v7101, %v7157
        %v7166 = vmul.f32 %v7102, %v7158
        %v7167 = vmul.f32 %v7103, %v7159
        %v7168 = vmul.f32 %v7104, %v7160
        %v7169 = vmul.f32 %v7105, %v7161
        %v7170 = vmul.f32 %v7106, %v7162
        %v7171 = vmul.f32 %v7107, %v7163
        %v7172 = vlaneseq
        %v7173 = vshrl.u32 %v7172, 7
        %v7174 = vsub.s32 4, %v7173
        %v7175 = vrot.slane %v573, %v7174
        %v7176 = vmul.f32 %v7164, %v7175
        %v7177 = vmul.f32 %v7165, %v7175
        %v7178 = vmul.f32 %v7166, %v7175
        %v7179 = vmul.f32 %v7167, %v7175
        %v7180 = vmul.f32 %v7168, %v7175
        %v7181 = vmul.f32 %v7169, %v7175
        %v7182 = vmul.f32 %v7170, %v7175
        %v7183 = vmul.f32 %v7171, %v7175
        %v7184 = vlaneseq
        %v7185 = vshrl.u32 %v7184, 7
        %v7186 = vsub.s32 5, %v7185
        %v7187 = vrot.slane %v573, %v7186
        %v7188 = vadd.f32 %v7176, %v7187
        %v7189 = vadd.f32 %v7177, %v7187
        %v7190 = vadd.f32 %v7178, %v7187
        %v7191 = vadd.f32 %v7179, %v7187
        %v7192 = vadd.f32 %v7180, %v7187
        %v7193 = vadd.f32 %v7181, %v7187
        %v7194 = vadd.f32 %v7182, %v7187
        %v7195 = vadd.f32 %v7183, %v7187
        %v7196 = vpack.c.bf16 %v7189, %v7188
        %v7197 = vpack.c.bf16 %v7191, %v7190
        %v7198 = vpack.c.bf16 %v7193, %v7192
        %v7199 = vpack.c.bf16 %v7195, %v7194
        %v7200 = vlaneseq
        %v7201 = vshrl.u32 %v7200, 7
        %v7202 = vsub.s32 6, %v7201
        %v7203 = vrot.slane %v573, %v7202
        %v7204 = vunpack.c.h.b16 %v553
        %v7205 = vunpack.c.h.b16 %v554
        %v7206 = vunpack.c.h.b16 %v555
        %v7207 = vunpack.c.h.b16 %v556
        %v7208 = vpack.c.b16 %v7205, %v7204
        %v7209 = vpack.c.b16 %v7207, %v7206
        %v7213 = vsel %vm582, %v7196, 0
        %v7216 = vsel %vm582, %v7197, 0
        %v7219 = vsel %vm582, %v7198, 0
        %v7222 = vsel %vm582, %v7199, 0
        %7224 = vmatprep.subr.bf16.mxu0 0
        %7225 = vmatpush1.bf16.msra.mxu0 0
        %7226 = vmatprep.subr.bf16.mxu0 0
        %7227 = vmatpush1.bf16.msra.mxu0 0
        %7228 = vmatprep.subr.bf16.mxu0 0
        %7229 = vmatpush1.bf16.msra.mxu0 0
        %7230 = vmatprep.subr.bf16.mxu0 0
        %7231 = vmatpush1.bf16.msra.mxu0 0
        %7232 = vmatprep.subr.bf16.mxu0 0
        %7233 = vmatpush1.bf16.msra.mxu0 0
        %7234 = vmatprep.subr.bf16.mxu0 0
        %7235 = vmatpush1.bf16.msra.mxu0 0
        %7236 = vmatprep.subr.bf16.mxu0 0
        %7237 = vmatpush1.bf16.msra.mxu0 %v7209
        %7238 = vmatprep.subr.bf16.mxu0 0
        %7239 = vmatpush1.bf16.msra.mxu0 %v7208
        %7240 = vmatprep.subr.bf16.mxu0 0
        %7241 = vmatpush2.bf16.msra.mxu0 0
        %7242 = vmatprep.subr.bf16.mxu0 0
        %7243 = vmatpush2.bf16.msra.mxu0 0
        %7244 = vmatprep.subr.bf16.mxu0 0
        %7245 = vmatpush2.bf16.msra.mxu0 0
        %7246 = vmatprep.subr.bf16.mxu0 0
        %7247 = vmatpush2.bf16.msra.mxu0 0
        %7248 = vmatprep.subr.bf16.mxu0 0
        %7249 = vmatpush2.bf16.msra.mxu0 0
        %7250 = vmatprep.subr.bf16.mxu0 0
        %7251 = vmatpush2.bf16.msra.mxu0 0
        %7252 = vmatprep.subr.bf16.mxu0 0
        %7253 = vmatpush2.bf16.msra.mxu0 0
        %7254 = vmatprep.subr.bf16.mxu0 0
        %7255 = vmatpush2.bf16.msra.mxu0 0
        %7256 = vmatprep.mubr.bf16.mxu0 0
        %7257 = vmatmul.mubr.bf16.gmra.mxu0 %v7213
        %v7258 = vpop.f32.mrf.mxu0
        %v7259 = vadd.f32 %v7203, %v7258
        %v7260 = vpop.f32.mrf.mxu0
        %v7261 = vpop.f32.mrf.mxu0
        %v7262 = vadd.f32 %v7203, %v7261
        %v7263 = vpop.f32.mrf.mxu0
        %7264 = vmatprep.mubr.bf16.mxu0 0
        %7265 = vmatmul.mubr.bf16.gmra.mxu0 %v7216
        %v7266 = vpop.f32.mrf.mxu0
        %v7267 = vadd.f32 %v7203, %v7266
        %v7268 = vpop.f32.mrf.mxu0
        %v7269 = vpop.f32.mrf.mxu0
        %v7270 = vadd.f32 %v7203, %v7269
        %v7271 = vpop.f32.mrf.mxu0
        %7272 = vmatprep.mubr.bf16.mxu0 0
        %7273 = vmatmul.mubr.bf16.gmra.mxu0 %v7219
        %v7274 = vpop.f32.mrf.mxu0
        %v7275 = vadd.f32 %v7203, %v7274
        %v7276 = vpop.f32.mrf.mxu0
        %v7277 = vpop.f32.mrf.mxu0
        %v7278 = vadd.f32 %v7203, %v7277
        %v7279 = vpop.f32.mrf.mxu0
        %7280 = vmatprep.mubr.bf16.mxu0 0
        %7281 = vmatmul.mubr.bf16.gmra.mxu0 %v7222
        %v7282 = vpop.f32.mrf.mxu0
        %v7283 = vadd.f32 %v7203, %v7282
        %v7284 = vpop.f32.mrf.mxu0
        %v7285 = vpop.f32.mrf.mxu0
        %v7286 = vadd.f32 %v7203, %v7285
        %v7287 = vpop.f32.mrf.mxu0
        %7288 = vdwg.mxu0
        %v7289 = vmul.f32 %v7259, 0.5
        %v7290 = vmul.f32 %v7262, 0.5
        %v7291 = vmul.f32 %v7267, 0.5
        %v7292 = vmul.f32 %v7270, 0.5
        %v7293 = vmul.f32 %v7275, 0.5
        %v7294 = vmul.f32 %v7278, 0.5
        %v7295 = vmul.f32 %v7283, 0.5
        %v7296 = vmul.f32 %v7286, 0.5
        %v7297 = vmul.f32 %v7259, 0.70710677
        %v7298 = vmul.f32 %v7262, 0.70710677
        %v7299 = vmul.f32 %v7267, 0.70710677
        %v7300 = vmul.f32 %v7270, 0.70710677
        %v7301 = vmul.f32 %v7275, 0.70710677
        %v7302 = vmul.f32 %v7278, 0.70710677
        %v7303 = vmul.f32 %v7283, 0.70710677
        %v7304 = vmul.f32 %v7286, 0.70710677
        %v7305 = verf.f32.pop %v7297
        %v7306 = verf.f32.pop %v7298
        %v7307 = verf.f32.pop %v7299
        %v7308 = verf.f32.pop %v7300
        %v7309 = verf.f32.pop %v7301
        %v7310 = verf.f32.pop %v7302
        %v7311 = verf.f32.pop %v7303
        %v7312 = verf.f32.pop %v7304
        %v7313 = vadd.f32 %v7305, 1.0
        %v7314 = vadd.f32 %v7306, 1.0
        %v7315 = vadd.f32 %v7307, 1.0
        %v7316 = vadd.f32 %v7308, 1.0
        %v7317 = vadd.f32 %v7309, 1.0
        %v7318 = vadd.f32 %v7310, 1.0
        %v7319 = vadd.f32 %v7311, 1.0
        %v7320 = vadd.f32 %v7312, 1.0
        %v7321 = vmul.f32 %v7289, %v7313
        %v7322 = vmul.f32 %v7290, %v7314
        %v7323 = vmul.f32 %v7291, %v7315
        %v7324 = vmul.f32 %v7292, %v7316
        %v7325 = vmul.f32 %v7293, %v7317
        %v7326 = vmul.f32 %v7294, %v7318
        %v7327 = vmul.f32 %v7295, %v7319
        %v7328 = vmul.f32 %v7296, %v7320
        %v7329 = vpack.c.bf16 %v7322, %v7321
        %v7330 = vpack.c.bf16 %v7324, %v7323
        %v7331 = vpack.c.bf16 %v7326, %v7325
        %v7332 = vpack.c.bf16 %v7328, %v7327
        %v7333 = vlaneseq
        %v7334 = vshrl.u32 %v7333, 7
        %v7335 = vsub.s32 7, %v7334
        %v7336 = vrot.slane %v573, %v7335
        %v7353 = vunpack.c.l.b16 %v557
        %v7354 = vunpack.c.l.b16 %v558
        %v7355 = vunpack.c.l.b16 %v559
        %v7356 = vunpack.c.l.b16 %v560
        %v7357 = vunpack.c.l.b16 %v561
        %v7358 = vunpack.c.l.b16 %v562
        %v7359 = vunpack.c.l.b16 %v563
        %v7360 = vunpack.c.l.b16 %v564
        %v7361 = vunpack.c.l.b16 %v565
        %v7362 = vunpack.c.l.b16 %v566
        %v7363 = vunpack.c.l.b16 %v567
        %v7364 = vunpack.c.l.b16 %v568
        %v7365 = vunpack.c.l.b16 %v569
        %v7366 = vunpack.c.l.b16 %v570
        %v7367 = vunpack.c.l.b16 %v571
        %v7368 = vunpack.c.l.b16 %v572
        %v7369 = vpack.c.b16 %v7354, %v7353
        %v7370 = vpack.c.b16 %v7356, %v7355
        %v7371 = vpack.c.b16 %v7358, %v7357
        %v7372 = vpack.c.b16 %v7360, %v7359
        %v7373 = vpack.c.b16 %v7362, %v7361
        %v7374 = vpack.c.b16 %v7364, %v7363
        %v7375 = vpack.c.b16 %v7366, %v7365
        %v7376 = vpack.c.b16 %v7368, %v7367
        %7385 = vmatprep.subr.bf16.mxu0 0
        %7386 = vmatpush1.bf16.msra.mxu0 %v7376
        %7387 = vmatprep.subr.bf16.mxu0 0
        %7388 = vmatpush1.bf16.msra.mxu0 %v7375
        %7389 = vmatprep.subr.bf16.mxu0 0
        %7390 = vmatpush1.bf16.msra.mxu0 %v7374
        %7391 = vmatprep.subr.bf16.mxu0 0
        %7392 = vmatpush1.bf16.msra.mxu0 %v7373
        %7393 = vmatprep.subr.bf16.mxu0 0
        %7394 = vmatpush1.bf16.msra.mxu0 %v7372
        %7395 = vmatprep.subr.bf16.mxu0 0
        %7396 = vmatpush1.bf16.msra.mxu0 %v7371
        %7397 = vmatprep.subr.bf16.mxu0 0
        %7398 = vmatpush1.bf16.msra.mxu0 %v7370
        %7399 = vmatprep.subr.bf16.mxu0 0
        %7400 = vmatpush1.bf16.msra.mxu0 %v7369
        %7401 = vmatprep.subr.bf16.mxu0 0
        %7402 = vmatpush2.bf16.msra.mxu0 0
        %7403 = vmatprep.subr.bf16.mxu0 0
        %7404 = vmatpush2.bf16.msra.mxu0 0
        %7405 = vmatprep.subr.bf16.mxu0 0
        %7406 = vmatpush2.bf16.msra.mxu0 0
        %7407 = vmatprep.subr.bf16.mxu0 0
        %7408 = vmatpush2.bf16.msra.mxu0 0
        %7409 = vmatprep.subr.bf16.mxu0 0
        %7410 = vmatpush2.bf16.msra.mxu0 0
        %7411 = vmatprep.subr.bf16.mxu0 0
        %7412 = vmatpush2.bf16.msra.mxu0 0
        %7413 = vmatprep.subr.bf16.mxu0 0
        %7414 = vmatpush2.bf16.msra.mxu0 0
        %7415 = vmatprep.subr.bf16.mxu0 0
        %7416 = vmatpush2.bf16.msra.mxu0 0
        %7417 = vmatprep.mubr.bf16.mxu0 0
        %7418 = vmatmul.mubr.bf16.gmra.mxu0 %v7329
        %v7419 = vpop.f32.mrf.mxu0
        %v7420 = vadd.f32 %v7336, %v7419
        %v7421 = vpop.f32.mrf.mxu0
        %v7422 = vpop.f32.mrf.mxu0
        %v7423 = vadd.f32 %v7336, %v7422
        %v7424 = vpop.f32.mrf.mxu0
        %7425 = vmatprep.mubr.bf16.mxu0 0
        %7426 = vmatmul.mubr.bf16.gmra.mxu0 %v7330
        %v7427 = vpop.f32.mrf.mxu0
        %v7428 = vadd.f32 %v7336, %v7427
        %v7429 = vpop.f32.mrf.mxu0
        %v7430 = vpop.f32.mrf.mxu0
        %v7431 = vadd.f32 %v7336, %v7430
        %v7432 = vpop.f32.mrf.mxu0
        %7433 = vmatprep.mubr.bf16.mxu0 0
        %7434 = vmatmul.mubr.bf16.gmra.mxu0 %v7331
        %v7435 = vpop.f32.mrf.mxu0
        %v7436 = vadd.f32 %v7336, %v7435
        %v7437 = vpop.f32.mrf.mxu0
        %v7438 = vpop.f32.mrf.mxu0
        %v7439 = vadd.f32 %v7336, %v7438
        %v7440 = vpop.f32.mrf.mxu0
        %7441 = vmatprep.mubr.bf16.mxu0 0
        %7442 = vmatmul.mubr.bf16.gmra.mxu0 %v7332
        %v7443 = vpop.f32.mrf.mxu0
        %v7444 = vadd.f32 %v7336, %v7443
        %v7445 = vpop.f32.mrf.mxu0
        %v7446 = vpop.f32.mrf.mxu0
        %v7447 = vadd.f32 %v7336, %v7446
        %v7448 = vpop.f32.mrf.mxu0
        %7449 = vdwg.mxu0
        %v7450 = vadd.f32 %v7060, %v7420
        %v7451 = vadd.f32 %v7061, %v7423
        %v7452 = vadd.f32 %v7062, %v7428
        %v7453 = vadd.f32 %v7063, %v7431
        %v7454 = vadd.f32 %v7064, %v7436
        %v7455 = vadd.f32 %v7065, %v7439
        %v7456 = vadd.f32 %v7066, %v7444
        %v7457 = vadd.f32 %v7067, %v7447
        %7458 = vst.msk [vmem:[#allocation2] sm:$0xff] %vm582, %v7450
        %7459 = vst.msk [vmem:[#allocation2 + $0x8] sm:$0xff] %vm582, %v7451
        %7460 = vst.msk [vmem:[#allocation2 + $0x10] sm:$0xff] %vm582, %v7452
        %7461 = vst.msk [vmem:[#allocation2 + $0x18] sm:$0xff] %vm582, %v7453
        %7462 = vst.msk [vmem:[#allocation2 + $0x20] sm:$0xff] %vm582, %v7454
        %7463 = vst.msk [vmem:[#allocation2 + $0x28] sm:$0xff] %vm582, %v7455
        %7464 = vst.msk [vmem:[#allocation2 + $0x30] sm:$0xff] %vm582, %v7456
        %7465 = vst.msk [vmem:[#allocation2 + $0x38] sm:$0xff] %vm582, %v7457
        %p7466 = scmp.eq.s32.totalorder %s27, 1
        // Predicated region
        $region65: #{tpu_custom_call.1} parent=59 // pred_check
          %p7467 = pneg %p7466
        $region66: #{tpu_custom_call.1} parent=59 // pred_check_branch
          %7469 = sbr.rel (%p7467) target = $region68
        $region67: #{tpu_custom_call.1} parent=59 // pred_region
          %v7470 = vld [vmem:[%s6] sm:$0x1]
          %v7471 = vld [vmem:[%s7] sm:$0x1]
          %v7474 = vrot.slane %v7454, 7
          %vm7475 = vcmask 1041409
          %v7476 = vsel %vm7475, %v7474, %v7450
          %vm7478 = vcmask 254976
          %v7479 = vsel %vm7478, %v7476, 0.0
          %7480 = vadd.xlane.f32.xlu0 %v7479
          %v7481 = vpop.xlane.xlu0 %7480
          %v7482 = vmul.f32 %v7481, %v607
          %v7484 = vrot.slane %v7482, 1
          %v7487 = vsub.f32 %v7450, %v7482
          %v7488 = vsub.f32 %v7454, %v7484
          %v7489 = vmul.f32 %v7487, %v7487
          %v7490 = vmul.f32 %v7488, %v7488
          %v7493 = vrot.slane %v7490, 7
          %v7494 = vsel %vm7475, %v7493, %v7489
          %v7496 = vsel %vm7478, %v7494, 0.0
          %7497 = vadd.xlane.f32.xlu0 %v7496
          %v7498 = vpop.xlane.xlu0 %7497
          %v7499 = vmul.f32 %v7498, %v607
          %v7500 = vadd.f32 %v7499, 1e-05
          %v7501 = vrsqrt.pop %v7500
          %v7503 = vrot.slane %v7501, 1
          %v7506 = vmul.f32 %v7487, %v7501
          %v7507 = vmul.f32 %v7488, %v7503
          %v7509 = vlaneseq
          %v7510 = vshrl.u32 %v7509, 7
          %v7511 = vsub.s32 0, %v7510
          %v7512 = vrot.slane %v7470, %v7511
          %v7514 = vmul.f32 %v7506, %v7512
          %v7515 = vmul.f32 %v7507, %v7512
          %v7517 = vlaneseq
          %v7518 = vshrl.u32 %v7517, 7
          %v7519 = vsub.s32 0, %v7518
          %v7520 = vrot.slane %v7471, %v7519
          %v7522 = vadd.f32 %v7514, %v7520
          %v7523 = vadd.f32 %v7515, %v7520
          %v7524 = vld [vmem:[%s8] sm:$0xff]
          %v7525 = vld [vmem:[%s8 + $0x8] sm:$0xff]
          %v7526 = vld [vmem:[%s8 + $0x10] sm:$0xff]
          %v7527 = vld [vmem:[%s8 + $0x18] sm:$0xff]
          %v7528 = vld [vmem:[%s9] sm:$0x1]
          %v7529 = vpack.c.bf16 %v7522, %v7522
          %v7530 = vpack.c.bf16 %v7523, %v7523
          %v7531 = vpack.c.bf16 %v7525, %v7524
          %v7532 = vpack.c.bf16 %v7527, %v7526
          %v7534 = vlaneseq
          %v7535 = vshrl.u32 %v7534, 7
          %v7536 = vsub.s32 0, %v7535
          %v7537 = vrot.slane %v7528, %v7536
          %v7541 = vunpack.c.l.b16 %v7529
          %v7542 = vunpack.c.l.b16 %v7530
          %v7543 = vrot.slane %v7542, 7
          %v7544 = vsel %vm7475, %v7543, %v7541
          %v7545 = vpack.c.b16 %v7544, %v7544
          %v7547 = vsel %vm582, %v7545, 0
          %7549 = vmatprep.subr.bf16.mxu0 0
          %7550 = vmatpush1.bf16.msra.mxu0 0
          %7551 = vmatprep.subr.bf16.mxu0 0
          %7552 = vmatpush1.bf16.msra.mxu0 0
          %7553 = vmatprep.subr.bf16.mxu0 0
          %7554 = vmatpush1.bf16.msra.mxu0 0
          %7555 = vmatprep.subr.bf16.mxu0 0
          %7556 = vmatpush1.bf16.msra.mxu0 0
          %7557 = vmatprep.subr.bf16.mxu0 0
          %7558 = vmatpush1.bf16.msra.mxu0 0
          %7559 = vmatprep.subr.bf16.mxu0 0
          %7560 = vmatpush1.bf16.msra.mxu0 0
          %7561 = vmatprep.subr.bf16.mxu0 0
          %7562 = vmatpush1.bf16.msra.mxu0 %v7532
          %7563 = vmatprep.subr.bf16.mxu0 0
          %7564 = vmatpush1.bf16.msra.mxu0 %v7531
          %7565 = vmatprep.subr.bf16.mxu0 0
          %7566 = vmatpush2.bf16.msra.mxu0 0
          %7567 = vmatprep.subr.bf16.mxu0 0
          %7568 = vmatpush2.bf16.msra.mxu0 0
          %7569 = vmatprep.subr.bf16.mxu0 0
          %7570 = vmatpush2.bf16.msra.mxu0 0
          %7571 = vmatprep.subr.bf16.mxu0 0
          %7572 = vmatpush2.bf16.msra.mxu0 0
          %7573 = vmatprep.subr.bf16.mxu0 0
          %7574 = vmatpush2.bf16.msra.mxu0 0
          %7575 = vmatprep.subr.bf16.mxu0 0
          %7576 = vmatpush2.bf16.msra.mxu0 0
          %7577 = vmatprep.subr.bf16.mxu0 0
          %7578 = vmatpush2.bf16.msra.mxu0 0
          %7579 = vmatprep.subr.bf16.mxu0 0
          %7580 = vmatpush2.bf16.msra.mxu0 0
          %7581 = vmatprep.mubr.bf16.mxu0 0
          %7582 = vmatmul.mubr.bf16.gmra.mxu0 %v7547
          %v7583 = vpop.f32.mrf.mxu0
          %v7584 = vadd.f32 %v7537, %v7583
          %v7585 = vpop.f32.mrf.mxu0
          %v7586 = vpop.f32.mrf.mxu0
          %v7587 = vpop.f32.mrf.mxu0
          %7588 = vdwg.mxu0
          %vm7589 = vcmask 74752
          %7590 = vst.msk [vmem:[#allocation3] sm:$0x3] %vm7589, %v7584
        $region68: #{tpu_custom_call.1} parent=59 // pred_fallthru
          _
        // Predicated region
        $region69: #{tpu_custom_call.1} parent=59 // pred_check
          %p7591 = pneg %p282
        $region70: #{tpu_custom_call.1} parent=59 // pred_check_branch
          %7593 = sbr.rel (%p7591) target = $region72
        $region71: #{tpu_custom_call.1} parent=59 // pred_region
          %s7595 = ssub.s32 32, 32
          %7596 = vsyncadd [#allocation4], %s7595
          %s7597 = smul.addr %s26, 32
          %s7598 = scalar_lea.hbm %s10, %s7597
          %s7600 = sshll.u32 [#allocation3], 4
          %s7601 = int_to_ptr.vmem [resolvable:$true] %s7600
          %7603 = dma.vmem_to_hbm [thread:$0]  %s7601, 32, %s7598, [#allocation4]
        $region72: #{tpu_custom_call.1} parent=59 // pred_fallthru
          _
        // Predicated region
        $region73: #{tpu_custom_call.1} parent=59 // pred_check
          %p7604 = pneg %p282
        $region74: #{tpu_custom_call.1} parent=59 // pred_check_branch
          %7606 = sbr.rel (%p7604) target = $region76
        $region75: #{tpu_custom_call.1} parent=59 // pred_region
          %7607 = dma.done [#allocation4], 32
        $region76: #{tpu_custom_call.1} parent=59 // pred_fallthru
          _
      $region60: #{tpu_custom_call.1} parent=5 // pred_fallthru
        _
      %p7608 = scmp.le.s32.totalorder 2, %s17
      // Predicated region
      $region77: #{tpu_custom_call.1} parent=5 // pred_check
        %p7609 = pneg %p7608
      $region78: #{tpu_custom_call.1} parent=5 // pred_check_branch
        %7611 = sbr.rel (%p7609) target = $region80
      $region79: #{tpu_custom_call.1} parent=5 // pred_region
        %s7612 = ssub.s32 %s17, 2
      $region80: #{tpu_custom_call.1} parent=5 // pred_fallthru
        _
    $region6: #{tpu_custom_call.1} parent=1 // loop_footer
      %s21 = sadd.s32 1, %s17
    $region7: #{tpu_custom_call.1} parent=1 // loop_footer_branch
      %16 = sbr.rel target = $region3
    $region8: #{tpu_custom_call.1} parent=1 // loop_exit
      _
    %7613 = vsyncpa [#allocation4], 1
    %s7614 = scalar_lea.sflag [#allocation4], 1
    %7615 = vsyncpa %s7614, 1

</llo_original>
